<compile_context>
chip_gen: v5e
topology: v5e:2x2
jax: 0.10.0
libtpu: 0.0.40
codegen_flags: <defaults>
</compile_context>

<pallas_src>
import functools

import jax
import jax.numpy as jnp
from jax.experimental import pallas as pl
from jax.experimental.pallas import tpu as pltpu


def _round_up(x, m):
    return ((x + m - 1) // m) * m


# ------------------------------------------------------------------ #
# Tiled linear (matmul) kernels
# ------------------------------------------------------------------ #
def _linear_kernel(x_ref, w_ref, o_ref, acc_ref):
    @pl.when(pl.program_id(2) == 0)
    def _():
        acc_ref[...] = jnp.zeros_like(acc_ref)

    acc_ref[...] += jnp.dot(x_ref[...], w_ref[...],
                            preferred_element_type=jnp.float32)

    @pl.when(pl.program_id(2) == pl.num_programs(2) - 1)
    def _():
        o_ref[...] = acc_ref[...].astype(o_ref.dtype)


def _linear_bias_kernel(x_ref, w_ref, b_ref, o_ref, acc_ref):
    @pl.when(pl.program_id(2) == 0)
    def _():
        acc_ref[...] = jnp.zeros_like(acc_ref)

    acc_ref[...] += jnp.dot(x_ref[...], w_ref[...],
                            preferred_element_type=jnp.float32)

    @pl.when(pl.program_id(2) == pl.num_programs(2) - 1)
    def _():
        o_ref[...] = (acc_ref[...] + b_ref[...]).astype(o_ref.dtype)


def pallas_linear(x2d, w, b=None, *, tm=512, tn=256, tk=512):
    """Tiled (M, Din) @ (Din, Dout) [+ b] -> (M, Dout) f32.

    Tiles shrink automatically for small problems (kept (8,128)-aligned) and
    operands are zero-padded to tile multiples (zero K-padding contributes
    nothing; padded M/N rows/cols are sliced off).
    """
    M, Din = x2d.shape
    Dout = w.shape[1]
    tm = min(tm, _round_up(M, 8))
    tn = min(tn, _round_up(Dout, 128))
    tk = min(tk, _round_up(Din, 128))
    Mp, Kp, Np = _round_up(M, tm), _round_up(Din, tk), _round_up(Dout, tn)

    xp = x2d if (Mp == M and Kp == Din) else jnp.pad(
        x2d, ((0, Mp - M), (0, Kp - Din)))
    wp = w if (Kp == Din and Np == Dout) else jnp.pad(
        w, ((0, Kp - Din), (0, Np - Dout)))

    grid = (Mp // tm, Np // tn, Kp // tk)
    x_spec = pl.BlockSpec((tm, tk), lambda i, j, k: (i, k))
    w_spec = pl.BlockSpec((tk, tn), lambda i, j, k: (k, j))
    o_spec = pl.BlockSpec((tm, tn), lambda i, j, k: (i, j))
    out_shape = jax.ShapeDtypeStruct((Mp, Np), jnp.float32)
    scratch = [pltpu.VMEM((tm, tn), jnp.float32)]
    cparams = pltpu.CompilerParams(
        dimension_semantics=("parallel", "parallel", "arbitrary"))

    if b is None:
        out = pl.pallas_call(
            _linear_kernel, grid=grid,
            in_specs=[x_spec, w_spec], out_specs=o_spec,
            out_shape=out_shape, scratch_shapes=scratch,
            compiler_params=cparams,
        )(xp, wp)
    else:
        bp = b if Np == Dout else jnp.pad(b, (0, Np - Dout))
        b_spec = pl.BlockSpec((1, tn), lambda i, j, k: (0, j))
        out = pl.pallas_call(
            _linear_bias_kernel, grid=grid,
            in_specs=[x_spec, w_spec, b_spec], out_specs=o_spec,
            out_shape=out_shape, scratch_shapes=scratch,
            compiler_params=cparams,
        )(xp, wp, bp.reshape(1, Np))

    if Mp != M or Np != Dout:
        out = out[:M, :Dout]
    return out


# ------------------------------------------------------------------ #
# Batched-group attention kernels
# ------------------------------------------------------------------ #
def _attn_kernel(q_ref, k_ref, v_ref, o_ref, *, scale):
    q = q_ref[...] * scale                                 # pre-scale q
    s = jnp.einsum('gqd,gkd->gqk', q, k_ref[...],
                   preferred_element_type=jnp.float32)
    s = s - jnp.max(s, axis=-1, keepdims=True)
    p = jnp.exp(s)
    l = jnp.sum(p, axis=-1, keepdims=True)
    o = jnp.einsum('gqk,gkd->gqd', p, v_ref[...],
                   preferred_element_type=jnp.float32)
    # normalize the small (Lq, hd) output, divide on the EUP slot
    o_ref[...] = (o * pl.reciprocal(l, approx=True)).astype(o_ref.dtype)


def _attn_mask_kernel(q_ref, k_ref, v_ref, m_ref, o_ref, *, scale):
    q = q_ref[...] * scale
    s = jnp.einsum('gqd,gkd->gqk', q, k_ref[...],
                   preferred_element_type=jnp.float32)
    # large finite negative instead of -inf: robust to fully-masked rows.
    s = jnp.where(m_ref[...][None] != 0, -1e30, s)
    s = s - jnp.max(s, axis=-1, keepdims=True)
    p = jnp.exp(s)
    l = jnp.sum(p, axis=-1, keepdims=True)
    o = jnp.einsum('gqk,gkd->gqd', p, v_ref[...],
                   preferred_element_type=jnp.float32)
    o_ref[...] = (o * pl.reciprocal(l, approx=True)).astype(o_ref.dtype)


def pallas_attention(q, k, v, scale, mask=None, *, group_cap=64):
    """q: (G, Lq, hd); k, v: (G, Lk, hd); mask: (Lq, Lk) bool/int or None.

    Processes Gb groups per grid step (batched einsum) instead of one tiny
    head per step.  The mask (if any) uses a constant index_map so the same
    (Lq, Lk) block stays resident in VMEM across the whole grid.
    """
    G, Lq, hd = q.shape
    Lk = k.shape[1]
    # cap Gb so the f32 score tensor (lane/sublane padded) stays small
    score_bytes = 4 * _round_up(Lq, 8) * _round_up(Lk, 128)
    gb = max(1, min(group_cap, G, (2 * 1024 * 1024) // score_bytes))
    Gp = _round_up(G, gb)
    if Gp != G:
        pad = ((0, Gp - G), (0, 0), (0, 0))
        q = jnp.pad(q, pad)
        k = jnp.pad(k, pad)
        v = jnp.pad(v, pad)

    grid = (Gp // gb,)
    q_spec = pl.BlockSpec((gb, Lq, hd), lambda g: (g, 0, 0))
    kv_spec = pl.BlockSpec((gb, Lk, hd), lambda g: (g, 0, 0))
    o_spec = pl.BlockSpec((gb, Lq, hd), lambda g: (g, 0, 0))
    out_shape = jax.ShapeDtypeStruct((Gp, Lq, hd), jnp.float32)
    cparams = pltpu.CompilerParams(dimension_semantics=("parallel",))

    if mask is None:
        out = pl.pallas_call(
            functools.partial(_attn_kernel, scale=scale),
            grid=grid, in_specs=[q_spec, kv_spec, kv_spec],
            out_specs=o_spec, out_shape=out_shape,
            compiler_params=cparams,
        )(q, k, v)
    else:
        # resident mask: constant index_map -> DMA'd once, not per grid step.
        m = mask.astype(jnp.int32)
        m_spec = pl.BlockSpec((Lq, Lk), lambda g: (0, 0))
        out = pl.pallas_call(
            functools.partial(_attn_mask_kernel, scale=scale),
            grid=grid, in_specs=[q_spec, kv_spec, kv_spec, m_spec],
            out_specs=o_spec, out_shape=out_shape,
            compiler_params=cparams,
        )(q, k, v, m)

    return out[:G] if Gp != G else out


# ------------------------------------------------------------------ #
# Parameter init (deterministic, synthetic)
# ------------------------------------------------------------------ #
def init_params(key, dim, geo_num_heads, sem_num_heads, t_num_heads, output_dim):
    total = geo_num_heads + sem_num_heads + t_num_heads
    head_dim = dim // total
    Dg = geo_num_heads * head_dim
    Ds = sem_num_heads * head_dim
    Dt = dim - Dg - Ds
    ks = jax.random.split(key, 16)

    def w(k, din, dout):
        return jax.random.normal(k, (din, dout), jnp.float32) * 0.02

    p = {
        # 1x1 convs, qkv_bias=False -> no bias
        "t_q_w": w(ks[0], dim, Dt),
        "t_k_w": w(ks[1], dim, Dt),
        "t_v_w": w(ks[2], dim, Dt),
        "geo_q_w": w(ks[3], dim, Dg),
        "geo_k_w": w(ks[4], dim, Dg),
        "geo_v_w": w(ks[5], dim, Dg),
        "sem_q_w": w(ks[6], dim, Ds),
        "sem_k_w": w(ks[7], dim, Ds),
        "sem_v_w": w(ks[8], dim, Ds),
        # pattern linears (bias=True), one set per output_dim
        "pat_q_w": [w(jax.random.fold_in(ks[9], i), dim, Dg) for i in range(output_dim)],
        "pat_q_b": [jnp.zeros((Dg,), jnp.float32) for _ in range(output_dim)],
        "pat_k_w": [w(jax.random.fold_in(ks[10], i), dim, Dg) for i in range(output_dim)],
        "pat_k_b": [jnp.zeros((Dg,), jnp.float32) for _ in range(output_dim)],
        "pat_v_w": [w(jax.random.fold_in(ks[11], i), dim, Dg) for i in range(output_dim)],
        "pat_v_b": [jnp.zeros((Dg,), jnp.float32) for _ in range(output_dim)],
        # output projection (bias=True)
        "proj_w": w(ks[12], dim, dim),
        "proj_b": jnp.zeros((dim,), jnp.float32),
    }
    return p


# ------------------------------------------------------------------ #
# Forward pass (glue in JAX, hot paths in Pallas)
# ------------------------------------------------------------------ #
def st_self_attention(params, xs, x_patterns, pattern_keys,
                      geo_mask=None, sem_mask=None,
                      geo_num_heads=4, sem_num_heads=2, t_num_heads=2,
                      output_dim=1):
    x0, x1 = xs
    B, T, N, D = x0.shape
    total = geo_num_heads + sem_num_heads + t_num_heads
    hd = D // total
    scale = hd ** (-0.5)
    Dg = geo_num_heads * hd
    Ds = sem_num_heads * hd
    Dt = t_num_heads * hd

    # ---------------- temporal attention (over T, per node/head) ----------------
    # fused q/k/v projection: x1 is read from HBM once instead of 3x.
    x1f = x1.reshape(B * T * N, D)
    t_w = jnp.concatenate([params["t_q_w"], params["t_k_w"], params["t_v_w"]], axis=1)
    t_qkv = pallas_linear(x1f, t_w).reshape(B, T, N, 3 * Dt)
    t_q = t_qkv[..., :Dt]
    t_k = t_qkv[..., Dt:2 * Dt]
    t_v = t_qkv[..., 2 * Dt:]

    def to_bh(a):  # (B,T,N,Dt) -> (B*N*heads, T, hd)
        return (a.reshape(B, T, N, t_num_heads, hd)
                 .transpose(0, 2, 3, 1, 4)
                 .reshape(B * N * t_num_heads, T, hd))

    t_out = pallas_attention(to_bh(t_q), to_bh(t_k), to_bh(t_v), scale)
    t_x = (t_out.reshape(B, N, t_num_heads, T, hd)
                .transpose(0, 3, 1, 2, 4)
                .reshape(B, T, N, Dt))

    # ---------------- geo + sem q/k/v: single fused projection over x0 ----------------
    x0f = x0.reshape(B * T * N, D)
    gs_w = jnp.concatenate(
        [params["geo_q_w"], params["geo_k_w"], params["geo_v_w"],
         params["sem_q_w"], params["sem_k_w"], params["sem_v_w"]], axis=1)
    gs = pallas_linear(x0f, gs_w)                       # (B*T*N, 3*Dg + 3*Ds)
    geo_q = gs[:, 0 * Dg:1 * Dg].reshape(B, T, N, Dg)
    geo_k = gs[:, 1 * Dg:2 * Dg].reshape(B, T, N, Dg)
    geo_v = gs[:, 2 * Dg:3 * Dg].reshape(B, T, N, Dg)
    sem_q = gs[:, 3 * Dg + 0 * Ds:3 * Dg + 1 * Ds].reshape(B, T, N, Ds)
    sem_k = gs[:, 3 * Dg + 1 * Ds:3 * Dg + 2 * Ds].reshape(B, T, N, Ds)
    sem_v = gs[:, 3 * Dg + 2 * Ds:3 * Dg + 3 * Ds].reshape(B, T, N, Ds)

    # ---------------- pattern attention (adds to geo_k) ----------------
    # output_dim is typically 1; k/v share pattern_keys so their projections
    # are fused into one (D, 2*Dg) matmul per i.
    S = pattern_keys.shape[2]
    for i in range(output_dim):
        xp = x_patterns[..., i].reshape(B * T * N, D)
        pk = pattern_keys[..., i].reshape(B * T * S, D)
        p_q = pallas_linear(xp, params["pat_q_w"][i],
                            params["pat_q_b"][i]).reshape(B * T, N, Dg)
        kv_w = jnp.concatenate([params["pat_k_w"][i], params["pat_v_w"][i]], axis=1)
        kv_b = jnp.concatenate([params["pat_k_b"][i], params["pat_v_b"][i]])
        p_kv = pallas_linear(pk, kv_w, kv_b).reshape(B * T, S, 2 * Dg)
        p_k = p_kv[..., :Dg]
        p_v = p_kv[..., Dg:]
        pat = pallas_attention(p_q, p_k, p_v, scale)    # (B*T, N, Dg), no head split
        geo_k = geo_k + pat.reshape(B, T, N, Dg)

    # ---------------- geo attention (over N, per time step/head) ----------------
    gh = geo_num_heads

    def to_geo(a):  # (B,T,N,Dg) -> (B*T*gh, N, hd)
        return (a.reshape(B, T, N, gh, hd)
                 .transpose(0, 1, 3, 2, 4)
                 .reshape(B * T * gh, N, hd))

    geo_out = pallas_attention(to_geo(geo_q), to_geo(geo_k), to_geo(geo_v),
                               scale, mask=geo_mask)
    geo_x = (geo_out.reshape(B, T, gh, N, hd)
                    .transpose(0, 1, 3, 2, 4)
                    .reshape(B, T, N, Dg))

    # ---------------- sem attention (over N, per time step/head) ----------------
    sh = sem_num_heads

    def to_sem(a):  # (B,T,N,Ds) -> (B*T*sh, N, hd)
        return (a.reshape(B, T, N, sh, hd)
                 .transpose(0, 1, 3, 2, 4)
                 .reshape(B * T * sh, N, hd))

    sem_out = pallas_attention(to_sem(sem_q), to_sem(sem_k), to_sem(sem_v),
                               scale, mask=sem_mask)
    sem_x = (sem_out.reshape(B, T, sh, N, hd)
                    .transpose(0, 1, 3, 2, 4)
                    .reshape(B, T, N, Ds))

    # ---------------- output projection ----------------
    cat = jnp.concatenate([t_x, geo_x, sem_x], axis=-1)   # (B, T, N, D)
    out = pallas_linear(cat.reshape(B * T * N, D),
                        params["proj_w"], params["proj_b"]).reshape(B, T, N, D)
    # attn_drop / proj_drop: rate 0.0 -> identity (eval semantics)
    return out


# ------------------------------------------------------------------ #
# Driver
# ------------------------------------------------------------------ #
if __name__ == "__main__":
    B, T, N, D = 2, 4, 8, 32
    s_attn_size = 4
    output_dim = 1
    geo_num_heads, sem_num_heads, t_num_heads = 4, 2, 2

    key = jax.random.PRNGKey(0)
    k_par, k_x0, k_x1, k_xp, k_pk, k_gm, k_sm = jax.random.split(key, 7)

    params = init_params(k_par, D, geo_num_heads, sem_num_heads, t_num_heads,
                         output_dim)

    x0 = jax.random.normal(k_x0, (B, T, N, D), jnp.float32)
    x1 = jax.random.normal(k_x1, (B, T, N, D), jnp.float32)
    x_patterns = jax.random.normal(k_xp, (B, T, N, D, output_dim), jnp.float32)
    pattern_keys = jax.random.normal(k_pk, (B, T, s_attn_size, D, output_dim),
                                     jnp.float32)

    # boolean masks (True = masked); kernel uses a finite -1e30 fill so even a
    # fully-masked row would stay finite, but keep the diagonal unmasked anyway.
    geo_mask = jax.random.bernoulli(k_gm, 0.3, (N, N))
    geo_mask = geo_mask & (~jnp.eye(N, dtype=bool))
    sem_mask = jax.random.bernoulli(k_sm, 0.3, (N, N))
    sem_mask = sem_mask & (~jnp.eye(N, dtype=bool))

    fwd = jax.jit(functools.partial(
        st_self_attention,
        geo_num_heads=geo_num_heads,
        sem_num_heads=sem_num_heads,
        t_num_heads=t_num_heads,
        output_dim=output_dim))

    out = fwd(params, [x0, x1], x_patterns, pattern_keys, geo_mask, sem_mask)
    out = jax.block_until_ready(out)
    assert out.shape == (B, T, N, D)
    assert bool(jnp.all(jnp.isfinite(out)))
    print("KERNEL_OK")
</pallas_src>

<mosaic_0001>
module attributes {stable_mosaic.version = 11 : i64} {
  func.func @_linear_kernel(%arg0: i32, %arg1: i32, %arg2: i32, %arg3: memref<64x128xf32, #tpu.memory_space<vmem>>, %arg4: memref<128x128xf32, #tpu.memory_space<vmem>>, %arg5: memref<64x128xf32, #tpu.memory_space<vmem>>, %arg6: memref<64x128xf32, #tpu.memory_space<vmem>>) attributes {dimension_semantics = [#tpu.dimension_semantics<parallel>, #tpu.dimension_semantics<parallel>, #tpu.dimension_semantics<arbitrary>], iteration_bounds = array<i64: 1, 1, 1>, scalar_prefetch = 0 : i64, scratch_operands = 1 : i64, tpu.core_type = #tpu.core_type<tc>, window_params = [{transform_indices = @transform_0, window_bounds = array<i64: 64, 128>}, {transform_indices = @transform_1, window_bounds = array<i64: 128, 128>}, {transform_indices = @transform_2, window_bounds = array<i64: 64, 128>}]} {
    %c0_i32 = arith.constant 0 : i32
    %0 = arith.cmpi eq, %arg2, %c0_i32 : i32
    %1 = arith.extui %0 : i1 to i32
    %c0_i32_0 = arith.constant 0 : i32
    %2 = arith.cmpi ne, %1, %c0_i32_0 : i32
    scf.if %2 {
      %cst_10 = arith.constant 0.000000e+00 : f32
      %12 = vector.broadcast %cst_10 : f32 to vector<64x128xf32>
      %c0_11 = arith.constant 0 : index
      %c0_12 = arith.constant 0 : index
      %13 = vector.load %arg6[%c0_11, %c0_12] : memref<64x128xf32, #tpu.memory_space<vmem>>, vector<64x128xf32>
      tpu.vector_store %arg6[%c0_11, %c0_12], %12 {strides = array<i32>} : memref<64x128xf32, #tpu.memory_space<vmem>>, vector<64x128xf32>,
    } else {
    }
    %c0 = arith.constant 0 : index
    %c0_1 = arith.constant 0 : index
    %3 = vector.load %arg6[%c0, %c0_1] : memref<64x128xf32, #tpu.memory_space<vmem>>, vector<64x128xf32>
    %c0_2 = arith.constant 0 : index
    %c0_3 = arith.constant 0 : index
    %4 = vector.load %arg3[%c0_2, %c0_3] : memref<64x128xf32, #tpu.memory_space<vmem>>, vector<64x128xf32>
    %c0_4 = arith.constant 0 : index
    %c0_5 = arith.constant 0 : index
    %5 = vector.load %arg4[%c0_4, %c0_5] : memref<128x128xf32, #tpu.memory_space<vmem>>, vector<128x128xf32>
    %cst = arith.constant dense<0.000000e+00> : vector<64x128xf32>
    %6 = tpu.matmul %4, %5, %cst {dimension_numbers = #tpu.dot_dimension_numbers<[1], [0], [0], [1], [0, 0, 1, 1], [], []>} : vector<64x128xf32>, vector<128x128xf32>, vector<64x128xf32> -> vector<64x128xf32>
    %7 = arith.addf %3, %6 : vector<64x128xf32>
    %c0_6 = arith.constant 0 : index
    %c0_7 = arith.constant 0 : index
    %8 = vector.load %arg6[%c0_6, %c0_7] : memref<64x128xf32, #tpu.memory_space<vmem>>, vector<64x128xf32>
    tpu.vector_store %arg6[%c0_6, %c0_7], %7 {strides = array<i32>} : memref<64x128xf32, #tpu.memory_space<vmem>>, vector<64x128xf32>,
    %c0_i32_8 = arith.constant 0 : i32
    %9 = arith.cmpi eq, %arg2, %c0_i32_8 : i32
    %10 = arith.extui %9 : i1 to i32
    %c0_i32_9 = arith.constant 0 : i32
    %11 = arith.cmpi ne, %10, %c0_i32_9 : i32
    scf.if %11 {
      %c0_10 = arith.constant 0 : index
      %c0_11 = arith.constant 0 : index
      %12 = vector.load %arg6[%c0_10, %c0_11] : memref<64x128xf32, #tpu.memory_space<vmem>>, vector<64x128xf32>
      %c0_12 = arith.constant 0 : index
      %c0_13 = arith.constant 0 : index
      %13 = vector.load %arg5[%c0_12, %c0_13] : memref<64x128xf32, #tpu.memory_space<vmem>>, vector<64x128xf32>
      tpu.vector_store %arg5[%c0_12, %c0_13], %12 {strides = array<i32>} : memref<64x128xf32, #tpu.memory_space<vmem>>, vector<64x128xf32>,
    } else {
    }
    return
  }
  func.func @transform_0(%arg0: i32, %arg1: i32, %arg2: i32) -> (i32, i32) {
    %c0_i32 = arith.constant 0 : i32
    return %arg0, %arg2 : i32, i32
  }
  func.func @transform_1(%arg0: i32, %arg1: i32, %arg2: i32) -> (i32, i32) {
    %c0_i32 = arith.constant 0 : i32
    return %arg2, %arg1 : i32, i32
  }
  func.func @transform_2(%arg0: i32, %arg1: i32, %arg2: i32) -> (i32, i32) {
    %c0_i32 = arith.constant 0 : i32
    return %arg0, %arg1 : i32, i32
  }
}

module attributes {stable_mosaic.version = 11 : i64} {
  func.func @_linear_bias_kernel(%arg0: i32, %arg1: i32, %arg2: i32, %arg3: memref<32x128xf32, #tpu.memory_space<vmem>>, %arg4: memref<128x128xf32, #tpu.memory_space<vmem>>, %arg5: memref<1x128xf32, #tpu.memory_space<vmem>>, %arg6: memref<32x128xf32, #tpu.memory_space<vmem>>, %arg7: memref<32x128xf32, #tpu.memory_space<vmem>>) attributes {dimension_semantics = [#tpu.dimension_semantics<parallel>, #tpu.dimension_semantics<parallel>, #tpu.dimension_semantics<arbitrary>], iteration_bounds = array<i64: 1, 1, 1>, scalar_prefetch = 0 : i64, scratch_operands = 1 : i64, tpu.core_type = #tpu.core_type<tc>, window_params = [{transform_indices = @transform_0, window_bounds = array<i64: 32, 128>}, {transform_indices = @transform_1, window_bounds = array<i64: 128, 128>}, {transform_indices = @transform_2, window_bounds = array<i64: 1, 128>}, {transform_indices = @transform_3, window_bounds = array<i64: 32, 128>}]} {
    %c0_i32 = arith.constant 0 : i32
    %0 = arith.cmpi eq, %arg2, %c0_i32 : i32
    %1 = arith.extui %0 : i1 to i32
    %c0_i32_0 = arith.constant 0 : i32
    %2 = arith.cmpi ne, %1, %c0_i32_0 : i32
    scf.if %2 {
      %cst_10 = arith.constant 0.000000e+00 : f32
      %12 = vector.broadcast %cst_10 : f32 to vector<32x128xf32>
      %c0_11 = arith.constant 0 : index
      %c0_12 = arith.constant 0 : index
      %13 = vector.load %arg7[%c0_11, %c0_12] : memref<32x128xf32, #tpu.memory_space<vmem>>, vector<32x128xf32>
      tpu.vector_store %arg7[%c0_11, %c0_12], %12 {strides = array<i32>} : memref<32x128xf32, #tpu.memory_space<vmem>>, vector<32x128xf32>,
    } else {
    }
    %c0 = arith.constant 0 : index
    %c0_1 = arith.constant 0 : index
    %3 = vector.load %arg7[%c0, %c0_1] : memref<32x128xf32, #tpu.memory_space<vmem>>, vector<32x128xf32>
    %c0_2 = arith.constant 0 : index
    %c0_3 = arith.constant 0 : index
    %4 = vector.load %arg3[%c0_2, %c0_3] : memref<32x128xf32, #tpu.memory_space<vmem>>, vector<32x128xf32>
    %c0_4 = arith.constant 0 : index
    %c0_5 = arith.constant 0 : index
    %5 = vector.load %arg4[%c0_4, %c0_5] : memref<128x128xf32, #tpu.memory_space<vmem>>, vector<128x128xf32>
    %cst = arith.constant dense<0.000000e+00> : vector<32x128xf32>
    %6 = tpu.matmul %4, %5, %cst {dimension_numbers = #tpu.dot_dimension_numbers<[1], [0], [0], [1], [0, 0, 1, 1], [], []>} : vector<32x128xf32>, vector<128x128xf32>, vector<32x128xf32> -> vector<32x128xf32>
    %7 = arith.addf %3, %6 : vector<32x128xf32>
    %c0_6 = arith.constant 0 : index
    %c0_7 = arith.constant 0 : index
    %8 = vector.load %arg7[%c0_6, %c0_7] : memref<32x128xf32, #tpu.memory_space<vmem>>, vector<32x128xf32>
    tpu.vector_store %arg7[%c0_6, %c0_7], %7 {strides = array<i32>} : memref<32x128xf32, #tpu.memory_space<vmem>>, vector<32x128xf32>,
    %c0_i32_8 = arith.constant 0 : i32
    %9 = arith.cmpi eq, %arg2, %c0_i32_8 : i32
    %10 = arith.extui %9 : i1 to i32
    %c0_i32_9 = arith.constant 0 : i32
    %11 = arith.cmpi ne, %10, %c0_i32_9 : i32
    scf.if %11 {
      %c0_10 = arith.constant 0 : index
      %c0_11 = arith.constant 0 : index
      %12 = vector.load %arg7[%c0_10, %c0_11] : memref<32x128xf32, #tpu.memory_space<vmem>>, vector<32x128xf32>
      %c0_12 = arith.constant 0 : index
      %c0_13 = arith.constant 0 : index
      %13 = vector.load %arg5[%c0_12, %c0_13] : memref<1x128xf32, #tpu.memory_space<vmem>>, vector<1x128xf32>
      %14 = vector.broadcast %13 : vector<1x128xf32> to vector<32x128xf32>
      %15 = arith.addf %12, %14 : vector<32x128xf32>
      %c0_14 = arith.constant 0 : index
      %c0_15 = arith.constant 0 : index
      %16 = vector.load %arg6[%c0_14, %c0_15] : memref<32x128xf32, #tpu.memory_space<vmem>>, vector<32x128xf32>
      tpu.vector_store %arg6[%c0_14, %c0_15], %15 {strides = array<i32>} : memref<32x128xf32, #tpu.memory_space<vmem>>, vector<32x128xf32>,
    } else {
    }
    return
  }
  func.func @transform_0(%arg0: i32, %arg1: i32, %arg2: i32) -> (i32, i32) {
    %c0_i32 = arith.constant 0 : i32
    return %arg0, %arg2 : i32, i32
  }
  func.func @transform_1(%arg0: i32, %arg1: i32, %arg2: i32) -> (i32, i32) {
    %c0_i32 = arith.constant 0 : i32
    return %arg2, %arg1 : i32, i32
  }
  func.func @transform_2(%arg0: i32, %arg1: i32, %arg2: i32) -> (i32, i32) {
    %c0_i32 = arith.constant 0 : i32
    %c0_i32_0 = arith.constant 0 : i32
    return %c0_i32, %arg1 : i32, i32
  }
  func.func @transform_3(%arg0: i32, %arg1: i32, %arg2: i32) -> (i32, i32) {
    %c0_i32 = arith.constant 0 : i32
    return %arg0, %arg1 : i32, i32
  }
}

module attributes {stable_mosaic.version = 11 : i64} {
  func.func @_linear_bias_kernel(%arg0: i32, %arg1: i32, %arg2: i32, %arg3: memref<64x128xf32, #tpu.memory_space<vmem>>, %arg4: memref<128x128xf32, #tpu.memory_space<vmem>>, %arg5: memref<1x128xf32, #tpu.memory_space<vmem>>, %arg6: memref<64x128xf32, #tpu.memory_space<vmem>>, %arg7: memref<64x128xf32, #tpu.memory_space<vmem>>) attributes {dimension_semantics = [#tpu.dimension_semantics<parallel>, #tpu.dimension_semantics<parallel>, #tpu.dimension_semantics<arbitrary>], iteration_bounds = array<i64: 1, 1, 1>, scalar_prefetch = 0 : i64, scratch_operands = 1 : i64, tpu.core_type = #tpu.core_type<tc>, window_params = [{transform_indices = @transform_0, window_bounds = array<i64: 64, 128>}, {transform_indices = @transform_1, window_bounds = array<i64: 128, 128>}, {transform_indices = @transform_2, window_bounds = array<i64: 1, 128>}, {transform_indices = @transform_3, window_bounds = array<i64: 64, 128>}]} {
    %c0_i32 = arith.constant 0 : i32
    %0 = arith.cmpi eq, %arg2, %c0_i32 : i32
    %1 = arith.extui %0 : i1 to i32
    %c0_i32_0 = arith.constant 0 : i32
    %2 = arith.cmpi ne, %1, %c0_i32_0 : i32
    scf.if %2 {
      %cst_10 = arith.constant 0.000000e+00 : f32
      %12 = vector.broadcast %cst_10 : f32 to vector<64x128xf32>
      %c0_11 = arith.constant 0 : index
      %c0_12 = arith.constant 0 : index
      %13 = vector.load %arg7[%c0_11, %c0_12] : memref<64x128xf32, #tpu.memory_space<vmem>>, vector<64x128xf32>
      tpu.vector_store %arg7[%c0_11, %c0_12], %12 {strides = array<i32>} : memref<64x128xf32, #tpu.memory_space<vmem>>, vector<64x128xf32>,
    } else {
    }
    %c0 = arith.constant 0 : index
    %c0_1 = arith.constant 0 : index
    %3 = vector.load %arg7[%c0, %c0_1] : memref<64x128xf32, #tpu.memory_space<vmem>>, vector<64x128xf32>
    %c0_2 = arith.constant 0 : index
    %c0_3 = arith.constant 0 : index
    %4 = vector.load %arg3[%c0_2, %c0_3] : memref<64x128xf32, #tpu.memory_space<vmem>>, vector<64x128xf32>
    %c0_4 = arith.constant 0 : index
    %c0_5 = arith.constant 0 : index
    %5 = vector.load %arg4[%c0_4, %c0_5] : memref<128x128xf32, #tpu.memory_space<vmem>>, vector<128x128xf32>
    %cst = arith.constant dense<0.000000e+00> : vector<64x128xf32>
    %6 = tpu.matmul %4, %5, %cst {dimension_numbers = #tpu.dot_dimension_numbers<[1], [0], [0], [1], [0, 0, 1, 1], [], []>} : vector<64x128xf32>, vector<128x128xf32>, vector<64x128xf32> -> vector<64x128xf32>
    %7 = arith.addf %3, %6 : vector<64x128xf32>
    %c0_6 = arith.constant 0 : index
    %c0_7 = arith.constant 0 : index
    %8 = vector.load %arg7[%c0_6, %c0_7] : memref<64x128xf32, #tpu.memory_space<vmem>>, vector<64x128xf32>
    tpu.vector_store %arg7[%c0_6, %c0_7], %7 {strides = array<i32>} : memref<64x128xf32, #tpu.memory_space<vmem>>, vector<64x128xf32>,
    %c0_i32_8 = arith.constant 0 : i32
    %9 = arith.cmpi eq, %arg2, %c0_i32_8 : i32
    %10 = arith.extui %9 : i1 to i32
    %c0_i32_9 = arith.constant 0 : i32
    %11 = arith.cmpi ne, %10, %c0_i32_9 : i32
    scf.if %11 {
      %c0_10 = arith.constant 0 : index
      %c0_11 = arith.constant 0 : index
      %12 = vector.load %arg7[%c0_10, %c0_11] : memref<64x128xf32, #tpu.memory_space<vmem>>, vector<64x128xf32>
      %c0_12 = arith.constant 0 : index
      %c0_13 = arith.constant 0 : index
      %13 = vector.load %arg5[%c0_12, %c0_13] : memref<1x128xf32, #tpu.memory_space<vmem>>, vector<1x128xf32>
      %14 = vector.broadcast %13 : vector<1x128xf32> to vector<64x128xf32>
      %15 = arith.addf %12, %14 : vector<64x128xf32>
      %c0_14 = arith.constant 0 : index
      %c0_15 = arith.constant 0 : index
      %16 = vector.load %arg6[%c0_14, %c0_15] : memref<64x128xf32, #tpu.memory_space<vmem>>, vector<64x128xf32>
      tpu.vector_store %arg6[%c0_14, %c0_15], %15 {strides = array<i32>} : memref<64x128xf32, #tpu.memory_space<vmem>>, vector<64x128xf32>,
    } else {
    }
    return
  }
  func.func @transform_0(%arg0: i32, %arg1: i32, %arg2: i32) -> (i32, i32) {
    %c0_i32 = arith.constant 0 : i32
    return %arg0, %arg2 : i32, i32
  }
  func.func @transform_1(%arg0: i32, %arg1: i32, %arg2: i32) -> (i32, i32) {
    %c0_i32 = arith.constant 0 : i32
    return %arg2, %arg1 : i32, i32
  }
  func.func @transform_2(%arg0: i32, %arg1: i32, %arg2: i32) -> (i32, i32) {
    %c0_i32 = arith.constant 0 : i32
    %c0_i32_0 = arith.constant 0 : i32
    return %c0_i32, %arg1 : i32, i32
  }
  func.func @transform_3(%arg0: i32, %arg1: i32, %arg2: i32) -> (i32, i32) {
    %c0_i32 = arith.constant 0 : i32
    return %arg0, %arg1 : i32, i32
  }
}

module attributes {stable_mosaic.version = 11 : i64} {
  func.func @_attn_kernel(%arg0: i32, %arg1: memref<8x8x16xf32, #tpu.memory_space<vmem>>, %arg2: memref<8x4x16xf32, #tpu.memory_space<vmem>>, %arg3: memref<8x4x16xf32, #tpu.memory_space<vmem>>, %arg4: memref<8x8x16xf32, #tpu.memory_space<vmem>>) attributes {dimension_semantics = [#tpu.dimension_semantics<parallel>], iteration_bounds = array<i64: 1>, scalar_prefetch = 0 : i64, scratch_operands = 0 : i64, tpu.core_type = #tpu.core_type<tc>, window_params = [{transform_indices = @transform_0, window_bounds = array<i64: 8, 8, 16>}, {transform_indices = @transform_1, window_bounds = array<i64: 8, 4, 16>}, {transform_indices = @transform_2, window_bounds = array<i64: 8, 4, 16>}, {transform_indices = @transform_3, window_bounds = array<i64: 8, 8, 16>}]} {
    %c0 = arith.constant 0 : index
    %c0_0 = arith.constant 0 : index
    %c0_1 = arith.constant 0 : index
    %0 = vector.load %arg1[%c0, %c0_0, %c0_1] : memref<8x8x16xf32, #tpu.memory_space<vmem>>, vector<8x8x16xf32>
    %cst = arith.constant 5.000000e-01 : f32
    %1 = vector.broadcast %cst : f32 to vector<8x8x16xf32>
    %2 = arith.mulf %0, %1 : vector<8x8x16xf32>
    %c0_2 = arith.constant 0 : index
    %c0_3 = arith.constant 0 : index
    %c0_4 = arith.constant 0 : index
    %3 = vector.load %arg2[%c0_2, %c0_3, %c0_4] : memref<8x4x16xf32, #tpu.memory_space<vmem>>, vector<8x4x16xf32>
    "tpu.trace_start"() <{level = 10 : i32, message = "gqd,gkd->gqk"}> : () -> ()
    %cst_5 = arith.constant dense<0.000000e+00> : vector<8x8x4xf32>
    %4 = tpu.matmul %2, %3, %cst_5 {dimension_numbers = #tpu.dot_dimension_numbers<[2], [2], [1], [1], [0, 0, 0, 1, 1, 1], [0], [0]>} : vector<8x8x16xf32>, vector<8x4x16xf32>, vector<8x8x4xf32> -> vector<8x8x4xf32>
    "tpu.trace_stop"() : () -> ()
    %cst_6 = arith.constant dense<0xFF800000> : vector<8x8xf32>
    %5 = vector.multi_reduction <maximumf>, %4, %cst_6 [2] : vector<8x8x4xf32> to vector<8x8xf32>
    %6 = vector.shape_cast %5 : vector<8x8xf32> to vector<8x8x1xf32>
    %7 = vector.broadcast %6 : vector<8x8x1xf32> to vector<8x8x4xf32>
    %8 = arith.subf %4, %7 : vector<8x8x4xf32>
    %9 = math.exp %8 : vector<8x8x4xf32>
    %cst_7 = arith.constant dense<0.000000e+00> : vector<8x8xf32>
    %10 = vector.multi_reduction <add>, %9, %cst_7 [2] : vector<8x8x4xf32> to vector<8x8xf32>
    %11 = vector.shape_cast %10 : vector<8x8xf32> to vector<8x8x1xf32>
    %c0_8 = arith.constant 0 : index
    %c0_9 = arith.constant 0 : index
    %c0_10 = arith.constant 0 : index
    %12 = vector.load %arg3[%c0_8, %c0_9, %c0_10] : memref<8x4x16xf32, #tpu.memory_space<vmem>>, vector<8x4x16xf32>
    "tpu.trace_start"() <{level = 10 : i32, message = "gqk,gkd->gqd"}> : () -> ()
    %cst_11 = arith.constant dense<0.000000e+00> : vector<8x8x16xf32>
    %13 = tpu.matmul %9, %12, %cst_11 {dimension_numbers = #tpu.dot_dimension_numbers<[2], [1], [1], [2], [0, 0, 0, 1, 1, 2], [0], [0]>} : vector<8x8x4xf32>, vector<8x4x16xf32>, vector<8x8x16xf32> -> vector<8x8x16xf32>
    "tpu.trace_stop"() : () -> ()
    %14 = tpu.reciprocal %11 {approx = true} : vector<8x8x1xf32> -> vector<8x8x1xf32>
    %15 = vector.broadcast %14 : vector<8x8x1xf32> to vector<8x8x16xf32>
    %16 = arith.mulf %13, %15 : vector<8x8x16xf32>
    %c0_12 = arith.constant 0 : index
    %c0_13 = arith.constant 0 : index
    %c0_14 = arith.constant 0 : index
    %17 = vector.load %arg4[%c0_12, %c0_13, %c0_14] : memref<8x8x16xf32, #tpu.memory_space<vmem>>, vector<8x8x16xf32>
    tpu.vector_store %arg4[%c0_12, %c0_13, %c0_14], %16 {strides = array<i32>} : memref<8x8x16xf32, #tpu.memory_space<vmem>>, vector<8x8x16xf32>,
    return
  }
  func.func @transform_0(%arg0: i32) -> (i32, i32, i32) {
    %c0_i32 = arith.constant 0 : i32
    %c0_i32_0 = arith.constant 0 : i32
    %c0_i32_1 = arith.constant 0 : i32
    return %arg0, %c0_i32, %c0_i32_0 : i32, i32, i32
  }
  func.func @transform_1(%arg0: i32) -> (i32, i32, i32) {
    %c0_i32 = arith.constant 0 : i32
    %c0_i32_0 = arith.constant 0 : i32
    %c0_i32_1 = arith.constant 0 : i32
    return %arg0, %c0_i32, %c0_i32_0 : i32, i32, i32
  }
  func.func @transform_2(%arg0: i32) -> (i32, i32, i32) {
    %c0_i32 = arith.constant 0 : i32
    %c0_i32_0 = arith.constant 0 : i32
    %c0_i32_1 = arith.constant 0 : i32
    return %arg0, %c0_i32, %c0_i32_0 : i32, i32, i32
  }
  func.func @transform_3(%arg0: i32) -> (i32, i32, i32) {
    %c0_i32 = arith.constant 0 : i32
    %c0_i32_0 = arith.constant 0 : i32
    %c0_i32_1 = arith.constant 0 : i32
    return %arg0, %c0_i32, %c0_i32_0 : i32, i32, i32
  }
}

module attributes {stable_mosaic.version = 11 : i64} {
  func.func @_attn_mask_kernel(%arg0: i32, %arg1: memref<32x8x4xf32, #tpu.memory_space<vmem>>, %arg2: memref<32x8x4xf32, #tpu.memory_space<vmem>>, %arg3: memref<32x8x4xf32, #tpu.memory_space<vmem>>, %arg4: memref<8x8xi32, #tpu.memory_space<vmem>>, %arg5: memref<32x8x4xf32, #tpu.memory_space<vmem>>) attributes {dimension_semantics = [#tpu.dimension_semantics<parallel>], iteration_bounds = array<i64: 1>, scalar_prefetch = 0 : i64, scratch_operands = 0 : i64, tpu.core_type = #tpu.core_type<tc>, window_params = [{transform_indices = @transform_0, window_bounds = array<i64: 32, 8, 4>}, {transform_indices = @transform_1, window_bounds = array<i64: 32, 8, 4>}, {transform_indices = @transform_2, window_bounds = array<i64: 32, 8, 4>}, {pipeline_mode = #tpu.pipeline_mode<synchronous>, transform_indices = @transform_3, window_bounds = array<i64: 8, 8>}, {transform_indices = @transform_4, window_bounds = array<i64: 32, 8, 4>}]} {
    %c0 = arith.constant 0 : index
    %c0_0 = arith.constant 0 : index
    %c0_1 = arith.constant 0 : index
    %0 = vector.load %arg1[%c0, %c0_0, %c0_1] : memref<32x8x4xf32, #tpu.memory_space<vmem>>, vector<32x8x4xf32>
    %cst = arith.constant 5.000000e-01 : f32
    %1 = vector.broadcast %cst : f32 to vector<32x8x4xf32>
    %2 = arith.mulf %0, %1 : vector<32x8x4xf32>
    %c0_2 = arith.constant 0 : index
    %c0_3 = arith.constant 0 : index
    %c0_4 = arith.constant 0 : index
    %3 = vector.load %arg2[%c0_2, %c0_3, %c0_4] : memref<32x8x4xf32, #tpu.memory_space<vmem>>, vector<32x8x4xf32>
    "tpu.trace_start"() <{level = 10 : i32, message = "gqd,gkd->gqk"}> : () -> ()
    %cst_5 = arith.constant dense<0.000000e+00> : vector<32x8x8xf32>
    %4 = tpu.matmul %2, %3, %cst_5 {dimension_numbers = #tpu.dot_dimension_numbers<[2], [2], [1], [1], [0, 0, 0, 1, 1, 1], [0], [0]>} : vector<32x8x4xf32>, vector<32x8x4xf32>, vector<32x8x8xf32> -> vector<32x8x8xf32>
    "tpu.trace_stop"() : () -> ()
    %c0_6 = arith.constant 0 : index
    %c0_7 = arith.constant 0 : index
    %5 = vector.load %arg4[%c0_6, %c0_7] : memref<8x8xi32, #tpu.memory_space<vmem>>, vector<8x8xi32>
    %6 = vector.shape_cast %5 : vector<8x8xi32> to vector<1x8x8xi32>
    %c0_i32 = arith.constant 0 : i32
    %7 = vector.broadcast %c0_i32 : i32 to vector<1x8x8xi32>
    %8 = arith.cmpi ne, %6, %7 : vector<1x8x8xi32>
    %cst_8 = arith.constant -1.000000e+30 : f32
    %9 = vector.shape_cast %8 : vector<1x8x8xi1> to vector<1x8x8xi1>
    %10 = vector.broadcast %9 : vector<1x8x8xi1> to vector<32x8x8xi1>
    %11 = vector.broadcast %cst_8 : f32 to vector<32x8x8xf32>
    %12 = arith.select %10, %11, %4 : vector<32x8x8xi1>, vector<32x8x8xf32>
    %cst_9 = arith.constant dense<0xFF800000> : vector<32x8xf32>
    %13 = vector.multi_reduction <maximumf>, %12, %cst_9 [2] : vector<32x8x8xf32> to vector<32x8xf32>
    %14 = vector.shape_cast %13 : vector<32x8xf32> to vector<32x8x1xf32>
    %15 = vector.broadcast %14 : vector<32x8x1xf32> to vector<32x8x8xf32>
    %16 = arith.subf %12, %15 : vector<32x8x8xf32>
    %17 = math.exp %16 : vector<32x8x8xf32>
    %cst_10 = arith.constant dense<0.000000e+00> : vector<32x8xf32>
    %18 = vector.multi_reduction <add>, %17, %cst_10 [2] : vector<32x8x8xf32> to vector<32x8xf32>
    %19 = vector.shape_cast %18 : vector<32x8xf32> to vector<32x8x1xf32>
    %c0_11 = arith.constant 0 : index
    %c0_12 = arith.constant 0 : index
    %c0_13 = arith.constant 0 : index
    %20 = vector.load %arg3[%c0_11, %c0_12, %c0_13] : memref<32x8x4xf32, #tpu.memory_space<vmem>>, vector<32x8x4xf32>
    "tpu.trace_start"() <{level = 10 : i32, message = "gqk,gkd->gqd"}> : () -> ()
    %cst_14 = arith.constant dense<0.000000e+00> : vector<32x8x4xf32>
    %21 = tpu.matmul %17, %20, %cst_14 {dimension_numbers = #tpu.dot_dimension_numbers<[2], [1], [1], [2], [0, 0, 0, 1, 1, 2], [0], [0]>} : vector<32x8x8xf32>, vector<32x8x4xf32>, vector<32x8x4xf32> -> vector<32x8x4xf32>
    "tpu.trace_stop"() : () -> ()
    %22 = tpu.reciprocal %19 {approx = true} : vector<32x8x1xf32> -> vector<32x8x1xf32>
    %23 = vector.broadcast %22 : vector<32x8x1xf32> to vector<32x8x4xf32>
    %24 = arith.mulf %21, %23 : vector<32x8x4xf32>
    %c0_15 = arith.constant 0 : index
    %c0_16 = arith.constant 0 : index
    %c0_17 = arith.constant 0 : index
    %25 = vector.load %arg5[%c0_15, %c0_16, %c0_17] : memref<32x8x4xf32, #tpu.memory_space<vmem>>, vector<32x8x4xf32>
    tpu.vector_store %arg5[%c0_15, %c0_16, %c0_17], %24 {strides = array<i32>} : memref<32x8x4xf32, #tpu.memory_space<vmem>>, vector<32x8x4xf32>,
    return
  }
  func.func @transform_0(%arg0: i32) -> (i32, i32, i32) {
    %c0_i32 = arith.constant 0 : i32
    %c0_i32_0 = arith.constant 0 : i32
    %c0_i32_1 = arith.constant 0 : i32
    return %arg0, %c0_i32, %c0_i32_0 : i32, i32, i32
  }
  func.func @transform_1(%arg0: i32) -> (i32, i32, i32) {
    %c0_i32 = arith.constant 0 : i32
    %c0_i32_0 = arith.constant 0 : i32
    %c0_i32_1 = arith.constant 0 : i32
    return %arg0, %c0_i32, %c0_i32_0 : i32, i32, i32
  }
  func.func @transform_2(%arg0: i32) -> (i32, i32, i32) {
    %c0_i32 = arith.constant 0 : i32
    %c0_i32_0 = arith.constant 0 : i32
    %c0_i32_1 = arith.constant 0 : i32
    return %arg0, %c0_i32, %c0_i32_0 : i32, i32, i32
  }
  func.func @transform_3(%arg0: i32) -> (i32, i32) {
    %c0_i32 = arith.constant 0 : i32
    %c0_i32_0 = arith.constant 0 : i32
    %c0_i32_1 = arith.constant 0 : i32
    return %c0_i32, %c0_i32_0 : i32, i32
  }
  func.func @transform_4(%arg0: i32) -> (i32, i32, i32) {
    %c0_i32 = arith.constant 0 : i32
    %c0_i32_0 = arith.constant 0 : i32
    %c0_i32_1 = arith.constant 0 : i32
    return %arg0, %c0_i32, %c0_i32_0 : i32, i32, i32
  }
}

module attributes {stable_mosaic.version = 11 : i64} {
  func.func @_attn_mask_kernel(%arg0: i32, %arg1: memref<16x8x4xf32, #tpu.memory_space<vmem>>, %arg2: memref<16x8x4xf32, #tpu.memory_space<vmem>>, %arg3: memref<16x8x4xf32, #tpu.memory_space<vmem>>, %arg4: memref<8x8xi32, #tpu.memory_space<vmem>>, %arg5: memref<16x8x4xf32, #tpu.memory_space<vmem>>) attributes {dimension_semantics = [#tpu.dimension_semantics<parallel>], iteration_bounds = array<i64: 1>, scalar_prefetch = 0 : i64, scratch_operands = 0 : i64, tpu.core_type = #tpu.core_type<tc>, window_params = [{transform_indices = @transform_0, window_bounds = array<i64: 16, 8, 4>}, {transform_indices = @transform_1, window_bounds = array<i64: 16, 8, 4>}, {transform_indices = @transform_2, window_bounds = array<i64: 16, 8, 4>}, {pipeline_mode = #tpu.pipeline_mode<synchronous>, transform_indices = @transform_3, window_bounds = array<i64: 8, 8>}, {transform_indices = @transform_4, window_bounds = array<i64: 16, 8, 4>}]} {
    %c0 = arith.constant 0 : index
    %c0_0 = arith.constant 0 : index
    %c0_1 = arith.constant 0 : index
    %0 = vector.load %arg1[%c0, %c0_0, %c0_1] : memref<16x8x4xf32, #tpu.memory_space<vmem>>, vector<16x8x4xf32>
    %cst = arith.constant 5.000000e-01 : f32
    %1 = vector.broadcast %cst : f32 to vector<16x8x4xf32>
    %2 = arith.mulf %0, %1 : vector<16x8x4xf32>
    %c0_2 = arith.constant 0 : index
    %c0_3 = arith.constant 0 : index
    %c0_4 = arith.constant 0 : index
    %3 = vector.load %arg2[%c0_2, %c0_3, %c0_4] : memref<16x8x4xf32, #tpu.memory_space<vmem>>, vector<16x8x4xf32>
    "tpu.trace_start"() <{level = 10 : i32, message = "gqd,gkd->gqk"}> : () -> ()
    %cst_5 = arith.constant dense<0.000000e+00> : vector<16x8x8xf32>
    %4 = tpu.matmul %2, %3, %cst_5 {dimension_numbers = #tpu.dot_dimension_numbers<[2], [2], [1], [1], [0, 0, 0, 1, 1, 1], [0], [0]>} : vector<16x8x4xf32>, vector<16x8x4xf32>, vector<16x8x8xf32> -> vector<16x8x8xf32>
    "tpu.trace_stop"() : () -> ()
    %c0_6 = arith.constant 0 : index
    %c0_7 = arith.constant 0 : index
    %5 = vector.load %arg4[%c0_6, %c0_7] : memref<8x8xi32, #tpu.memory_space<vmem>>, vector<8x8xi32>
    %6 = vector.shape_cast %5 : vector<8x8xi32> to vector<1x8x8xi32>
    %c0_i32 = arith.constant 0 : i32
    %7 = vector.broadcast %c0_i32 : i32 to vector<1x8x8xi32>
    %8 = arith.cmpi ne, %6, %7 : vector<1x8x8xi32>
    %cst_8 = arith.constant -1.000000e+30 : f32
    %9 = vector.shape_cast %8 : vector<1x8x8xi1> to vector<1x8x8xi1>
    %10 = vector.broadcast %9 : vector<1x8x8xi1> to vector<16x8x8xi1>
    %11 = vector.broadcast %cst_8 : f32 to vector<16x8x8xf32>
    %12 = arith.select %10, %11, %4 : vector<16x8x8xi1>, vector<16x8x8xf32>
    %cst_9 = arith.constant dense<0xFF800000> : vector<16x8xf32>
    %13 = vector.multi_reduction <maximumf>, %12, %cst_9 [2] : vector<16x8x8xf32> to vector<16x8xf32>
    %14 = vector.shape_cast %13 : vector<16x8xf32> to vector<16x8x1xf32>
    %15 = vector.broadcast %14 : vector<16x8x1xf32> to vector<16x8x8xf32>
    %16 = arith.subf %12, %15 : vector<16x8x8xf32>
    %17 = math.exp %16 : vector<16x8x8xf32>
    %cst_10 = arith.constant dense<0.000000e+00> : vector<16x8xf32>
    %18 = vector.multi_reduction <add>, %17, %cst_10 [2] : vector<16x8x8xf32> to vector<16x8xf32>
    %19 = vector.shape_cast %18 : vector<16x8xf32> to vector<16x8x1xf32>
    %c0_11 = arith.constant 0 : index
    %c0_12 = arith.constant 0 : index
    %c0_13 = arith.constant 0 : index
    %20 = vector.load %arg3[%c0_11, %c0_12, %c0_13] : memref<16x8x4xf32, #tpu.memory_space<vmem>>, vector<16x8x4xf32>
    "tpu.trace_start"() <{level = 10 : i32, message = "gqk,gkd->gqd"}> : () -> ()
    %cst_14 = arith.constant dense<0.000000e+00> : vector<16x8x4xf32>
    %21 = tpu.matmul %17, %20, %cst_14 {dimension_numbers = #tpu.dot_dimension_numbers<[2], [1], [1], [2], [0, 0, 0, 1, 1, 2], [0], [0]>} : vector<16x8x8xf32>, vector<16x8x4xf32>, vector<16x8x4xf32> -> vector<16x8x4xf32>
    "tpu.trace_stop"() : () -> ()
    %22 = tpu.reciprocal %19 {approx = true} : vector<16x8x1xf32> -> vector<16x8x1xf32>
    %23 = vector.broadcast %22 : vector<16x8x1xf32> to vector<16x8x4xf32>
    %24 = arith.mulf %21, %23 : vector<16x8x4xf32>
    %c0_15 = arith.constant 0 : index
    %c0_16 = arith.constant 0 : index
    %c0_17 = arith.constant 0 : index
    %25 = vector.load %arg5[%c0_15, %c0_16, %c0_17] : memref<16x8x4xf32, #tpu.memory_space<vmem>>, vector<16x8x4xf32>
    tpu.vector_store %arg5[%c0_15, %c0_16, %c0_17], %24 {strides = array<i32>} : memref<16x8x4xf32, #tpu.memory_space<vmem>>, vector<16x8x4xf32>,
    return
  }
  func.func @transform_0(%arg0: i32) -> (i32, i32, i32) {
    %c0_i32 = arith.constant 0 : i32
    %c0_i32_0 = arith.constant 0 : i32
    %c0_i32_1 = arith.constant 0 : i32
    return %arg0, %c0_i32, %c0_i32_0 : i32, i32, i32
  }
  func.func @transform_1(%arg0: i32) -> (i32, i32, i32) {
    %c0_i32 = arith.constant 0 : i32
    %c0_i32_0 = arith.constant 0 : i32
    %c0_i32_1 = arith.constant 0 : i32
    return %arg0, %c0_i32, %c0_i32_0 : i32, i32, i32
  }
  func.func @transform_2(%arg0: i32) -> (i32, i32, i32) {
    %c0_i32 = arith.constant 0 : i32
    %c0_i32_0 = arith.constant 0 : i32
    %c0_i32_1 = arith.constant 0 : i32
    return %arg0, %c0_i32, %c0_i32_0 : i32, i32, i32
  }
  func.func @transform_3(%arg0: i32) -> (i32, i32) {
    %c0_i32 = arith.constant 0 : i32
    %c0_i32_0 = arith.constant 0 : i32
    %c0_i32_1 = arith.constant 0 : i32
    return %c0_i32, %c0_i32_0 : i32, i32
  }
  func.func @transform_4(%arg0: i32) -> (i32, i32, i32) {
    %c0_i32 = arith.constant 0 : i32
    %c0_i32_0 = arith.constant 0 : i32
    %c0_i32_1 = arith.constant 0 : i32
    return %arg0, %c0_i32, %c0_i32_0 : i32, i32, i32
  }
}

module attributes {stable_mosaic.version = 11 : i64} {
  func.func @_attn_kernel(%arg0: i32, %arg1: memref<32x4x4xf32, #tpu.memory_space<vmem>>, %arg2: memref<32x4x4xf32, #tpu.memory_space<vmem>>, %arg3: memref<32x4x4xf32, #tpu.memory_space<vmem>>, %arg4: memref<32x4x4xf32, #tpu.memory_space<vmem>>) attributes {dimension_semantics = [#tpu.dimension_semantics<parallel>], iteration_bounds = array<i64: 1>, scalar_prefetch = 0 : i64, scratch_operands = 0 : i64, tpu.core_type = #tpu.core_type<tc>, window_params = [{transform_indices = @transform_0, window_bounds = array<i64: 32, 4, 4>}, {transform_indices = @transform_1, window_bounds = array<i64: 32, 4, 4>}, {transform_indices = @transform_2, window_bounds = array<i64: 32, 4, 4>}, {transform_indices = @transform_3, window_bounds = array<i64: 32, 4, 4>}]} {
    %c0 = arith.constant 0 : index
    %c0_0 = arith.constant 0 : index
    %c0_1 = arith.constant 0 : index
    %0 = vector.load %arg1[%c0, %c0_0, %c0_1] : memref<32x4x4xf32, #tpu.memory_space<vmem>>, vector<32x4x4xf32>
    %cst = arith.constant 5.000000e-01 : f32
    %1 = vector.broadcast %cst : f32 to vector<32x4x4xf32>
    %2 = arith.mulf %0, %1 : vector<32x4x4xf32>
    %c0_2 = arith.constant 0 : index
    %c0_3 = arith.constant 0 : index
    %c0_4 = arith.constant 0 : index
    %3 = vector.load %arg2[%c0_2, %c0_3, %c0_4] : memref<32x4x4xf32, #tpu.memory_space<vmem>>, vector<32x4x4xf32>
    "tpu.trace_start"() <{level = 10 : i32, message = "gqd,gkd->gqk"}> : () -> ()
    %cst_5 = arith.constant dense<0.000000e+00> : vector<32x4x4xf32>
    %4 = tpu.matmul %2, %3, %cst_5 {dimension_numbers = #tpu.dot_dimension_numbers<[2], [2], [1], [1], [0, 0, 0, 1, 1, 1], [0], [0]>} : vector<32x4x4xf32>, vector<32x4x4xf32>, vector<32x4x4xf32> -> vector<32x4x4xf32>
    "tpu.trace_stop"() : () -> ()
    %cst_6 = arith.constant dense<0xFF800000> : vector<32x4xf32>
    %5 = vector.multi_reduction <maximumf>, %4, %cst_6 [2] : vector<32x4x4xf32> to vector<32x4xf32>
    %6 = vector.shape_cast %5 : vector<32x4xf32> to vector<32x4x1xf32>
    %7 = vector.broadcast %6 : vector<32x4x1xf32> to vector<32x4x4xf32>
    %8 = arith.subf %4, %7 : vector<32x4x4xf32>
    %9 = math.exp %8 : vector<32x4x4xf32>
    %cst_7 = arith.constant dense<0.000000e+00> : vector<32x4xf32>
    %10 = vector.multi_reduction <add>, %9, %cst_7 [2] : vector<32x4x4xf32> to vector<32x4xf32>
    %11 = vector.shape_cast %10 : vector<32x4xf32> to vector<32x4x1xf32>
    %c0_8 = arith.constant 0 : index
    %c0_9 = arith.constant 0 : index
    %c0_10 = arith.constant 0 : index
    %12 = vector.load %arg3[%c0_8, %c0_9, %c0_10] : memref<32x4x4xf32, #tpu.memory_space<vmem>>, vector<32x4x4xf32>
    "tpu.trace_start"() <{level = 10 : i32, message = "gqk,gkd->gqd"}> : () -> ()
    %cst_11 = arith.constant dense<0.000000e+00> : vector<32x4x4xf32>
    %13 = tpu.matmul %9, %12, %cst_11 {dimension_numbers = #tpu.dot_dimension_numbers<[2], [1], [1], [2], [0, 0, 0, 1, 1, 2], [0], [0]>} : vector<32x4x4xf32>, vector<32x4x4xf32>, vector<32x4x4xf32> -> vector<32x4x4xf32>
    "tpu.trace_stop"() : () -> ()
    %14 = tpu.reciprocal %11 {approx = true} : vector<32x4x1xf32> -> vector<32x4x1xf32>
    %15 = vector.broadcast %14 : vector<32x4x1xf32> to vector<32x4x4xf32>
    %16 = arith.mulf %13, %15 : vector<32x4x4xf32>
    %c0_12 = arith.constant 0 : index
    %c0_13 = arith.constant 0 : index
    %c0_14 = arith.constant 0 : index
    %17 = vector.load %arg4[%c0_12, %c0_13, %c0_14] : memref<32x4x4xf32, #tpu.memory_space<vmem>>, vector<32x4x4xf32>
    tpu.vector_store %arg4[%c0_12, %c0_13, %c0_14], %16 {strides = array<i32>} : memref<32x4x4xf32, #tpu.memory_space<vmem>>, vector<32x4x4xf32>,
    return
  }
  func.func @transform_0(%arg0: i32) -> (i32, i32, i32) {
    %c0_i32 = arith.constant 0 : i32
    %c0_i32_0 = arith.constant 0 : i32
    %c0_i32_1 = arith.constant 0 : i32
    return %arg0, %c0_i32, %c0_i32_0 : i32, i32, i32
  }
  func.func @transform_1(%arg0: i32) -> (i32, i32, i32) {
    %c0_i32 = arith.constant 0 : i32
    %c0_i32_0 = arith.constant 0 : i32
    %c0_i32_1 = arith.constant 0 : i32
    return %arg0, %c0_i32, %c0_i32_0 : i32, i32, i32
  }
  func.func @transform_2(%arg0: i32) -> (i32, i32, i32) {
    %c0_i32 = arith.constant 0 : i32
    %c0_i32_0 = arith.constant 0 : i32
    %c0_i32_1 = arith.constant 0 : i32
    return %arg0, %c0_i32, %c0_i32_0 : i32, i32, i32
  }
  func.func @transform_3(%arg0: i32) -> (i32, i32, i32) {
    %c0_i32 = arith.constant 0 : i32
    %c0_i32_0 = arith.constant 0 : i32
    %c0_i32_1 = arith.constant 0 : i32
    return %arg0, %c0_i32, %c0_i32_0 : i32, i32, i32
  }
}

module attributes {stable_mosaic.version = 11 : i64} {
  func.func @_linear_bias_kernel(%arg0: i32, %arg1: i32, %arg2: i32, %arg3: memref<64x128xf32, #tpu.memory_space<vmem>>, %arg4: memref<128x128xf32, #tpu.memory_space<vmem>>, %arg5: memref<1x128xf32, #tpu.memory_space<vmem>>, %arg6: memref<64x128xf32, #tpu.memory_space<vmem>>, %arg7: memref<64x128xf32, #tpu.memory_space<vmem>>) attributes {dimension_semantics = [#tpu.dimension_semantics<parallel>, #tpu.dimension_semantics<parallel>, #tpu.dimension_semantics<arbitrary>], iteration_bounds = array<i64: 1, 1, 1>, scalar_prefetch = 0 : i64, scratch_operands = 1 : i64, tpu.core_type = #tpu.core_type<tc>, window_params = [{transform_indices = @transform_0, window_bounds = array<i64: 64, 128>}, {transform_indices = @transform_1, window_bounds = array<i64: 128, 128>}, {transform_indices = @transform_2, window_bounds = array<i64: 1, 128>}, {transform_indices = @transform_3, window_bounds = array<i64: 64, 128>}]} {
    %c0_i32 = arith.constant 0 : i32
    %0 = arith.cmpi eq, %arg2, %c0_i32 : i32
    %1 = arith.extui %0 : i1 to i32
    %c0_i32_0 = arith.constant 0 : i32
    %2 = arith.cmpi ne, %1, %c0_i32_0 : i32
    scf.if %2 {
      %cst_10 = arith.constant 0.000000e+00 : f32
      %12 = vector.broadcast %cst_10 : f32 to vector<64x128xf32>
      %c0_11 = arith.constant 0 : index
      %c0_12 = arith.constant 0 : index
      %13 = vector.load %arg7[%c0_11, %c0_12] : memref<64x128xf32, #tpu.memory_space<vmem>>, vector<64x128xf32>
      tpu.vector_store %arg7[%c0_11, %c0_12], %12 {strides = array<i32>} : memref<64x128xf32, #tpu.memory_space<vmem>>, vector<64x128xf32>,
    } else {
    }
    %c0 = arith.constant 0 : index
    %c0_1 = arith.constant 0 : index
    %3 = vector.load %arg7[%c0, %c0_1] : memref<64x128xf32, #tpu.memory_space<vmem>>, vector<64x128xf32>
    %c0_2 = arith.constant 0 : index
    %c0_3 = arith.constant 0 : index
    %4 = vector.load %arg3[%c0_2, %c0_3] : memref<64x128xf32, #tpu.memory_space<vmem>>, vector<64x128xf32>
    %c0_4 = arith.constant 0 : index
    %c0_5 = arith.constant 0 : index
    %5 = vector.load %arg4[%c0_4, %c0_5] : memref<128x128xf32, #tpu.memory_space<vmem>>, vector<128x128xf32>
    %cst = arith.constant dense<0.000000e+00> : vector<64x128xf32>
    %6 = tpu.matmul %4, %5, %cst {dimension_numbers = #tpu.dot_dimension_numbers<[1], [0], [0], [1], [0, 0, 1, 1], [], []>} : vector<64x128xf32>, vector<128x128xf32>, vector<64x128xf32> -> vector<64x128xf32>
    %7 = arith.addf %3, %6 : vector<64x128xf32>
    %c0_6 = arith.constant 0 : index
    %c0_7 = arith.constant 0 : index
    %8 = vector.load %arg7[%c0_6, %c0_7] : memref<64x128xf32, #tpu.memory_space<vmem>>, vector<64x128xf32>
    tpu.vector_store %arg7[%c0_6, %c0_7], %7 {strides = array<i32>} : memref<64x128xf32, #tpu.memory_space<vmem>>, vector<64x128xf32>,
    %c0_i32_8 = arith.constant 0 : i32
    %9 = arith.cmpi eq, %arg2, %c0_i32_8 : i32
    %10 = arith.extui %9 : i1 to i32
    %c0_i32_9 = arith.constant 0 : i32
    %11 = arith.cmpi ne, %10, %c0_i32_9 : i32
    scf.if %11 {
      %c0_10 = arith.constant 0 : index
      %c0_11 = arith.constant 0 : index
      %12 = vector.load %arg7[%c0_10, %c0_11] : memref<64x128xf32, #tpu.memory_space<vmem>>, vector<64x128xf32>
      %c0_12 = arith.constant 0 : index
      %c0_13 = arith.constant 0 : index
      %13 = vector.load %arg5[%c0_12, %c0_13] : memref<1x128xf32, #tpu.memory_space<vmem>>, vector<1x128xf32>
      %14 = vector.broadcast %13 : vector<1x128xf32> to vector<64x128xf32>
      %15 = arith.addf %12, %14 : vector<64x128xf32>
      %c0_14 = arith.constant 0 : index
      %c0_15 = arith.constant 0 : index
      %16 = vector.load %arg6[%c0_14, %c0_15] : memref<64x128xf32, #tpu.memory_space<vmem>>, vector<64x128xf32>
      tpu.vector_store %arg6[%c0_14, %c0_15], %15 {strides = array<i32>} : memref<64x128xf32, #tpu.memory_space<vmem>>, vector<64x128xf32>,
    } else {
    }
    return
  }
  func.func @transform_0(%arg0: i32, %arg1: i32, %arg2: i32) -> (i32, i32) {
    %c0_i32 = arith.constant 0 : i32
    return %arg0, %arg2 : i32, i32
  }
  func.func @transform_1(%arg0: i32, %arg1: i32, %arg2: i32) -> (i32, i32) {
    %c0_i32 = arith.constant 0 : i32
    return %arg2, %arg1 : i32, i32
  }
  func.func @transform_2(%arg0: i32, %arg1: i32, %arg2: i32) -> (i32, i32) {
    %c0_i32 = arith.constant 0 : i32
    %c0_i32_0 = arith.constant 0 : i32
    return %c0_i32, %arg1 : i32, i32
  }
  func.func @transform_3(%arg0: i32, %arg1: i32, %arg2: i32) -> (i32, i32) {
    %c0_i32 = arith.constant 0 : i32
    return %arg0, %arg1 : i32, i32
  }
}

</mosaic_0001>

<llo_original>
// kernel: st_self_attention.11
$region0: #{st_self_attention.11}
  #allocation0 [shape = 'u32[]', space=smem, size = 0x4, offset = 0x4, fixed_abs, tag = 'smem constant byte address 0x4 - core index']
  #allocation1 [shape = 'u32[72,128]{1,0:T(1,128)}', space=vmem, size = 0x9000, scoped, tag = 'internal scratch']
  #allocation2 [shape = 'f32[64,128]{1,0:T(8,128)}', space=vmem, size = 0x8000, scoped, tag = 'scratch operand']
  %s0 = inlined_call_operand.vmem [shape: f32[64,128], index: 0, kind: input, shape index: {}]
  %s1 = inlined_call_operand.vmem [shape: f32[128,128], index: 1, kind: input, shape index: {}]
  %s2 = inlined_call_operand.vmem [shape: f32[64,128], index: 2, kind: output, shape index: {}]
  %s3 = sld [smem:[#allocation0]]
  $region26: #{st_self_attention.11} parent=0
    _
  %s5 = ssub.s32 1, %s3
  %s6 = scalar_select 0, %s5, %s3
  // Predicated region
  $region2: #{st_self_attention.11} parent=0 // pred_check
    _
  $region3: #{st_self_attention.11} parent=0 // pred_check_branch
    %8 = sbr.rel (0) target = $region5
  $region4: #{st_self_attention.11} parent=0 // pred_region
    _
  $region5: #{st_self_attention.11} parent=0 // pred_fallthru
    _
  // Predicated region
  $region6: #{st_self_attention.11} parent=0 // pred_check
    _
  $region7: #{st_self_attention.11} parent=0 // pred_check_branch
    %10 = sbr.rel (0) target = $region9
  $region8: #{st_self_attention.11} parent=0 // pred_region
    _
  $region9: #{st_self_attention.11} parent=0 // pred_fallthru
    _
  %p11 = scmp.eq.s32.totalorder 0, 0
  // Predicated region
  $region10: #{st_self_attention.11} parent=0 // pred_check
    %p12 = pneg %p11
  $region11: #{st_self_attention.11} parent=0 // pred_check_branch
    %14 = sbr.rel (%p12) target = $region13
  $region12: #{st_self_attention.11} parent=0 // pred_region
    %15 = vst [vmem:[#allocation2] sm:$0xff] 0.0
    %16 = vst [vmem:[#allocation2 + $0x8] sm:$0xff] 0.0
    %17 = vst [vmem:[#allocation2 + $0x10] sm:$0xff] 0.0
    %18 = vst [vmem:[#allocation2 + $0x18] sm:$0xff] 0.0
    %19 = vst [vmem:[#allocation2 + $0x20] sm:$0xff] 0.0
    %20 = vst [vmem:[#allocation2 + $0x28] sm:$0xff] 0.0
    %21 = vst [vmem:[#allocation2 + $0x30] sm:$0xff] 0.0
    %22 = vst [vmem:[#allocation2 + $0x38] sm:$0xff] 0.0
  $region13: #{st_self_attention.11} parent=0 // pred_fallthru
    _
  %v23 = vld [vmem:[#allocation2] sm:$0xff]
  %v24 = vld [vmem:[#allocation2 + $0x8] sm:$0xff]
  %v25 = vld [vmem:[#allocation2 + $0x10] sm:$0xff]
  %v26 = vld [vmem:[#allocation2 + $0x18] sm:$0xff]
  %v27 = vld [vmem:[#allocation2 + $0x20] sm:$0xff]
  %v28 = vld [vmem:[#allocation2 + $0x28] sm:$0xff]
  %v29 = vld [vmem:[#allocation2 + $0x30] sm:$0xff]
  %v30 = vld [vmem:[#allocation2 + $0x38] sm:$0xff]
  %v31 = vld [vmem:[%s0] sm:$0xff]
  %v32 = vld [vmem:[%s0 + $0x8] sm:$0xff]
  %v33 = vld [vmem:[%s0 + $0x10] sm:$0xff]
  %v34 = vld [vmem:[%s0 + $0x18] sm:$0xff]
  %v35 = vld [vmem:[%s0 + $0x20] sm:$0xff]
  %v36 = vld [vmem:[%s0 + $0x28] sm:$0xff]
  %v37 = vld [vmem:[%s0 + $0x30] sm:$0xff]
  %v38 = vld [vmem:[%s0 + $0x38] sm:$0xff]
  %v39 = vld [vmem:[%s1] sm:$0xff]
  %v40 = vld [vmem:[%s1 + $0x8] sm:$0xff]
  %v41 = vld [vmem:[%s1 + $0x10] sm:$0xff]
  %v42 = vld [vmem:[%s1 + $0x18] sm:$0xff]
  %v43 = vld [vmem:[%s1 + $0x20] sm:$0xff]
  %v44 = vld [vmem:[%s1 + $0x28] sm:$0xff]
  %v45 = vld [vmem:[%s1 + $0x30] sm:$0xff]
  %v46 = vld [vmem:[%s1 + $0x38] sm:$0xff]
  %v47 = vld [vmem:[%s1 + $0x40] sm:$0xff]
  %v48 = vld [vmem:[%s1 + $0x48] sm:$0xff]
  %v49 = vld [vmem:[%s1 + $0x50] sm:$0xff]
  %v50 = vld [vmem:[%s1 + $0x58] sm:$0xff]
  %v51 = vld [vmem:[%s1 + $0x60] sm:$0xff]
  %v52 = vld [vmem:[%s1 + $0x68] sm:$0xff]
  %v53 = vld [vmem:[%s1 + $0x70] sm:$0xff]
  %v54 = vld [vmem:[%s1 + $0x78] sm:$0xff]
  %55 = vmatpush.msra.mxu0 %v54
  %56 = vmatpush.msra.mxu0 %v53
  %57 = vmatpush.msra.mxu0 %v52
  %58 = vmatpush.msra.mxu0 %v51
  %59 = vmatpush.msra.mxu0 %v50
  %60 = vmatpush.msra.mxu0 %v49
  %61 = vmatpush.msra.mxu0 %v48
  %62 = vmatpush.msra.mxu0 %v47
  %63 = vmatpush.msra.mxu0 %v46
  %64 = vmatpush.msra.mxu0 %v45
  %65 = vmatpush.msra.mxu0 %v44
  %66 = vmatpush.msra.mxu0 %v43
  %67 = vmatpush.msra.mxu0 %v42
  %68 = vmatpush.msra.mxu0 %v41
  %69 = vmatpush.msra.mxu0 %v40
  %70 = vmatpush.msra.mxu0 %v39
  %71 = vmatmul.f32.gmra.mxu0 %v31
  %v72 = vpop.f32.mrf.mxu0
  %v73 = vadd.f32 0.0, %v72
  %74 = vmatmul.f32.gmra.mxu0 %v32
  %v75 = vpop.f32.mrf.mxu0
  %v76 = vadd.f32 0.0, %v75
  %77 = vmatmul.f32.gmra.mxu0 %v33
  %v78 = vpop.f32.mrf.mxu0
  %v79 = vadd.f32 0.0, %v78
  %80 = vmatmul.f32.gmra.mxu0 %v34
  %v81 = vpop.f32.mrf.mxu0
  %v82 = vadd.f32 0.0, %v81
  %83 = vmatmul.f32.gmra.mxu0 %v35
  %v84 = vpop.f32.mrf.mxu0
  %v85 = vadd.f32 0.0, %v84
  %86 = vmatmul.f32.gmra.mxu0 %v36
  %v87 = vpop.f32.mrf.mxu0
  %v88 = vadd.f32 0.0, %v87
  %89 = vmatmul.f32.gmra.mxu0 %v37
  %v90 = vpop.f32.mrf.mxu0
  %v91 = vadd.f32 0.0, %v90
  %92 = vmatmul.f32.gmra.mxu0 %v38
  %v93 = vpop.f32.mrf.mxu0
  %v94 = vadd.f32 0.0, %v93
  %95 = vdwg.mxu0
  %v96 = vadd.f32 %v23, %v73
  %v97 = vadd.f32 %v24, %v76
  %v98 = vadd.f32 %v25, %v79
  %v99 = vadd.f32 %v26, %v82
  %v100 = vadd.f32 %v27, %v85
  %v101 = vadd.f32 %v28, %v88
  %v102 = vadd.f32 %v29, %v91
  %v103 = vadd.f32 %v30, %v94
  %104 = vst [vmem:[#allocation2] sm:$0xff] %v96
  %105 = vst [vmem:[#allocation2 + $0x8] sm:$0xff] %v97
  %106 = vst [vmem:[#allocation2 + $0x10] sm:$0xff] %v98
  %107 = vst [vmem:[#allocation2 + $0x18] sm:$0xff] %v99
  %108 = vst [vmem:[#allocation2 + $0x20] sm:$0xff] %v100
  %109 = vst [vmem:[#allocation2 + $0x28] sm:$0xff] %v101
  %110 = vst [vmem:[#allocation2 + $0x30] sm:$0xff] %v102
  %111 = vst [vmem:[#allocation2 + $0x38] sm:$0xff] %v103
  // Predicated region
  $region14: #{st_self_attention.11} parent=0 // pred_check
    %p112 = pneg %p11
  $region15: #{st_self_attention.11} parent=0 // pred_check_branch
    %114 = sbr.rel (%p112) target = $region17
  $region16: #{st_self_attention.11} parent=0 // pred_region
    %v115 = vld [vmem:[#allocation2] sm:$0xff]
    %v116 = vld [vmem:[#allocation2 + $0x8] sm:$0xff]
    %v117 = vld [vmem:[#allocation2 + $0x10] sm:$0xff]
    %v118 = vld [vmem:[#allocation2 + $0x18] sm:$0xff]
    %v119 = vld [vmem:[#allocation2 + $0x20] sm:$0xff]
    %v120 = vld [vmem:[#allocation2 + $0x28] sm:$0xff]
    %v121 = vld [vmem:[#allocation2 + $0x30] sm:$0xff]
    %v122 = vld [vmem:[#allocation2 + $0x38] sm:$0xff]
    %123 = vst [vmem:[%s2] sm:$0xff] %v115
    %124 = vst [vmem:[%s2 + $0x8] sm:$0xff] %v116
    %125 = vst [vmem:[%s2 + $0x10] sm:$0xff] %v117
    %126 = vst [vmem:[%s2 + $0x18] sm:$0xff] %v118
    %127 = vst [vmem:[%s2 + $0x20] sm:$0xff] %v119
    %128 = vst [vmem:[%s2 + $0x28] sm:$0xff] %v120
    %129 = vst [vmem:[%s2 + $0x30] sm:$0xff] %v121
    %130 = vst [vmem:[%s2 + $0x38] sm:$0xff] %v122
  $region17: #{st_self_attention.11} parent=0 // pred_fallthru
    _
  // Predicated region
  $region18: #{st_self_attention.11} parent=0 // pred_check
    _
  $region19: #{st_self_attention.11} parent=0 // pred_check_branch
    %132 = sbr.rel (0) target = $region21
  $region20: #{st_self_attention.11} parent=0 // pred_region
    _
  $region21: #{st_self_attention.11} parent=0 // pred_fallthru
    _
  // Predicated region
  $region22: #{st_self_attention.11} parent=0 // pred_check
    _
  $region23: #{st_self_attention.11} parent=0 // pred_check_branch
    %134 = sbr.rel (0) target = $region25
  $region24: #{st_self_attention.11} parent=0 // pred_region
    _
  $region25: #{st_self_attention.11} parent=0 // pred_fallthru
    _

// kernel: st_self_attention.13
$region0: #{st_self_attention.13}
  #allocation0 [shape = 'u32[]', space=smem, size = 0x4, offset = 0x4, fixed_abs, tag = 'smem constant byte address 0x4 - core index']
  #allocation1 [shape = 'u32[72,128]{1,0:T(1,128)}', space=vmem, size = 0x9000, scoped, tag = 'internal scratch']
  #allocation2 [shape = 'f32[32,128]{1,0:T(8,128)}', space=vmem, size = 0x4000, scoped, tag = 'scratch operand']
  %s0 = inlined_call_operand.vmem [shape: f32[32,128], index: 0, kind: input, shape index: {}]
  %s1 = inlined_call_operand.vmem [shape: f32[128,128], index: 1, kind: input, shape index: {}]
  %s2 = inlined_call_operand.vmem [shape: f32[1,128], index: 2, kind: input, shape index: {}]
  %s3 = inlined_call_operand.vmem [shape: f32[32,128], index: 3, kind: output, shape index: {}]
  %s4 = sld [smem:[#allocation0]]
  $region30: #{st_self_attention.13} parent=0
    _
  %s6 = ssub.s32 1, %s4
  %s7 = scalar_select 0, %s6, %s4
  // Predicated region
  $region2: #{st_self_attention.13} parent=0 // pred_check
    _
  $region3: #{st_self_attention.13} parent=0 // pred_check_branch
    %9 = sbr.rel (0) target = $region5
  $region4: #{st_self_attention.13} parent=0 // pred_region
    _
  $region5: #{st_self_attention.13} parent=0 // pred_fallthru
    _
  // Predicated region
  $region6: #{st_self_attention.13} parent=0 // pred_check
    _
  $region7: #{st_self_attention.13} parent=0 // pred_check_branch
    %11 = sbr.rel (0) target = $region9
  $region8: #{st_self_attention.13} parent=0 // pred_region
    _
  $region9: #{st_self_attention.13} parent=0 // pred_fallthru
    _
  // Predicated region
  $region10: #{st_self_attention.13} parent=0 // pred_check
    _
  $region11: #{st_self_attention.13} parent=0 // pred_check_branch
    %13 = sbr.rel (0) target = $region13
  $region12: #{st_self_attention.13} parent=0 // pred_region
    _
  $region13: #{st_self_attention.13} parent=0 // pred_fallthru
    _
  %p14 = scmp.eq.s32.totalorder 0, 0
  // Predicated region
  $region14: #{st_self_attention.13} parent=0 // pred_check
    %p15 = pneg %p14
  $region15: #{st_self_attention.13} parent=0 // pred_check_branch
    %17 = sbr.rel (%p15) target = $region17
  $region16: #{st_self_attention.13} parent=0 // pred_region
    %18 = vst [vmem:[#allocation2] sm:$0xff] 0.0
    %19 = vst [vmem:[#allocation2 + $0x8] sm:$0xff] 0.0
    %20 = vst [vmem:[#allocation2 + $0x10] sm:$0xff] 0.0
    %21 = vst [vmem:[#allocation2 + $0x18] sm:$0xff] 0.0
  $region17: #{st_self_attention.13} parent=0 // pred_fallthru
    _
  %v22 = vld [vmem:[#allocation2] sm:$0xff]
  %v23 = vld [vmem:[#allocation2 + $0x8] sm:$0xff]
  %v24 = vld [vmem:[#allocation2 + $0x10] sm:$0xff]
  %v25 = vld [vmem:[#allocation2 + $0x18] sm:$0xff]
  %v26 = vld [vmem:[%s0] sm:$0xff]
  %v27 = vld [vmem:[%s0 + $0x8] sm:$0xff]
  %v28 = vld [vmem:[%s0 + $0x10] sm:$0xff]
  %v29 = vld [vmem:[%s0 + $0x18] sm:$0xff]
  %v30 = vld [vmem:[%s1] sm:$0xff]
  %v31 = vld [vmem:[%s1 + $0x8] sm:$0xff]
  %v32 = vld [vmem:[%s1 + $0x10] sm:$0xff]
  %v33 = vld [vmem:[%s1 + $0x18] sm:$0xff]
  %v34 = vld [vmem:[%s1 + $0x20] sm:$0xff]
  %v35 = vld [vmem:[%s1 + $0x28] sm:$0xff]
  %v36 = vld [vmem:[%s1 + $0x30] sm:$0xff]
  %v37 = vld [vmem:[%s1 + $0x38] sm:$0xff]
  %v38 = vld [vmem:[%s1 + $0x40] sm:$0xff]
  %v39 = vld [vmem:[%s1 + $0x48] sm:$0xff]
  %v40 = vld [vmem:[%s1 + $0x50] sm:$0xff]
  %v41 = vld [vmem:[%s1 + $0x58] sm:$0xff]
  %v42 = vld [vmem:[%s1 + $0x60] sm:$0xff]
  %v43 = vld [vmem:[%s1 + $0x68] sm:$0xff]
  %v44 = vld [vmem:[%s1 + $0x70] sm:$0xff]
  %v45 = vld [vmem:[%s1 + $0x78] sm:$0xff]
  %46 = vmatpush.msra.mxu0 %v45
  %47 = vmatpush.msra.mxu0 %v44
  %48 = vmatpush.msra.mxu0 %v43
  %49 = vmatpush.msra.mxu0 %v42
  %50 = vmatpush.msra.mxu0 %v41
  %51 = vmatpush.msra.mxu0 %v40
  %52 = vmatpush.msra.mxu0 %v39
  %53 = vmatpush.msra.mxu0 %v38
  %54 = vmatpush.msra.mxu0 %v37
  %55 = vmatpush.msra.mxu0 %v36
  %56 = vmatpush.msra.mxu0 %v35
  %57 = vmatpush.msra.mxu0 %v34
  %58 = vmatpush.msra.mxu0 %v33
  %59 = vmatpush.msra.mxu0 %v32
  %60 = vmatpush.msra.mxu0 %v31
  %61 = vmatpush.msra.mxu0 %v30
  %62 = vmatmul.f32.gmra.mxu0 %v26
  %v63 = vpop.f32.mrf.mxu0
  %v64 = vadd.f32 0.0, %v63
  %65 = vmatmul.f32.gmra.mxu0 %v27
  %v66 = vpop.f32.mrf.mxu0
  %v67 = vadd.f32 0.0, %v66
  %68 = vmatmul.f32.gmra.mxu0 %v28
  %v69 = vpop.f32.mrf.mxu0
  %v70 = vadd.f32 0.0, %v69
  %71 = vmatmul.f32.gmra.mxu0 %v29
  %v72 = vpop.f32.mrf.mxu0
  %v73 = vadd.f32 0.0, %v72
  %74 = vdwg.mxu0
  %v75 = vadd.f32 %v22, %v64
  %v76 = vadd.f32 %v23, %v67
  %v77 = vadd.f32 %v24, %v70
  %v78 = vadd.f32 %v25, %v73
  %79 = vst [vmem:[#allocation2] sm:$0xff] %v75
  %80 = vst [vmem:[#allocation2 + $0x8] sm:$0xff] %v76
  %81 = vst [vmem:[#allocation2 + $0x10] sm:$0xff] %v77
  %82 = vst [vmem:[#allocation2 + $0x18] sm:$0xff] %v78
  // Predicated region
  $region18: #{st_self_attention.13} parent=0 // pred_check
    %p83 = pneg %p14
  $region19: #{st_self_attention.13} parent=0 // pred_check_branch
    %85 = sbr.rel (%p83) target = $region21
  $region20: #{st_self_attention.13} parent=0 // pred_region
    %v86 = vld [vmem:[#allocation2] sm:$0xff]
    %v87 = vld [vmem:[#allocation2 + $0x8] sm:$0xff]
    %v88 = vld [vmem:[#allocation2 + $0x10] sm:$0xff]
    %v89 = vld [vmem:[#allocation2 + $0x18] sm:$0xff]
    %v90 = vld [vmem:[%s2] sm:$0x1]
    %v92 = vperm.slane %v90, 0
    %v94 = vadd.f32 %v86, %v92
    %v95 = vadd.f32 %v87, %v92
    %v96 = vadd.f32 %v88, %v92
    %v97 = vadd.f32 %v89, %v92
    %98 = vst [vmem:[%s3] sm:$0xff] %v94
    %99 = vst [vmem:[%s3 + $0x8] sm:$0xff] %v95
    %100 = vst [vmem:[%s3 + $0x10] sm:$0xff] %v96
    %101 = vst [vmem:[%s3 + $0x18] sm:$0xff] %v97
  $region21: #{st_self_attention.13} parent=0 // pred_fallthru
    _
  // Predicated region
  $region22: #{st_self_attention.13} parent=0 // pred_check
    _
  $region23: #{st_self_attention.13} parent=0 // pred_check_branch
    %103 = sbr.rel (0) target = $region25
  $region24: #{st_self_attention.13} parent=0 // pred_region
    _
  $region25: #{st_self_attention.13} parent=0 // pred_fallthru
    _
  // Predicated region
  $region26: #{st_self_attention.13} parent=0 // pred_check
    _
  $region27: #{st_self_attention.13} parent=0 // pred_check_branch
    %105 = sbr.rel (0) target = $region29
  $region28: #{st_self_attention.13} parent=0 // pred_region
    _
  $region29: #{st_self_attention.13} parent=0 // pred_fallthru
    _

// kernel: st_self_attention.12
$region0: #{st_self_attention.12}
  #allocation0 [shape = 'u32[]', space=smem, size = 0x4, offset = 0x4, fixed_abs, tag = 'smem constant byte address 0x4 - core index']
  #allocation1 [shape = 'u32[72,128]{1,0:T(1,128)}', space=vmem, size = 0x9000, scoped, tag = 'internal scratch']
  #allocation2 [shape = 'f32[64,128]{1,0:T(8,128)}', space=vmem, size = 0x8000, scoped, tag = 'scratch operand']
  %s0 = inlined_call_operand.vmem [shape: f32[64,128], index: 0, kind: input, shape index: {}]
  %s1 = inlined_call_operand.vmem [shape: f32[128,128], index: 1, kind: input, shape index: {}]
  %s2 = inlined_call_operand.vmem [shape: f32[1,128], index: 2, kind: input, shape index: {}]
  %s3 = inlined_call_operand.vmem [shape: f32[64,128], index: 3, kind: output, shape index: {}]
  %s4 = sld [smem:[#allocation0]]
  $region30: #{st_self_attention.12} parent=0
    _
  %s6 = ssub.s32 1, %s4
  %s7 = scalar_select 0, %s6, %s4
  // Predicated region
  $region2: #{st_self_attention.12} parent=0 // pred_check
    _
  $region3: #{st_self_attention.12} parent=0 // pred_check_branch
    %9 = sbr.rel (0) target = $region5
  $region4: #{st_self_attention.12} parent=0 // pred_region
    _
  $region5: #{st_self_attention.12} parent=0 // pred_fallthru
    _
  // Predicated region
  $region6: #{st_self_attention.12} parent=0 // pred_check
    _
  $region7: #{st_self_attention.12} parent=0 // pred_check_branch
    %11 = sbr.rel (0) target = $region9
  $region8: #{st_self_attention.12} parent=0 // pred_region
    _
  $region9: #{st_self_attention.12} parent=0 // pred_fallthru
    _
  // Predicated region
  $region10: #{st_self_attention.12} parent=0 // pred_check
    _
  $region11: #{st_self_attention.12} parent=0 // pred_check_branch
    %13 = sbr.rel (0) target = $region13
  $region12: #{st_self_attention.12} parent=0 // pred_region
    _
  $region13: #{st_self_attention.12} parent=0 // pred_fallthru
    _
  %p14 = scmp.eq.s32.totalorder 0, 0
  // Predicated region
  $region14: #{st_self_attention.12} parent=0 // pred_check
    %p15 = pneg %p14
  $region15: #{st_self_attention.12} parent=0 // pred_check_branch
    %17 = sbr.rel (%p15) target = $region17
  $region16: #{st_self_attention.12} parent=0 // pred_region
    %18 = vst [vmem:[#allocation2] sm:$0xff] 0.0
    %19 = vst [vmem:[#allocation2 + $0x8] sm:$0xff] 0.0
    %20 = vst [vmem:[#allocation2 + $0x10] sm:$0xff] 0.0
    %21 = vst [vmem:[#allocation2 + $0x18] sm:$0xff] 0.0
    %22 = vst [vmem:[#allocation2 + $0x20] sm:$0xff] 0.0
    %23 = vst [vmem:[#allocation2 + $0x28] sm:$0xff] 0.0
    %24 = vst [vmem:[#allocation2 + $0x30] sm:$0xff] 0.0
    %25 = vst [vmem:[#allocation2 + $0x38] sm:$0xff] 0.0
  $region17: #{st_self_attention.12} parent=0 // pred_fallthru
    _
  %v26 = vld [vmem:[#allocation2] sm:$0xff]
  %v27 = vld [vmem:[#allocation2 + $0x8] sm:$0xff]
  %v28 = vld [vmem:[#allocation2 + $0x10] sm:$0xff]
  %v29 = vld [vmem:[#allocation2 + $0x18] sm:$0xff]
  %v30 = vld [vmem:[#allocation2 + $0x20] sm:$0xff]
  %v31 = vld [vmem:[#allocation2 + $0x28] sm:$0xff]
  %v32 = vld [vmem:[#allocation2 + $0x30] sm:$0xff]
  %v33 = vld [vmem:[#allocation2 + $0x38] sm:$0xff]
  %v34 = vld [vmem:[%s0] sm:$0xff]
  %v35 = vld [vmem:[%s0 + $0x8] sm:$0xff]
  %v36 = vld [vmem:[%s0 + $0x10] sm:$0xff]
  %v37 = vld [vmem:[%s0 + $0x18] sm:$0xff]
  %v38 = vld [vmem:[%s0 + $0x20] sm:$0xff]
  %v39 = vld [vmem:[%s0 + $0x28] sm:$0xff]
  %v40 = vld [vmem:[%s0 + $0x30] sm:$0xff]
  %v41 = vld [vmem:[%s0 + $0x38] sm:$0xff]
  %v42 = vld [vmem:[%s1] sm:$0xff]
  %v43 = vld [vmem:[%s1 + $0x8] sm:$0xff]
  %v44 = vld [vmem:[%s1 + $0x10] sm:$0xff]
  %v45 = vld [vmem:[%s1 + $0x18] sm:$0xff]
  %v46 = vld [vmem:[%s1 + $0x20] sm:$0xff]
  %v47 = vld [vmem:[%s1 + $0x28] sm:$0xff]
  %v48 = vld [vmem:[%s1 + $0x30] sm:$0xff]
  %v49 = vld [vmem:[%s1 + $0x38] sm:$0xff]
  %v50 = vld [vmem:[%s1 + $0x40] sm:$0xff]
  %v51 = vld [vmem:[%s1 + $0x48] sm:$0xff]
  %v52 = vld [vmem:[%s1 + $0x50] sm:$0xff]
  %v53 = vld [vmem:[%s1 + $0x58] sm:$0xff]
  %v54 = vld [vmem:[%s1 + $0x60] sm:$0xff]
  %v55 = vld [vmem:[%s1 + $0x68] sm:$0xff]
  %v56 = vld [vmem:[%s1 + $0x70] sm:$0xff]
  %v57 = vld [vmem:[%s1 + $0x78] sm:$0xff]
  %58 = vmatpush.msra.mxu0 %v57
  %59 = vmatpush.msra.mxu0 %v56
  %60 = vmatpush.msra.mxu0 %v55
  %61 = vmatpush.msra.mxu0 %v54
  %62 = vmatpush.msra.mxu0 %v53
  %63 = vmatpush.msra.mxu0 %v52
  %64 = vmatpush.msra.mxu0 %v51
  %65 = vmatpush.msra.mxu0 %v50
  %66 = vmatpush.msra.mxu0 %v49
  %67 = vmatpush.msra.mxu0 %v48
  %68 = vmatpush.msra.mxu0 %v47
  %69 = vmatpush.msra.mxu0 %v46
  %70 = vmatpush.msra.mxu0 %v45
  %71 = vmatpush.msra.mxu0 %v44
  %72 = vmatpush.msra.mxu0 %v43
  %73 = vmatpush.msra.mxu0 %v42
  %74 = vmatmul.f32.gmra.mxu0 %v34
  %v75 = vpop.f32.mrf.mxu0
  %v76 = vadd.f32 0.0, %v75
  %77 = vmatmul.f32.gmra.mxu0 %v35
  %v78 = vpop.f32.mrf.mxu0
  %v79 = vadd.f32 0.0, %v78
  %80 = vmatmul.f32.gmra.mxu0 %v36
  %v81 = vpop.f32.mrf.mxu0
  %v82 = vadd.f32 0.0, %v81
  %83 = vmatmul.f32.gmra.mxu0 %v37
  %v84 = vpop.f32.mrf.mxu0
  %v85 = vadd.f32 0.0, %v84
  %86 = vmatmul.f32.gmra.mxu0 %v38
  %v87 = vpop.f32.mrf.mxu0
  %v88 = vadd.f32 0.0, %v87
  %89 = vmatmul.f32.gmra.mxu0 %v39
  %v90 = vpop.f32.mrf.mxu0
  %v91 = vadd.f32 0.0, %v90
  %92 = vmatmul.f32.gmra.mxu0 %v40
  %v93 = vpop.f32.mrf.mxu0
  %v94 = vadd.f32 0.0, %v93
  %95 = vmatmul.f32.gmra.mxu0 %v41
  %v96 = vpop.f32.mrf.mxu0
  %v97 = vadd.f32 0.0, %v96
  %98 = vdwg.mxu0
  %v99 = vadd.f32 %v26, %v76
  %v100 = vadd.f32 %v27, %v79
  %v101 = vadd.f32 %v28, %v82
  %v102 = vadd.f32 %v29, %v85
  %v103 = vadd.f32 %v30, %v88
  %v104 = vadd.f32 %v31, %v91
  %v105 = vadd.f32 %v32, %v94
  %v106 = vadd.f32 %v33, %v97
  %107 = vst [vmem:[#allocation2] sm:$0xff] %v99
  %108 = vst [vmem:[#allocation2 + $0x8] sm:$0xff] %v100
  %109 = vst [vmem:[#allocation2 + $0x10] sm:$0xff] %v101
  %110 = vst [vmem:[#allocation2 + $0x18] sm:$0xff] %v102
  %111 = vst [vmem:[#allocation2 + $0x20] sm:$0xff] %v103
  %112 = vst [vmem:[#allocation2 + $0x28] sm:$0xff] %v104
  %113 = vst [vmem:[#allocation2 + $0x30] sm:$0xff] %v105
  %114 = vst [vmem:[#allocation2 + $0x38] sm:$0xff] %v106
  // Predicated region
  $region18: #{st_self_attention.12} parent=0 // pred_check
    %p115 = pneg %p14
  $region19: #{st_self_attention.12} parent=0 // pred_check_branch
    %117 = sbr.rel (%p115) target = $region21
  $region20: #{st_self_attention.12} parent=0 // pred_region
    %v118 = vld [vmem:[#allocation2] sm:$0xff]
    %v119 = vld [vmem:[#allocation2 + $0x8] sm:$0xff]
    %v120 = vld [vmem:[#allocation2 + $0x10] sm:$0xff]
    %v121 = vld [vmem:[#allocation2 + $0x18] sm:$0xff]
    %v122 = vld [vmem:[#allocation2 + $0x20] sm:$0xff]
    %v123 = vld [vmem:[#allocation2 + $0x28] sm:$0xff]
    %v124 = vld [vmem:[#allocation2 + $0x30] sm:$0xff]
    %v125 = vld [vmem:[#allocation2 + $0x38] sm:$0xff]
    %v126 = vld [vmem:[%s2] sm:$0x1]
    %v128 = vperm.slane %v126, 0
    %v130 = vadd.f32 %v118, %v128
    %v131 = vadd.f32 %v119, %v128
    %v132 = vadd.f32 %v120, %v128
    %v133 = vadd.f32 %v121, %v128
    %v134 = vadd.f32 %v122, %v128
    %v135 = vadd.f32 %v123, %v128
    %v136 = vadd.f32 %v124, %v128
    %v137 = vadd.f32 %v125, %v128
    %138 = vst [vmem:[%s3] sm:$0xff] %v130
    %139 = vst [vmem:[%s3 + $0x8] sm:$0xff] %v131
    %140 = vst [vmem:[%s3 + $0x10] sm:$0xff] %v132
    %141 = vst [vmem:[%s3 + $0x18] sm:$0xff] %v133
    %142 = vst [vmem:[%s3 + $0x20] sm:$0xff] %v134
    %143 = vst [vmem:[%s3 + $0x28] sm:$0xff] %v135
    %144 = vst [vmem:[%s3 + $0x30] sm:$0xff] %v136
    %145 = vst [vmem:[%s3 + $0x38] sm:$0xff] %v137
  $region21: #{st_self_attention.12} parent=0 // pred_fallthru
    _
  // Predicated region
  $region22: #{st_self_attention.12} parent=0 // pred_check
    _
  $region23: #{st_self_attention.12} parent=0 // pred_check_branch
    %147 = sbr.rel (0) target = $region25
  $region24: #{st_self_attention.12} parent=0 // pred_region
    _
  $region25: #{st_self_attention.12} parent=0 // pred_fallthru
    _
  // Predicated region
  $region26: #{st_self_attention.12} parent=0 // pred_check
    _
  $region27: #{st_self_attention.12} parent=0 // pred_check_branch
    %149 = sbr.rel (0) target = $region29
  $region28: #{st_self_attention.12} parent=0 // pred_region
    _
  $region29: #{st_self_attention.12} parent=0 // pred_fallthru
    _

// kernel: st_self_attention.14
$region0: #{st_self_attention.14}
  #allocation0 [shape = 'u32[]', space=smem, size = 0x4, offset = 0x4, fixed_abs, tag = 'smem constant byte address 0x4 - core index']
  #allocation1 [shape = 'u32[72,128]{1,0:T(1,128)}', space=vmem, size = 0x9000, scoped, tag = 'internal scratch']
  %s0 = inlined_call_operand.vmem [shape: f32[8,8,16], index: 0, kind: input, shape index: {}]
  %s1 = inlined_call_operand.vmem [shape: f32[8,4,16], index: 1, kind: input, shape index: {}]
  %s2 = inlined_call_operand.vmem [shape: f32[8,4,16], index: 2, kind: input, shape index: {}]
  %s3 = inlined_call_operand.vmem [shape: f32[8,8,16], index: 3, kind: output, shape index: {}]
  %s4 = sld [smem:[#allocation0]]
  $region22: #{st_self_attention.14} parent=0
    _
  %s6 = ssub.s32 1, %s4
  %s7 = scalar_select 0, %s6, %s4
  // Predicated region
  $region2: #{st_self_attention.14} parent=0 // pred_check
    _
  $region3: #{st_self_attention.14} parent=0 // pred_check_branch
    %9 = sbr.rel (0) target = $region5
  $region4: #{st_self_attention.14} parent=0 // pred_region
    _
  $region5: #{st_self_attention.14} parent=0 // pred_fallthru
    _
  // Predicated region
  $region6: #{st_self_attention.14} parent=0 // pred_check
    _
  $region7: #{st_self_attention.14} parent=0 // pred_check_branch
    %11 = sbr.rel (0) target = $region9
  $region8: #{st_self_attention.14} parent=0 // pred_region
    _
  $region9: #{st_self_attention.14} parent=0 // pred_fallthru
    _
  // Predicated region
  $region10: #{st_self_attention.14} parent=0 // pred_check
    _
  $region11: #{st_self_attention.14} parent=0 // pred_check_branch
    %13 = sbr.rel (0) target = $region13
  $region12: #{st_self_attention.14} parent=0 // pred_region
    _
  $region13: #{st_self_attention.14} parent=0 // pred_fallthru
    _
  %v14 = vld [vmem:[%s0] sm:$0xff]
  %v15 = vld [vmem:[%s0 + $0x8] sm:$0xff]
  %v16 = vld [vmem:[%s0 + $0x10] sm:$0xff]
  %v17 = vld [vmem:[%s0 + $0x18] sm:$0xff]
  %v18 = vld [vmem:[%s0 + $0x20] sm:$0xff]
  %v19 = vld [vmem:[%s0 + $0x28] sm:$0xff]
  %v20 = vld [vmem:[%s0 + $0x30] sm:$0xff]
  %v21 = vld [vmem:[%s0 + $0x38] sm:$0xff]
  %v22 = vmul.f32 %v14, 0.5
  %v23 = vmul.f32 %v15, 0.5
  %v24 = vmul.f32 %v16, 0.5
  %v25 = vmul.f32 %v17, 0.5
  %v26 = vmul.f32 %v18, 0.5
  %v27 = vmul.f32 %v19, 0.5
  %v28 = vmul.f32 %v20, 0.5
  %v29 = vmul.f32 %v21, 0.5
  %v30 = vld [vmem:[%s1] sm:$0xf]
  %v31 = vld [vmem:[%s1 + $0x4] sm:$0xf]
  %v32 = vld [vmem:[%s1 + $0x8] sm:$0xf]
  %v33 = vld [vmem:[%s1 + $0xc] sm:$0xf]
  %v34 = vld [vmem:[%s1 + $0x10] sm:$0xf]
  %v35 = vld [vmem:[%s1 + $0x14] sm:$0xf]
  %v36 = vld [vmem:[%s1 + $0x18] sm:$0xf]
  %v37 = vld [vmem:[%s1 + $0x1c] sm:$0xf]
  %vm38 = vcmask 130048
  %v40 = vsel %vm38, %v22, 0
  %v43 = vsel %vm38, %v30, 0
  %45 = vmatpush.xpose.msra.mxu0 0.0
  %46 = vmatpush.xpose.msra.mxu0 0.0
  %47 = vmatpush.xpose.msra.mxu0 0.0
  %48 = vmatpush.xpose.msra.mxu0 0.0
  %49 = vmatpush.xpose.msra.mxu0 0.0
  %50 = vmatpush.xpose.msra.mxu0 0.0
  %51 = vmatpush.xpose.msra.mxu0 0.0
  %52 = vmatpush.xpose.msra.mxu0 0.0
  %53 = vmatpush.xpose.msra.mxu0 0.0
  %54 = vmatpush.xpose.msra.mxu0 0.0
  %55 = vmatpush.xpose.msra.mxu0 0.0
  %56 = vmatpush.xpose.msra.mxu0 0.0
  %57 = vmatpush.xpose.msra.mxu0 0.0
  %58 = vmatpush.xpose.msra.mxu0 0.0
  %59 = vmatpush.xpose.msra.mxu0 0.0
  %60 = vmatpush.xpose.msra.mxu0 %v43
  %61 = vmatmul.f32.gmra.mxu0 %v40
  %v62 = vpop.f32.mrf.mxu0
  %v63 = vadd.f32 0.0, %v62
  %64 = vdwg.mxu0
  %v66 = vsel %vm38, %v23, 0
  %v69 = vsel %vm38, %v31, 0
  %71 = vmatpush.xpose.msra.mxu0 0.0
  %72 = vmatpush.xpose.msra.mxu0 0.0
  %73 = vmatpush.xpose.msra.mxu0 0.0
  %74 = vmatpush.xpose.msra.mxu0 0.0
  %75 = vmatpush.xpose.msra.mxu0 0.0
  %76 = vmatpush.xpose.msra.mxu0 0.0
  %77 = vmatpush.xpose.msra.mxu0 0.0
  %78 = vmatpush.xpose.msra.mxu0 0.0
  %79 = vmatpush.xpose.msra.mxu0 0.0
  %80 = vmatpush.xpose.msra.mxu0 0.0
  %81 = vmatpush.xpose.msra.mxu0 0.0
  %82 = vmatpush.xpose.msra.mxu0 0.0
  %83 = vmatpush.xpose.msra.mxu0 0.0
  %84 = vmatpush.xpose.msra.mxu0 0.0
  %85 = vmatpush.xpose.msra.mxu0 0.0
  %86 = vmatpush.xpose.msra.mxu0 %v69
  %87 = vmatmul.f32.gmra.mxu0 %v66
  %v88 = vpop.f32.mrf.mxu0
  %v89 = vadd.f32 0.0, %v88
  %90 = vdwg.mxu0
  %v92 = vsel %vm38, %v24, 0
  %v95 = vsel %vm38, %v32, 0
  %97 = vmatpush.xpose.msra.mxu0 0.0
  %98 = vmatpush.xpose.msra.mxu0 0.0
  %99 = vmatpush.xpose.msra.mxu0 0.0
  %100 = vmatpush.xpose.msra.mxu0 0.0
  %101 = vmatpush.xpose.msra.mxu0 0.0
  %102 = vmatpush.xpose.msra.mxu0 0.0
  %103 = vmatpush.xpose.msra.mxu0 0.0
  %104 = vmatpush.xpose.msra.mxu0 0.0
  %105 = vmatpush.xpose.msra.mxu0 0.0
  %106 = vmatpush.xpose.msra.mxu0 0.0
  %107 = vmatpush.xpose.msra.mxu0 0.0
  %108 = vmatpush.xpose.msra.mxu0 0.0
  %109 = vmatpush.xpose.msra.mxu0 0.0
  %110 = vmatpush.xpose.msra.mxu0 0.0
  %111 = vmatpush.xpose.msra.mxu0 0.0
  %112 = vmatpush.xpose.msra.mxu0 %v95
  %113 = vmatmul.f32.gmra.mxu0 %v92
  %v114 = vpop.f32.mrf.mxu0
  %v115 = vadd.f32 0.0, %v114
  %116 = vdwg.mxu0
  %v118 = vsel %vm38, %v25, 0
  %v121 = vsel %vm38, %v33, 0
  %123 = vmatpush.xpose.msra.mxu0 0.0
  %124 = vmatpush.xpose.msra.mxu0 0.0
  %125 = vmatpush.xpose.msra.mxu0 0.0
  %126 = vmatpush.xpose.msra.mxu0 0.0
  %127 = vmatpush.xpose.msra.mxu0 0.0
  %128 = vmatpush.xpose.msra.mxu0 0.0
  %129 = vmatpush.xpose.msra.mxu0 0.0
  %130 = vmatpush.xpose.msra.mxu0 0.0
  %131 = vmatpush.xpose.msra.mxu0 0.0
  %132 = vmatpush.xpose.msra.mxu0 0.0
  %133 = vmatpush.xpose.msra.mxu0 0.0
  %134 = vmatpush.xpose.msra.mxu0 0.0
  %135 = vmatpush.xpose.msra.mxu0 0.0
  %136 = vmatpush.xpose.msra.mxu0 0.0
  %137 = vmatpush.xpose.msra.mxu0 0.0
  %138 = vmatpush.xpose.msra.mxu0 %v121
  %139 = vmatmul.f32.gmra.mxu0 %v118
  %v140 = vpop.f32.mrf.mxu0
  %v141 = vadd.f32 0.0, %v140
  %142 = vdwg.mxu0
  %v144 = vsel %vm38, %v26, 0
  %v147 = vsel %vm38, %v34, 0
  %149 = vmatpush.xpose.msra.mxu0 0.0
  %150 = vmatpush.xpose.msra.mxu0 0.0
  %151 = vmatpush.xpose.msra.mxu0 0.0
  %152 = vmatpush.xpose.msra.mxu0 0.0
  %153 = vmatpush.xpose.msra.mxu0 0.0
  %154 = vmatpush.xpose.msra.mxu0 0.0
  %155 = vmatpush.xpose.msra.mxu0 0.0
  %156 = vmatpush.xpose.msra.mxu0 0.0
  %157 = vmatpush.xpose.msra.mxu0 0.0
  %158 = vmatpush.xpose.msra.mxu0 0.0
  %159 = vmatpush.xpose.msra.mxu0 0.0
  %160 = vmatpush.xpose.msra.mxu0 0.0
  %161 = vmatpush.xpose.msra.mxu0 0.0
  %162 = vmatpush.xpose.msra.mxu0 0.0
  %163 = vmatpush.xpose.msra.mxu0 0.0
  %164 = vmatpush.xpose.msra.mxu0 %v147
  %165 = vmatmul.f32.gmra.mxu0 %v144
  %v166 = vpop.f32.mrf.mxu0
  %v167 = vadd.f32 0.0, %v166
  %168 = vdwg.mxu0
  %v170 = vsel %vm38, %v27, 0
  %v173 = vsel %vm38, %v35, 0
  %175 = vmatpush.xpose.msra.mxu0 0.0
  %176 = vmatpush.xpose.msra.mxu0 0.0
  %177 = vmatpush.xpose.msra.mxu0 0.0
  %178 = vmatpush.xpose.msra.mxu0 0.0
  %179 = vmatpush.xpose.msra.mxu0 0.0
  %180 = vmatpush.xpose.msra.mxu0 0.0
  %181 = vmatpush.xpose.msra.mxu0 0.0
  %182 = vmatpush.xpose.msra.mxu0 0.0
  %183 = vmatpush.xpose.msra.mxu0 0.0
  %184 = vmatpush.xpose.msra.mxu0 0.0
  %185 = vmatpush.xpose.msra.mxu0 0.0
  %186 = vmatpush.xpose.msra.mxu0 0.0
  %187 = vmatpush.xpose.msra.mxu0 0.0
  %188 = vmatpush.xpose.msra.mxu0 0.0
  %189 = vmatpush.xpose.msra.mxu0 0.0
  %190 = vmatpush.xpose.msra.mxu0 %v173
  %191 = vmatmul.f32.gmra.mxu0 %v170
  %v192 = vpop.f32.mrf.mxu0
  %v193 = vadd.f32 0.0, %v192
  %194 = vdwg.mxu0
  %v196 = vsel %vm38, %v28, 0
  %v199 = vsel %vm38, %v36, 0
  %201 = vmatpush.xpose.msra.mxu0 0.0
  %202 = vmatpush.xpose.msra.mxu0 0.0
  %203 = vmatpush.xpose.msra.mxu0 0.0
  %204 = vmatpush.xpose.msra.mxu0 0.0
  %205 = vmatpush.xpose.msra.mxu0 0.0
  %206 = vmatpush.xpose.msra.mxu0 0.0
  %207 = vmatpush.xpose.msra.mxu0 0.0
  %208 = vmatpush.xpose.msra.mxu0 0.0
  %209 = vmatpush.xpose.msra.mxu0 0.0
  %210 = vmatpush.xpose.msra.mxu0 0.0
  %211 = vmatpush.xpose.msra.mxu0 0.0
  %212 = vmatpush.xpose.msra.mxu0 0.0
  %213 = vmatpush.xpose.msra.mxu0 0.0
  %214 = vmatpush.xpose.msra.mxu0 0.0
  %215 = vmatpush.xpose.msra.mxu0 0.0
  %216 = vmatpush.xpose.msra.mxu0 %v199
  %217 = vmatmul.f32.gmra.mxu0 %v196
  %v218 = vpop.f32.mrf.mxu0
  %v219 = vadd.f32 0.0, %v218
  %220 = vdwg.mxu0
  %v222 = vsel %vm38, %v29, 0
  %v225 = vsel %vm38, %v37, 0
  %227 = vmatpush.xpose.msra.mxu0 0.0
  %228 = vmatpush.xpose.msra.mxu0 0.0
  %229 = vmatpush.xpose.msra.mxu0 0.0
  %230 = vmatpush.xpose.msra.mxu0 0.0
  %231 = vmatpush.xpose.msra.mxu0 0.0
  %232 = vmatpush.xpose.msra.mxu0 0.0
  %233 = vmatpush.xpose.msra.mxu0 0.0
  %234 = vmatpush.xpose.msra.mxu0 0.0
  %235 = vmatpush.xpose.msra.mxu0 0.0
  %236 = vmatpush.xpose.msra.mxu0 0.0
  %237 = vmatpush.xpose.msra.mxu0 0.0
  %238 = vmatpush.xpose.msra.mxu0 0.0
  %239 = vmatpush.xpose.msra.mxu0 0.0
  %240 = vmatpush.xpose.msra.mxu0 0.0
  %241 = vmatpush.xpose.msra.mxu0 0.0
  %242 = vmatpush.xpose.msra.mxu0 %v225
  %243 = vmatmul.f32.gmra.mxu0 %v222
  %v244 = vpop.f32.mrf.mxu0
  %v245 = vadd.f32 0.0, %v244
  %246 = vdwg.mxu0
  %vm247 = vcmask 31744
  %v248 = vsel %vm247, %v63, -inf
  %249 = vmax.xlane.f32.xlu0 %v248
  %v250 = vpop.xlane.xlu0 %249
  %v251 = vsel %vm247, %v89, -inf
  %252 = vmax.xlane.f32.xlu0 %v251
  %v253 = vpop.xlane.xlu0 %252
  %v254 = vsel %vm247, %v115, -inf
  %255 = vmax.xlane.f32.xlu0 %v254
  %v256 = vpop.xlane.xlu0 %255
  %v257 = vsel %vm247, %v141, -inf
  %258 = vmax.xlane.f32.xlu0 %v257
  %v259 = vpop.xlane.xlu0 %258
  %v260 = vsel %vm247, %v167, -inf
  %261 = vmax.xlane.f32.xlu0 %v260
  %v262 = vpop.xlane.xlu0 %261
  %v263 = vsel %vm247, %v193, -inf
  %264 = vmax.xlane.f32.xlu0 %v263
  %v265 = vpop.xlane.xlu0 %264
  %v266 = vsel %vm247, %v219, -inf
  %267 = vmax.xlane.f32.xlu0 %v266
  %v268 = vpop.xlane.xlu0 %267
  %v269 = vsel %vm247, %v245, -inf
  %270 = vmax.xlane.f32.xlu0 %v269
  %v271 = vpop.xlane.xlu0 %270
  %v272 = vsub.f32 %v63, %v250
  %v273 = vsub.f32 %v89, %v253
  %v274 = vsub.f32 %v115, %v256
  %v275 = vsub.f32 %v141, %v259
  %v276 = vsub.f32 %v167, %v262
  %v277 = vsub.f32 %v193, %v265
  %v278 = vsub.f32 %v219, %v268
  %v279 = vsub.f32 %v245, %v271
  %v280 = vmul.f32 %v272, 1.442695
  %v281 = vpow.pop %v280
  %v282 = vmul.f32 %v273, 1.442695
  %v283 = vpow.pop %v282
  %v284 = vmul.f32 %v274, 1.442695
  %v285 = vpow.pop %v284
  %v286 = vmul.f32 %v275, 1.442695
  %v287 = vpow.pop %v286
  %v288 = vmul.f32 %v276, 1.442695
  %v289 = vpow.pop %v288
  %v290 = vmul.f32 %v277, 1.442695
  %v291 = vpow.pop %v290
  %v292 = vmul.f32 %v278, 1.442695
  %v293 = vpow.pop %v292
  %v294 = vmul.f32 %v279, 1.442695
  %v295 = vpow.pop %v294
  %v296 = vsel %vm247, %v281, 0.0
  %297 = vadd.xlane.f32.xlu0 %v296
  %v298 = vpop.xlane.xlu0 %297
  %v299 = vsel %vm247, %v283, 0.0
  %300 = vadd.xlane.f32.xlu0 %v299
  %v301 = vpop.xlane.xlu0 %300
  %v302 = vsel %vm247, %v285, 0.0
  %303 = vadd.xlane.f32.xlu0 %v302
  %v304 = vpop.xlane.xlu0 %303
  %v305 = vsel %vm247, %v287, 0.0
  %306 = vadd.xlane.f32.xlu0 %v305
  %v307 = vpop.xlane.xlu0 %306
  %v308 = vsel %vm247, %v289, 0.0
  %309 = vadd.xlane.f32.xlu0 %v308
  %v310 = vpop.xlane.xlu0 %309
  %v311 = vsel %vm247, %v291, 0.0
  %312 = vadd.xlane.f32.xlu0 %v311
  %v313 = vpop.xlane.xlu0 %312
  %v314 = vsel %vm247, %v293, 0.0
  %315 = vadd.xlane.f32.xlu0 %v314
  %v316 = vpop.xlane.xlu0 %315
  %v317 = vsel %vm247, %v295, 0.0
  %318 = vadd.xlane.f32.xlu0 %v317
  %v319 = vpop.xlane.xlu0 %318
  %v320 = vld [vmem:[%s2] sm:$0xf]
  %v321 = vld [vmem:[%s2 + $0x4] sm:$0xf]
  %v322 = vld [vmem:[%s2 + $0x8] sm:$0xf]
  %v323 = vld [vmem:[%s2 + $0xc] sm:$0xf]
  %v324 = vld [vmem:[%s2 + $0x10] sm:$0xf]
  %v325 = vld [vmem:[%s2 + $0x14] sm:$0xf]
  %v326 = vld [vmem:[%s2 + $0x18] sm:$0xf]
  %v327 = vld [vmem:[%s2 + $0x1c] sm:$0xf]
  %v329 = vsel %vm247, %v281, 0
  %vm331 = vcmask 1043456
  %v333 = vsel %vm331, %v320, 0
  %335 = vmatpush.msra.mxu0 0.0
  %336 = vmatpush.msra.mxu0 0.0
  %337 = vmatpush.msra.mxu0 0.0
  %338 = vmatpush.msra.mxu0 0.0
  %339 = vmatpush.msra.mxu0 0.0
  %340 = vmatpush.msra.mxu0 0.0
  %341 = vmatpush.msra.mxu0 0.0
  %342 = vmatpush.msra.mxu0 0.0
  %343 = vmatpush.msra.mxu0 0.0
  %344 = vmatpush.msra.mxu0 0.0
  %345 = vmatpush.msra.mxu0 0.0
  %346 = vmatpush.msra.mxu0 0.0
  %347 = vmatpush.msra.mxu0 0.0
  %348 = vmatpush.msra.mxu0 0.0
  %349 = vmatpush.msra.mxu0 0.0
  %350 = vmatpush.msra.mxu0 %v333
  %351 = vmatmul.f32.gmra.mxu0 %v329
  %v352 = vpop.f32.mrf.mxu0
  %v353 = vadd.f32 0.0, %v352
  %354 = vdwg.mxu0
  %v356 = vsel %vm247, %v283, 0
  %v359 = vsel %vm331, %v321, 0
  %361 = vmatpush.msra.mxu0 0.0
  %362 = vmatpush.msra.mxu0 0.0
  %363 = vmatpush.msra.mxu0 0.0
  %364 = vmatpush.msra.mxu0 0.0
  %365 = vmatpush.msra.mxu0 0.0
  %366 = vmatpush.msra.mxu0 0.0
  %367 = vmatpush.msra.mxu0 0.0
  %368 = vmatpush.msra.mxu0 0.0
  %369 = vmatpush.msra.mxu0 0.0
  %370 = vmatpush.msra.mxu0 0.0
  %371 = vmatpush.msra.mxu0 0.0
  %372 = vmatpush.msra.mxu0 0.0
  %373 = vmatpush.msra.mxu0 0.0
  %374 = vmatpush.msra.mxu0 0.0
  %375 = vmatpush.msra.mxu0 0.0
  %376 = vmatpush.msra.mxu0 %v359
  %377 = vmatmul.f32.gmra.mxu0 %v356
  %v378 = vpop.f32.mrf.mxu0
  %v379 = vadd.f32 0.0, %v378
  %380 = vdwg.mxu0
  %v382 = vsel %vm247, %v285, 0
  %v385 = vsel %vm331, %v322, 0
  %387 = vmatpush.msra.mxu0 0.0
  %388 = vmatpush.msra.mxu0 0.0
  %389 = vmatpush.msra.mxu0 0.0
  %390 = vmatpush.msra.mxu0 0.0
  %391 = vmatpush.msra.mxu0 0.0
  %392 = vmatpush.msra.mxu0 0.0
  %393 = vmatpush.msra.mxu0 0.0
  %394 = vmatpush.msra.mxu0 0.0
  %395 = vmatpush.msra.mxu0 0.0
  %396 = vmatpush.msra.mxu0 0.0
  %397 = vmatpush.msra.mxu0 0.0
  %398 = vmatpush.msra.mxu0 0.0
  %399 = vmatpush.msra.mxu0 0.0
  %400 = vmatpush.msra.mxu0 0.0
  %401 = vmatpush.msra.mxu0 0.0
  %402 = vmatpush.msra.mxu0 %v385
  %403 = vmatmul.f32.gmra.mxu0 %v382
  %v404 = vpop.f32.mrf.mxu0
  %v405 = vadd.f32 0.0, %v404
  %406 = vdwg.mxu0
  %v408 = vsel %vm247, %v287, 0
  %v411 = vsel %vm331, %v323, 0
  %413 = vmatpush.msra.mxu0 0.0
  %414 = vmatpush.msra.mxu0 0.0
  %415 = vmatpush.msra.mxu0 0.0
  %416 = vmatpush.msra.mxu0 0.0
  %417 = vmatpush.msra.mxu0 0.0
  %418 = vmatpush.msra.mxu0 0.0
  %419 = vmatpush.msra.mxu0 0.0
  %420 = vmatpush.msra.mxu0 0.0
  %421 = vmatpush.msra.mxu0 0.0
  %422 = vmatpush.msra.mxu0 0.0
  %423 = vmatpush.msra.mxu0 0.0
  %424 = vmatpush.msra.mxu0 0.0
  %425 = vmatpush.msra.mxu0 0.0
  %426 = vmatpush.msra.mxu0 0.0
  %427 = vmatpush.msra.mxu0 0.0
  %428 = vmatpush.msra.mxu0 %v411
  %429 = vmatmul.f32.gmra.mxu0 %v408
  %v430 = vpop.f32.mrf.mxu0
  %v431 = vadd.f32 0.0, %v430
  %432 = vdwg.mxu0
  %v434 = vsel %vm247, %v289, 0
  %v437 = vsel %vm331, %v324, 0
  %439 = vmatpush.msra.mxu0 0.0
  %440 = vmatpush.msra.mxu0 0.0
  %441 = vmatpush.msra.mxu0 0.0
  %442 = vmatpush.msra.mxu0 0.0
  %443 = vmatpush.msra.mxu0 0.0
  %444 = vmatpush.msra.mxu0 0.0
  %445 = vmatpush.msra.mxu0 0.0
  %446 = vmatpush.msra.mxu0 0.0
  %447 = vmatpush.msra.mxu0 0.0
  %448 = vmatpush.msra.mxu0 0.0
  %449 = vmatpush.msra.mxu0 0.0
  %450 = vmatpush.msra.mxu0 0.0
  %451 = vmatpush.msra.mxu0 0.0
  %452 = vmatpush.msra.mxu0 0.0
  %453 = vmatpush.msra.mxu0 0.0
  %454 = vmatpush.msra.mxu0 %v437
  %455 = vmatmul.f32.gmra.mxu0 %v434
  %v456 = vpop.f32.mrf.mxu0
  %v457 = vadd.f32 0.0, %v456
  %458 = vdwg.mxu0
  %v460 = vsel %vm247, %v291, 0
  %v463 = vsel %vm331, %v325, 0
  %465 = vmatpush.msra.mxu0 0.0
  %466 = vmatpush.msra.mxu0 0.0
  %467 = vmatpush.msra.mxu0 0.0
  %468 = vmatpush.msra.mxu0 0.0
  %469 = vmatpush.msra.mxu0 0.0
  %470 = vmatpush.msra.mxu0 0.0
  %471 = vmatpush.msra.mxu0 0.0
  %472 = vmatpush.msra.mxu0 0.0
  %473 = vmatpush.msra.mxu0 0.0
  %474 = vmatpush.msra.mxu0 0.0
  %475 = vmatpush.msra.mxu0 0.0
  %476 = vmatpush.msra.mxu0 0.0
  %477 = vmatpush.msra.mxu0 0.0
  %478 = vmatpush.msra.mxu0 0.0
  %479 = vmatpush.msra.mxu0 0.0
  %480 = vmatpush.msra.mxu0 %v463
  %481 = vmatmul.f32.gmra.mxu0 %v460
  %v482 = vpop.f32.mrf.mxu0
  %v483 = vadd.f32 0.0, %v482
  %484 = vdwg.mxu0
  %v486 = vsel %vm247, %v293, 0
  %v489 = vsel %vm331, %v326, 0
  %491 = vmatpush.msra.mxu0 0.0
  %492 = vmatpush.msra.mxu0 0.0
  %493 = vmatpush.msra.mxu0 0.0
  %494 = vmatpush.msra.mxu0 0.0
  %495 = vmatpush.msra.mxu0 0.0
  %496 = vmatpush.msra.mxu0 0.0
  %497 = vmatpush.msra.mxu0 0.0
  %498 = vmatpush.msra.mxu0 0.0
  %499 = vmatpush.msra.mxu0 0.0
  %500 = vmatpush.msra.mxu0 0.0
  %501 = vmatpush.msra.mxu0 0.0
  %502 = vmatpush.msra.mxu0 0.0
  %503 = vmatpush.msra.mxu0 0.0
  %504 = vmatpush.msra.mxu0 0.0
  %505 = vmatpush.msra.mxu0 0.0
  %506 = vmatpush.msra.mxu0 %v489
  %507 = vmatmul.f32.gmra.mxu0 %v486
  %v508 = vpop.f32.mrf.mxu0
  %v509 = vadd.f32 0.0, %v508
  %510 = vdwg.mxu0
  %v512 = vsel %vm247, %v295, 0
  %v515 = vsel %vm331, %v327, 0
  %517 = vmatpush.msra.mxu0 0.0
  %518 = vmatpush.msra.mxu0 0.0
  %519 = vmatpush.msra.mxu0 0.0
  %520 = vmatpush.msra.mxu0 0.0
  %521 = vmatpush.msra.mxu0 0.0
  %522 = vmatpush.msra.mxu0 0.0
  %523 = vmatpush.msra.mxu0 0.0
  %524 = vmatpush.msra.mxu0 0.0
  %525 = vmatpush.msra.mxu0 0.0
  %526 = vmatpush.msra.mxu0 0.0
  %527 = vmatpush.msra.mxu0 0.0
  %528 = vmatpush.msra.mxu0 0.0
  %529 = vmatpush.msra.mxu0 0.0
  %530 = vmatpush.msra.mxu0 0.0
  %531 = vmatpush.msra.mxu0 0.0
  %532 = vmatpush.msra.mxu0 %v515
  %533 = vmatmul.f32.gmra.mxu0 %v512
  %v534 = vpop.f32.mrf.mxu0
  %v535 = vadd.f32 0.0, %v534
  %536 = vdwg.mxu0
  %v537 = vrcp.pop %v298
  %v538 = vrcp.pop %v301
  %v539 = vrcp.pop %v304
  %v540 = vrcp.pop %v307
  %v541 = vrcp.pop %v310
  %v542 = vrcp.pop %v313
  %v543 = vrcp.pop %v316
  %v544 = vrcp.pop %v319
  %v545 = vmul.f32 %v353, %v537
  %v546 = vmul.f32 %v379, %v538
  %v547 = vmul.f32 %v405, %v539
  %v548 = vmul.f32 %v431, %v540
  %v549 = vmul.f32 %v457, %v541
  %v550 = vmul.f32 %v483, %v542
  %v551 = vmul.f32 %v509, %v543
  %v552 = vmul.f32 %v535, %v544
  %553 = vst.msk [vmem:[%s3] sm:$0xff] %vm38, %v545
  %554 = vst.msk [vmem:[%s3 + $0x8] sm:$0xff] %vm38, %v546
  %555 = vst.msk [vmem:[%s3 + $0x10] sm:$0xff] %vm38, %v547
  %556 = vst.msk [vmem:[%s3 + $0x18] sm:$0xff] %vm38, %v548
  %557 = vst.msk [vmem:[%s3 + $0x20] sm:$0xff] %vm38, %v549
  %558 = vst.msk [vmem:[%s3 + $0x28] sm:$0xff] %vm38, %v550
  %559 = vst.msk [vmem:[%s3 + $0x30] sm:$0xff] %vm38, %v551
  %560 = vst.msk [vmem:[%s3 + $0x38] sm:$0xff] %vm38, %v552
  // Predicated region
  $region14: #{st_self_attention.14} parent=0 // pred_check
    _
  $region15: #{st_self_attention.14} parent=0 // pred_check_branch
    %562 = sbr.rel (0) target = $region17
  $region16: #{st_self_attention.14} parent=0 // pred_region
    _
  $region17: #{st_self_attention.14} parent=0 // pred_fallthru
    _
  // Predicated region
  $region18: #{st_self_attention.14} parent=0 // pred_check
    _
  $region19: #{st_self_attention.14} parent=0 // pred_check_branch
    %564 = sbr.rel (0) target = $region21
  $region20: #{st_self_attention.14} parent=0 // pred_region
    _
  $region21: #{st_self_attention.14} parent=0 // pred_fallthru
    _

// kernel: st_self_attention.16
$region0: #{st_self_attention.16}
  #allocation0 [shape = 'u32[]', space=smem, size = 0x4, offset = 0x4, fixed_abs, tag = 'smem constant byte address 0x4 - core index']
  #allocation1 [shape = 'u32[72,128]{1,0:T(1,128)}', space=vmem, size = 0x9000, scoped, tag = 'internal scratch']
  %s0 = inlined_call_operand.vmem [shape: f32[16,8,4], index: 0, kind: input, shape index: {}]
  %s1 = inlined_call_operand.vmem [shape: f32[16,8,4], index: 1, kind: input, shape index: {}]
  %s2 = inlined_call_operand.vmem [shape: f32[16,8,4], index: 2, kind: input, shape index: {}]
  %s3 = inlined_call_operand.vmem [shape: s32[8,8], index: 3, kind: input, shape index: {}]
  %s4 = inlined_call_operand.vmem [shape: f32[16,8,4], index: 4, kind: output, shape index: {}]
  %s5 = sld [smem:[#allocation0]]
  $region26: #{st_self_attention.16} parent=0
    _
  %s7 = ssub.s32 1, %s5
  %s8 = scalar_select 0, %s7, %s5
  // Predicated region
  $region2: #{st_self_attention.16} parent=0 // pred_check
    _
  $region3: #{st_self_attention.16} parent=0 // pred_check_branch
    %10 = sbr.rel (0) target = $region5
  $region4: #{st_self_attention.16} parent=0 // pred_region
    _
  $region5: #{st_self_attention.16} parent=0 // pred_fallthru
    _
  // Predicated region
  $region6: #{st_self_attention.16} parent=0 // pred_check
    _
  $region7: #{st_self_attention.16} parent=0 // pred_check_branch
    %12 = sbr.rel (0) target = $region9
  $region8: #{st_self_attention.16} parent=0 // pred_region
    _
  $region9: #{st_self_attention.16} parent=0 // pred_fallthru
    _
  // Predicated region
  $region10: #{st_self_attention.16} parent=0 // pred_check
    _
  $region11: #{st_self_attention.16} parent=0 // pred_check_branch
    %14 = sbr.rel (0) target = $region13
  $region12: #{st_self_attention.16} parent=0 // pred_region
    _
  $region13: #{st_self_attention.16} parent=0 // pred_fallthru
    _
  // Predicated region
  $region14: #{st_self_attention.16} parent=0 // pred_check
    _
  $region15: #{st_self_attention.16} parent=0 // pred_check_branch
    %16 = sbr.rel (0) target = $region17
  $region16: #{st_self_attention.16} parent=0 // pred_region
    _
  $region17: #{st_self_attention.16} parent=0 // pred_fallthru
    _
  %v17 = vld [vmem:[%s0] sm:$0xff]
  %v18 = vld [vmem:[%s0 + $0x8] sm:$0xff]
  %v19 = vld [vmem:[%s0 + $0x10] sm:$0xff]
  %v20 = vld [vmem:[%s0 + $0x18] sm:$0xff]
  %v21 = vld [vmem:[%s0 + $0x20] sm:$0xff]
  %v22 = vld [vmem:[%s0 + $0x28] sm:$0xff]
  %v23 = vld [vmem:[%s0 + $0x30] sm:$0xff]
  %v24 = vld [vmem:[%s0 + $0x38] sm:$0xff]
  %v25 = vld [vmem:[%s0 + $0x40] sm:$0xff]
  %v26 = vld [vmem:[%s0 + $0x48] sm:$0xff]
  %v27 = vld [vmem:[%s0 + $0x50] sm:$0xff]
  %v28 = vld [vmem:[%s0 + $0x58] sm:$0xff]
  %v29 = vld [vmem:[%s0 + $0x60] sm:$0xff]
  %v30 = vld [vmem:[%s0 + $0x68] sm:$0xff]
  %v31 = vld [vmem:[%s0 + $0x70] sm:$0xff]
  %v32 = vld [vmem:[%s0 + $0x78] sm:$0xff]
  %v33 = vmul.f32 %v17, 0.5
  %v34 = vmul.f32 %v18, 0.5
  %v35 = vmul.f32 %v19, 0.5
  %v36 = vmul.f32 %v20, 0.5
  %v37 = vmul.f32 %v21, 0.5
  %v38 = vmul.f32 %v22, 0.5
  %v39 = vmul.f32 %v23, 0.5
  %v40 = vmul.f32 %v24, 0.5
  %v41 = vmul.f32 %v25, 0.5
  %v42 = vmul.f32 %v26, 0.5
  %v43 = vmul.f32 %v27, 0.5
  %v44 = vmul.f32 %v28, 0.5
  %v45 = vmul.f32 %v29, 0.5
  %v46 = vmul.f32 %v30, 0.5
  %v47 = vmul.f32 %v31, 0.5
  %v48 = vmul.f32 %v32, 0.5
  %v49 = vld [vmem:[%s1] sm:$0xff]
  %v50 = vld [vmem:[%s1 + $0x8] sm:$0xff]
  %v51 = vld [vmem:[%s1 + $0x10] sm:$0xff]
  %v52 = vld [vmem:[%s1 + $0x18] sm:$0xff]
  %v53 = vld [vmem:[%s1 + $0x20] sm:$0xff]
  %v54 = vld [vmem:[%s1 + $0x28] sm:$0xff]
  %v55 = vld [vmem:[%s1 + $0x30] sm:$0xff]
  %v56 = vld [vmem:[%s1 + $0x38] sm:$0xff]
  %v57 = vld [vmem:[%s1 + $0x40] sm:$0xff]
  %v58 = vld [vmem:[%s1 + $0x48] sm:$0xff]
  %v59 = vld [vmem:[%s1 + $0x50] sm:$0xff]
  %v60 = vld [vmem:[%s1 + $0x58] sm:$0xff]
  %v61 = vld [vmem:[%s1 + $0x60] sm:$0xff]
  %v62 = vld [vmem:[%s1 + $0x68] sm:$0xff]
  %v63 = vld [vmem:[%s1 + $0x70] sm:$0xff]
  %v64 = vld [vmem:[%s1 + $0x78] sm:$0xff]
  %vm65 = vcmask 31744
  %v67 = vsel %vm65, %v33, 0
  %v70 = vsel %vm65, %v49, 0
  %72 = vmatpush.xpose.msra.mxu0 0.0
  %73 = vmatpush.xpose.msra.mxu0 0.0
  %74 = vmatpush.xpose.msra.mxu0 0.0
  %75 = vmatpush.xpose.msra.mxu0 0.0
  %76 = vmatpush.xpose.msra.mxu0 0.0
  %77 = vmatpush.xpose.msra.mxu0 0.0
  %78 = vmatpush.xpose.msra.mxu0 0.0
  %79 = vmatpush.xpose.msra.mxu0 0.0
  %80 = vmatpush.xpose.msra.mxu0 0.0
  %81 = vmatpush.xpose.msra.mxu0 0.0
  %82 = vmatpush.xpose.msra.mxu0 0.0
  %83 = vmatpush.xpose.msra.mxu0 0.0
  %84 = vmatpush.xpose.msra.mxu0 0.0
  %85 = vmatpush.xpose.msra.mxu0 0.0
  %86 = vmatpush.xpose.msra.mxu0 0.0
  %87 = vmatpush.xpose.msra.mxu0 %v70
  %88 = vmatmul.f32.gmra.mxu0 %v67
  %v89 = vpop.f32.mrf.mxu0
  %v90 = vadd.f32 0.0, %v89
  %91 = vdwg.mxu0
  %v93 = vsel %vm65, %v34, 0
  %v96 = vsel %vm65, %v50, 0
  %98 = vmatpush.xpose.msra.mxu0 0.0
  %99 = vmatpush.xpose.msra.mxu0 0.0
  %100 = vmatpush.xpose.msra.mxu0 0.0
  %101 = vmatpush.xpose.msra.mxu0 0.0
  %102 = vmatpush.xpose.msra.mxu0 0.0
  %103 = vmatpush.xpose.msra.mxu0 0.0
  %104 = vmatpush.xpose.msra.mxu0 0.0
  %105 = vmatpush.xpose.msra.mxu0 0.0
  %106 = vmatpush.xpose.msra.mxu0 0.0
  %107 = vmatpush.xpose.msra.mxu0 0.0
  %108 = vmatpush.xpose.msra.mxu0 0.0
  %109 = vmatpush.xpose.msra.mxu0 0.0
  %110 = vmatpush.xpose.msra.mxu0 0.0
  %111 = vmatpush.xpose.msra.mxu0 0.0
  %112 = vmatpush.xpose.msra.mxu0 0.0
  %113 = vmatpush.xpose.msra.mxu0 %v96
  %114 = vmatmul.f32.gmra.mxu0 %v93
  %v115 = vpop.f32.mrf.mxu0
  %v116 = vadd.f32 0.0, %v115
  %117 = vdwg.mxu0
  %v119 = vsel %vm65, %v35, 0
  %v122 = vsel %vm65, %v51, 0
  %124 = vmatpush.xpose.msra.mxu0 0.0
  %125 = vmatpush.xpose.msra.mxu0 0.0
  %126 = vmatpush.xpose.msra.mxu0 0.0
  %127 = vmatpush.xpose.msra.mxu0 0.0
  %128 = vmatpush.xpose.msra.mxu0 0.0
  %129 = vmatpush.xpose.msra.mxu0 0.0
  %130 = vmatpush.xpose.msra.mxu0 0.0
  %131 = vmatpush.xpose.msra.mxu0 0.0
  %132 = vmatpush.xpose.msra.mxu0 0.0
  %133 = vmatpush.xpose.msra.mxu0 0.0
  %134 = vmatpush.xpose.msra.mxu0 0.0
  %135 = vmatpush.xpose.msra.mxu0 0.0
  %136 = vmatpush.xpose.msra.mxu0 0.0
  %137 = vmatpush.xpose.msra.mxu0 0.0
  %138 = vmatpush.xpose.msra.mxu0 0.0
  %139 = vmatpush.xpose.msra.mxu0 %v122
  %140 = vmatmul.f32.gmra.mxu0 %v119
  %v141 = vpop.f32.mrf.mxu0
  %v142 = vadd.f32 0.0, %v141
  %143 = vdwg.mxu0
  %v145 = vsel %vm65, %v36, 0
  %v148 = vsel %vm65, %v52, 0
  %150 = vmatpush.xpose.msra.mxu0 0.0
  %151 = vmatpush.xpose.msra.mxu0 0.0
  %152 = vmatpush.xpose.msra.mxu0 0.0
  %153 = vmatpush.xpose.msra.mxu0 0.0
  %154 = vmatpush.xpose.msra.mxu0 0.0
  %155 = vmatpush.xpose.msra.mxu0 0.0
  %156 = vmatpush.xpose.msra.mxu0 0.0
  %157 = vmatpush.xpose.msra.mxu0 0.0
  %158 = vmatpush.xpose.msra.mxu0 0.0
  %159 = vmatpush.xpose.msra.mxu0 0.0
  %160 = vmatpush.xpose.msra.mxu0 0.0
  %161 = vmatpush.xpose.msra.mxu0 0.0
  %162 = vmatpush.xpose.msra.mxu0 0.0
  %163 = vmatpush.xpose.msra.mxu0 0.0
  %164 = vmatpush.xpose.msra.mxu0 0.0
  %165 = vmatpush.xpose.msra.mxu0 %v148
  %166 = vmatmul.f32.gmra.mxu0 %v145
  %v167 = vpop.f32.mrf.mxu0
  %v168 = vadd.f32 0.0, %v167
  %169 = vdwg.mxu0
  %v171 = vsel %vm65, %v37, 0
  %v174 = vsel %vm65, %v53, 0
  %176 = vmatpush.xpose.msra.mxu0 0.0
  %177 = vmatpush.xpose.msra.mxu0 0.0
  %178 = vmatpush.xpose.msra.mxu0 0.0
  %179 = vmatpush.xpose.msra.mxu0 0.0
  %180 = vmatpush.xpose.msra.mxu0 0.0
  %181 = vmatpush.xpose.msra.mxu0 0.0
  %182 = vmatpush.xpose.msra.mxu0 0.0
  %183 = vmatpush.xpose.msra.mxu0 0.0
  %184 = vmatpush.xpose.msra.mxu0 0.0
  %185 = vmatpush.xpose.msra.mxu0 0.0
  %186 = vmatpush.xpose.msra.mxu0 0.0
  %187 = vmatpush.xpose.msra.mxu0 0.0
  %188 = vmatpush.xpose.msra.mxu0 0.0
  %189 = vmatpush.xpose.msra.mxu0 0.0
  %190 = vmatpush.xpose.msra.mxu0 0.0
  %191 = vmatpush.xpose.msra.mxu0 %v174
  %192 = vmatmul.f32.gmra.mxu0 %v171
  %v193 = vpop.f32.mrf.mxu0
  %v194 = vadd.f32 0.0, %v193
  %195 = vdwg.mxu0
  %v197 = vsel %vm65, %v38, 0
  %v200 = vsel %vm65, %v54, 0
  %202 = vmatpush.xpose.msra.mxu0 0.0
  %203 = vmatpush.xpose.msra.mxu0 0.0
  %204 = vmatpush.xpose.msra.mxu0 0.0
  %205 = vmatpush.xpose.msra.mxu0 0.0
  %206 = vmatpush.xpose.msra.mxu0 0.0
  %207 = vmatpush.xpose.msra.mxu0 0.0
  %208 = vmatpush.xpose.msra.mxu0 0.0
  %209 = vmatpush.xpose.msra.mxu0 0.0
  %210 = vmatpush.xpose.msra.mxu0 0.0
  %211 = vmatpush.xpose.msra.mxu0 0.0
  %212 = vmatpush.xpose.msra.mxu0 0.0
  %213 = vmatpush.xpose.msra.mxu0 0.0
  %214 = vmatpush.xpose.msra.mxu0 0.0
  %215 = vmatpush.xpose.msra.mxu0 0.0
  %216 = vmatpush.xpose.msra.mxu0 0.0
  %217 = vmatpush.xpose.msra.mxu0 %v200
  %218 = vmatmul.f32.gmra.mxu0 %v197
  %v219 = vpop.f32.mrf.mxu0
  %v220 = vadd.f32 0.0, %v219
  %221 = vdwg.mxu0
  %v223 = vsel %vm65, %v39, 0
  %v226 = vsel %vm65, %v55, 0
  %228 = vmatpush.xpose.msra.mxu0 0.0
  %229 = vmatpush.xpose.msra.mxu0 0.0
  %230 = vmatpush.xpose.msra.mxu0 0.0
  %231 = vmatpush.xpose.msra.mxu0 0.0
  %232 = vmatpush.xpose.msra.mxu0 0.0
  %233 = vmatpush.xpose.msra.mxu0 0.0
  %234 = vmatpush.xpose.msra.mxu0 0.0
  %235 = vmatpush.xpose.msra.mxu0 0.0
  %236 = vmatpush.xpose.msra.mxu0 0.0
  %237 = vmatpush.xpose.msra.mxu0 0.0
  %238 = vmatpush.xpose.msra.mxu0 0.0
  %239 = vmatpush.xpose.msra.mxu0 0.0
  %240 = vmatpush.xpose.msra.mxu0 0.0
  %241 = vmatpush.xpose.msra.mxu0 0.0
  %242 = vmatpush.xpose.msra.mxu0 0.0
  %243 = vmatpush.xpose.msra.mxu0 %v226
  %244 = vmatmul.f32.gmra.mxu0 %v223
  %v245 = vpop.f32.mrf.mxu0
  %v246 = vadd.f32 0.0, %v245
  %247 = vdwg.mxu0
  %v249 = vsel %vm65, %v40, 0
  %v252 = vsel %vm65, %v56, 0
  %254 = vmatpush.xpose.msra.mxu0 0.0
  %255 = vmatpush.xpose.msra.mxu0 0.0
  %256 = vmatpush.xpose.msra.mxu0 0.0
  %257 = vmatpush.xpose.msra.mxu0 0.0
  %258 = vmatpush.xpose.msra.mxu0 0.0
  %259 = vmatpush.xpose.msra.mxu0 0.0
  %260 = vmatpush.xpose.msra.mxu0 0.0
  %261 = vmatpush.xpose.msra.mxu0 0.0
  %262 = vmatpush.xpose.msra.mxu0 0.0
  %263 = vmatpush.xpose.msra.mxu0 0.0
  %264 = vmatpush.xpose.msra.mxu0 0.0
  %265 = vmatpush.xpose.msra.mxu0 0.0
  %266 = vmatpush.xpose.msra.mxu0 0.0
  %267 = vmatpush.xpose.msra.mxu0 0.0
  %268 = vmatpush.xpose.msra.mxu0 0.0
  %269 = vmatpush.xpose.msra.mxu0 %v252
  %270 = vmatmul.f32.gmra.mxu0 %v249
  %v271 = vpop.f32.mrf.mxu0
  %v272 = vadd.f32 0.0, %v271
  %273 = vdwg.mxu0
  %v275 = vsel %vm65, %v41, 0
  %v278 = vsel %vm65, %v57, 0
  %280 = vmatpush.xpose.msra.mxu0 0.0
  %281 = vmatpush.xpose.msra.mxu0 0.0
  %282 = vmatpush.xpose.msra.mxu0 0.0
  %283 = vmatpush.xpose.msra.mxu0 0.0
  %284 = vmatpush.xpose.msra.mxu0 0.0
  %285 = vmatpush.xpose.msra.mxu0 0.0
  %286 = vmatpush.xpose.msra.mxu0 0.0
  %287 = vmatpush.xpose.msra.mxu0 0.0
  %288 = vmatpush.xpose.msra.mxu0 0.0
  %289 = vmatpush.xpose.msra.mxu0 0.0
  %290 = vmatpush.xpose.msra.mxu0 0.0
  %291 = vmatpush.xpose.msra.mxu0 0.0
  %292 = vmatpush.xpose.msra.mxu0 0.0
  %293 = vmatpush.xpose.msra.mxu0 0.0
  %294 = vmatpush.xpose.msra.mxu0 0.0
  %295 = vmatpush.xpose.msra.mxu0 %v278
  %296 = vmatmul.f32.gmra.mxu0 %v275
  %v297 = vpop.f32.mrf.mxu0
  %v298 = vadd.f32 0.0, %v297
  %299 = vdwg.mxu0
  %v301 = vsel %vm65, %v42, 0
  %v304 = vsel %vm65, %v58, 0
  %306 = vmatpush.xpose.msra.mxu0 0.0
  %307 = vmatpush.xpose.msra.mxu0 0.0
  %308 = vmatpush.xpose.msra.mxu0 0.0
  %309 = vmatpush.xpose.msra.mxu0 0.0
  %310 = vmatpush.xpose.msra.mxu0 0.0
  %311 = vmatpush.xpose.msra.mxu0 0.0
  %312 = vmatpush.xpose.msra.mxu0 0.0
  %313 = vmatpush.xpose.msra.mxu0 0.0
  %314 = vmatpush.xpose.msra.mxu0 0.0
  %315 = vmatpush.xpose.msra.mxu0 0.0
  %316 = vmatpush.xpose.msra.mxu0 0.0
  %317 = vmatpush.xpose.msra.mxu0 0.0
  %318 = vmatpush.xpose.msra.mxu0 0.0
  %319 = vmatpush.xpose.msra.mxu0 0.0
  %320 = vmatpush.xpose.msra.mxu0 0.0
  %321 = vmatpush.xpose.msra.mxu0 %v304
  %322 = vmatmul.f32.gmra.mxu0 %v301
  %v323 = vpop.f32.mrf.mxu0
  %v324 = vadd.f32 0.0, %v323
  %325 = vdwg.mxu0
  %v327 = vsel %vm65, %v43, 0
  %v330 = vsel %vm65, %v59, 0
  %332 = vmatpush.xpose.msra.mxu0 0.0
  %333 = vmatpush.xpose.msra.mxu0 0.0
  %334 = vmatpush.xpose.msra.mxu0 0.0
  %335 = vmatpush.xpose.msra.mxu0 0.0
  %336 = vmatpush.xpose.msra.mxu0 0.0
  %337 = vmatpush.xpose.msra.mxu0 0.0
  %338 = vmatpush.xpose.msra.mxu0 0.0
  %339 = vmatpush.xpose.msra.mxu0 0.0
  %340 = vmatpush.xpose.msra.mxu0 0.0
  %341 = vmatpush.xpose.msra.mxu0 0.0
  %342 = vmatpush.xpose.msra.mxu0 0.0
  %343 = vmatpush.xpose.msra.mxu0 0.0
  %344 = vmatpush.xpose.msra.mxu0 0.0
  %345 = vmatpush.xpose.msra.mxu0 0.0
  %346 = vmatpush.xpose.msra.mxu0 0.0
  %347 = vmatpush.xpose.msra.mxu0 %v330
  %348 = vmatmul.f32.gmra.mxu0 %v327
  %v349 = vpop.f32.mrf.mxu0
  %v350 = vadd.f32 0.0, %v349
  %351 = vdwg.mxu0
  %v353 = vsel %vm65, %v44, 0
  %v356 = vsel %vm65, %v60, 0
  %358 = vmatpush.xpose.msra.mxu0 0.0
  %359 = vmatpush.xpose.msra.mxu0 0.0
  %360 = vmatpush.xpose.msra.mxu0 0.0
  %361 = vmatpush.xpose.msra.mxu0 0.0
  %362 = vmatpush.xpose.msra.mxu0 0.0
  %363 = vmatpush.xpose.msra.mxu0 0.0
  %364 = vmatpush.xpose.msra.mxu0 0.0
  %365 = vmatpush.xpose.msra.mxu0 0.0
  %366 = vmatpush.xpose.msra.mxu0 0.0
  %367 = vmatpush.xpose.msra.mxu0 0.0
  %368 = vmatpush.xpose.msra.mxu0 0.0
  %369 = vmatpush.xpose.msra.mxu0 0.0
  %370 = vmatpush.xpose.msra.mxu0 0.0
  %371 = vmatpush.xpose.msra.mxu0 0.0
  %372 = vmatpush.xpose.msra.mxu0 0.0
  %373 = vmatpush.xpose.msra.mxu0 %v356
  %374 = vmatmul.f32.gmra.mxu0 %v353
  %v375 = vpop.f32.mrf.mxu0
  %v376 = vadd.f32 0.0, %v375
  %377 = vdwg.mxu0
  %v379 = vsel %vm65, %v45, 0
  %v382 = vsel %vm65, %v61, 0
  %384 = vmatpush.xpose.msra.mxu0 0.0
  %385 = vmatpush.xpose.msra.mxu0 0.0
  %386 = vmatpush.xpose.msra.mxu0 0.0
  %387 = vmatpush.xpose.msra.mxu0 0.0
  %388 = vmatpush.xpose.msra.mxu0 0.0
  %389 = vmatpush.xpose.msra.mxu0 0.0
  %390 = vmatpush.xpose.msra.mxu0 0.0
  %391 = vmatpush.xpose.msra.mxu0 0.0
  %392 = vmatpush.xpose.msra.mxu0 0.0
  %393 = vmatpush.xpose.msra.mxu0 0.0
  %394 = vmatpush.xpose.msra.mxu0 0.0
  %395 = vmatpush.xpose.msra.mxu0 0.0
  %396 = vmatpush.xpose.msra.mxu0 0.0
  %397 = vmatpush.xpose.msra.mxu0 0.0
  %398 = vmatpush.xpose.msra.mxu0 0.0
  %399 = vmatpush.xpose.msra.mxu0 %v382
  %400 = vmatmul.f32.gmra.mxu0 %v379
  %v401 = vpop.f32.mrf.mxu0
  %v402 = vadd.f32 0.0, %v401
  %403 = vdwg.mxu0
  %v405 = vsel %vm65, %v46, 0
  %v408 = vsel %vm65, %v62, 0
  %410 = vmatpush.xpose.msra.mxu0 0.0
  %411 = vmatpush.xpose.msra.mxu0 0.0
  %412 = vmatpush.xpose.msra.mxu0 0.0
  %413 = vmatpush.xpose.msra.mxu0 0.0
  %414 = vmatpush.xpose.msra.mxu0 0.0
  %415 = vmatpush.xpose.msra.mxu0 0.0
  %416 = vmatpush.xpose.msra.mxu0 0.0
  %417 = vmatpush.xpose.msra.mxu0 0.0
  %418 = vmatpush.xpose.msra.mxu0 0.0
  %419 = vmatpush.xpose.msra.mxu0 0.0
  %420 = vmatpush.xpose.msra.mxu0 0.0
  %421 = vmatpush.xpose.msra.mxu0 0.0
  %422 = vmatpush.xpose.msra.mxu0 0.0
  %423 = vmatpush.xpose.msra.mxu0 0.0
  %424 = vmatpush.xpose.msra.mxu0 0.0
  %425 = vmatpush.xpose.msra.mxu0 %v408
  %426 = vmatmul.f32.gmra.mxu0 %v405
  %v427 = vpop.f32.mrf.mxu0
  %v428 = vadd.f32 0.0, %v427
  %429 = vdwg.mxu0
  %v431 = vsel %vm65, %v47, 0
  %v434 = vsel %vm65, %v63, 0
  %436 = vmatpush.xpose.msra.mxu0 0.0
  %437 = vmatpush.xpose.msra.mxu0 0.0
  %438 = vmatpush.xpose.msra.mxu0 0.0
  %439 = vmatpush.xpose.msra.mxu0 0.0
  %440 = vmatpush.xpose.msra.mxu0 0.0
  %441 = vmatpush.xpose.msra.mxu0 0.0
  %442 = vmatpush.xpose.msra.mxu0 0.0
  %443 = vmatpush.xpose.msra.mxu0 0.0
  %444 = vmatpush.xpose.msra.mxu0 0.0
  %445 = vmatpush.xpose.msra.mxu0 0.0
  %446 = vmatpush.xpose.msra.mxu0 0.0
  %447 = vmatpush.xpose.msra.mxu0 0.0
  %448 = vmatpush.xpose.msra.mxu0 0.0
  %449 = vmatpush.xpose.msra.mxu0 0.0
  %450 = vmatpush.xpose.msra.mxu0 0.0
  %451 = vmatpush.xpose.msra.mxu0 %v434
  %452 = vmatmul.f32.gmra.mxu0 %v431
  %v453 = vpop.f32.mrf.mxu0
  %v454 = vadd.f32 0.0, %v453
  %455 = vdwg.mxu0
  %v457 = vsel %vm65, %v48, 0
  %v460 = vsel %vm65, %v64, 0
  %462 = vmatpush.xpose.msra.mxu0 0.0
  %463 = vmatpush.xpose.msra.mxu0 0.0
  %464 = vmatpush.xpose.msra.mxu0 0.0
  %465 = vmatpush.xpose.msra.mxu0 0.0
  %466 = vmatpush.xpose.msra.mxu0 0.0
  %467 = vmatpush.xpose.msra.mxu0 0.0
  %468 = vmatpush.xpose.msra.mxu0 0.0
  %469 = vmatpush.xpose.msra.mxu0 0.0
  %470 = vmatpush.xpose.msra.mxu0 0.0
  %471 = vmatpush.xpose.msra.mxu0 0.0
  %472 = vmatpush.xpose.msra.mxu0 0.0
  %473 = vmatpush.xpose.msra.mxu0 0.0
  %474 = vmatpush.xpose.msra.mxu0 0.0
  %475 = vmatpush.xpose.msra.mxu0 0.0
  %476 = vmatpush.xpose.msra.mxu0 0.0
  %477 = vmatpush.xpose.msra.mxu0 %v460
  %478 = vmatmul.f32.gmra.mxu0 %v457
  %v479 = vpop.f32.mrf.mxu0
  %v480 = vadd.f32 0.0, %v479
  %481 = vdwg.mxu0
  %v482 = vld [vmem:[%s3] sm:$0xff]
  %vm483 = vcmp.ne.s32.totalorder %v482, 0
  %v484 = vsel %vm483, 1, 0
  %vm485 = vcmp.eq.s32.totalorder %v484, 1
  %v486 = vsel %vm485, -1e+30, %v90
  %v487 = vsel %vm485, -1e+30, %v116
  %v488 = vsel %vm485, -1e+30, %v142
  %v489 = vsel %vm485, -1e+30, %v168
  %v490 = vsel %vm485, -1e+30, %v194
  %v491 = vsel %vm485, -1e+30, %v220
  %v492 = vsel %vm485, -1e+30, %v246
  %v493 = vsel %vm485, -1e+30, %v272
  %v494 = vsel %vm485, -1e+30, %v298
  %v495 = vsel %vm485, -1e+30, %v324
  %v496 = vsel %vm485, -1e+30, %v350
  %v497 = vsel %vm485, -1e+30, %v376
  %v498 = vsel %vm485, -1e+30, %v402
  %v499 = vsel %vm485, -1e+30, %v428
  %v500 = vsel %vm485, -1e+30, %v454
  %v501 = vsel %vm485, -1e+30, %v480
  %vm502 = vcmask 64512
  %v503 = vsel %vm502, %v486, -inf
  %504 = vmax.xlane.f32.xlu0 %v503
  %v505 = vpop.xlane.xlu0 %504
  %v506 = vsel %vm502, %v487, -inf
  %507 = vmax.xlane.f32.xlu0 %v506
  %v508 = vpop.xlane.xlu0 %507
  %v509 = vsel %vm502, %v488, -inf
  %510 = vmax.xlane.f32.xlu0 %v509
  %v511 = vpop.xlane.xlu0 %510
  %v512 = vsel %vm502, %v489, -inf
  %513 = vmax.xlane.f32.xlu0 %v512
  %v514 = vpop.xlane.xlu0 %513
  %v515 = vsel %vm502, %v490, -inf
  %516 = vmax.xlane.f32.xlu0 %v515
  %v517 = vpop.xlane.xlu0 %516
  %v518 = vsel %vm502, %v491, -inf
  %519 = vmax.xlane.f32.xlu0 %v518
  %v520 = vpop.xlane.xlu0 %519
  %v521 = vsel %vm502, %v492, -inf
  %522 = vmax.xlane.f32.xlu0 %v521
  %v523 = vpop.xlane.xlu0 %522
  %v524 = vsel %vm502, %v493, -inf
  %525 = vmax.xlane.f32.xlu0 %v524
  %v526 = vpop.xlane.xlu0 %525
  %v527 = vsel %vm502, %v494, -inf
  %528 = vmax.xlane.f32.xlu0 %v527
  %v529 = vpop.xlane.xlu0 %528
  %v530 = vsel %vm502, %v495, -inf
  %531 = vmax.xlane.f32.xlu0 %v530
  %v532 = vpop.xlane.xlu0 %531
  %v533 = vsel %vm502, %v496, -inf
  %534 = vmax.xlane.f32.xlu0 %v533
  %v535 = vpop.xlane.xlu0 %534
  %v536 = vsel %vm502, %v497, -inf
  %537 = vmax.xlane.f32.xlu0 %v536
  %v538 = vpop.xlane.xlu0 %537
  %v539 = vsel %vm502, %v498, -inf
  %540 = vmax.xlane.f32.xlu0 %v539
  %v541 = vpop.xlane.xlu0 %540
  %v542 = vsel %vm502, %v499, -inf
  %543 = vmax.xlane.f32.xlu0 %v542
  %v544 = vpop.xlane.xlu0 %543
  %v545 = vsel %vm502, %v500, -inf
  %546 = vmax.xlane.f32.xlu0 %v545
  %v547 = vpop.xlane.xlu0 %546
  %v548 = vsel %vm502, %v501, -inf
  %549 = vmax.xlane.f32.xlu0 %v548
  %v550 = vpop.xlane.xlu0 %549
  %v551 = vsub.f32 %v486, %v505
  %v552 = vsub.f32 %v487, %v508
  %v553 = vsub.f32 %v488, %v511
  %v554 = vsub.f32 %v489, %v514
  %v555 = vsub.f32 %v490, %v517
  %v556 = vsub.f32 %v491, %v520
  %v557 = vsub.f32 %v492, %v523
  %v558 = vsub.f32 %v493, %v526
  %v559 = vsub.f32 %v494, %v529
  %v560 = vsub.f32 %v495, %v532
  %v561 = vsub.f32 %v496, %v535
  %v562 = vsub.f32 %v497, %v538
  %v563 = vsub.f32 %v498, %v541
  %v564 = vsub.f32 %v499, %v544
  %v565 = vsub.f32 %v500, %v547
  %v566 = vsub.f32 %v501, %v550
  %v567 = vmul.f32 %v551, 1.442695
  %v568 = vpow.pop %v567
  %v569 = vmul.f32 %v552, 1.442695
  %v570 = vpow.pop %v569
  %v571 = vmul.f32 %v553, 1.442695
  %v572 = vpow.pop %v571
  %v573 = vmul.f32 %v554, 1.442695
  %v574 = vpow.pop %v573
  %v575 = vmul.f32 %v555, 1.442695
  %v576 = vpow.pop %v575
  %v577 = vmul.f32 %v556, 1.442695
  %v578 = vpow.pop %v577
  %v579 = vmul.f32 %v557, 1.442695
  %v580 = vpow.pop %v579
  %v581 = vmul.f32 %v558, 1.442695
  %v582 = vpow.pop %v581
  %v583 = vmul.f32 %v559, 1.442695
  %v584 = vpow.pop %v583
  %v585 = vmul.f32 %v560, 1.442695
  %v586 = vpow.pop %v585
  %v587 = vmul.f32 %v561, 1.442695
  %v588 = vpow.pop %v587
  %v589 = vmul.f32 %v562, 1.442695
  %v590 = vpow.pop %v589
  %v591 = vmul.f32 %v563, 1.442695
  %v592 = vpow.pop %v591
  %v593 = vmul.f32 %v564, 1.442695
  %v594 = vpow.pop %v593
  %v595 = vmul.f32 %v565, 1.442695
  %v596 = vpow.pop %v595
  %v597 = vmul.f32 %v566, 1.442695
  %v598 = vpow.pop %v597
  %v599 = vsel %vm502, %v568, 0.0
  %600 = vadd.xlane.f32.xlu0 %v599
  %v601 = vpop.xlane.xlu0 %600
  %v602 = vsel %vm502, %v570, 0.0
  %603 = vadd.xlane.f32.xlu0 %v602
  %v604 = vpop.xlane.xlu0 %603
  %v605 = vsel %vm502, %v572, 0.0
  %606 = vadd.xlane.f32.xlu0 %v605
  %v607 = vpop.xlane.xlu0 %606
  %v608 = vsel %vm502, %v574, 0.0
  %609 = vadd.xlane.f32.xlu0 %v608
  %v610 = vpop.xlane.xlu0 %609
  %v611 = vsel %vm502, %v576, 0.0
  %612 = vadd.xlane.f32.xlu0 %v611
  %v613 = vpop.xlane.xlu0 %612
  %v614 = vsel %vm502, %v578, 0.0
  %615 = vadd.xlane.f32.xlu0 %v614
  %v616 = vpop.xlane.xlu0 %615
  %v617 = vsel %vm502, %v580, 0.0
  %618 = vadd.xlane.f32.xlu0 %v617
  %v619 = vpop.xlane.xlu0 %618
  %v620 = vsel %vm502, %v582, 0.0
  %621 = vadd.xlane.f32.xlu0 %v620
  %v622 = vpop.xlane.xlu0 %621
  %v623 = vsel %vm502, %v584, 0.0
  %624 = vadd.xlane.f32.xlu0 %v623
  %v625 = vpop.xlane.xlu0 %624
  %v626 = vsel %vm502, %v586, 0.0
  %627 = vadd.xlane.f32.xlu0 %v626
  %v628 = vpop.xlane.xlu0 %627
  %v629 = vsel %vm502, %v588, 0.0
  %630 = vadd.xlane.f32.xlu0 %v629
  %v631 = vpop.xlane.xlu0 %630
  %v632 = vsel %vm502, %v590, 0.0
  %633 = vadd.xlane.f32.xlu0 %v632
  %v634 = vpop.xlane.xlu0 %633
  %v635 = vsel %vm502, %v592, 0.0
  %636 = vadd.xlane.f32.xlu0 %v635
  %v637 = vpop.xlane.xlu0 %636
  %v638 = vsel %vm502, %v594, 0.0
  %639 = vadd.xlane.f32.xlu0 %v638
  %v640 = vpop.xlane.xlu0 %639
  %v641 = vsel %vm502, %v596, 0.0
  %642 = vadd.xlane.f32.xlu0 %v641
  %v643 = vpop.xlane.xlu0 %642
  %v644 = vsel %vm502, %v598, 0.0
  %645 = vadd.xlane.f32.xlu0 %v644
  %v646 = vpop.xlane.xlu0 %645
  %v647 = vld [vmem:[%s2] sm:$0xff]
  %v648 = vld [vmem:[%s2 + $0x8] sm:$0xff]
  %v649 = vld [vmem:[%s2 + $0x10] sm:$0xff]
  %v650 = vld [vmem:[%s2 + $0x18] sm:$0xff]
  %v651 = vld [vmem:[%s2 + $0x20] sm:$0xff]
  %v652 = vld [vmem:[%s2 + $0x28] sm:$0xff]
  %v653 = vld [vmem:[%s2 + $0x30] sm:$0xff]
  %v654 = vld [vmem:[%s2 + $0x38] sm:$0xff]
  %v655 = vld [vmem:[%s2 + $0x40] sm:$0xff]
  %v656 = vld [vmem:[%s2 + $0x48] sm:$0xff]
  %v657 = vld [vmem:[%s2 + $0x50] sm:$0xff]
  %v658 = vld [vmem:[%s2 + $0x58] sm:$0xff]
  %v659 = vld [vmem:[%s2 + $0x60] sm:$0xff]
  %v660 = vld [vmem:[%s2 + $0x68] sm:$0xff]
  %v661 = vld [vmem:[%s2 + $0x70] sm:$0xff]
  %v662 = vld [vmem:[%s2 + $0x78] sm:$0xff]
  %v664 = vsel %vm502, %v568, 0
  %666 = vmatpush.msra.mxu0 0.0
  %667 = vmatpush.msra.mxu0 0.0
  %668 = vmatpush.msra.mxu0 0.0
  %669 = vmatpush.msra.mxu0 0.0
  %670 = vmatpush.msra.mxu0 0.0
  %671 = vmatpush.msra.mxu0 0.0
  %672 = vmatpush.msra.mxu0 0.0
  %673 = vmatpush.msra.mxu0 0.0
  %674 = vmatpush.msra.mxu0 0.0
  %675 = vmatpush.msra.mxu0 0.0
  %676 = vmatpush.msra.mxu0 0.0
  %677 = vmatpush.msra.mxu0 0.0
  %678 = vmatpush.msra.mxu0 0.0
  %679 = vmatpush.msra.mxu0 0.0
  %680 = vmatpush.msra.mxu0 0.0
  %681 = vmatpush.msra.mxu0 %v647
  %682 = vmatmul.f32.gmra.mxu0 %v664
  %v683 = vpop.f32.mrf.mxu0
  %v684 = vadd.f32 0.0, %v683
  %685 = vdwg.mxu0
  %v687 = vsel %vm502, %v570, 0
  %689 = vmatpush.msra.mxu0 0.0
  %690 = vmatpush.msra.mxu0 0.0
  %691 = vmatpush.msra.mxu0 0.0
  %692 = vmatpush.msra.mxu0 0.0
  %693 = vmatpush.msra.mxu0 0.0
  %694 = vmatpush.msra.mxu0 0.0
  %695 = vmatpush.msra.mxu0 0.0
  %696 = vmatpush.msra.mxu0 0.0
  %697 = vmatpush.msra.mxu0 0.0
  %698 = vmatpush.msra.mxu0 0.0
  %699 = vmatpush.msra.mxu0 0.0
  %700 = vmatpush.msra.mxu0 0.0
  %701 = vmatpush.msra.mxu0 0.0
  %702 = vmatpush.msra.mxu0 0.0
  %703 = vmatpush.msra.mxu0 0.0
  %704 = vmatpush.msra.mxu0 %v648
  %705 = vmatmul.f32.gmra.mxu0 %v687
  %v706 = vpop.f32.mrf.mxu0
  %v707 = vadd.f32 0.0, %v706
  %708 = vdwg.mxu0
  %v710 = vsel %vm502, %v572, 0
  %712 = vmatpush.msra.mxu0 0.0
  %713 = vmatpush.msra.mxu0 0.0
  %714 = vmatpush.msra.mxu0 0.0
  %715 = vmatpush.msra.mxu0 0.0
  %716 = vmatpush.msra.mxu0 0.0
  %717 = vmatpush.msra.mxu0 0.0
  %718 = vmatpush.msra.mxu0 0.0
  %719 = vmatpush.msra.mxu0 0.0
  %720 = vmatpush.msra.mxu0 0.0
  %721 = vmatpush.msra.mxu0 0.0
  %722 = vmatpush.msra.mxu0 0.0
  %723 = vmatpush.msra.mxu0 0.0
  %724 = vmatpush.msra.mxu0 0.0
  %725 = vmatpush.msra.mxu0 0.0
  %726 = vmatpush.msra.mxu0 0.0
  %727 = vmatpush.msra.mxu0 %v649
  %728 = vmatmul.f32.gmra.mxu0 %v710
  %v729 = vpop.f32.mrf.mxu0
  %v730 = vadd.f32 0.0, %v729
  %731 = vdwg.mxu0
  %v733 = vsel %vm502, %v574, 0
  %735 = vmatpush.msra.mxu0 0.0
  %736 = vmatpush.msra.mxu0 0.0
  %737 = vmatpush.msra.mxu0 0.0
  %738 = vmatpush.msra.mxu0 0.0
  %739 = vmatpush.msra.mxu0 0.0
  %740 = vmatpush.msra.mxu0 0.0
  %741 = vmatpush.msra.mxu0 0.0
  %742 = vmatpush.msra.mxu0 0.0
  %743 = vmatpush.msra.mxu0 0.0
  %744 = vmatpush.msra.mxu0 0.0
  %745 = vmatpush.msra.mxu0 0.0
  %746 = vmatpush.msra.mxu0 0.0
  %747 = vmatpush.msra.mxu0 0.0
  %748 = vmatpush.msra.mxu0 0.0
  %749 = vmatpush.msra.mxu0 0.0
  %750 = vmatpush.msra.mxu0 %v650
  %751 = vmatmul.f32.gmra.mxu0 %v733
  %v752 = vpop.f32.mrf.mxu0
  %v753 = vadd.f32 0.0, %v752
  %754 = vdwg.mxu0
  %v756 = vsel %vm502, %v576, 0
  %758 = vmatpush.msra.mxu0 0.0
  %759 = vmatpush.msra.mxu0 0.0
  %760 = vmatpush.msra.mxu0 0.0
  %761 = vmatpush.msra.mxu0 0.0
  %762 = vmatpush.msra.mxu0 0.0
  %763 = vmatpush.msra.mxu0 0.0
  %764 = vmatpush.msra.mxu0 0.0
  %765 = vmatpush.msra.mxu0 0.0
  %766 = vmatpush.msra.mxu0 0.0
  %767 = vmatpush.msra.mxu0 0.0
  %768 = vmatpush.msra.mxu0 0.0
  %769 = vmatpush.msra.mxu0 0.0
  %770 = vmatpush.msra.mxu0 0.0
  %771 = vmatpush.msra.mxu0 0.0
  %772 = vmatpush.msra.mxu0 0.0
  %773 = vmatpush.msra.mxu0 %v651
  %774 = vmatmul.f32.gmra.mxu0 %v756
  %v775 = vpop.f32.mrf.mxu0
  %v776 = vadd.f32 0.0, %v775
  %777 = vdwg.mxu0
  %v779 = vsel %vm502, %v578, 0
  %781 = vmatpush.msra.mxu0 0.0
  %782 = vmatpush.msra.mxu0 0.0
  %783 = vmatpush.msra.mxu0 0.0
  %784 = vmatpush.msra.mxu0 0.0
  %785 = vmatpush.msra.mxu0 0.0
  %786 = vmatpush.msra.mxu0 0.0
  %787 = vmatpush.msra.mxu0 0.0
  %788 = vmatpush.msra.mxu0 0.0
  %789 = vmatpush.msra.mxu0 0.0
  %790 = vmatpush.msra.mxu0 0.0
  %791 = vmatpush.msra.mxu0 0.0
  %792 = vmatpush.msra.mxu0 0.0
  %793 = vmatpush.msra.mxu0 0.0
  %794 = vmatpush.msra.mxu0 0.0
  %795 = vmatpush.msra.mxu0 0.0
  %796 = vmatpush.msra.mxu0 %v652
  %797 = vmatmul.f32.gmra.mxu0 %v779
  %v798 = vpop.f32.mrf.mxu0
  %v799 = vadd.f32 0.0, %v798
  %800 = vdwg.mxu0
  %v802 = vsel %vm502, %v580, 0
  %804 = vmatpush.msra.mxu0 0.0
  %805 = vmatpush.msra.mxu0 0.0
  %806 = vmatpush.msra.mxu0 0.0
  %807 = vmatpush.msra.mxu0 0.0
  %808 = vmatpush.msra.mxu0 0.0
  %809 = vmatpush.msra.mxu0 0.0
  %810 = vmatpush.msra.mxu0 0.0
  %811 = vmatpush.msra.mxu0 0.0
  %812 = vmatpush.msra.mxu0 0.0
  %813 = vmatpush.msra.mxu0 0.0
  %814 = vmatpush.msra.mxu0 0.0
  %815 = vmatpush.msra.mxu0 0.0
  %816 = vmatpush.msra.mxu0 0.0
  %817 = vmatpush.msra.mxu0 0.0
  %818 = vmatpush.msra.mxu0 0.0
  %819 = vmatpush.msra.mxu0 %v653
  %820 = vmatmul.f32.gmra.mxu0 %v802
  %v821 = vpop.f32.mrf.mxu0
  %v822 = vadd.f32 0.0, %v821
  %823 = vdwg.mxu0
  %v825 = vsel %vm502, %v582, 0
  %827 = vmatpush.msra.mxu0 0.0
  %828 = vmatpush.msra.mxu0 0.0
  %829 = vmatpush.msra.mxu0 0.0
  %830 = vmatpush.msra.mxu0 0.0
  %831 = vmatpush.msra.mxu0 0.0
  %832 = vmatpush.msra.mxu0 0.0
  %833 = vmatpush.msra.mxu0 0.0
  %834 = vmatpush.msra.mxu0 0.0
  %835 = vmatpush.msra.mxu0 0.0
  %836 = vmatpush.msra.mxu0 0.0
  %837 = vmatpush.msra.mxu0 0.0
  %838 = vmatpush.msra.mxu0 0.0
  %839 = vmatpush.msra.mxu0 0.0
  %840 = vmatpush.msra.mxu0 0.0
  %841 = vmatpush.msra.mxu0 0.0
  %842 = vmatpush.msra.mxu0 %v654
  %843 = vmatmul.f32.gmra.mxu0 %v825
  %v844 = vpop.f32.mrf.mxu0
  %v845 = vadd.f32 0.0, %v844
  %846 = vdwg.mxu0
  %v848 = vsel %vm502, %v584, 0
  %850 = vmatpush.msra.mxu0 0.0
  %851 = vmatpush.msra.mxu0 0.0
  %852 = vmatpush.msra.mxu0 0.0
  %853 = vmatpush.msra.mxu0 0.0
  %854 = vmatpush.msra.mxu0 0.0
  %855 = vmatpush.msra.mxu0 0.0
  %856 = vmatpush.msra.mxu0 0.0
  %857 = vmatpush.msra.mxu0 0.0
  %858 = vmatpush.msra.mxu0 0.0
  %859 = vmatpush.msra.mxu0 0.0
  %860 = vmatpush.msra.mxu0 0.0
  %861 = vmatpush.msra.mxu0 0.0
  %862 = vmatpush.msra.mxu0 0.0
  %863 = vmatpush.msra.mxu0 0.0
  %864 = vmatpush.msra.mxu0 0.0
  %865 = vmatpush.msra.mxu0 %v655
  %866 = vmatmul.f32.gmra.mxu0 %v848
  %v867 = vpop.f32.mrf.mxu0
  %v868 = vadd.f32 0.0, %v867
  %869 = vdwg.mxu0
  %v871 = vsel %vm502, %v586, 0
  %873 = vmatpush.msra.mxu0 0.0
  %874 = vmatpush.msra.mxu0 0.0
  %875 = vmatpush.msra.mxu0 0.0
  %876 = vmatpush.msra.mxu0 0.0
  %877 = vmatpush.msra.mxu0 0.0
  %878 = vmatpush.msra.mxu0 0.0
  %879 = vmatpush.msra.mxu0 0.0
  %880 = vmatpush.msra.mxu0 0.0
  %881 = vmatpush.msra.mxu0 0.0
  %882 = vmatpush.msra.mxu0 0.0
  %883 = vmatpush.msra.mxu0 0.0
  %884 = vmatpush.msra.mxu0 0.0
  %885 = vmatpush.msra.mxu0 0.0
  %886 = vmatpush.msra.mxu0 0.0
  %887 = vmatpush.msra.mxu0 0.0
  %888 = vmatpush.msra.mxu0 %v656
  %889 = vmatmul.f32.gmra.mxu0 %v871
  %v890 = vpop.f32.mrf.mxu0
  %v891 = vadd.f32 0.0, %v890
  %892 = vdwg.mxu0
  %v894 = vsel %vm502, %v588, 0
  %896 = vmatpush.msra.mxu0 0.0
  %897 = vmatpush.msra.mxu0 0.0
  %898 = vmatpush.msra.mxu0 0.0
  %899 = vmatpush.msra.mxu0 0.0
  %900 = vmatpush.msra.mxu0 0.0
  %901 = vmatpush.msra.mxu0 0.0
  %902 = vmatpush.msra.mxu0 0.0
  %903 = vmatpush.msra.mxu0 0.0
  %904 = vmatpush.msra.mxu0 0.0
  %905 = vmatpush.msra.mxu0 0.0
  %906 = vmatpush.msra.mxu0 0.0
  %907 = vmatpush.msra.mxu0 0.0
  %908 = vmatpush.msra.mxu0 0.0
  %909 = vmatpush.msra.mxu0 0.0
  %910 = vmatpush.msra.mxu0 0.0
  %911 = vmatpush.msra.mxu0 %v657
  %912 = vmatmul.f32.gmra.mxu0 %v894
  %v913 = vpop.f32.mrf.mxu0
  %v914 = vadd.f32 0.0, %v913
  %915 = vdwg.mxu0
  %v917 = vsel %vm502, %v590, 0
  %919 = vmatpush.msra.mxu0 0.0
  %920 = vmatpush.msra.mxu0 0.0
  %921 = vmatpush.msra.mxu0 0.0
  %922 = vmatpush.msra.mxu0 0.0
  %923 = vmatpush.msra.mxu0 0.0
  %924 = vmatpush.msra.mxu0 0.0
  %925 = vmatpush.msra.mxu0 0.0
  %926 = vmatpush.msra.mxu0 0.0
  %927 = vmatpush.msra.mxu0 0.0
  %928 = vmatpush.msra.mxu0 0.0
  %929 = vmatpush.msra.mxu0 0.0
  %930 = vmatpush.msra.mxu0 0.0
  %931 = vmatpush.msra.mxu0 0.0
  %932 = vmatpush.msra.mxu0 0.0
  %933 = vmatpush.msra.mxu0 0.0
  %934 = vmatpush.msra.mxu0 %v658
  %935 = vmatmul.f32.gmra.mxu0 %v917
  %v936 = vpop.f32.mrf.mxu0
  %v937 = vadd.f32 0.0, %v936
  %938 = vdwg.mxu0
  %v940 = vsel %vm502, %v592, 0
  %942 = vmatpush.msra.mxu0 0.0
  %943 = vmatpush.msra.mxu0 0.0
  %944 = vmatpush.msra.mxu0 0.0
  %945 = vmatpush.msra.mxu0 0.0
  %946 = vmatpush.msra.mxu0 0.0
  %947 = vmatpush.msra.mxu0 0.0
  %948 = vmatpush.msra.mxu0 0.0
  %949 = vmatpush.msra.mxu0 0.0
  %950 = vmatpush.msra.mxu0 0.0
  %951 = vmatpush.msra.mxu0 0.0
  %952 = vmatpush.msra.mxu0 0.0
  %953 = vmatpush.msra.mxu0 0.0
  %954 = vmatpush.msra.mxu0 0.0
  %955 = vmatpush.msra.mxu0 0.0
  %956 = vmatpush.msra.mxu0 0.0
  %957 = vmatpush.msra.mxu0 %v659
  %958 = vmatmul.f32.gmra.mxu0 %v940
  %v959 = vpop.f32.mrf.mxu0
  %v960 = vadd.f32 0.0, %v959
  %961 = vdwg.mxu0
  %v963 = vsel %vm502, %v594, 0
  %965 = vmatpush.msra.mxu0 0.0
  %966 = vmatpush.msra.mxu0 0.0
  %967 = vmatpush.msra.mxu0 0.0
  %968 = vmatpush.msra.mxu0 0.0
  %969 = vmatpush.msra.mxu0 0.0
  %970 = vmatpush.msra.mxu0 0.0
  %971 = vmatpush.msra.mxu0 0.0
  %972 = vmatpush.msra.mxu0 0.0
  %973 = vmatpush.msra.mxu0 0.0
  %974 = vmatpush.msra.mxu0 0.0
  %975 = vmatpush.msra.mxu0 0.0
  %976 = vmatpush.msra.mxu0 0.0
  %977 = vmatpush.msra.mxu0 0.0
  %978 = vmatpush.msra.mxu0 0.0
  %979 = vmatpush.msra.mxu0 0.0
  %980 = vmatpush.msra.mxu0 %v660
  %981 = vmatmul.f32.gmra.mxu0 %v963
  %v982 = vpop.f32.mrf.mxu0
  %v983 = vadd.f32 0.0, %v982
  %984 = vdwg.mxu0
  %v986 = vsel %vm502, %v596, 0
  %988 = vmatpush.msra.mxu0 0.0
  %989 = vmatpush.msra.mxu0 0.0
  %990 = vmatpush.msra.mxu0 0.0
  %991 = vmatpush.msra.mxu0 0.0
  %992 = vmatpush.msra.mxu0 0.0
  %993 = vmatpush.msra.mxu0 0.0
  %994 = vmatpush.msra.mxu0 0.0
  %995 = vmatpush.msra.mxu0 0.0
  %996 = vmatpush.msra.mxu0 0.0
  %997 = vmatpush.msra.mxu0 0.0
  %998 = vmatpush.msra.mxu0 0.0
  %999 = vmatpush.msra.mxu0 0.0
  %1000 = vmatpush.msra.mxu0 0.0
  %1001 = vmatpush.msra.mxu0 0.0
  %1002 = vmatpush.msra.mxu0 0.0
  %1003 = vmatpush.msra.mxu0 %v661
  %1004 = vmatmul.f32.gmra.mxu0 %v986
  %v1005 = vpop.f32.mrf.mxu0
  %v1006 = vadd.f32 0.0, %v1005
  %1007 = vdwg.mxu0
  %v1009 = vsel %vm502, %v598, 0
  %1011 = vmatpush.msra.mxu0 0.0
  %1012 = vmatpush.msra.mxu0 0.0
  %1013 = vmatpush.msra.mxu0 0.0
  %1014 = vmatpush.msra.mxu0 0.0
  %1015 = vmatpush.msra.mxu0 0.0
  %1016 = vmatpush.msra.mxu0 0.0
  %1017 = vmatpush.msra.mxu0 0.0
  %1018 = vmatpush.msra.mxu0 0.0
  %1019 = vmatpush.msra.mxu0 0.0
  %1020 = vmatpush.msra.mxu0 0.0
  %1021 = vmatpush.msra.mxu0 0.0
  %1022 = vmatpush.msra.mxu0 0.0
  %1023 = vmatpush.msra.mxu0 0.0
  %1024 = vmatpush.msra.mxu0 0.0
  %1025 = vmatpush.msra.mxu0 0.0
  %1026 = vmatpush.msra.mxu0 %v662
  %1027 = vmatmul.f32.gmra.mxu0 %v1009
  %v1028 = vpop.f32.mrf.mxu0
  %v1029 = vadd.f32 0.0, %v1028
  %1030 = vdwg.mxu0
  %v1031 = vrcp.pop %v601
  %v1032 = vrcp.pop %v604
  %v1033 = vrcp.pop %v607
  %v1034 = vrcp.pop %v610
  %v1035 = vrcp.pop %v613
  %v1036 = vrcp.pop %v616
  %v1037 = vrcp.pop %v619
  %v1038 = vrcp.pop %v622
  %v1039 = vrcp.pop %v625
  %v1040 = vrcp.pop %v628
  %v1041 = vrcp.pop %v631
  %v1042 = vrcp.pop %v634
  %v1043 = vrcp.pop %v637
  %v1044 = vrcp.pop %v640
  %v1045 = vrcp.pop %v643
  %v1046 = vrcp.pop %v646
  %v1047 = vmul.f32 %v684, %v1031
  %v1048 = vmul.f32 %v707, %v1032
  %v1049 = vmul.f32 %v730, %v1033
  %v1050 = vmul.f32 %v753, %v1034
  %v1051 = vmul.f32 %v776, %v1035
  %v1052 = vmul.f32 %v799, %v1036
  %v1053 = vmul.f32 %v822, %v1037
  %v1054 = vmul.f32 %v845, %v1038
  %v1055 = vmul.f32 %v868, %v1039
  %v1056 = vmul.f32 %v891, %v1040
  %v1057 = vmul.f32 %v914, %v1041
  %v1058 = vmul.f32 %v937, %v1042
  %v1059 = vmul.f32 %v960, %v1043
  %v1060 = vmul.f32 %v983, %v1044
  %v1061 = vmul.f32 %v1006, %v1045
  %v1062 = vmul.f32 %v1029, %v1046
  %1063 = vst.msk [vmem:[%s4] sm:$0xff] %vm65, %v1047
  %1064 = vst.msk [vmem:[%s4 + $0x8] sm:$0xff] %vm65, %v1048
  %1065 = vst.msk [vmem:[%s4 + $0x10] sm:$0xff] %vm65, %v1049
  %1066 = vst.msk [vmem:[%s4 + $0x18] sm:$0xff] %vm65, %v1050
  %1067 = vst.msk [vmem:[%s4 + $0x20] sm:$0xff] %vm65, %v1051
  %1068 = vst.msk [vmem:[%s4 + $0x28] sm:$0xff] %vm65, %v1052
  %1069 = vst.msk [vmem:[%s4 + $0x30] sm:$0xff] %vm65, %v1053
  %1070 = vst.msk [vmem:[%s4 + $0x38] sm:$0xff] %vm65, %v1054
  %1071 = vst.msk [vmem:[%s4 + $0x40] sm:$0xff] %vm65, %v1055
  %1072 = vst.msk [vmem:[%s4 + $0x48] sm:$0xff] %vm65, %v1056
  %1073 = vst.msk [vmem:[%s4 + $0x50] sm:$0xff] %vm65, %v1057
  %1074 = vst.msk [vmem:[%s4 + $0x58] sm:$0xff] %vm65, %v1058
  %1075 = vst.msk [vmem:[%s4 + $0x60] sm:$0xff] %vm65, %v1059
  %1076 = vst.msk [vmem:[%s4 + $0x68] sm:$0xff] %vm65, %v1060
  %1077 = vst.msk [vmem:[%s4 + $0x70] sm:$0xff] %vm65, %v1061
  %1078 = vst.msk [vmem:[%s4 + $0x78] sm:$0xff] %vm65, %v1062
  // Predicated region
  $region18: #{st_self_attention.16} parent=0 // pred_check
    _
  $region19: #{st_self_attention.16} parent=0 // pred_check_branch
    %1080 = sbr.rel (0) target = $region21
  $region20: #{st_self_attention.16} parent=0 // pred_region
    _
  $region21: #{st_self_attention.16} parent=0 // pred_fallthru
    _
  // Predicated region
  $region22: #{st_self_attention.16} parent=0 // pred_check
    _
  $region23: #{st_self_attention.16} parent=0 // pred_check_branch
    %1082 = sbr.rel (0) target = $region25
  $region24: #{st_self_attention.16} parent=0 // pred_region
    _
  $region25: #{st_self_attention.16} parent=0 // pred_fallthru
    _

// kernel: st_self_attention.15
$region0: #{st_self_attention.15}
  #allocation0 [shape = 'u32[]', space=smem, size = 0x4, offset = 0x4, fixed_abs, tag = 'smem constant byte address 0x4 - core index']
  #allocation1 [shape = 'u32[72,128]{1,0:T(1,128)}', space=vmem, size = 0x9000, scoped, tag = 'internal scratch']
  %s0 = inlined_call_operand.vmem [shape: f32[32,8,4], index: 0, kind: input, shape index: {}]
  %s1 = inlined_call_operand.vmem [shape: f32[32,8,4], index: 1, kind: input, shape index: {}]
  %s2 = inlined_call_operand.vmem [shape: f32[32,8,4], index: 2, kind: input, shape index: {}]
  %s3 = inlined_call_operand.vmem [shape: s32[8,8], index: 3, kind: input, shape index: {}]
  %s4 = inlined_call_operand.vmem [shape: f32[32,8,4], index: 4, kind: output, shape index: {}]
  %s5 = sld [smem:[#allocation0]]
  $region26: #{st_self_attention.15} parent=0
    _
  %s7 = ssub.s32 1, %s5
  %s8 = scalar_select 0, %s7, %s5
  // Predicated region
  $region2: #{st_self_attention.15} parent=0 // pred_check
    _
  $region3: #{st_self_attention.15} parent=0 // pred_check_branch
    %10 = sbr.rel (0) target = $region5
  $region4: #{st_self_attention.15} parent=0 // pred_region
    _
  $region5: #{st_self_attention.15} parent=0 // pred_fallthru
    _
  // Predicated region
  $region6: #{st_self_attention.15} parent=0 // pred_check
    _
  $region7: #{st_self_attention.15} parent=0 // pred_check_branch
    %12 = sbr.rel (0) target = $region9
  $region8: #{st_self_attention.15} parent=0 // pred_region
    _
  $region9: #{st_self_attention.15} parent=0 // pred_fallthru
    _
  // Predicated region
  $region10: #{st_self_attention.15} parent=0 // pred_check
    _
  $region11: #{st_self_attention.15} parent=0 // pred_check_branch
    %14 = sbr.rel (0) target = $region13
  $region12: #{st_self_attention.15} parent=0 // pred_region
    _
  $region13: #{st_self_attention.15} parent=0 // pred_fallthru
    _
  // Predicated region
  $region14: #{st_self_attention.15} parent=0 // pred_check
    _
  $region15: #{st_self_attention.15} parent=0 // pred_check_branch
    %16 = sbr.rel (0) target = $region17
  $region16: #{st_self_attention.15} parent=0 // pred_region
    _
  $region17: #{st_self_attention.15} parent=0 // pred_fallthru
    _
  %v17 = vld [vmem:[%s0] sm:$0xff]
  %v18 = vld [vmem:[%s0 + $0x8] sm:$0xff]
  %v19 = vld [vmem:[%s0 + $0x10] sm:$0xff]
  %v20 = vld [vmem:[%s0 + $0x18] sm:$0xff]
  %v21 = vld [vmem:[%s0 + $0x20] sm:$0xff]
  %v22 = vld [vmem:[%s0 + $0x28] sm:$0xff]
  %v23 = vld [vmem:[%s0 + $0x30] sm:$0xff]
  %v24 = vld [vmem:[%s0 + $0x38] sm:$0xff]
  %v25 = vld [vmem:[%s0 + $0x40] sm:$0xff]
  %v26 = vld [vmem:[%s0 + $0x48] sm:$0xff]
  %v27 = vld [vmem:[%s0 + $0x50] sm:$0xff]
  %v28 = vld [vmem:[%s0 + $0x58] sm:$0xff]
  %v29 = vld [vmem:[%s0 + $0x60] sm:$0xff]
  %v30 = vld [vmem:[%s0 + $0x68] sm:$0xff]
  %v31 = vld [vmem:[%s0 + $0x70] sm:$0xff]
  %v32 = vld [vmem:[%s0 + $0x78] sm:$0xff]
  %v33 = vld [vmem:[%s0 + $0x80] sm:$0xff]
  %v34 = vld [vmem:[%s0 + $0x88] sm:$0xff]
  %v35 = vld [vmem:[%s0 + $0x90] sm:$0xff]
  %v36 = vld [vmem:[%s0 + $0x98] sm:$0xff]
  %v37 = vld [vmem:[%s0 + $0xa0] sm:$0xff]
  %v38 = vld [vmem:[%s0 + $0xa8] sm:$0xff]
  %v39 = vld [vmem:[%s0 + $0xb0] sm:$0xff]
  %v40 = vld [vmem:[%s0 + $0xb8] sm:$0xff]
  %v41 = vld [vmem:[%s0 + $0xc0] sm:$0xff]
  %v42 = vld [vmem:[%s0 + $0xc8] sm:$0xff]
  %v43 = vld [vmem:[%s0 + $0xd0] sm:$0xff]
  %v44 = vld [vmem:[%s0 + $0xd8] sm:$0xff]
  %v45 = vld [vmem:[%s0 + $0xe0] sm:$0xff]
  %v46 = vld [vmem:[%s0 + $0xe8] sm:$0xff]
  %v47 = vld [vmem:[%s0 + $0xf0] sm:$0xff]
  %v48 = vld [vmem:[%s0 + $0xf8] sm:$0xff]
  %v49 = vmul.f32 %v17, 0.5
  %v50 = vmul.f32 %v18, 0.5
  %v51 = vmul.f32 %v19, 0.5
  %v52 = vmul.f32 %v20, 0.5
  %v53 = vmul.f32 %v21, 0.5
  %v54 = vmul.f32 %v22, 0.5
  %v55 = vmul.f32 %v23, 0.5
  %v56 = vmul.f32 %v24, 0.5
  %v57 = vmul.f32 %v25, 0.5
  %v58 = vmul.f32 %v26, 0.5
  %v59 = vmul.f32 %v27, 0.5
  %v60 = vmul.f32 %v28, 0.5
  %v61 = vmul.f32 %v29, 0.5
  %v62 = vmul.f32 %v30, 0.5
  %v63 = vmul.f32 %v31, 0.5
  %v64 = vmul.f32 %v32, 0.5
  %v65 = vmul.f32 %v33, 0.5
  %v66 = vmul.f32 %v34, 0.5
  %v67 = vmul.f32 %v35, 0.5
  %v68 = vmul.f32 %v36, 0.5
  %v69 = vmul.f32 %v37, 0.5
  %v70 = vmul.f32 %v38, 0.5
  %v71 = vmul.f32 %v39, 0.5
  %v72 = vmul.f32 %v40, 0.5
  %v73 = vmul.f32 %v41, 0.5
  %v74 = vmul.f32 %v42, 0.5
  %v75 = vmul.f32 %v43, 0.5
  %v76 = vmul.f32 %v44, 0.5
  %v77 = vmul.f32 %v45, 0.5
  %v78 = vmul.f32 %v46, 0.5
  %v79 = vmul.f32 %v47, 0.5
  %v80 = vmul.f32 %v48, 0.5
  %v81 = vld [vmem:[%s1] sm:$0xff]
  %v82 = vld [vmem:[%s1 + $0x8] sm:$0xff]
  %v83 = vld [vmem:[%s1 + $0x10] sm:$0xff]
  %v84 = vld [vmem:[%s1 + $0x18] sm:$0xff]
  %v85 = vld [vmem:[%s1 + $0x20] sm:$0xff]
  %v86 = vld [vmem:[%s1 + $0x28] sm:$0xff]
  %v87 = vld [vmem:[%s1 + $0x30] sm:$0xff]
  %v88 = vld [vmem:[%s1 + $0x38] sm:$0xff]
  %v89 = vld [vmem:[%s1 + $0x40] sm:$0xff]
  %v90 = vld [vmem:[%s1 + $0x48] sm:$0xff]
  %v91 = vld [vmem:[%s1 + $0x50] sm:$0xff]
  %v92 = vld [vmem:[%s1 + $0x58] sm:$0xff]
  %v93 = vld [vmem:[%s1 + $0x60] sm:$0xff]
  %v94 = vld [vmem:[%s1 + $0x68] sm:$0xff]
  %v95 = vld [vmem:[%s1 + $0x70] sm:$0xff]
  %v96 = vld [vmem:[%s1 + $0x78] sm:$0xff]
  %v97 = vld [vmem:[%s1 + $0x80] sm:$0xff]
  %v98 = vld [vmem:[%s1 + $0x88] sm:$0xff]
  %v99 = vld [vmem:[%s1 + $0x90] sm:$0xff]
  %v100 = vld [vmem:[%s1 + $0x98] sm:$0xff]
  %v101 = vld [vmem:[%s1 + $0xa0] sm:$0xff]
  %v102 = vld [vmem:[%s1 + $0xa8] sm:$0xff]
  %v103 = vld [vmem:[%s1 + $0xb0] sm:$0xff]
  %v104 = vld [vmem:[%s1 + $0xb8] sm:$0xff]
  %v105 = vld [vmem:[%s1 + $0xc0] sm:$0xff]
  %v106 = vld [vmem:[%s1 + $0xc8] sm:$0xff]
  %v107 = vld [vmem:[%s1 + $0xd0] sm:$0xff]
  %v108 = vld [vmem:[%s1 + $0xd8] sm:$0xff]
  %v109 = vld [vmem:[%s1 + $0xe0] sm:$0xff]
  %v110 = vld [vmem:[%s1 + $0xe8] sm:$0xff]
  %v111 = vld [vmem:[%s1 + $0xf0] sm:$0xff]
  %v112 = vld [vmem:[%s1 + $0xf8] sm:$0xff]
  %vm113 = vcmask 31744
  %v115 = vsel %vm113, %v49, 0
  %v118 = vsel %vm113, %v81, 0
  %120 = vmatpush.xpose.msra.mxu0 0.0
  %121 = vmatpush.xpose.msra.mxu0 0.0
  %122 = vmatpush.xpose.msra.mxu0 0.0
  %123 = vmatpush.xpose.msra.mxu0 0.0
  %124 = vmatpush.xpose.msra.mxu0 0.0
  %125 = vmatpush.xpose.msra.mxu0 0.0
  %126 = vmatpush.xpose.msra.mxu0 0.0
  %127 = vmatpush.xpose.msra.mxu0 0.0
  %128 = vmatpush.xpose.msra.mxu0 0.0
  %129 = vmatpush.xpose.msra.mxu0 0.0
  %130 = vmatpush.xpose.msra.mxu0 0.0
  %131 = vmatpush.xpose.msra.mxu0 0.0
  %132 = vmatpush.xpose.msra.mxu0 0.0
  %133 = vmatpush.xpose.msra.mxu0 0.0
  %134 = vmatpush.xpose.msra.mxu0 0.0
  %135 = vmatpush.xpose.msra.mxu0 %v118
  %136 = vmatmul.f32.gmra.mxu0 %v115
  %v137 = vpop.f32.mrf.mxu0
  %v138 = vadd.f32 0.0, %v137
  %139 = vdwg.mxu0
  %v141 = vsel %vm113, %v50, 0
  %v144 = vsel %vm113, %v82, 0
  %146 = vmatpush.xpose.msra.mxu0 0.0
  %147 = vmatpush.xpose.msra.mxu0 0.0
  %148 = vmatpush.xpose.msra.mxu0 0.0
  %149 = vmatpush.xpose.msra.mxu0 0.0
  %150 = vmatpush.xpose.msra.mxu0 0.0
  %151 = vmatpush.xpose.msra.mxu0 0.0
  %152 = vmatpush.xpose.msra.mxu0 0.0
  %153 = vmatpush.xpose.msra.mxu0 0.0
  %154 = vmatpush.xpose.msra.mxu0 0.0
  %155 = vmatpush.xpose.msra.mxu0 0.0
  %156 = vmatpush.xpose.msra.mxu0 0.0
  %157 = vmatpush.xpose.msra.mxu0 0.0
  %158 = vmatpush.xpose.msra.mxu0 0.0
  %159 = vmatpush.xpose.msra.mxu0 0.0
  %160 = vmatpush.xpose.msra.mxu0 0.0
  %161 = vmatpush.xpose.msra.mxu0 %v144
  %162 = vmatmul.f32.gmra.mxu0 %v141
  %v163 = vpop.f32.mrf.mxu0
  %v164 = vadd.f32 0.0, %v163
  %165 = vdwg.mxu0
  %v167 = vsel %vm113, %v51, 0
  %v170 = vsel %vm113, %v83, 0
  %172 = vmatpush.xpose.msra.mxu0 0.0
  %173 = vmatpush.xpose.msra.mxu0 0.0
  %174 = vmatpush.xpose.msra.mxu0 0.0
  %175 = vmatpush.xpose.msra.mxu0 0.0
  %176 = vmatpush.xpose.msra.mxu0 0.0
  %177 = vmatpush.xpose.msra.mxu0 0.0
  %178 = vmatpush.xpose.msra.mxu0 0.0
  %179 = vmatpush.xpose.msra.mxu0 0.0
  %180 = vmatpush.xpose.msra.mxu0 0.0
  %181 = vmatpush.xpose.msra.mxu0 0.0
  %182 = vmatpush.xpose.msra.mxu0 0.0
  %183 = vmatpush.xpose.msra.mxu0 0.0
  %184 = vmatpush.xpose.msra.mxu0 0.0
  %185 = vmatpush.xpose.msra.mxu0 0.0
  %186 = vmatpush.xpose.msra.mxu0 0.0
  %187 = vmatpush.xpose.msra.mxu0 %v170
  %188 = vmatmul.f32.gmra.mxu0 %v167
  %v189 = vpop.f32.mrf.mxu0
  %v190 = vadd.f32 0.0, %v189
  %191 = vdwg.mxu0
  %v193 = vsel %vm113, %v52, 0
  %v196 = vsel %vm113, %v84, 0
  %198 = vmatpush.xpose.msra.mxu0 0.0
  %199 = vmatpush.xpose.msra.mxu0 0.0
  %200 = vmatpush.xpose.msra.mxu0 0.0
  %201 = vmatpush.xpose.msra.mxu0 0.0
  %202 = vmatpush.xpose.msra.mxu0 0.0
  %203 = vmatpush.xpose.msra.mxu0 0.0
  %204 = vmatpush.xpose.msra.mxu0 0.0
  %205 = vmatpush.xpose.msra.mxu0 0.0
  %206 = vmatpush.xpose.msra.mxu0 0.0
  %207 = vmatpush.xpose.msra.mxu0 0.0
  %208 = vmatpush.xpose.msra.mxu0 0.0
  %209 = vmatpush.xpose.msra.mxu0 0.0
  %210 = vmatpush.xpose.msra.mxu0 0.0
  %211 = vmatpush.xpose.msra.mxu0 0.0
  %212 = vmatpush.xpose.msra.mxu0 0.0
  %213 = vmatpush.xpose.msra.mxu0 %v196
  %214 = vmatmul.f32.gmra.mxu0 %v193
  %v215 = vpop.f32.mrf.mxu0
  %v216 = vadd.f32 0.0, %v215
  %217 = vdwg.mxu0
  %v219 = vsel %vm113, %v53, 0
  %v222 = vsel %vm113, %v85, 0
  %224 = vmatpush.xpose.msra.mxu0 0.0
  %225 = vmatpush.xpose.msra.mxu0 0.0
  %226 = vmatpush.xpose.msra.mxu0 0.0
  %227 = vmatpush.xpose.msra.mxu0 0.0
  %228 = vmatpush.xpose.msra.mxu0 0.0
  %229 = vmatpush.xpose.msra.mxu0 0.0
  %230 = vmatpush.xpose.msra.mxu0 0.0
  %231 = vmatpush.xpose.msra.mxu0 0.0
  %232 = vmatpush.xpose.msra.mxu0 0.0
  %233 = vmatpush.xpose.msra.mxu0 0.0
  %234 = vmatpush.xpose.msra.mxu0 0.0
  %235 = vmatpush.xpose.msra.mxu0 0.0
  %236 = vmatpush.xpose.msra.mxu0 0.0
  %237 = vmatpush.xpose.msra.mxu0 0.0
  %238 = vmatpush.xpose.msra.mxu0 0.0
  %239 = vmatpush.xpose.msra.mxu0 %v222
  %240 = vmatmul.f32.gmra.mxu0 %v219
  %v241 = vpop.f32.mrf.mxu0
  %v242 = vadd.f32 0.0, %v241
  %243 = vdwg.mxu0
  %v245 = vsel %vm113, %v54, 0
  %v248 = vsel %vm113, %v86, 0
  %250 = vmatpush.xpose.msra.mxu0 0.0
  %251 = vmatpush.xpose.msra.mxu0 0.0
  %252 = vmatpush.xpose.msra.mxu0 0.0
  %253 = vmatpush.xpose.msra.mxu0 0.0
  %254 = vmatpush.xpose.msra.mxu0 0.0
  %255 = vmatpush.xpose.msra.mxu0 0.0
  %256 = vmatpush.xpose.msra.mxu0 0.0
  %257 = vmatpush.xpose.msra.mxu0 0.0
  %258 = vmatpush.xpose.msra.mxu0 0.0
  %259 = vmatpush.xpose.msra.mxu0 0.0
  %260 = vmatpush.xpose.msra.mxu0 0.0
  %261 = vmatpush.xpose.msra.mxu0 0.0
  %262 = vmatpush.xpose.msra.mxu0 0.0
  %263 = vmatpush.xpose.msra.mxu0 0.0
  %264 = vmatpush.xpose.msra.mxu0 0.0
  %265 = vmatpush.xpose.msra.mxu0 %v248
  %266 = vmatmul.f32.gmra.mxu0 %v245
  %v267 = vpop.f32.mrf.mxu0
  %v268 = vadd.f32 0.0, %v267
  %269 = vdwg.mxu0
  %v271 = vsel %vm113, %v55, 0
  %v274 = vsel %vm113, %v87, 0
  %276 = vmatpush.xpose.msra.mxu0 0.0
  %277 = vmatpush.xpose.msra.mxu0 0.0
  %278 = vmatpush.xpose.msra.mxu0 0.0
  %279 = vmatpush.xpose.msra.mxu0 0.0
  %280 = vmatpush.xpose.msra.mxu0 0.0
  %281 = vmatpush.xpose.msra.mxu0 0.0
  %282 = vmatpush.xpose.msra.mxu0 0.0
  %283 = vmatpush.xpose.msra.mxu0 0.0
  %284 = vmatpush.xpose.msra.mxu0 0.0
  %285 = vmatpush.xpose.msra.mxu0 0.0
  %286 = vmatpush.xpose.msra.mxu0 0.0
  %287 = vmatpush.xpose.msra.mxu0 0.0
  %288 = vmatpush.xpose.msra.mxu0 0.0
  %289 = vmatpush.xpose.msra.mxu0 0.0
  %290 = vmatpush.xpose.msra.mxu0 0.0
  %291 = vmatpush.xpose.msra.mxu0 %v274
  %292 = vmatmul.f32.gmra.mxu0 %v271
  %v293 = vpop.f32.mrf.mxu0
  %v294 = vadd.f32 0.0, %v293
  %295 = vdwg.mxu0
  %v297 = vsel %vm113, %v56, 0
  %v300 = vsel %vm113, %v88, 0
  %302 = vmatpush.xpose.msra.mxu0 0.0
  %303 = vmatpush.xpose.msra.mxu0 0.0
  %304 = vmatpush.xpose.msra.mxu0 0.0
  %305 = vmatpush.xpose.msra.mxu0 0.0
  %306 = vmatpush.xpose.msra.mxu0 0.0
  %307 = vmatpush.xpose.msra.mxu0 0.0
  %308 = vmatpush.xpose.msra.mxu0 0.0
  %309 = vmatpush.xpose.msra.mxu0 0.0
  %310 = vmatpush.xpose.msra.mxu0 0.0
  %311 = vmatpush.xpose.msra.mxu0 0.0
  %312 = vmatpush.xpose.msra.mxu0 0.0
  %313 = vmatpush.xpose.msra.mxu0 0.0
  %314 = vmatpush.xpose.msra.mxu0 0.0
  %315 = vmatpush.xpose.msra.mxu0 0.0
  %316 = vmatpush.xpose.msra.mxu0 0.0
  %317 = vmatpush.xpose.msra.mxu0 %v300
  %318 = vmatmul.f32.gmra.mxu0 %v297
  %v319 = vpop.f32.mrf.mxu0
  %v320 = vadd.f32 0.0, %v319
  %321 = vdwg.mxu0
  %v323 = vsel %vm113, %v57, 0
  %v326 = vsel %vm113, %v89, 0
  %328 = vmatpush.xpose.msra.mxu0 0.0
  %329 = vmatpush.xpose.msra.mxu0 0.0
  %330 = vmatpush.xpose.msra.mxu0 0.0
  %331 = vmatpush.xpose.msra.mxu0 0.0
  %332 = vmatpush.xpose.msra.mxu0 0.0
  %333 = vmatpush.xpose.msra.mxu0 0.0
  %334 = vmatpush.xpose.msra.mxu0 0.0
  %335 = vmatpush.xpose.msra.mxu0 0.0
  %336 = vmatpush.xpose.msra.mxu0 0.0
  %337 = vmatpush.xpose.msra.mxu0 0.0
  %338 = vmatpush.xpose.msra.mxu0 0.0
  %339 = vmatpush.xpose.msra.mxu0 0.0
  %340 = vmatpush.xpose.msra.mxu0 0.0
  %341 = vmatpush.xpose.msra.mxu0 0.0
  %342 = vmatpush.xpose.msra.mxu0 0.0
  %343 = vmatpush.xpose.msra.mxu0 %v326
  %344 = vmatmul.f32.gmra.mxu0 %v323
  %v345 = vpop.f32.mrf.mxu0
  %v346 = vadd.f32 0.0, %v345
  %347 = vdwg.mxu0
  %v349 = vsel %vm113, %v58, 0
  %v352 = vsel %vm113, %v90, 0
  %354 = vmatpush.xpose.msra.mxu0 0.0
  %355 = vmatpush.xpose.msra.mxu0 0.0
  %356 = vmatpush.xpose.msra.mxu0 0.0
  %357 = vmatpush.xpose.msra.mxu0 0.0
  %358 = vmatpush.xpose.msra.mxu0 0.0
  %359 = vmatpush.xpose.msra.mxu0 0.0
  %360 = vmatpush.xpose.msra.mxu0 0.0
  %361 = vmatpush.xpose.msra.mxu0 0.0
  %362 = vmatpush.xpose.msra.mxu0 0.0
  %363 = vmatpush.xpose.msra.mxu0 0.0
  %364 = vmatpush.xpose.msra.mxu0 0.0
  %365 = vmatpush.xpose.msra.mxu0 0.0
  %366 = vmatpush.xpose.msra.mxu0 0.0
  %367 = vmatpush.xpose.msra.mxu0 0.0
  %368 = vmatpush.xpose.msra.mxu0 0.0
  %369 = vmatpush.xpose.msra.mxu0 %v352
  %370 = vmatmul.f32.gmra.mxu0 %v349
  %v371 = vpop.f32.mrf.mxu0
  %v372 = vadd.f32 0.0, %v371
  %373 = vdwg.mxu0
  %v375 = vsel %vm113, %v59, 0
  %v378 = vsel %vm113, %v91, 0
  %380 = vmatpush.xpose.msra.mxu0 0.0
  %381 = vmatpush.xpose.msra.mxu0 0.0
  %382 = vmatpush.xpose.msra.mxu0 0.0
  %383 = vmatpush.xpose.msra.mxu0 0.0
  %384 = vmatpush.xpose.msra.mxu0 0.0
  %385 = vmatpush.xpose.msra.mxu0 0.0
  %386 = vmatpush.xpose.msra.mxu0 0.0
  %387 = vmatpush.xpose.msra.mxu0 0.0
  %388 = vmatpush.xpose.msra.mxu0 0.0
  %389 = vmatpush.xpose.msra.mxu0 0.0
  %390 = vmatpush.xpose.msra.mxu0 0.0
  %391 = vmatpush.xpose.msra.mxu0 0.0
  %392 = vmatpush.xpose.msra.mxu0 0.0
  %393 = vmatpush.xpose.msra.mxu0 0.0
  %394 = vmatpush.xpose.msra.mxu0 0.0
  %395 = vmatpush.xpose.msra.mxu0 %v378
  %396 = vmatmul.f32.gmra.mxu0 %v375
  %v397 = vpop.f32.mrf.mxu0
  %v398 = vadd.f32 0.0, %v397
  %399 = vdwg.mxu0
  %v401 = vsel %vm113, %v60, 0
  %v404 = vsel %vm113, %v92, 0
  %406 = vmatpush.xpose.msra.mxu0 0.0
  %407 = vmatpush.xpose.msra.mxu0 0.0
  %408 = vmatpush.xpose.msra.mxu0 0.0
  %409 = vmatpush.xpose.msra.mxu0 0.0
  %410 = vmatpush.xpose.msra.mxu0 0.0
  %411 = vmatpush.xpose.msra.mxu0 0.0
  %412 = vmatpush.xpose.msra.mxu0 0.0
  %413 = vmatpush.xpose.msra.mxu0 0.0
  %414 = vmatpush.xpose.msra.mxu0 0.0
  %415 = vmatpush.xpose.msra.mxu0 0.0
  %416 = vmatpush.xpose.msra.mxu0 0.0
  %417 = vmatpush.xpose.msra.mxu0 0.0
  %418 = vmatpush.xpose.msra.mxu0 0.0
  %419 = vmatpush.xpose.msra.mxu0 0.0
  %420 = vmatpush.xpose.msra.mxu0 0.0
  %421 = vmatpush.xpose.msra.mxu0 %v404
  %422 = vmatmul.f32.gmra.mxu0 %v401
  %v423 = vpop.f32.mrf.mxu0
  %v424 = vadd.f32 0.0, %v423
  %425 = vdwg.mxu0
  %v427 = vsel %vm113, %v61, 0
  %v430 = vsel %vm113, %v93, 0
  %432 = vmatpush.xpose.msra.mxu0 0.0
  %433 = vmatpush.xpose.msra.mxu0 0.0
  %434 = vmatpush.xpose.msra.mxu0 0.0
  %435 = vmatpush.xpose.msra.mxu0 0.0
  %436 = vmatpush.xpose.msra.mxu0 0.0
  %437 = vmatpush.xpose.msra.mxu0 0.0
  %438 = vmatpush.xpose.msra.mxu0 0.0
  %439 = vmatpush.xpose.msra.mxu0 0.0
  %440 = vmatpush.xpose.msra.mxu0 0.0
  %441 = vmatpush.xpose.msra.mxu0 0.0
  %442 = vmatpush.xpose.msra.mxu0 0.0
  %443 = vmatpush.xpose.msra.mxu0 0.0
  %444 = vmatpush.xpose.msra.mxu0 0.0
  %445 = vmatpush.xpose.msra.mxu0 0.0
  %446 = vmatpush.xpose.msra.mxu0 0.0
  %447 = vmatpush.xpose.msra.mxu0 %v430
  %448 = vmatmul.f32.gmra.mxu0 %v427
  %v449 = vpop.f32.mrf.mxu0
  %v450 = vadd.f32 0.0, %v449
  %451 = vdwg.mxu0
  %v453 = vsel %vm113, %v62, 0
  %v456 = vsel %vm113, %v94, 0
  %458 = vmatpush.xpose.msra.mxu0 0.0
  %459 = vmatpush.xpose.msra.mxu0 0.0
  %460 = vmatpush.xpose.msra.mxu0 0.0
  %461 = vmatpush.xpose.msra.mxu0 0.0
  %462 = vmatpush.xpose.msra.mxu0 0.0
  %463 = vmatpush.xpose.msra.mxu0 0.0
  %464 = vmatpush.xpose.msra.mxu0 0.0
  %465 = vmatpush.xpose.msra.mxu0 0.0
  %466 = vmatpush.xpose.msra.mxu0 0.0
  %467 = vmatpush.xpose.msra.mxu0 0.0
  %468 = vmatpush.xpose.msra.mxu0 0.0
  %469 = vmatpush.xpose.msra.mxu0 0.0
  %470 = vmatpush.xpose.msra.mxu0 0.0
  %471 = vmatpush.xpose.msra.mxu0 0.0
  %472 = vmatpush.xpose.msra.mxu0 0.0
  %473 = vmatpush.xpose.msra.mxu0 %v456
  %474 = vmatmul.f32.gmra.mxu0 %v453
  %v475 = vpop.f32.mrf.mxu0
  %v476 = vadd.f32 0.0, %v475
  %477 = vdwg.mxu0
  %v479 = vsel %vm113, %v63, 0
  %v482 = vsel %vm113, %v95, 0
  %484 = vmatpush.xpose.msra.mxu0 0.0
  %485 = vmatpush.xpose.msra.mxu0 0.0
  %486 = vmatpush.xpose.msra.mxu0 0.0
  %487 = vmatpush.xpose.msra.mxu0 0.0
  %488 = vmatpush.xpose.msra.mxu0 0.0
  %489 = vmatpush.xpose.msra.mxu0 0.0
  %490 = vmatpush.xpose.msra.mxu0 0.0
  %491 = vmatpush.xpose.msra.mxu0 0.0
  %492 = vmatpush.xpose.msra.mxu0 0.0
  %493 = vmatpush.xpose.msra.mxu0 0.0
  %494 = vmatpush.xpose.msra.mxu0 0.0
  %495 = vmatpush.xpose.msra.mxu0 0.0
  %496 = vmatpush.xpose.msra.mxu0 0.0
  %497 = vmatpush.xpose.msra.mxu0 0.0
  %498 = vmatpush.xpose.msra.mxu0 0.0
  %499 = vmatpush.xpose.msra.mxu0 %v482
  %500 = vmatmul.f32.gmra.mxu0 %v479
  %v501 = vpop.f32.mrf.mxu0
  %v502 = vadd.f32 0.0, %v501
  %503 = vdwg.mxu0
  %v505 = vsel %vm113, %v64, 0
  %v508 = vsel %vm113, %v96, 0
  %510 = vmatpush.xpose.msra.mxu0 0.0
  %511 = vmatpush.xpose.msra.mxu0 0.0
  %512 = vmatpush.xpose.msra.mxu0 0.0
  %513 = vmatpush.xpose.msra.mxu0 0.0
  %514 = vmatpush.xpose.msra.mxu0 0.0
  %515 = vmatpush.xpose.msra.mxu0 0.0
  %516 = vmatpush.xpose.msra.mxu0 0.0
  %517 = vmatpush.xpose.msra.mxu0 0.0
  %518 = vmatpush.xpose.msra.mxu0 0.0
  %519 = vmatpush.xpose.msra.mxu0 0.0
  %520 = vmatpush.xpose.msra.mxu0 0.0
  %521 = vmatpush.xpose.msra.mxu0 0.0
  %522 = vmatpush.xpose.msra.mxu0 0.0
  %523 = vmatpush.xpose.msra.mxu0 0.0
  %524 = vmatpush.xpose.msra.mxu0 0.0
  %525 = vmatpush.xpose.msra.mxu0 %v508
  %526 = vmatmul.f32.gmra.mxu0 %v505
  %v527 = vpop.f32.mrf.mxu0
  %v528 = vadd.f32 0.0, %v527
  %529 = vdwg.mxu0
  %v531 = vsel %vm113, %v65, 0
  %v534 = vsel %vm113, %v97, 0
  %536 = vmatpush.xpose.msra.mxu0 0.0
  %537 = vmatpush.xpose.msra.mxu0 0.0
  %538 = vmatpush.xpose.msra.mxu0 0.0
  %539 = vmatpush.xpose.msra.mxu0 0.0
  %540 = vmatpush.xpose.msra.mxu0 0.0
  %541 = vmatpush.xpose.msra.mxu0 0.0
  %542 = vmatpush.xpose.msra.mxu0 0.0
  %543 = vmatpush.xpose.msra.mxu0 0.0
  %544 = vmatpush.xpose.msra.mxu0 0.0
  %545 = vmatpush.xpose.msra.mxu0 0.0
  %546 = vmatpush.xpose.msra.mxu0 0.0
  %547 = vmatpush.xpose.msra.mxu0 0.0
  %548 = vmatpush.xpose.msra.mxu0 0.0
  %549 = vmatpush.xpose.msra.mxu0 0.0
  %550 = vmatpush.xpose.msra.mxu0 0.0
  %551 = vmatpush.xpose.msra.mxu0 %v534
  %552 = vmatmul.f32.gmra.mxu0 %v531
  %v553 = vpop.f32.mrf.mxu0
  %v554 = vadd.f32 0.0, %v553
  %555 = vdwg.mxu0
  %v557 = vsel %vm113, %v66, 0
  %v560 = vsel %vm113, %v98, 0
  %562 = vmatpush.xpose.msra.mxu0 0.0
  %563 = vmatpush.xpose.msra.mxu0 0.0
  %564 = vmatpush.xpose.msra.mxu0 0.0
  %565 = vmatpush.xpose.msra.mxu0 0.0
  %566 = vmatpush.xpose.msra.mxu0 0.0
  %567 = vmatpush.xpose.msra.mxu0 0.0
  %568 = vmatpush.xpose.msra.mxu0 0.0
  %569 = vmatpush.xpose.msra.mxu0 0.0
  %570 = vmatpush.xpose.msra.mxu0 0.0
  %571 = vmatpush.xpose.msra.mxu0 0.0
  %572 = vmatpush.xpose.msra.mxu0 0.0
  %573 = vmatpush.xpose.msra.mxu0 0.0
  %574 = vmatpush.xpose.msra.mxu0 0.0
  %575 = vmatpush.xpose.msra.mxu0 0.0
  %576 = vmatpush.xpose.msra.mxu0 0.0
  %577 = vmatpush.xpose.msra.mxu0 %v560
  %578 = vmatmul.f32.gmra.mxu0 %v557
  %v579 = vpop.f32.mrf.mxu0
  %v580 = vadd.f32 0.0, %v579
  %581 = vdwg.mxu0
  %v583 = vsel %vm113, %v67, 0
  %v586 = vsel %vm113, %v99, 0
  %588 = vmatpush.xpose.msra.mxu0 0.0
  %589 = vmatpush.xpose.msra.mxu0 0.0
  %590 = vmatpush.xpose.msra.mxu0 0.0
  %591 = vmatpush.xpose.msra.mxu0 0.0
  %592 = vmatpush.xpose.msra.mxu0 0.0
  %593 = vmatpush.xpose.msra.mxu0 0.0
  %594 = vmatpush.xpose.msra.mxu0 0.0
  %595 = vmatpush.xpose.msra.mxu0 0.0
  %596 = vmatpush.xpose.msra.mxu0 0.0
  %597 = vmatpush.xpose.msra.mxu0 0.0
  %598 = vmatpush.xpose.msra.mxu0 0.0
  %599 = vmatpush.xpose.msra.mxu0 0.0
  %600 = vmatpush.xpose.msra.mxu0 0.0
  %601 = vmatpush.xpose.msra.mxu0 0.0
  %602 = vmatpush.xpose.msra.mxu0 0.0
  %603 = vmatpush.xpose.msra.mxu0 %v586
  %604 = vmatmul.f32.gmra.mxu0 %v583
  %v605 = vpop.f32.mrf.mxu0
  %v606 = vadd.f32 0.0, %v605
  %607 = vdwg.mxu0
  %v609 = vsel %vm113, %v68, 0
  %v612 = vsel %vm113, %v100, 0
  %614 = vmatpush.xpose.msra.mxu0 0.0
  %615 = vmatpush.xpose.msra.mxu0 0.0
  %616 = vmatpush.xpose.msra.mxu0 0.0
  %617 = vmatpush.xpose.msra.mxu0 0.0
  %618 = vmatpush.xpose.msra.mxu0 0.0
  %619 = vmatpush.xpose.msra.mxu0 0.0
  %620 = vmatpush.xpose.msra.mxu0 0.0
  %621 = vmatpush.xpose.msra.mxu0 0.0
  %622 = vmatpush.xpose.msra.mxu0 0.0
  %623 = vmatpush.xpose.msra.mxu0 0.0
  %624 = vmatpush.xpose.msra.mxu0 0.0
  %625 = vmatpush.xpose.msra.mxu0 0.0
  %626 = vmatpush.xpose.msra.mxu0 0.0
  %627 = vmatpush.xpose.msra.mxu0 0.0
  %628 = vmatpush.xpose.msra.mxu0 0.0
  %629 = vmatpush.xpose.msra.mxu0 %v612
  %630 = vmatmul.f32.gmra.mxu0 %v609
  %v631 = vpop.f32.mrf.mxu0
  %v632 = vadd.f32 0.0, %v631
  %633 = vdwg.mxu0
  %v635 = vsel %vm113, %v69, 0
  %v638 = vsel %vm113, %v101, 0
  %640 = vmatpush.xpose.msra.mxu0 0.0
  %641 = vmatpush.xpose.msra.mxu0 0.0
  %642 = vmatpush.xpose.msra.mxu0 0.0
  %643 = vmatpush.xpose.msra.mxu0 0.0
  %644 = vmatpush.xpose.msra.mxu0 0.0
  %645 = vmatpush.xpose.msra.mxu0 0.0
  %646 = vmatpush.xpose.msra.mxu0 0.0
  %647 = vmatpush.xpose.msra.mxu0 0.0
  %648 = vmatpush.xpose.msra.mxu0 0.0
  %649 = vmatpush.xpose.msra.mxu0 0.0
  %650 = vmatpush.xpose.msra.mxu0 0.0
  %651 = vmatpush.xpose.msra.mxu0 0.0
  %652 = vmatpush.xpose.msra.mxu0 0.0
  %653 = vmatpush.xpose.msra.mxu0 0.0
  %654 = vmatpush.xpose.msra.mxu0 0.0
  %655 = vmatpush.xpose.msra.mxu0 %v638
  %656 = vmatmul.f32.gmra.mxu0 %v635
  %v657 = vpop.f32.mrf.mxu0
  %v658 = vadd.f32 0.0, %v657
  %659 = vdwg.mxu0
  %v661 = vsel %vm113, %v70, 0
  %v664 = vsel %vm113, %v102, 0
  %666 = vmatpush.xpose.msra.mxu0 0.0
  %667 = vmatpush.xpose.msra.mxu0 0.0
  %668 = vmatpush.xpose.msra.mxu0 0.0
  %669 = vmatpush.xpose.msra.mxu0 0.0
  %670 = vmatpush.xpose.msra.mxu0 0.0
  %671 = vmatpush.xpose.msra.mxu0 0.0
  %672 = vmatpush.xpose.msra.mxu0 0.0
  %673 = vmatpush.xpose.msra.mxu0 0.0
  %674 = vmatpush.xpose.msra.mxu0 0.0
  %675 = vmatpush.xpose.msra.mxu0 0.0
  %676 = vmatpush.xpose.msra.mxu0 0.0
  %677 = vmatpush.xpose.msra.mxu0 0.0
  %678 = vmatpush.xpose.msra.mxu0 0.0
  %679 = vmatpush.xpose.msra.mxu0 0.0
  %680 = vmatpush.xpose.msra.mxu0 0.0
  %681 = vmatpush.xpose.msra.mxu0 %v664
  %682 = vmatmul.f32.gmra.mxu0 %v661
  %v683 = vpop.f32.mrf.mxu0
  %v684 = vadd.f32 0.0, %v683
  %685 = vdwg.mxu0
  %v687 = vsel %vm113, %v71, 0
  %v690 = vsel %vm113, %v103, 0
  %692 = vmatpush.xpose.msra.mxu0 0.0
  %693 = vmatpush.xpose.msra.mxu0 0.0
  %694 = vmatpush.xpose.msra.mxu0 0.0
  %695 = vmatpush.xpose.msra.mxu0 0.0
  %696 = vmatpush.xpose.msra.mxu0 0.0
  %697 = vmatpush.xpose.msra.mxu0 0.0
  %698 = vmatpush.xpose.msra.mxu0 0.0
  %699 = vmatpush.xpose.msra.mxu0 0.0
  %700 = vmatpush.xpose.msra.mxu0 0.0
  %701 = vmatpush.xpose.msra.mxu0 0.0
  %702 = vmatpush.xpose.msra.mxu0 0.0
  %703 = vmatpush.xpose.msra.mxu0 0.0
  %704 = vmatpush.xpose.msra.mxu0 0.0
  %705 = vmatpush.xpose.msra.mxu0 0.0
  %706 = vmatpush.xpose.msra.mxu0 0.0
  %707 = vmatpush.xpose.msra.mxu0 %v690
  %708 = vmatmul.f32.gmra.mxu0 %v687
  %v709 = vpop.f32.mrf.mxu0
  %v710 = vadd.f32 0.0, %v709
  %711 = vdwg.mxu0
  %v713 = vsel %vm113, %v72, 0
  %v716 = vsel %vm113, %v104, 0
  %718 = vmatpush.xpose.msra.mxu0 0.0
  %719 = vmatpush.xpose.msra.mxu0 0.0
  %720 = vmatpush.xpose.msra.mxu0 0.0
  %721 = vmatpush.xpose.msra.mxu0 0.0
  %722 = vmatpush.xpose.msra.mxu0 0.0
  %723 = vmatpush.xpose.msra.mxu0 0.0
  %724 = vmatpush.xpose.msra.mxu0 0.0
  %725 = vmatpush.xpose.msra.mxu0 0.0
  %726 = vmatpush.xpose.msra.mxu0 0.0
  %727 = vmatpush.xpose.msra.mxu0 0.0
  %728 = vmatpush.xpose.msra.mxu0 0.0
  %729 = vmatpush.xpose.msra.mxu0 0.0
  %730 = vmatpush.xpose.msra.mxu0 0.0
  %731 = vmatpush.xpose.msra.mxu0 0.0
  %732 = vmatpush.xpose.msra.mxu0 0.0
  %733 = vmatpush.xpose.msra.mxu0 %v716
  %734 = vmatmul.f32.gmra.mxu0 %v713
  %v735 = vpop.f32.mrf.mxu0
  %v736 = vadd.f32 0.0, %v735
  %737 = vdwg.mxu0
  %v739 = vsel %vm113, %v73, 0
  %v742 = vsel %vm113, %v105, 0
  %744 = vmatpush.xpose.msra.mxu0 0.0
  %745 = vmatpush.xpose.msra.mxu0 0.0
  %746 = vmatpush.xpose.msra.mxu0 0.0
  %747 = vmatpush.xpose.msra.mxu0 0.0
  %748 = vmatpush.xpose.msra.mxu0 0.0
  %749 = vmatpush.xpose.msra.mxu0 0.0
  %750 = vmatpush.xpose.msra.mxu0 0.0
  %751 = vmatpush.xpose.msra.mxu0 0.0
  %752 = vmatpush.xpose.msra.mxu0 0.0
  %753 = vmatpush.xpose.msra.mxu0 0.0
  %754 = vmatpush.xpose.msra.mxu0 0.0
  %755 = vmatpush.xpose.msra.mxu0 0.0
  %756 = vmatpush.xpose.msra.mxu0 0.0
  %757 = vmatpush.xpose.msra.mxu0 0.0
  %758 = vmatpush.xpose.msra.mxu0 0.0
  %759 = vmatpush.xpose.msra.mxu0 %v742
  %760 = vmatmul.f32.gmra.mxu0 %v739
  %v761 = vpop.f32.mrf.mxu0
  %v762 = vadd.f32 0.0, %v761
  %763 = vdwg.mxu0
  %v765 = vsel %vm113, %v74, 0
  %v768 = vsel %vm113, %v106, 0
  %770 = vmatpush.xpose.msra.mxu0 0.0
  %771 = vmatpush.xpose.msra.mxu0 0.0
  %772 = vmatpush.xpose.msra.mxu0 0.0
  %773 = vmatpush.xpose.msra.mxu0 0.0
  %774 = vmatpush.xpose.msra.mxu0 0.0
  %775 = vmatpush.xpose.msra.mxu0 0.0
  %776 = vmatpush.xpose.msra.mxu0 0.0
  %777 = vmatpush.xpose.msra.mxu0 0.0
  %778 = vmatpush.xpose.msra.mxu0 0.0
  %779 = vmatpush.xpose.msra.mxu0 0.0
  %780 = vmatpush.xpose.msra.mxu0 0.0
  %781 = vmatpush.xpose.msra.mxu0 0.0
  %782 = vmatpush.xpose.msra.mxu0 0.0
  %783 = vmatpush.xpose.msra.mxu0 0.0
  %784 = vmatpush.xpose.msra.mxu0 0.0
  %785 = vmatpush.xpose.msra.mxu0 %v768
  %786 = vmatmul.f32.gmra.mxu0 %v765
  %v787 = vpop.f32.mrf.mxu0
  %v788 = vadd.f32 0.0, %v787
  %789 = vdwg.mxu0
  %v791 = vsel %vm113, %v75, 0
  %v794 = vsel %vm113, %v107, 0
  %796 = vmatpush.xpose.msra.mxu0 0.0
  %797 = vmatpush.xpose.msra.mxu0 0.0
  %798 = vmatpush.xpose.msra.mxu0 0.0
  %799 = vmatpush.xpose.msra.mxu0 0.0
  %800 = vmatpush.xpose.msra.mxu0 0.0
  %801 = vmatpush.xpose.msra.mxu0 0.0
  %802 = vmatpush.xpose.msra.mxu0 0.0
  %803 = vmatpush.xpose.msra.mxu0 0.0
  %804 = vmatpush.xpose.msra.mxu0 0.0
  %805 = vmatpush.xpose.msra.mxu0 0.0
  %806 = vmatpush.xpose.msra.mxu0 0.0
  %807 = vmatpush.xpose.msra.mxu0 0.0
  %808 = vmatpush.xpose.msra.mxu0 0.0
  %809 = vmatpush.xpose.msra.mxu0 0.0
  %810 = vmatpush.xpose.msra.mxu0 0.0
  %811 = vmatpush.xpose.msra.mxu0 %v794
  %812 = vmatmul.f32.gmra.mxu0 %v791
  %v813 = vpop.f32.mrf.mxu0
  %v814 = vadd.f32 0.0, %v813
  %815 = vdwg.mxu0
  %v817 = vsel %vm113, %v76, 0
  %v820 = vsel %vm113, %v108, 0
  %822 = vmatpush.xpose.msra.mxu0 0.0
  %823 = vmatpush.xpose.msra.mxu0 0.0
  %824 = vmatpush.xpose.msra.mxu0 0.0
  %825 = vmatpush.xpose.msra.mxu0 0.0
  %826 = vmatpush.xpose.msra.mxu0 0.0
  %827 = vmatpush.xpose.msra.mxu0 0.0
  %828 = vmatpush.xpose.msra.mxu0 0.0
  %829 = vmatpush.xpose.msra.mxu0 0.0
  %830 = vmatpush.xpose.msra.mxu0 0.0
  %831 = vmatpush.xpose.msra.mxu0 0.0
  %832 = vmatpush.xpose.msra.mxu0 0.0
  %833 = vmatpush.xpose.msra.mxu0 0.0
  %834 = vmatpush.xpose.msra.mxu0 0.0
  %835 = vmatpush.xpose.msra.mxu0 0.0
  %836 = vmatpush.xpose.msra.mxu0 0.0
  %837 = vmatpush.xpose.msra.mxu0 %v820
  %838 = vmatmul.f32.gmra.mxu0 %v817
  %v839 = vpop.f32.mrf.mxu0
  %v840 = vadd.f32 0.0, %v839
  %841 = vdwg.mxu0
  %v843 = vsel %vm113, %v77, 0
  %v846 = vsel %vm113, %v109, 0
  %848 = vmatpush.xpose.msra.mxu0 0.0
  %849 = vmatpush.xpose.msra.mxu0 0.0
  %850 = vmatpush.xpose.msra.mxu0 0.0
  %851 = vmatpush.xpose.msra.mxu0 0.0
  %852 = vmatpush.xpose.msra.mxu0 0.0
  %853 = vmatpush.xpose.msra.mxu0 0.0
  %854 = vmatpush.xpose.msra.mxu0 0.0
  %855 = vmatpush.xpose.msra.mxu0 0.0
  %856 = vmatpush.xpose.msra.mxu0 0.0
  %857 = vmatpush.xpose.msra.mxu0 0.0
  %858 = vmatpush.xpose.msra.mxu0 0.0
  %859 = vmatpush.xpose.msra.mxu0 0.0
  %860 = vmatpush.xpose.msra.mxu0 0.0
  %861 = vmatpush.xpose.msra.mxu0 0.0
  %862 = vmatpush.xpose.msra.mxu0 0.0
  %863 = vmatpush.xpose.msra.mxu0 %v846
  %864 = vmatmul.f32.gmra.mxu0 %v843
  %v865 = vpop.f32.mrf.mxu0
  %v866 = vadd.f32 0.0, %v865
  %867 = vdwg.mxu0
  %v869 = vsel %vm113, %v78, 0
  %v872 = vsel %vm113, %v110, 0
  %874 = vmatpush.xpose.msra.mxu0 0.0
  %875 = vmatpush.xpose.msra.mxu0 0.0
  %876 = vmatpush.xpose.msra.mxu0 0.0
  %877 = vmatpush.xpose.msra.mxu0 0.0
  %878 = vmatpush.xpose.msra.mxu0 0.0
  %879 = vmatpush.xpose.msra.mxu0 0.0
  %880 = vmatpush.xpose.msra.mxu0 0.0
  %881 = vmatpush.xpose.msra.mxu0 0.0
  %882 = vmatpush.xpose.msra.mxu0 0.0
  %883 = vmatpush.xpose.msra.mxu0 0.0
  %884 = vmatpush.xpose.msra.mxu0 0.0
  %885 = vmatpush.xpose.msra.mxu0 0.0
  %886 = vmatpush.xpose.msra.mxu0 0.0
  %887 = vmatpush.xpose.msra.mxu0 0.0
  %888 = vmatpush.xpose.msra.mxu0 0.0
  %889 = vmatpush.xpose.msra.mxu0 %v872
  %890 = vmatmul.f32.gmra.mxu0 %v869
  %v891 = vpop.f32.mrf.mxu0
  %v892 = vadd.f32 0.0, %v891
  %893 = vdwg.mxu0
  %v895 = vsel %vm113, %v79, 0
  %v898 = vsel %vm113, %v111, 0
  %900 = vmatpush.xpose.msra.mxu0 0.0
  %901 = vmatpush.xpose.msra.mxu0 0.0
  %902 = vmatpush.xpose.msra.mxu0 0.0
  %903 = vmatpush.xpose.msra.mxu0 0.0
  %904 = vmatpush.xpose.msra.mxu0 0.0
  %905 = vmatpush.xpose.msra.mxu0 0.0
  %906 = vmatpush.xpose.msra.mxu0 0.0
  %907 = vmatpush.xpose.msra.mxu0 0.0
  %908 = vmatpush.xpose.msra.mxu0 0.0
  %909 = vmatpush.xpose.msra.mxu0 0.0
  %910 = vmatpush.xpose.msra.mxu0 0.0
  %911 = vmatpush.xpose.msra.mxu0 0.0
  %912 = vmatpush.xpose.msra.mxu0 0.0
  %913 = vmatpush.xpose.msra.mxu0 0.0
  %914 = vmatpush.xpose.msra.mxu0 0.0
  %915 = vmatpush.xpose.msra.mxu0 %v898
  %916 = vmatmul.f32.gmra.mxu0 %v895
  %v917 = vpop.f32.mrf.mxu0
  %v918 = vadd.f32 0.0, %v917
  %919 = vdwg.mxu0
  %v921 = vsel %vm113, %v80, 0
  %v924 = vsel %vm113, %v112, 0
  %926 = vmatpush.xpose.msra.mxu0 0.0
  %927 = vmatpush.xpose.msra.mxu0 0.0
  %928 = vmatpush.xpose.msra.mxu0 0.0
  %929 = vmatpush.xpose.msra.mxu0 0.0
  %930 = vmatpush.xpose.msra.mxu0 0.0
  %931 = vmatpush.xpose.msra.mxu0 0.0
  %932 = vmatpush.xpose.msra.mxu0 0.0
  %933 = vmatpush.xpose.msra.mxu0 0.0
  %934 = vmatpush.xpose.msra.mxu0 0.0
  %935 = vmatpush.xpose.msra.mxu0 0.0
  %936 = vmatpush.xpose.msra.mxu0 0.0
  %937 = vmatpush.xpose.msra.mxu0 0.0
  %938 = vmatpush.xpose.msra.mxu0 0.0
  %939 = vmatpush.xpose.msra.mxu0 0.0
  %940 = vmatpush.xpose.msra.mxu0 0.0
  %941 = vmatpush.xpose.msra.mxu0 %v924
  %942 = vmatmul.f32.gmra.mxu0 %v921
  %v943 = vpop.f32.mrf.mxu0
  %v944 = vadd.f32 0.0, %v943
  %945 = vdwg.mxu0
  %v946 = vld [vmem:[%s3] sm:$0xff]
  %vm947 = vcmp.ne.s32.totalorder %v946, 0
  %v948 = vsel %vm947, 1, 0
  %vm949 = vcmp.eq.s32.totalorder %v948, 1
  %v950 = vsel %vm949, -1e+30, %v138
  %v951 = vsel %vm949, -1e+30, %v164
  %v952 = vsel %vm949, -1e+30, %v190
  %v953 = vsel %vm949, -1e+30, %v216
  %v954 = vsel %vm949, -1e+30, %v242
  %v955 = vsel %vm949, -1e+30, %v268
  %v956 = vsel %vm949, -1e+30, %v294
  %v957 = vsel %vm949, -1e+30, %v320
  %v958 = vsel %vm949, -1e+30, %v346
  %v959 = vsel %vm949, -1e+30, %v372
  %v960 = vsel %vm949, -1e+30, %v398
  %v961 = vsel %vm949, -1e+30, %v424
  %v962 = vsel %vm949, -1e+30, %v450
  %v963 = vsel %vm949, -1e+30, %v476
  %v964 = vsel %vm949, -1e+30, %v502
  %v965 = vsel %vm949, -1e+30, %v528
  %v966 = vsel %vm949, -1e+30, %v554
  %v967 = vsel %vm949, -1e+30, %v580
  %v968 = vsel %vm949, -1e+30, %v606
  %v969 = vsel %vm949, -1e+30, %v632
  %v970 = vsel %vm949, -1e+30, %v658
  %v971 = vsel %vm949, -1e+30, %v684
  %v972 = vsel %vm949, -1e+30, %v710
  %v973 = vsel %vm949, -1e+30, %v736
  %v974 = vsel %vm949, -1e+30, %v762
  %v975 = vsel %vm949, -1e+30, %v788
  %v976 = vsel %vm949, -1e+30, %v814
  %v977 = vsel %vm949, -1e+30, %v840
  %v978 = vsel %vm949, -1e+30, %v866
  %v979 = vsel %vm949, -1e+30, %v892
  %v980 = vsel %vm949, -1e+30, %v918
  %v981 = vsel %vm949, -1e+30, %v944
  %vm982 = vcmask 64512
  %v983 = vsel %vm982, %v950, -inf
  %984 = vmax.xlane.f32.xlu0 %v983
  %v985 = vpop.xlane.xlu0 %984
  %v986 = vsel %vm982, %v951, -inf
  %987 = vmax.xlane.f32.xlu0 %v986
  %v988 = vpop.xlane.xlu0 %987
  %v989 = vsel %vm982, %v952, -inf
  %990 = vmax.xlane.f32.xlu0 %v989
  %v991 = vpop.xlane.xlu0 %990
  %v992 = vsel %vm982, %v953, -inf
  %993 = vmax.xlane.f32.xlu0 %v992
  %v994 = vpop.xlane.xlu0 %993
  %v995 = vsel %vm982, %v954, -inf
  %996 = vmax.xlane.f32.xlu0 %v995
  %v997 = vpop.xlane.xlu0 %996
  %v998 = vsel %vm982, %v955, -inf
  %999 = vmax.xlane.f32.xlu0 %v998
  %v1000 = vpop.xlane.xlu0 %999
  %v1001 = vsel %vm982, %v956, -inf
  %1002 = vmax.xlane.f32.xlu0 %v1001
  %v1003 = vpop.xlane.xlu0 %1002
  %v1004 = vsel %vm982, %v957, -inf
  %1005 = vmax.xlane.f32.xlu0 %v1004
  %v1006 = vpop.xlane.xlu0 %1005
  %v1007 = vsel %vm982, %v958, -inf
  %1008 = vmax.xlane.f32.xlu0 %v1007
  %v1009 = vpop.xlane.xlu0 %1008
  %v1010 = vsel %vm982, %v959, -inf
  %1011 = vmax.xlane.f32.xlu0 %v1010
  %v1012 = vpop.xlane.xlu0 %1011
  %v1013 = vsel %vm982, %v960, -inf
  %1014 = vmax.xlane.f32.xlu0 %v1013
  %v1015 = vpop.xlane.xlu0 %1014
  %v1016 = vsel %vm982, %v961, -inf
  %1017 = vmax.xlane.f32.xlu0 %v1016
  %v1018 = vpop.xlane.xlu0 %1017
  %v1019 = vsel %vm982, %v962, -inf
  %1020 = vmax.xlane.f32.xlu0 %v1019
  %v1021 = vpop.xlane.xlu0 %1020
  %v1022 = vsel %vm982, %v963, -inf
  %1023 = vmax.xlane.f32.xlu0 %v1022
  %v1024 = vpop.xlane.xlu0 %1023
  %v1025 = vsel %vm982, %v964, -inf
  %1026 = vmax.xlane.f32.xlu0 %v1025
  %v1027 = vpop.xlane.xlu0 %1026
  %v1028 = vsel %vm982, %v965, -inf
  %1029 = vmax.xlane.f32.xlu0 %v1028
  %v1030 = vpop.xlane.xlu0 %1029
  %v1031 = vsel %vm982, %v966, -inf
  %1032 = vmax.xlane.f32.xlu0 %v1031
  %v1033 = vpop.xlane.xlu0 %1032
  %v1034 = vsel %vm982, %v967, -inf
  %1035 = vmax.xlane.f32.xlu0 %v1034
  %v1036 = vpop.xlane.xlu0 %1035
  %v1037 = vsel %vm982, %v968, -inf
  %1038 = vmax.xlane.f32.xlu0 %v1037
  %v1039 = vpop.xlane.xlu0 %1038
  %v1040 = vsel %vm982, %v969, -inf
  %1041 = vmax.xlane.f32.xlu0 %v1040
  %v1042 = vpop.xlane.xlu0 %1041
  %v1043 = vsel %vm982, %v970, -inf
  %1044 = vmax.xlane.f32.xlu0 %v1043
  %v1045 = vpop.xlane.xlu0 %1044
  %v1046 = vsel %vm982, %v971, -inf
  %1047 = vmax.xlane.f32.xlu0 %v1046
  %v1048 = vpop.xlane.xlu0 %1047
  %v1049 = vsel %vm982, %v972, -inf
  %1050 = vmax.xlane.f32.xlu0 %v1049
  %v1051 = vpop.xlane.xlu0 %1050
  %v1052 = vsel %vm982, %v973, -inf
  %1053 = vmax.xlane.f32.xlu0 %v1052
  %v1054 = vpop.xlane.xlu0 %1053
  %v1055 = vsel %vm982, %v974, -inf
  %1056 = vmax.xlane.f32.xlu0 %v1055
  %v1057 = vpop.xlane.xlu0 %1056
  %v1058 = vsel %vm982, %v975, -inf
  %1059 = vmax.xlane.f32.xlu0 %v1058
  %v1060 = vpop.xlane.xlu0 %1059
  %v1061 = vsel %vm982, %v976, -inf
  %1062 = vmax.xlane.f32.xlu0 %v1061
  %v1063 = vpop.xlane.xlu0 %1062
  %v1064 = vsel %vm982, %v977, -inf
  %1065 = vmax.xlane.f32.xlu0 %v1064
  %v1066 = vpop.xlane.xlu0 %1065
  %v1067 = vsel %vm982, %v978, -inf
  %1068 = vmax.xlane.f32.xlu0 %v1067
  %v1069 = vpop.xlane.xlu0 %1068
  %v1070 = vsel %vm982, %v979, -inf
  %1071 = vmax.xlane.f32.xlu0 %v1070
  %v1072 = vpop.xlane.xlu0 %1071
  %v1073 = vsel %vm982, %v980, -inf
  %1074 = vmax.xlane.f32.xlu0 %v1073
  %v1075 = vpop.xlane.xlu0 %1074
  %v1076 = vsel %vm982, %v981, -inf
  %1077 = vmax.xlane.f32.xlu0 %v1076
  %v1078 = vpop.xlane.xlu0 %1077
  %v1079 = vsub.f32 %v950, %v985
  %v1080 = vsub.f32 %v951, %v988
  %v1081 = vsub.f32 %v952, %v991
  %v1082 = vsub.f32 %v953, %v994
  %v1083 = vsub.f32 %v954, %v997
  %v1084 = vsub.f32 %v955, %v1000
  %v1085 = vsub.f32 %v956, %v1003
  %v1086 = vsub.f32 %v957, %v1006
  %v1087 = vsub.f32 %v958, %v1009
  %v1088 = vsub.f32 %v959, %v1012
  %v1089 = vsub.f32 %v960, %v1015
  %v1090 = vsub.f32 %v961, %v1018
  %v1091 = vsub.f32 %v962, %v1021
  %v1092 = vsub.f32 %v963, %v1024
  %v1093 = vsub.f32 %v964, %v1027
  %v1094 = vsub.f32 %v965, %v1030
  %v1095 = vsub.f32 %v966, %v1033
  %v1096 = vsub.f32 %v967, %v1036
  %v1097 = vsub.f32 %v968, %v1039
  %v1098 = vsub.f32 %v969, %v1042
  %v1099 = vsub.f32 %v970, %v1045
  %v1100 = vsub.f32 %v971, %v1048
  %v1101 = vsub.f32 %v972, %v1051
  %v1102 = vsub.f32 %v973, %v1054
  %v1103 = vsub.f32 %v974, %v1057
  %v1104 = vsub.f32 %v975, %v1060
  %v1105 = vsub.f32 %v976, %v1063
  %v1106 = vsub.f32 %v977, %v1066
  %v1107 = vsub.f32 %v978, %v1069
  %v1108 = vsub.f32 %v979, %v1072
  %v1109 = vsub.f32 %v980, %v1075
  %v1110 = vsub.f32 %v981, %v1078
  %v1111 = vmul.f32 %v1079, 1.442695
  %v1112 = vpow.pop %v1111
  %v1113 = vmul.f32 %v1080, 1.442695
  %v1114 = vpow.pop %v1113
  %v1115 = vmul.f32 %v1081, 1.442695
  %v1116 = vpow.pop %v1115
  %v1117 = vmul.f32 %v1082, 1.442695
  %v1118 = vpow.pop %v1117
  %v1119 = vmul.f32 %v1083, 1.442695
  %v1120 = vpow.pop %v1119
  %v1121 = vmul.f32 %v1084, 1.442695
  %v1122 = vpow.pop %v1121
  %v1123 = vmul.f32 %v1085, 1.442695
  %v1124 = vpow.pop %v1123
  %v1125 = vmul.f32 %v1086, 1.442695
  %v1126 = vpow.pop %v1125
  %v1127 = vmul.f32 %v1087, 1.442695
  %v1128 = vpow.pop %v1127
  %v1129 = vmul.f32 %v1088, 1.442695
  %v1130 = vpow.pop %v1129
  %v1131 = vmul.f32 %v1089, 1.442695
  %v1132 = vpow.pop %v1131
  %v1133 = vmul.f32 %v1090, 1.442695
  %v1134 = vpow.pop %v1133
  %v1135 = vmul.f32 %v1091, 1.442695
  %v1136 = vpow.pop %v1135
  %v1137 = vmul.f32 %v1092, 1.442695
  %v1138 = vpow.pop %v1137
  %v1139 = vmul.f32 %v1093, 1.442695
  %v1140 = vpow.pop %v1139
  %v1141 = vmul.f32 %v1094, 1.442695
  %v1142 = vpow.pop %v1141
  %v1143 = vmul.f32 %v1095, 1.442695
  %v1144 = vpow.pop %v1143
  %v1145 = vmul.f32 %v1096, 1.442695
  %v1146 = vpow.pop %v1145
  %v1147 = vmul.f32 %v1097, 1.442695
  %v1148 = vpow.pop %v1147
  %v1149 = vmul.f32 %v1098, 1.442695
  %v1150 = vpow.pop %v1149
  %v1151 = vmul.f32 %v1099, 1.442695
  %v1152 = vpow.pop %v1151
  %v1153 = vmul.f32 %v1100, 1.442695
  %v1154 = vpow.pop %v1153
  %v1155 = vmul.f32 %v1101, 1.442695
  %v1156 = vpow.pop %v1155
  %v1157 = vmul.f32 %v1102, 1.442695
  %v1158 = vpow.pop %v1157
  %v1159 = vmul.f32 %v1103, 1.442695
  %v1160 = vpow.pop %v1159
  %v1161 = vmul.f32 %v1104, 1.442695
  %v1162 = vpow.pop %v1161
  %v1163 = vmul.f32 %v1105, 1.442695
  %v1164 = vpow.pop %v1163
  %v1165 = vmul.f32 %v1106, 1.442695
  %v1166 = vpow.pop %v1165
  %v1167 = vmul.f32 %v1107, 1.442695
  %v1168 = vpow.pop %v1167
  %v1169 = vmul.f32 %v1108, 1.442695
  %v1170 = vpow.pop %v1169
  %v1171 = vmul.f32 %v1109, 1.442695
  %v1172 = vpow.pop %v1171
  %v1173 = vmul.f32 %v1110, 1.442695
  %v1174 = vpow.pop %v1173
  %v1175 = vsel %vm982, %v1112, 0.0
  %1176 = vadd.xlane.f32.xlu0 %v1175
  %v1177 = vpop.xlane.xlu0 %1176
  %v1178 = vsel %vm982, %v1114, 0.0
  %1179 = vadd.xlane.f32.xlu0 %v1178
  %v1180 = vpop.xlane.xlu0 %1179
  %v1181 = vsel %vm982, %v1116, 0.0
  %1182 = vadd.xlane.f32.xlu0 %v1181
  %v1183 = vpop.xlane.xlu0 %1182
  %v1184 = vsel %vm982, %v1118, 0.0
  %1185 = vadd.xlane.f32.xlu0 %v1184
  %v1186 = vpop.xlane.xlu0 %1185
  %v1187 = vsel %vm982, %v1120, 0.0
  %1188 = vadd.xlane.f32.xlu0 %v1187
  %v1189 = vpop.xlane.xlu0 %1188
  %v1190 = vsel %vm982, %v1122, 0.0
  %1191 = vadd.xlane.f32.xlu0 %v1190
  %v1192 = vpop.xlane.xlu0 %1191
  %v1193 = vsel %vm982, %v1124, 0.0
  %1194 = vadd.xlane.f32.xlu0 %v1193
  %v1195 = vpop.xlane.xlu0 %1194
  %v1196 = vsel %vm982, %v1126, 0.0
  %1197 = vadd.xlane.f32.xlu0 %v1196
  %v1198 = vpop.xlane.xlu0 %1197
  %v1199 = vsel %vm982, %v1128, 0.0
  %1200 = vadd.xlane.f32.xlu0 %v1199
  %v1201 = vpop.xlane.xlu0 %1200
  %v1202 = vsel %vm982, %v1130, 0.0
  %1203 = vadd.xlane.f32.xlu0 %v1202
  %v1204 = vpop.xlane.xlu0 %1203
  %v1205 = vsel %vm982, %v1132, 0.0
  %1206 = vadd.xlane.f32.xlu0 %v1205
  %v1207 = vpop.xlane.xlu0 %1206
  %v1208 = vsel %vm982, %v1134, 0.0
  %1209 = vadd.xlane.f32.xlu0 %v1208
  %v1210 = vpop.xlane.xlu0 %1209
  %v1211 = vsel %vm982, %v1136, 0.0
  %1212 = vadd.xlane.f32.xlu0 %v1211
  %v1213 = vpop.xlane.xlu0 %1212
  %v1214 = vsel %vm982, %v1138, 0.0
  %1215 = vadd.xlane.f32.xlu0 %v1214
  %v1216 = vpop.xlane.xlu0 %1215
  %v1217 = vsel %vm982, %v1140, 0.0
  %1218 = vadd.xlane.f32.xlu0 %v1217
  %v1219 = vpop.xlane.xlu0 %1218
  %v1220 = vsel %vm982, %v1142, 0.0
  %1221 = vadd.xlane.f32.xlu0 %v1220
  %v1222 = vpop.xlane.xlu0 %1221
  %v1223 = vsel %vm982, %v1144, 0.0
  %1224 = vadd.xlane.f32.xlu0 %v1223
  %v1225 = vpop.xlane.xlu0 %1224
  %v1226 = vsel %vm982, %v1146, 0.0
  %1227 = vadd.xlane.f32.xlu0 %v1226
  %v1228 = vpop.xlane.xlu0 %1227
  %v1229 = vsel %vm982, %v1148, 0.0
  %1230 = vadd.xlane.f32.xlu0 %v1229
  %v1231 = vpop.xlane.xlu0 %1230
  %v1232 = vsel %vm982, %v1150, 0.0
  %1233 = vadd.xlane.f32.xlu0 %v1232
  %v1234 = vpop.xlane.xlu0 %1233
  %v1235 = vsel %vm982, %v1152, 0.0
  %1236 = vadd.xlane.f32.xlu0 %v1235
  %v1237 = vpop.xlane.xlu0 %1236
  %v1238 = vsel %vm982, %v1154, 0.0
  %1239 = vadd.xlane.f32.xlu0 %v1238
  %v1240 = vpop.xlane.xlu0 %1239
  %v1241 = vsel %vm982, %v1156, 0.0
  %1242 = vadd.xlane.f32.xlu0 %v1241
  %v1243 = vpop.xlane.xlu0 %1242
  %v1244 = vsel %vm982, %v1158, 0.0
  %1245 = vadd.xlane.f32.xlu0 %v1244
  %v1246 = vpop.xlane.xlu0 %1245
  %v1247 = vsel %vm982, %v1160, 0.0
  %1248 = vadd.xlane.f32.xlu0 %v1247
  %v1249 = vpop.xlane.xlu0 %1248
  %v1250 = vsel %vm982, %v1162, 0.0
  %1251 = vadd.xlane.f32.xlu0 %v1250
  %v1252 = vpop.xlane.xlu0 %1251
  %v1253 = vsel %vm982, %v1164, 0.0
  %1254 = vadd.xlane.f32.xlu0 %v1253
  %v1255 = vpop.xlane.xlu0 %1254
  %v1256 = vsel %vm982, %v1166, 0.0
  %1257 = vadd.xlane.f32.xlu0 %v1256
  %v1258 = vpop.xlane.xlu0 %1257
  %v1259 = vsel %vm982, %v1168, 0.0
  %1260 = vadd.xlane.f32.xlu0 %v1259
  %v1261 = vpop.xlane.xlu0 %1260
  %v1262 = vsel %vm982, %v1170, 0.0
  %1263 = vadd.xlane.f32.xlu0 %v1262
  %v1264 = vpop.xlane.xlu0 %1263
  %v1265 = vsel %vm982, %v1172, 0.0
  %1266 = vadd.xlane.f32.xlu0 %v1265
  %v1267 = vpop.xlane.xlu0 %1266
  %v1268 = vsel %vm982, %v1174, 0.0
  %1269 = vadd.xlane.f32.xlu0 %v1268
  %v1270 = vpop.xlane.xlu0 %1269
  %v1271 = vld [vmem:[%s2] sm:$0xff]
  %v1272 = vld [vmem:[%s2 + $0x8] sm:$0xff]
  %v1273 = vld [vmem:[%s2 + $0x10] sm:$0xff]
  %v1274 = vld [vmem:[%s2 + $0x18] sm:$0xff]
  %v1275 = vld [vmem:[%s2 + $0x20] sm:$0xff]
  %v1276 = vld [vmem:[%s2 + $0x28] sm:$0xff]
  %v1277 = vld [vmem:[%s2 + $0x30] sm:$0xff]
  %v1278 = vld [vmem:[%s2 + $0x38] sm:$0xff]
  %v1279 = vld [vmem:[%s2 + $0x40] sm:$0xff]
  %v1280 = vld [vmem:[%s2 + $0x48] sm:$0xff]
  %v1281 = vld [vmem:[%s2 + $0x50] sm:$0xff]
  %v1282 = vld [vmem:[%s2 + $0x58] sm:$0xff]
  %v1283 = vld [vmem:[%s2 + $0x60] sm:$0xff]
  %v1284 = vld [vmem:[%s2 + $0x68] sm:$0xff]
  %v1285 = vld [vmem:[%s2 + $0x70] sm:$0xff]
  %v1286 = vld [vmem:[%s2 + $0x78] sm:$0xff]
  %v1287 = vld [vmem:[%s2 + $0x80] sm:$0xff]
  %v1288 = vld [vmem:[%s2 + $0x88] sm:$0xff]
  %v1289 = vld [vmem:[%s2 + $0x90] sm:$0xff]
  %v1290 = vld [vmem:[%s2 + $0x98] sm:$0xff]
  %v1291 = vld [vmem:[%s2 + $0xa0] sm:$0xff]
  %v1292 = vld [vmem:[%s2 + $0xa8] sm:$0xff]
  %v1293 = vld [vmem:[%s2 + $0xb0] sm:$0xff]
  %v1294 = vld [vmem:[%s2 + $0xb8] sm:$0xff]
  %v1295 = vld [vmem:[%s2 + $0xc0] sm:$0xff]
  %v1296 = vld [vmem:[%s2 + $0xc8] sm:$0xff]
  %v1297 = vld [vmem:[%s2 + $0xd0] sm:$0xff]
  %v1298 = vld [vmem:[%s2 + $0xd8] sm:$0xff]
  %v1299 = vld [vmem:[%s2 + $0xe0] sm:$0xff]
  %v1300 = vld [vmem:[%s2 + $0xe8] sm:$0xff]
  %v1301 = vld [vmem:[%s2 + $0xf0] sm:$0xff]
  %v1302 = vld [vmem:[%s2 + $0xf8] sm:$0xff]
  %v1304 = vsel %vm982, %v1112, 0
  %1306 = vmatpush.msra.mxu0 0.0
  %1307 = vmatpush.msra.mxu0 0.0
  %1308 = vmatpush.msra.mxu0 0.0
  %1309 = vmatpush.msra.mxu0 0.0
  %1310 = vmatpush.msra.mxu0 0.0
  %1311 = vmatpush.msra.mxu0 0.0
  %1312 = vmatpush.msra.mxu0 0.0
  %1313 = vmatpush.msra.mxu0 0.0
  %1314 = vmatpush.msra.mxu0 0.0
  %1315 = vmatpush.msra.mxu0 0.0
  %1316 = vmatpush.msra.mxu0 0.0
  %1317 = vmatpush.msra.mxu0 0.0
  %1318 = vmatpush.msra.mxu0 0.0
  %1319 = vmatpush.msra.mxu0 0.0
  %1320 = vmatpush.msra.mxu0 0.0
  %1321 = vmatpush.msra.mxu0 %v1271
  %1322 = vmatmul.f32.gmra.mxu0 %v1304
  %v1323 = vpop.f32.mrf.mxu0
  %v1324 = vadd.f32 0.0, %v1323
  %1325 = vdwg.mxu0
  %v1327 = vsel %vm982, %v1114, 0
  %1329 = vmatpush.msra.mxu0 0.0
  %1330 = vmatpush.msra.mxu0 0.0
  %1331 = vmatpush.msra.mxu0 0.0
  %1332 = vmatpush.msra.mxu0 0.0
  %1333 = vmatpush.msra.mxu0 0.0
  %1334 = vmatpush.msra.mxu0 0.0
  %1335 = vmatpush.msra.mxu0 0.0
  %1336 = vmatpush.msra.mxu0 0.0
  %1337 = vmatpush.msra.mxu0 0.0
  %1338 = vmatpush.msra.mxu0 0.0
  %1339 = vmatpush.msra.mxu0 0.0
  %1340 = vmatpush.msra.mxu0 0.0
  %1341 = vmatpush.msra.mxu0 0.0
  %1342 = vmatpush.msra.mxu0 0.0
  %1343 = vmatpush.msra.mxu0 0.0
  %1344 = vmatpush.msra.mxu0 %v1272
  %1345 = vmatmul.f32.gmra.mxu0 %v1327
  %v1346 = vpop.f32.mrf.mxu0
  %v1347 = vadd.f32 0.0, %v1346
  %1348 = vdwg.mxu0
  %v1350 = vsel %vm982, %v1116, 0
  %1352 = vmatpush.msra.mxu0 0.0
  %1353 = vmatpush.msra.mxu0 0.0
  %1354 = vmatpush.msra.mxu0 0.0
  %1355 = vmatpush.msra.mxu0 0.0
  %1356 = vmatpush.msra.mxu0 0.0
  %1357 = vmatpush.msra.mxu0 0.0
  %1358 = vmatpush.msra.mxu0 0.0
  %1359 = vmatpush.msra.mxu0 0.0
  %1360 = vmatpush.msra.mxu0 0.0
  %1361 = vmatpush.msra.mxu0 0.0
  %1362 = vmatpush.msra.mxu0 0.0
  %1363 = vmatpush.msra.mxu0 0.0
  %1364 = vmatpush.msra.mxu0 0.0
  %1365 = vmatpush.msra.mxu0 0.0
  %1366 = vmatpush.msra.mxu0 0.0
  %1367 = vmatpush.msra.mxu0 %v1273
  %1368 = vmatmul.f32.gmra.mxu0 %v1350
  %v1369 = vpop.f32.mrf.mxu0
  %v1370 = vadd.f32 0.0, %v1369
  %1371 = vdwg.mxu0
  %v1373 = vsel %vm982, %v1118, 0
  %1375 = vmatpush.msra.mxu0 0.0
  %1376 = vmatpush.msra.mxu0 0.0
  %1377 = vmatpush.msra.mxu0 0.0
  %1378 = vmatpush.msra.mxu0 0.0
  %1379 = vmatpush.msra.mxu0 0.0
  %1380 = vmatpush.msra.mxu0 0.0
  %1381 = vmatpush.msra.mxu0 0.0
  %1382 = vmatpush.msra.mxu0 0.0
  %1383 = vmatpush.msra.mxu0 0.0
  %1384 = vmatpush.msra.mxu0 0.0
  %1385 = vmatpush.msra.mxu0 0.0
  %1386 = vmatpush.msra.mxu0 0.0
  %1387 = vmatpush.msra.mxu0 0.0
  %1388 = vmatpush.msra.mxu0 0.0
  %1389 = vmatpush.msra.mxu0 0.0
  %1390 = vmatpush.msra.mxu0 %v1274
  %1391 = vmatmul.f32.gmra.mxu0 %v1373
  %v1392 = vpop.f32.mrf.mxu0
  %v1393 = vadd.f32 0.0, %v1392
  %1394 = vdwg.mxu0
  %v1396 = vsel %vm982, %v1120, 0
  %1398 = vmatpush.msra.mxu0 0.0
  %1399 = vmatpush.msra.mxu0 0.0
  %1400 = vmatpush.msra.mxu0 0.0
  %1401 = vmatpush.msra.mxu0 0.0
  %1402 = vmatpush.msra.mxu0 0.0
  %1403 = vmatpush.msra.mxu0 0.0
  %1404 = vmatpush.msra.mxu0 0.0
  %1405 = vmatpush.msra.mxu0 0.0
  %1406 = vmatpush.msra.mxu0 0.0
  %1407 = vmatpush.msra.mxu0 0.0
  %1408 = vmatpush.msra.mxu0 0.0
  %1409 = vmatpush.msra.mxu0 0.0
  %1410 = vmatpush.msra.mxu0 0.0
  %1411 = vmatpush.msra.mxu0 0.0
  %1412 = vmatpush.msra.mxu0 0.0
  %1413 = vmatpush.msra.mxu0 %v1275
  %1414 = vmatmul.f32.gmra.mxu0 %v1396
  %v1415 = vpop.f32.mrf.mxu0
  %v1416 = vadd.f32 0.0, %v1415
  %1417 = vdwg.mxu0
  %v1419 = vsel %vm982, %v1122, 0
  %1421 = vmatpush.msra.mxu0 0.0
  %1422 = vmatpush.msra.mxu0 0.0
  %1423 = vmatpush.msra.mxu0 0.0
  %1424 = vmatpush.msra.mxu0 0.0
  %1425 = vmatpush.msra.mxu0 0.0
  %1426 = vmatpush.msra.mxu0 0.0
  %1427 = vmatpush.msra.mxu0 0.0
  %1428 = vmatpush.msra.mxu0 0.0
  %1429 = vmatpush.msra.mxu0 0.0
  %1430 = vmatpush.msra.mxu0 0.0
  %1431 = vmatpush.msra.mxu0 0.0
  %1432 = vmatpush.msra.mxu0 0.0
  %1433 = vmatpush.msra.mxu0 0.0
  %1434 = vmatpush.msra.mxu0 0.0
  %1435 = vmatpush.msra.mxu0 0.0
  %1436 = vmatpush.msra.mxu0 %v1276
  %1437 = vmatmul.f32.gmra.mxu0 %v1419
  %v1438 = vpop.f32.mrf.mxu0
  %v1439 = vadd.f32 0.0, %v1438
  %1440 = vdwg.mxu0
  %v1442 = vsel %vm982, %v1124, 0
  %1444 = vmatpush.msra.mxu0 0.0
  %1445 = vmatpush.msra.mxu0 0.0
  %1446 = vmatpush.msra.mxu0 0.0
  %1447 = vmatpush.msra.mxu0 0.0
  %1448 = vmatpush.msra.mxu0 0.0
  %1449 = vmatpush.msra.mxu0 0.0
  %1450 = vmatpush.msra.mxu0 0.0
  %1451 = vmatpush.msra.mxu0 0.0
  %1452 = vmatpush.msra.mxu0 0.0
  %1453 = vmatpush.msra.mxu0 0.0
  %1454 = vmatpush.msra.mxu0 0.0
  %1455 = vmatpush.msra.mxu0 0.0
  %1456 = vmatpush.msra.mxu0 0.0
  %1457 = vmatpush.msra.mxu0 0.0
  %1458 = vmatpush.msra.mxu0 0.0
  %1459 = vmatpush.msra.mxu0 %v1277
  %1460 = vmatmul.f32.gmra.mxu0 %v1442
  %v1461 = vpop.f32.mrf.mxu0
  %v1462 = vadd.f32 0.0, %v1461
  %1463 = vdwg.mxu0
  %v1465 = vsel %vm982, %v1126, 0
  %1467 = vmatpush.msra.mxu0 0.0
  %1468 = vmatpush.msra.mxu0 0.0
  %1469 = vmatpush.msra.mxu0 0.0
  %1470 = vmatpush.msra.mxu0 0.0
  %1471 = vmatpush.msra.mxu0 0.0
  %1472 = vmatpush.msra.mxu0 0.0
  %1473 = vmatpush.msra.mxu0 0.0
  %1474 = vmatpush.msra.mxu0 0.0
  %1475 = vmatpush.msra.mxu0 0.0
  %1476 = vmatpush.msra.mxu0 0.0
  %1477 = vmatpush.msra.mxu0 0.0
  %1478 = vmatpush.msra.mxu0 0.0
  %1479 = vmatpush.msra.mxu0 0.0
  %1480 = vmatpush.msra.mxu0 0.0
  %1481 = vmatpush.msra.mxu0 0.0
  %1482 = vmatpush.msra.mxu0 %v1278
  %1483 = vmatmul.f32.gmra.mxu0 %v1465
  %v1484 = vpop.f32.mrf.mxu0
  %v1485 = vadd.f32 0.0, %v1484
  %1486 = vdwg.mxu0
  %v1488 = vsel %vm982, %v1128, 0
  %1490 = vmatpush.msra.mxu0 0.0
  %1491 = vmatpush.msra.mxu0 0.0
  %1492 = vmatpush.msra.mxu0 0.0
  %1493 = vmatpush.msra.mxu0 0.0
  %1494 = vmatpush.msra.mxu0 0.0
  %1495 = vmatpush.msra.mxu0 0.0
  %1496 = vmatpush.msra.mxu0 0.0
  %1497 = vmatpush.msra.mxu0 0.0
  %1498 = vmatpush.msra.mxu0 0.0
  %1499 = vmatpush.msra.mxu0 0.0
  %1500 = vmatpush.msra.mxu0 0.0
  %1501 = vmatpush.msra.mxu0 0.0
  %1502 = vmatpush.msra.mxu0 0.0
  %1503 = vmatpush.msra.mxu0 0.0
  %1504 = vmatpush.msra.mxu0 0.0
  %1505 = vmatpush.msra.mxu0 %v1279
  %1506 = vmatmul.f32.gmra.mxu0 %v1488
  %v1507 = vpop.f32.mrf.mxu0
  %v1508 = vadd.f32 0.0, %v1507
  %1509 = vdwg.mxu0
  %v1511 = vsel %vm982, %v1130, 0
  %1513 = vmatpush.msra.mxu0 0.0
  %1514 = vmatpush.msra.mxu0 0.0
  %1515 = vmatpush.msra.mxu0 0.0
  %1516 = vmatpush.msra.mxu0 0.0
  %1517 = vmatpush.msra.mxu0 0.0
  %1518 = vmatpush.msra.mxu0 0.0
  %1519 = vmatpush.msra.mxu0 0.0
  %1520 = vmatpush.msra.mxu0 0.0
  %1521 = vmatpush.msra.mxu0 0.0
  %1522 = vmatpush.msra.mxu0 0.0
  %1523 = vmatpush.msra.mxu0 0.0
  %1524 = vmatpush.msra.mxu0 0.0
  %1525 = vmatpush.msra.mxu0 0.0
  %1526 = vmatpush.msra.mxu0 0.0
  %1527 = vmatpush.msra.mxu0 0.0
  %1528 = vmatpush.msra.mxu0 %v1280
  %1529 = vmatmul.f32.gmra.mxu0 %v1511
  %v1530 = vpop.f32.mrf.mxu0
  %v1531 = vadd.f32 0.0, %v1530
  %1532 = vdwg.mxu0
  %v1534 = vsel %vm982, %v1132, 0
  %1536 = vmatpush.msra.mxu0 0.0
  %1537 = vmatpush.msra.mxu0 0.0
  %1538 = vmatpush.msra.mxu0 0.0
  %1539 = vmatpush.msra.mxu0 0.0
  %1540 = vmatpush.msra.mxu0 0.0
  %1541 = vmatpush.msra.mxu0 0.0
  %1542 = vmatpush.msra.mxu0 0.0
  %1543 = vmatpush.msra.mxu0 0.0
  %1544 = vmatpush.msra.mxu0 0.0
  %1545 = vmatpush.msra.mxu0 0.0
  %1546 = vmatpush.msra.mxu0 0.0
  %1547 = vmatpush.msra.mxu0 0.0
  %1548 = vmatpush.msra.mxu0 0.0
  %1549 = vmatpush.msra.mxu0 0.0
  %1550 = vmatpush.msra.mxu0 0.0
  %1551 = vmatpush.msra.mxu0 %v1281
  %1552 = vmatmul.f32.gmra.mxu0 %v1534
  %v1553 = vpop.f32.mrf.mxu0
  %v1554 = vadd.f32 0.0, %v1553
  %1555 = vdwg.mxu0
  %v1557 = vsel %vm982, %v1134, 0
  %1559 = vmatpush.msra.mxu0 0.0
  %1560 = vmatpush.msra.mxu0 0.0
  %1561 = vmatpush.msra.mxu0 0.0
  %1562 = vmatpush.msra.mxu0 0.0
  %1563 = vmatpush.msra.mxu0 0.0
  %1564 = vmatpush.msra.mxu0 0.0
  %1565 = vmatpush.msra.mxu0 0.0
  %1566 = vmatpush.msra.mxu0 0.0
  %1567 = vmatpush.msra.mxu0 0.0
  %1568 = vmatpush.msra.mxu0 0.0
  %1569 = vmatpush.msra.mxu0 0.0
  %1570 = vmatpush.msra.mxu0 0.0
  %1571 = vmatpush.msra.mxu0 0.0
  %1572 = vmatpush.msra.mxu0 0.0
  %1573 = vmatpush.msra.mxu0 0.0
  %1574 = vmatpush.msra.mxu0 %v1282
  %1575 = vmatmul.f32.gmra.mxu0 %v1557
  %v1576 = vpop.f32.mrf.mxu0
  %v1577 = vadd.f32 0.0, %v1576
  %1578 = vdwg.mxu0
  %v1580 = vsel %vm982, %v1136, 0
  %1582 = vmatpush.msra.mxu0 0.0
  %1583 = vmatpush.msra.mxu0 0.0
  %1584 = vmatpush.msra.mxu0 0.0
  %1585 = vmatpush.msra.mxu0 0.0
  %1586 = vmatpush.msra.mxu0 0.0
  %1587 = vmatpush.msra.mxu0 0.0
  %1588 = vmatpush.msra.mxu0 0.0
  %1589 = vmatpush.msra.mxu0 0.0
  %1590 = vmatpush.msra.mxu0 0.0
  %1591 = vmatpush.msra.mxu0 0.0
  %1592 = vmatpush.msra.mxu0 0.0
  %1593 = vmatpush.msra.mxu0 0.0
  %1594 = vmatpush.msra.mxu0 0.0
  %1595 = vmatpush.msra.mxu0 0.0
  %1596 = vmatpush.msra.mxu0 0.0
  %1597 = vmatpush.msra.mxu0 %v1283
  %1598 = vmatmul.f32.gmra.mxu0 %v1580
  %v1599 = vpop.f32.mrf.mxu0
  %v1600 = vadd.f32 0.0, %v1599
  %1601 = vdwg.mxu0
  %v1603 = vsel %vm982, %v1138, 0
  %1605 = vmatpush.msra.mxu0 0.0
  %1606 = vmatpush.msra.mxu0 0.0
  %1607 = vmatpush.msra.mxu0 0.0
  %1608 = vmatpush.msra.mxu0 0.0
  %1609 = vmatpush.msra.mxu0 0.0
  %1610 = vmatpush.msra.mxu0 0.0
  %1611 = vmatpush.msra.mxu0 0.0
  %1612 = vmatpush.msra.mxu0 0.0
  %1613 = vmatpush.msra.mxu0 0.0
  %1614 = vmatpush.msra.mxu0 0.0
  %1615 = vmatpush.msra.mxu0 0.0
  %1616 = vmatpush.msra.mxu0 0.0
  %1617 = vmatpush.msra.mxu0 0.0
  %1618 = vmatpush.msra.mxu0 0.0
  %1619 = vmatpush.msra.mxu0 0.0
  %1620 = vmatpush.msra.mxu0 %v1284
  %1621 = vmatmul.f32.gmra.mxu0 %v1603
  %v1622 = vpop.f32.mrf.mxu0
  %v1623 = vadd.f32 0.0, %v1622
  %1624 = vdwg.mxu0
  %v1626 = vsel %vm982, %v1140, 0
  %1628 = vmatpush.msra.mxu0 0.0
  %1629 = vmatpush.msra.mxu0 0.0
  %1630 = vmatpush.msra.mxu0 0.0
  %1631 = vmatpush.msra.mxu0 0.0
  %1632 = vmatpush.msra.mxu0 0.0
  %1633 = vmatpush.msra.mxu0 0.0
  %1634 = vmatpush.msra.mxu0 0.0
  %1635 = vmatpush.msra.mxu0 0.0
  %1636 = vmatpush.msra.mxu0 0.0
  %1637 = vmatpush.msra.mxu0 0.0
  %1638 = vmatpush.msra.mxu0 0.0
  %1639 = vmatpush.msra.mxu0 0.0
  %1640 = vmatpush.msra.mxu0 0.0
  %1641 = vmatpush.msra.mxu0 0.0
  %1642 = vmatpush.msra.mxu0 0.0
  %1643 = vmatpush.msra.mxu0 %v1285
  %1644 = vmatmul.f32.gmra.mxu0 %v1626
  %v1645 = vpop.f32.mrf.mxu0
  %v1646 = vadd.f32 0.0, %v1645
  %1647 = vdwg.mxu0
  %v1649 = vsel %vm982, %v1142, 0
  %1651 = vmatpush.msra.mxu0 0.0
  %1652 = vmatpush.msra.mxu0 0.0
  %1653 = vmatpush.msra.mxu0 0.0
  %1654 = vmatpush.msra.mxu0 0.0
  %1655 = vmatpush.msra.mxu0 0.0
  %1656 = vmatpush.msra.mxu0 0.0
  %1657 = vmatpush.msra.mxu0 0.0
  %1658 = vmatpush.msra.mxu0 0.0
  %1659 = vmatpush.msra.mxu0 0.0
  %1660 = vmatpush.msra.mxu0 0.0
  %1661 = vmatpush.msra.mxu0 0.0
  %1662 = vmatpush.msra.mxu0 0.0
  %1663 = vmatpush.msra.mxu0 0.0
  %1664 = vmatpush.msra.mxu0 0.0
  %1665 = vmatpush.msra.mxu0 0.0
  %1666 = vmatpush.msra.mxu0 %v1286
  %1667 = vmatmul.f32.gmra.mxu0 %v1649
  %v1668 = vpop.f32.mrf.mxu0
  %v1669 = vadd.f32 0.0, %v1668
  %1670 = vdwg.mxu0
  %v1672 = vsel %vm982, %v1144, 0
  %1674 = vmatpush.msra.mxu0 0.0
  %1675 = vmatpush.msra.mxu0 0.0
  %1676 = vmatpush.msra.mxu0 0.0
  %1677 = vmatpush.msra.mxu0 0.0
  %1678 = vmatpush.msra.mxu0 0.0
  %1679 = vmatpush.msra.mxu0 0.0
  %1680 = vmatpush.msra.mxu0 0.0
  %1681 = vmatpush.msra.mxu0 0.0
  %1682 = vmatpush.msra.mxu0 0.0
  %1683 = vmatpush.msra.mxu0 0.0
  %1684 = vmatpush.msra.mxu0 0.0
  %1685 = vmatpush.msra.mxu0 0.0
  %1686 = vmatpush.msra.mxu0 0.0
  %1687 = vmatpush.msra.mxu0 0.0
  %1688 = vmatpush.msra.mxu0 0.0
  %1689 = vmatpush.msra.mxu0 %v1287
  %1690 = vmatmul.f32.gmra.mxu0 %v1672
  %v1691 = vpop.f32.mrf.mxu0
  %v1692 = vadd.f32 0.0, %v1691
  %1693 = vdwg.mxu0
  %v1695 = vsel %vm982, %v1146, 0
  %1697 = vmatpush.msra.mxu0 0.0
  %1698 = vmatpush.msra.mxu0 0.0
  %1699 = vmatpush.msra.mxu0 0.0
  %1700 = vmatpush.msra.mxu0 0.0
  %1701 = vmatpush.msra.mxu0 0.0
  %1702 = vmatpush.msra.mxu0 0.0
  %1703 = vmatpush.msra.mxu0 0.0
  %1704 = vmatpush.msra.mxu0 0.0
  %1705 = vmatpush.msra.mxu0 0.0
  %1706 = vmatpush.msra.mxu0 0.0
  %1707 = vmatpush.msra.mxu0 0.0
  %1708 = vmatpush.msra.mxu0 0.0
  %1709 = vmatpush.msra.mxu0 0.0
  %1710 = vmatpush.msra.mxu0 0.0
  %1711 = vmatpush.msra.mxu0 0.0
  %1712 = vmatpush.msra.mxu0 %v1288
  %1713 = vmatmul.f32.gmra.mxu0 %v1695
  %v1714 = vpop.f32.mrf.mxu0
  %v1715 = vadd.f32 0.0, %v1714
  %1716 = vdwg.mxu0
  %v1718 = vsel %vm982, %v1148, 0
  %1720 = vmatpush.msra.mxu0 0.0
  %1721 = vmatpush.msra.mxu0 0.0
  %1722 = vmatpush.msra.mxu0 0.0
  %1723 = vmatpush.msra.mxu0 0.0
  %1724 = vmatpush.msra.mxu0 0.0
  %1725 = vmatpush.msra.mxu0 0.0
  %1726 = vmatpush.msra.mxu0 0.0
  %1727 = vmatpush.msra.mxu0 0.0
  %1728 = vmatpush.msra.mxu0 0.0
  %1729 = vmatpush.msra.mxu0 0.0
  %1730 = vmatpush.msra.mxu0 0.0
  %1731 = vmatpush.msra.mxu0 0.0
  %1732 = vmatpush.msra.mxu0 0.0
  %1733 = vmatpush.msra.mxu0 0.0
  %1734 = vmatpush.msra.mxu0 0.0
  %1735 = vmatpush.msra.mxu0 %v1289
  %1736 = vmatmul.f32.gmra.mxu0 %v1718
  %v1737 = vpop.f32.mrf.mxu0
  %v1738 = vadd.f32 0.0, %v1737
  %1739 = vdwg.mxu0
  %v1741 = vsel %vm982, %v1150, 0
  %1743 = vmatpush.msra.mxu0 0.0
  %1744 = vmatpush.msra.mxu0 0.0
  %1745 = vmatpush.msra.mxu0 0.0
  %1746 = vmatpush.msra.mxu0 0.0
  %1747 = vmatpush.msra.mxu0 0.0
  %1748 = vmatpush.msra.mxu0 0.0
  %1749 = vmatpush.msra.mxu0 0.0
  %1750 = vmatpush.msra.mxu0 0.0
  %1751 = vmatpush.msra.mxu0 0.0
  %1752 = vmatpush.msra.mxu0 0.0
  %1753 = vmatpush.msra.mxu0 0.0
  %1754 = vmatpush.msra.mxu0 0.0
  %1755 = vmatpush.msra.mxu0 0.0
  %1756 = vmatpush.msra.mxu0 0.0
  %1757 = vmatpush.msra.mxu0 0.0
  %1758 = vmatpush.msra.mxu0 %v1290
  %1759 = vmatmul.f32.gmra.mxu0 %v1741
  %v1760 = vpop.f32.mrf.mxu0
  %v1761 = vadd.f32 0.0, %v1760
  %1762 = vdwg.mxu0
  %v1764 = vsel %vm982, %v1152, 0
  %1766 = vmatpush.msra.mxu0 0.0
  %1767 = vmatpush.msra.mxu0 0.0
  %1768 = vmatpush.msra.mxu0 0.0
  %1769 = vmatpush.msra.mxu0 0.0
  %1770 = vmatpush.msra.mxu0 0.0
  %1771 = vmatpush.msra.mxu0 0.0
  %1772 = vmatpush.msra.mxu0 0.0
  %1773 = vmatpush.msra.mxu0 0.0
  %1774 = vmatpush.msra.mxu0 0.0
  %1775 = vmatpush.msra.mxu0 0.0
  %1776 = vmatpush.msra.mxu0 0.0
  %1777 = vmatpush.msra.mxu0 0.0
  %1778 = vmatpush.msra.mxu0 0.0
  %1779 = vmatpush.msra.mxu0 0.0
  %1780 = vmatpush.msra.mxu0 0.0
  %1781 = vmatpush.msra.mxu0 %v1291
  %1782 = vmatmul.f32.gmra.mxu0 %v1764
  %v1783 = vpop.f32.mrf.mxu0
  %v1784 = vadd.f32 0.0, %v1783
  %1785 = vdwg.mxu0
  %v1787 = vsel %vm982, %v1154, 0
  %1789 = vmatpush.msra.mxu0 0.0
  %1790 = vmatpush.msra.mxu0 0.0
  %1791 = vmatpush.msra.mxu0 0.0
  %1792 = vmatpush.msra.mxu0 0.0
  %1793 = vmatpush.msra.mxu0 0.0
  %1794 = vmatpush.msra.mxu0 0.0
  %1795 = vmatpush.msra.mxu0 0.0
  %1796 = vmatpush.msra.mxu0 0.0
  %1797 = vmatpush.msra.mxu0 0.0
  %1798 = vmatpush.msra.mxu0 0.0
  %1799 = vmatpush.msra.mxu0 0.0
  %1800 = vmatpush.msra.mxu0 0.0
  %1801 = vmatpush.msra.mxu0 0.0
  %1802 = vmatpush.msra.mxu0 0.0
  %1803 = vmatpush.msra.mxu0 0.0
  %1804 = vmatpush.msra.mxu0 %v1292
  %1805 = vmatmul.f32.gmra.mxu0 %v1787
  %v1806 = vpop.f32.mrf.mxu0
  %v1807 = vadd.f32 0.0, %v1806
  %1808 = vdwg.mxu0
  %v1810 = vsel %vm982, %v1156, 0
  %1812 = vmatpush.msra.mxu0 0.0
  %1813 = vmatpush.msra.mxu0 0.0
  %1814 = vmatpush.msra.mxu0 0.0
  %1815 = vmatpush.msra.mxu0 0.0
  %1816 = vmatpush.msra.mxu0 0.0
  %1817 = vmatpush.msra.mxu0 0.0
  %1818 = vmatpush.msra.mxu0 0.0
  %1819 = vmatpush.msra.mxu0 0.0
  %1820 = vmatpush.msra.mxu0 0.0
  %1821 = vmatpush.msra.mxu0 0.0
  %1822 = vmatpush.msra.mxu0 0.0
  %1823 = vmatpush.msra.mxu0 0.0
  %1824 = vmatpush.msra.mxu0 0.0
  %1825 = vmatpush.msra.mxu0 0.0
  %1826 = vmatpush.msra.mxu0 0.0
  %1827 = vmatpush.msra.mxu0 %v1293
  %1828 = vmatmul.f32.gmra.mxu0 %v1810
  %v1829 = vpop.f32.mrf.mxu0
  %v1830 = vadd.f32 0.0, %v1829
  %1831 = vdwg.mxu0
  %v1833 = vsel %vm982, %v1158, 0
  %1835 = vmatpush.msra.mxu0 0.0
  %1836 = vmatpush.msra.mxu0 0.0
  %1837 = vmatpush.msra.mxu0 0.0
  %1838 = vmatpush.msra.mxu0 0.0
  %1839 = vmatpush.msra.mxu0 0.0
  %1840 = vmatpush.msra.mxu0 0.0
  %1841 = vmatpush.msra.mxu0 0.0
  %1842 = vmatpush.msra.mxu0 0.0
  %1843 = vmatpush.msra.mxu0 0.0
  %1844 = vmatpush.msra.mxu0 0.0
  %1845 = vmatpush.msra.mxu0 0.0
  %1846 = vmatpush.msra.mxu0 0.0
  %1847 = vmatpush.msra.mxu0 0.0
  %1848 = vmatpush.msra.mxu0 0.0
  %1849 = vmatpush.msra.mxu0 0.0
  %1850 = vmatpush.msra.mxu0 %v1294
  %1851 = vmatmul.f32.gmra.mxu0 %v1833
  %v1852 = vpop.f32.mrf.mxu0
  %v1853 = vadd.f32 0.0, %v1852
  %1854 = vdwg.mxu0
  %v1856 = vsel %vm982, %v1160, 0
  %1858 = vmatpush.msra.mxu0 0.0
  %1859 = vmatpush.msra.mxu0 0.0
  %1860 = vmatpush.msra.mxu0 0.0
  %1861 = vmatpush.msra.mxu0 0.0
  %1862 = vmatpush.msra.mxu0 0.0
  %1863 = vmatpush.msra.mxu0 0.0
  %1864 = vmatpush.msra.mxu0 0.0
  %1865 = vmatpush.msra.mxu0 0.0
  %1866 = vmatpush.msra.mxu0 0.0
  %1867 = vmatpush.msra.mxu0 0.0
  %1868 = vmatpush.msra.mxu0 0.0
  %1869 = vmatpush.msra.mxu0 0.0
  %1870 = vmatpush.msra.mxu0 0.0
  %1871 = vmatpush.msra.mxu0 0.0
  %1872 = vmatpush.msra.mxu0 0.0
  %1873 = vmatpush.msra.mxu0 %v1295
  %1874 = vmatmul.f32.gmra.mxu0 %v1856
  %v1875 = vpop.f32.mrf.mxu0
  %v1876 = vadd.f32 0.0, %v1875
  %1877 = vdwg.mxu0
  %v1879 = vsel %vm982, %v1162, 0
  %1881 = vmatpush.msra.mxu0 0.0
  %1882 = vmatpush.msra.mxu0 0.0
  %1883 = vmatpush.msra.mxu0 0.0
  %1884 = vmatpush.msra.mxu0 0.0
  %1885 = vmatpush.msra.mxu0 0.0
  %1886 = vmatpush.msra.mxu0 0.0
  %1887 = vmatpush.msra.mxu0 0.0
  %1888 = vmatpush.msra.mxu0 0.0
  %1889 = vmatpush.msra.mxu0 0.0
  %1890 = vmatpush.msra.mxu0 0.0
  %1891 = vmatpush.msra.mxu0 0.0
  %1892 = vmatpush.msra.mxu0 0.0
  %1893 = vmatpush.msra.mxu0 0.0
  %1894 = vmatpush.msra.mxu0 0.0
  %1895 = vmatpush.msra.mxu0 0.0
  %1896 = vmatpush.msra.mxu0 %v1296
  %1897 = vmatmul.f32.gmra.mxu0 %v1879
  %v1898 = vpop.f32.mrf.mxu0
  %v1899 = vadd.f32 0.0, %v1898
  %1900 = vdwg.mxu0
  %v1902 = vsel %vm982, %v1164, 0
  %1904 = vmatpush.msra.mxu0 0.0
  %1905 = vmatpush.msra.mxu0 0.0
  %1906 = vmatpush.msra.mxu0 0.0
  %1907 = vmatpush.msra.mxu0 0.0
  %1908 = vmatpush.msra.mxu0 0.0
  %1909 = vmatpush.msra.mxu0 0.0
  %1910 = vmatpush.msra.mxu0 0.0
  %1911 = vmatpush.msra.mxu0 0.0
  %1912 = vmatpush.msra.mxu0 0.0
  %1913 = vmatpush.msra.mxu0 0.0
  %1914 = vmatpush.msra.mxu0 0.0
  %1915 = vmatpush.msra.mxu0 0.0
  %1916 = vmatpush.msra.mxu0 0.0
  %1917 = vmatpush.msra.mxu0 0.0
  %1918 = vmatpush.msra.mxu0 0.0
  %1919 = vmatpush.msra.mxu0 %v1297
  %1920 = vmatmul.f32.gmra.mxu0 %v1902
  %v1921 = vpop.f32.mrf.mxu0
  %v1922 = vadd.f32 0.0, %v1921
  %1923 = vdwg.mxu0
  %v1925 = vsel %vm982, %v1166, 0
  %1927 = vmatpush.msra.mxu0 0.0
  %1928 = vmatpush.msra.mxu0 0.0
  %1929 = vmatpush.msra.mxu0 0.0
  %1930 = vmatpush.msra.mxu0 0.0
  %1931 = vmatpush.msra.mxu0 0.0
  %1932 = vmatpush.msra.mxu0 0.0
  %1933 = vmatpush.msra.mxu0 0.0
  %1934 = vmatpush.msra.mxu0 0.0
  %1935 = vmatpush.msra.mxu0 0.0
  %1936 = vmatpush.msra.mxu0 0.0
  %1937 = vmatpush.msra.mxu0 0.0
  %1938 = vmatpush.msra.mxu0 0.0
  %1939 = vmatpush.msra.mxu0 0.0
  %1940 = vmatpush.msra.mxu0 0.0
  %1941 = vmatpush.msra.mxu0 0.0
  %1942 = vmatpush.msra.mxu0 %v1298
  %1943 = vmatmul.f32.gmra.mxu0 %v1925
  %v1944 = vpop.f32.mrf.mxu0
  %v1945 = vadd.f32 0.0, %v1944
  %1946 = vdwg.mxu0
  %v1948 = vsel %vm982, %v1168, 0
  %1950 = vmatpush.msra.mxu0 0.0
  %1951 = vmatpush.msra.mxu0 0.0
  %1952 = vmatpush.msra.mxu0 0.0
  %1953 = vmatpush.msra.mxu0 0.0
  %1954 = vmatpush.msra.mxu0 0.0
  %1955 = vmatpush.msra.mxu0 0.0
  %1956 = vmatpush.msra.mxu0 0.0
  %1957 = vmatpush.msra.mxu0 0.0
  %1958 = vmatpush.msra.mxu0 0.0
  %1959 = vmatpush.msra.mxu0 0.0
  %1960 = vmatpush.msra.mxu0 0.0
  %1961 = vmatpush.msra.mxu0 0.0
  %1962 = vmatpush.msra.mxu0 0.0
  %1963 = vmatpush.msra.mxu0 0.0
  %1964 = vmatpush.msra.mxu0 0.0
  %1965 = vmatpush.msra.mxu0 %v1299
  %1966 = vmatmul.f32.gmra.mxu0 %v1948
  %v1967 = vpop.f32.mrf.mxu0
  %v1968 = vadd.f32 0.0, %v1967
  %1969 = vdwg.mxu0
  %v1971 = vsel %vm982, %v1170, 0
  %1973 = vmatpush.msra.mxu0 0.0
  %1974 = vmatpush.msra.mxu0 0.0
  %1975 = vmatpush.msra.mxu0 0.0
  %1976 = vmatpush.msra.mxu0 0.0
  %1977 = vmatpush.msra.mxu0 0.0
  %1978 = vmatpush.msra.mxu0 0.0
  %1979 = vmatpush.msra.mxu0 0.0
  %1980 = vmatpush.msra.mxu0 0.0
  %1981 = vmatpush.msra.mxu0 0.0
  %1982 = vmatpush.msra.mxu0 0.0
  %1983 = vmatpush.msra.mxu0 0.0
  %1984 = vmatpush.msra.mxu0 0.0
  %1985 = vmatpush.msra.mxu0 0.0
  %1986 = vmatpush.msra.mxu0 0.0
  %1987 = vmatpush.msra.mxu0 0.0
  %1988 = vmatpush.msra.mxu0 %v1300
  %1989 = vmatmul.f32.gmra.mxu0 %v1971
  %v1990 = vpop.f32.mrf.mxu0
  %v1991 = vadd.f32 0.0, %v1990
  %1992 = vdwg.mxu0
  %v1994 = vsel %vm982, %v1172, 0
  %1996 = vmatpush.msra.mxu0 0.0
  %1997 = vmatpush.msra.mxu0 0.0
  %1998 = vmatpush.msra.mxu0 0.0
  %1999 = vmatpush.msra.mxu0 0.0
  %2000 = vmatpush.msra.mxu0 0.0
  %2001 = vmatpush.msra.mxu0 0.0
  %2002 = vmatpush.msra.mxu0 0.0
  %2003 = vmatpush.msra.mxu0 0.0
  %2004 = vmatpush.msra.mxu0 0.0
  %2005 = vmatpush.msra.mxu0 0.0
  %2006 = vmatpush.msra.mxu0 0.0
  %2007 = vmatpush.msra.mxu0 0.0
  %2008 = vmatpush.msra.mxu0 0.0
  %2009 = vmatpush.msra.mxu0 0.0
  %2010 = vmatpush.msra.mxu0 0.0
  %2011 = vmatpush.msra.mxu0 %v1301
  %2012 = vmatmul.f32.gmra.mxu0 %v1994
  %v2013 = vpop.f32.mrf.mxu0
  %v2014 = vadd.f32 0.0, %v2013
  %2015 = vdwg.mxu0
  %v2017 = vsel %vm982, %v1174, 0
  %2019 = vmatpush.msra.mxu0 0.0
  %2020 = vmatpush.msra.mxu0 0.0
  %2021 = vmatpush.msra.mxu0 0.0
  %2022 = vmatpush.msra.mxu0 0.0
  %2023 = vmatpush.msra.mxu0 0.0
  %2024 = vmatpush.msra.mxu0 0.0
  %2025 = vmatpush.msra.mxu0 0.0
  %2026 = vmatpush.msra.mxu0 0.0
  %2027 = vmatpush.msra.mxu0 0.0
  %2028 = vmatpush.msra.mxu0 0.0
  %2029 = vmatpush.msra.mxu0 0.0
  %2030 = vmatpush.msra.mxu0 0.0
  %2031 = vmatpush.msra.mxu0 0.0
  %2032 = vmatpush.msra.mxu0 0.0
  %2033 = vmatpush.msra.mxu0 0.0
  %2034 = vmatpush.msra.mxu0 %v1302
  %2035 = vmatmul.f32.gmra.mxu0 %v2017
  %v2036 = vpop.f32.mrf.mxu0
  %v2037 = vadd.f32 0.0, %v2036
  %2038 = vdwg.mxu0
  %v2039 = vrcp.pop %v1177
  %v2040 = vrcp.pop %v1180
  %v2041 = vrcp.pop %v1183
  %v2042 = vrcp.pop %v1186
  %v2043 = vrcp.pop %v1189
  %v2044 = vrcp.pop %v1192
  %v2045 = vrcp.pop %v1195
  %v2046 = vrcp.pop %v1198
  %v2047 = vrcp.pop %v1201
  %v2048 = vrcp.pop %v1204
  %v2049 = vrcp.pop %v1207
  %v2050 = vrcp.pop %v1210
  %v2051 = vrcp.pop %v1213
  %v2052 = vrcp.pop %v1216
  %v2053 = vrcp.pop %v1219
  %v2054 = vrcp.pop %v1222
  %v2055 = vrcp.pop %v1225
  %v2056 = vrcp.pop %v1228
  %v2057 = vrcp.pop %v1231
  %v2058 = vrcp.pop %v1234
  %v2059 = vrcp.pop %v1237
  %v2060 = vrcp.pop %v1240
  %v2061 = vrcp.pop %v1243
  %v2062 = vrcp.pop %v1246
  %v2063 = vrcp.pop %v1249
  %v2064 = vrcp.pop %v1252
  %v2065 = vrcp.pop %v1255
  %v2066 = vrcp.pop %v1258
  %v2067 = vrcp.pop %v1261
  %v2068 = vrcp.pop %v1264
  %v2069 = vrcp.pop %v1267
  %v2070 = vrcp.pop %v1270
  %v2071 = vmul.f32 %v1324, %v2039
  %v2072 = vmul.f32 %v1347, %v2040
  %v2073 = vmul.f32 %v1370, %v2041
  %v2074 = vmul.f32 %v1393, %v2042
  %v2075 = vmul.f32 %v1416, %v2043
  %v2076 = vmul.f32 %v1439, %v2044
  %v2077 = vmul.f32 %v1462, %v2045
  %v2078 = vmul.f32 %v1485, %v2046
  %v2079 = vmul.f32 %v1508, %v2047
  %v2080 = vmul.f32 %v1531, %v2048
  %v2081 = vmul.f32 %v1554, %v2049
  %v2082 = vmul.f32 %v1577, %v2050
  %v2083 = vmul.f32 %v1600, %v2051
  %v2084 = vmul.f32 %v1623, %v2052
  %v2085 = vmul.f32 %v1646, %v2053
  %v2086 = vmul.f32 %v1669, %v2054
  %v2087 = vmul.f32 %v1692, %v2055
  %v2088 = vmul.f32 %v1715, %v2056
  %v2089 = vmul.f32 %v1738, %v2057
  %v2090 = vmul.f32 %v1761, %v2058
  %v2091 = vmul.f32 %v1784, %v2059
  %v2092 = vmul.f32 %v1807, %v2060
  %v2093 = vmul.f32 %v1830, %v2061
  %v2094 = vmul.f32 %v1853, %v2062
  %v2095 = vmul.f32 %v1876, %v2063
  %v2096 = vmul.f32 %v1899, %v2064
  %v2097 = vmul.f32 %v1922, %v2065
  %v2098 = vmul.f32 %v1945, %v2066
  %v2099 = vmul.f32 %v1968, %v2067
  %v2100 = vmul.f32 %v1991, %v2068
  %v2101 = vmul.f32 %v2014, %v2069
  %v2102 = vmul.f32 %v2037, %v2070
  %2103 = vst.msk [vmem:[%s4] sm:$0xff] %vm113, %v2071
  %2104 = vst.msk [vmem:[%s4 + $0x8] sm:$0xff] %vm113, %v2072
  %2105 = vst.msk [vmem:[%s4 + $0x10] sm:$0xff] %vm113, %v2073
  %2106 = vst.msk [vmem:[%s4 + $0x18] sm:$0xff] %vm113, %v2074
  %2107 = vst.msk [vmem:[%s4 + $0x20] sm:$0xff] %vm113, %v2075
  %2108 = vst.msk [vmem:[%s4 + $0x28] sm:$0xff] %vm113, %v2076
  %2109 = vst.msk [vmem:[%s4 + $0x30] sm:$0xff] %vm113, %v2077
  %2110 = vst.msk [vmem:[%s4 + $0x38] sm:$0xff] %vm113, %v2078
  %2111 = vst.msk [vmem:[%s4 + $0x40] sm:$0xff] %vm113, %v2079
  %2112 = vst.msk [vmem:[%s4 + $0x48] sm:$0xff] %vm113, %v2080
  %2113 = vst.msk [vmem:[%s4 + $0x50] sm:$0xff] %vm113, %v2081
  %2114 = vst.msk [vmem:[%s4 + $0x58] sm:$0xff] %vm113, %v2082
  %2115 = vst.msk [vmem:[%s4 + $0x60] sm:$0xff] %vm113, %v2083
  %2116 = vst.msk [vmem:[%s4 + $0x68] sm:$0xff] %vm113, %v2084
  %2117 = vst.msk [vmem:[%s4 + $0x70] sm:$0xff] %vm113, %v2085
  %2118 = vst.msk [vmem:[%s4 + $0x78] sm:$0xff] %vm113, %v2086
  %2119 = vst.msk [vmem:[%s4 + $0x80] sm:$0xff] %vm113, %v2087
  %2120 = vst.msk [vmem:[%s4 + $0x88] sm:$0xff] %vm113, %v2088
  %2121 = vst.msk [vmem:[%s4 + $0x90] sm:$0xff] %vm113, %v2089
  %2122 = vst.msk [vmem:[%s4 + $0x98] sm:$0xff] %vm113, %v2090
  %2123 = vst.msk [vmem:[%s4 + $0xa0] sm:$0xff] %vm113, %v2091
  %2124 = vst.msk [vmem:[%s4 + $0xa8] sm:$0xff] %vm113, %v2092
  %2125 = vst.msk [vmem:[%s4 + $0xb0] sm:$0xff] %vm113, %v2093
  %2126 = vst.msk [vmem:[%s4 + $0xb8] sm:$0xff] %vm113, %v2094
  %2127 = vst.msk [vmem:[%s4 + $0xc0] sm:$0xff] %vm113, %v2095
  %2128 = vst.msk [vmem:[%s4 + $0xc8] sm:$0xff] %vm113, %v2096
  %2129 = vst.msk [vmem:[%s4 + $0xd0] sm:$0xff] %vm113, %v2097
  %2130 = vst.msk [vmem:[%s4 + $0xd8] sm:$0xff] %vm113, %v2098
  %2131 = vst.msk [vmem:[%s4 + $0xe0] sm:$0xff] %vm113, %v2099
  %2132 = vst.msk [vmem:[%s4 + $0xe8] sm:$0xff] %vm113, %v2100
  %2133 = vst.msk [vmem:[%s4 + $0xf0] sm:$0xff] %vm113, %v2101
  %2134 = vst.msk [vmem:[%s4 + $0xf8] sm:$0xff] %vm113, %v2102
  // Predicated region
  $region18: #{st_self_attention.15} parent=0 // pred_check
    _
  $region19: #{st_self_attention.15} parent=0 // pred_check_branch
    %2136 = sbr.rel (0) target = $region21
  $region20: #{st_self_attention.15} parent=0 // pred_region
    _
  $region21: #{st_self_attention.15} parent=0 // pred_fallthru
    _
  // Predicated region
  $region22: #{st_self_attention.15} parent=0 // pred_check
    _
  $region23: #{st_self_attention.15} parent=0 // pred_check_branch
    %2138 = sbr.rel (0) target = $region25
  $region24: #{st_self_attention.15} parent=0 // pred_region
    _
  $region25: #{st_self_attention.15} parent=0 // pred_fallthru
    _

// kernel: st_self_attention.17
$region0: #{st_self_attention.17}
  #allocation0 [shape = 'u32[]', space=smem, size = 0x4, offset = 0x4, fixed_abs, tag = 'smem constant byte address 0x4 - core index']
  #allocation1 [shape = 'u32[72,128]{1,0:T(1,128)}', space=vmem, size = 0x9000, scoped, tag = 'internal scratch']
  #allocation2 [shape = 'f32[64,128]{1,0:T(8,128)}', space=vmem, size = 0x8000, scoped, tag = 'scratch operand']
  %s0 = inlined_call_operand.vmem [shape: f32[64,128], index: 0, kind: input, shape index: {}]
  %s1 = inlined_call_operand.vmem [shape: f32[128,128], index: 1, kind: input, shape index: {}]
  %s2 = inlined_call_operand.vmem [shape: f32[1,128], index: 2, kind: input, shape index: {}]
  %s3 = inlined_call_operand.hbm [shape: f32[64,128], index: 3, kind: output, shape index: {}]
  %s4 = sld [smem:[#allocation0]]
  $region30: #{st_self_attention.17} parent=0
    _
  %s6 = ssub.s32 1, %s4
  %s7 = scalar_select 0, %s6, %s4
  $region1: #{st_self_attention.17} parent=0
    #allocation3 [shape = 'u8[32768]{0}', space=vmem, size = 0x8000, scoped, tag = 'output window, operand 0, single buffered']
    #allocation4 [shape = 's32[1]{0}', space=sflag, size = 0x4, scoped, tag = 'scoped memory for st_self_attention.17']
    %8 = vsyncpa [#allocation4], 0
    // Predicated region
    $region2: #{st_self_attention.17} parent=1 // pred_check
      _
    $region3: #{st_self_attention.17} parent=1 // pred_check_branch
      %10 = sbr.rel (0) target = $region5
    $region4: #{st_self_attention.17} parent=1 // pred_region
      _
    $region5: #{st_self_attention.17} parent=1 // pred_fallthru
      _
    // Predicated region
    $region6: #{st_self_attention.17} parent=1 // pred_check
      _
    $region7: #{st_self_attention.17} parent=1 // pred_check_branch
      %12 = sbr.rel (0) target = $region9
    $region8: #{st_self_attention.17} parent=1 // pred_region
      _
    $region9: #{st_self_attention.17} parent=1 // pred_fallthru
      _
    // Predicated region
    $region10: #{st_self_attention.17} parent=1 // pred_check
      _
    $region11: #{st_self_attention.17} parent=1 // pred_check_branch
      %14 = sbr.rel (0) target = $region13
    $region12: #{st_self_attention.17} parent=1 // pred_region
      _
    $region13: #{st_self_attention.17} parent=1 // pred_fallthru
      _
    %p15 = scmp.eq.s32.totalorder 0, 0
    // Predicated region
    $region14: #{st_self_attention.17} parent=1 // pred_check
      %p16 = pneg %p15
    $region15: #{st_self_attention.17} parent=1 // pred_check_branch
      %18 = sbr.rel (%p16) target = $region17
    $region16: #{st_self_attention.17} parent=1 // pred_region
      %19 = vst [vmem:[#allocation2] sm:$0xff] 0.0
      %20 = vst [vmem:[#allocation2 + $0x8] sm:$0xff] 0.0
      %21 = vst [vmem:[#allocation2 + $0x10] sm:$0xff] 0.0
      %22 = vst [vmem:[#allocation2 + $0x18] sm:$0xff] 0.0
      %23 = vst [vmem:[#allocation2 + $0x20] sm:$0xff] 0.0
      %24 = vst [vmem:[#allocation2 + $0x28] sm:$0xff] 0.0
      %25 = vst [vmem:[#allocation2 + $0x30] sm:$0xff] 0.0
      %26 = vst [vmem:[#allocation2 + $0x38] sm:$0xff] 0.0
    $region17: #{st_self_attention.17} parent=1 // pred_fallthru
      _
    %v27 = vld [vmem:[#allocation2] sm:$0xff]
    %v28 = vld [vmem:[#allocation2 + $0x8] sm:$0xff]
    %v29 = vld [vmem:[#allocation2 + $0x10] sm:$0xff]
    %v30 = vld [vmem:[#allocation2 + $0x18] sm:$0xff]
    %v31 = vld [vmem:[#allocation2 + $0x20] sm:$0xff]
    %v32 = vld [vmem:[#allocation2 + $0x28] sm:$0xff]
    %v33 = vld [vmem:[#allocation2 + $0x30] sm:$0xff]
    %v34 = vld [vmem:[#allocation2 + $0x38] sm:$0xff]
    %v35 = vld [vmem:[%s0] sm:$0xff]
    %v36 = vld [vmem:[%s0 + $0x8] sm:$0xff]
    %v37 = vld [vmem:[%s0 + $0x10] sm:$0xff]
    %v38 = vld [vmem:[%s0 + $0x18] sm:$0xff]
    %v39 = vld [vmem:[%s0 + $0x20] sm:$0xff]
    %v40 = vld [vmem:[%s0 + $0x28] sm:$0xff]
    %v41 = vld [vmem:[%s0 + $0x30] sm:$0xff]
    %v42 = vld [vmem:[%s0 + $0x38] sm:$0xff]
    %v43 = vld [vmem:[%s1] sm:$0xff]
    %v44 = vld [vmem:[%s1 + $0x8] sm:$0xff]
    %v45 = vld [vmem:[%s1 + $0x10] sm:$0xff]
    %v46 = vld [vmem:[%s1 + $0x18] sm:$0xff]
    %v47 = vld [vmem:[%s1 + $0x20] sm:$0xff]
    %v48 = vld [vmem:[%s1 + $0x28] sm:$0xff]
    %v49 = vld [vmem:[%s1 + $0x30] sm:$0xff]
    %v50 = vld [vmem:[%s1 + $0x38] sm:$0xff]
    %v51 = vld [vmem:[%s1 + $0x40] sm:$0xff]
    %v52 = vld [vmem:[%s1 + $0x48] sm:$0xff]
    %v53 = vld [vmem:[%s1 + $0x50] sm:$0xff]
    %v54 = vld [vmem:[%s1 + $0x58] sm:$0xff]
    %v55 = vld [vmem:[%s1 + $0x60] sm:$0xff]
    %v56 = vld [vmem:[%s1 + $0x68] sm:$0xff]
    %v57 = vld [vmem:[%s1 + $0x70] sm:$0xff]
    %v58 = vld [vmem:[%s1 + $0x78] sm:$0xff]
    %59 = vmatpush.msra.mxu0 %v58
    %60 = vmatpush.msra.mxu0 %v57
    %61 = vmatpush.msra.mxu0 %v56
    %62 = vmatpush.msra.mxu0 %v55
    %63 = vmatpush.msra.mxu0 %v54
    %64 = vmatpush.msra.mxu0 %v53
    %65 = vmatpush.msra.mxu0 %v52
    %66 = vmatpush.msra.mxu0 %v51
    %67 = vmatpush.msra.mxu0 %v50
    %68 = vmatpush.msra.mxu0 %v49
    %69 = vmatpush.msra.mxu0 %v48
    %70 = vmatpush.msra.mxu0 %v47
    %71 = vmatpush.msra.mxu0 %v46
    %72 = vmatpush.msra.mxu0 %v45
    %73 = vmatpush.msra.mxu0 %v44
    %74 = vmatpush.msra.mxu0 %v43
    %75 = vmatmul.f32.gmra.mxu0 %v35
    %v76 = vpop.f32.mrf.mxu0
    %v77 = vadd.f32 0.0, %v76
    %78 = vmatmul.f32.gmra.mxu0 %v36
    %v79 = vpop.f32.mrf.mxu0
    %v80 = vadd.f32 0.0, %v79
    %81 = vmatmul.f32.gmra.mxu0 %v37
    %v82 = vpop.f32.mrf.mxu0
    %v83 = vadd.f32 0.0, %v82
    %84 = vmatmul.f32.gmra.mxu0 %v38
    %v85 = vpop.f32.mrf.mxu0
    %v86 = vadd.f32 0.0, %v85
    %87 = vmatmul.f32.gmra.mxu0 %v39
    %v88 = vpop.f32.mrf.mxu0
    %v89 = vadd.f32 0.0, %v88
    %90 = vmatmul.f32.gmra.mxu0 %v40
    %v91 = vpop.f32.mrf.mxu0
    %v92 = vadd.f32 0.0, %v91
    %93 = vmatmul.f32.gmra.mxu0 %v41
    %v94 = vpop.f32.mrf.mxu0
    %v95 = vadd.f32 0.0, %v94
    %96 = vmatmul.f32.gmra.mxu0 %v42
    %v97 = vpop.f32.mrf.mxu0
    %v98 = vadd.f32 0.0, %v97
    %99 = vdwg.mxu0
    %v100 = vadd.f32 %v27, %v77
    %v101 = vadd.f32 %v28, %v80
    %v102 = vadd.f32 %v29, %v83
    %v103 = vadd.f32 %v30, %v86
    %v104 = vadd.f32 %v31, %v89
    %v105 = vadd.f32 %v32, %v92
    %v106 = vadd.f32 %v33, %v95
    %v107 = vadd.f32 %v34, %v98
    %108 = vst [vmem:[#allocation2] sm:$0xff] %v100
    %109 = vst [vmem:[#allocation2 + $0x8] sm:$0xff] %v101
    %110 = vst [vmem:[#allocation2 + $0x10] sm:$0xff] %v102
    %111 = vst [vmem:[#allocation2 + $0x18] sm:$0xff] %v103
    %112 = vst [vmem:[#allocation2 + $0x20] sm:$0xff] %v104
    %113 = vst [vmem:[#allocation2 + $0x28] sm:$0xff] %v105
    %114 = vst [vmem:[#allocation2 + $0x30] sm:$0xff] %v106
    %115 = vst [vmem:[#allocation2 + $0x38] sm:$0xff] %v107
    // Predicated region
    $region18: #{st_self_attention.17} parent=1 // pred_check
      %p116 = pneg %p15
    $region19: #{st_self_attention.17} parent=1 // pred_check_branch
      %118 = sbr.rel (%p116) target = $region21
    $region20: #{st_self_attention.17} parent=1 // pred_region
      %v119 = vld [vmem:[#allocation2] sm:$0xff]
      %v120 = vld [vmem:[#allocation2 + $0x8] sm:$0xff]
      %v121 = vld [vmem:[#allocation2 + $0x10] sm:$0xff]
      %v122 = vld [vmem:[#allocation2 + $0x18] sm:$0xff]
      %v123 = vld [vmem:[#allocation2 + $0x20] sm:$0xff]
      %v124 = vld [vmem:[#allocation2 + $0x28] sm:$0xff]
      %v125 = vld [vmem:[#allocation2 + $0x30] sm:$0xff]
      %v126 = vld [vmem:[#allocation2 + $0x38] sm:$0xff]
      %v127 = vld [vmem:[%s2] sm:$0x1]
      %v129 = vperm.slane %v127, 0
      %v131 = vadd.f32 %v119, %v129
      %v132 = vadd.f32 %v120, %v129
      %v133 = vadd.f32 %v121, %v129
      %v134 = vadd.f32 %v122, %v129
      %v135 = vadd.f32 %v123, %v129
      %v136 = vadd.f32 %v124, %v129
      %v137 = vadd.f32 %v125, %v129
      %v138 = vadd.f32 %v126, %v129
      %139 = vst [vmem:[#allocation3] sm:$0xff] %v131
      %140 = vst [vmem:[#allocation3 + $0x8] sm:$0xff] %v132
      %141 = vst [vmem:[#allocation3 + $0x10] sm:$0xff] %v133
      %142 = vst [vmem:[#allocation3 + $0x18] sm:$0xff] %v134
      %143 = vst [vmem:[#allocation3 + $0x20] sm:$0xff] %v135
      %144 = vst [vmem:[#allocation3 + $0x28] sm:$0xff] %v136
      %145 = vst [vmem:[#allocation3 + $0x30] sm:$0xff] %v137
      %146 = vst [vmem:[#allocation3 + $0x38] sm:$0xff] %v138
    $region21: #{st_self_attention.17} parent=1 // pred_fallthru
      _
    // Predicated region
    $region22: #{st_self_attention.17} parent=1 // pred_check
      _
    $region23: #{st_self_attention.17} parent=1 // pred_check_branch
      %148 = sbr.rel (0) target = $region25
    $region24: #{st_self_attention.17} parent=1 // pred_region
      %150 = vsyncadd [#allocation4], 0
      %s151 = sshll.u32 [#allocation3], 4
      %s152 = int_to_ptr.vmem [resolvable:$true] %s151
      %s153 = sshll.u32 %s3, 4
      %s154 = int_to_ptr.hbm [resolvable:$true] %s153
      %159 = dma.vmem_to_hbm [thread:$0]  %s152, 1024, %s154, [#allocation4], 128, 128, 8
    $region25: #{st_self_attention.17} parent=1 // pred_fallthru
      _
    // Predicated region
    $region26: #{st_self_attention.17} parent=1 // pred_check
      _
    $region27: #{st_self_attention.17} parent=1 // pred_check_branch
      %161 = sbr.rel (0) target = $region29
    $region28: #{st_self_attention.17} parent=1 // pred_region
      %163 = dma.done [#allocation4], 1024
    $region29: #{st_self_attention.17} parent=1 // pred_fallthru
      _
    %164 = vsyncpa [#allocation4], 1

// kernel: st_self_attention.10
$region0: #{st_self_attention.10}
  #allocation0 [shape = 'u32[]', space=smem, size = 0x4, offset = 0x4, fixed_abs, tag = 'smem constant byte address 0x4 - core index']
  #allocation1 [shape = 'u32[72,128]{1,0:T(1,128)}', space=vmem, size = 0x9000, scoped, tag = 'internal scratch']
  %s0 = inlined_call_operand.vmem [shape: f32[32,4,4], index: 0, kind: input, shape index: {}]
  %s1 = inlined_call_operand.vmem [shape: f32[32,4,4], index: 1, kind: input, shape index: {}]
  %s2 = inlined_call_operand.vmem [shape: f32[32,4,4], index: 2, kind: input, shape index: {}]
  %s3 = inlined_call_operand.vmem [shape: f32[32,4,4], index: 3, kind: output, shape index: {}]
  %s4 = sld [smem:[#allocation0]]
  $region22: #{st_self_attention.10} parent=0
    _
  %s6 = ssub.s32 1, %s4
  %s7 = scalar_select 0, %s6, %s4
  // Predicated region
  $region2: #{st_self_attention.10} parent=0 // pred_check
    _
  $region3: #{st_self_attention.10} parent=0 // pred_check_branch
    %9 = sbr.rel (0) target = $region5
  $region4: #{st_self_attention.10} parent=0 // pred_region
    _
  $region5: #{st_self_attention.10} parent=0 // pred_fallthru
    _
  // Predicated region
  $region6: #{st_self_attention.10} parent=0 // pred_check
    _
  $region7: #{st_self_attention.10} parent=0 // pred_check_branch
    %11 = sbr.rel (0) target = $region9
  $region8: #{st_self_attention.10} parent=0 // pred_region
    _
  $region9: #{st_self_attention.10} parent=0 // pred_fallthru
    _
  // Predicated region
  $region10: #{st_self_attention.10} parent=0 // pred_check
    _
  $region11: #{st_self_attention.10} parent=0 // pred_check_branch
    %13 = sbr.rel (0) target = $region13
  $region12: #{st_self_attention.10} parent=0 // pred_region
    _
  $region13: #{st_self_attention.10} parent=0 // pred_fallthru
    _
  %v14 = vld [vmem:[%s0] sm:$0xf]
  %v15 = vld [vmem:[%s0 + $0x4] sm:$0xf]
  %v16 = vld [vmem:[%s0 + $0x8] sm:$0xf]
  %v17 = vld [vmem:[%s0 + $0xc] sm:$0xf]
  %v18 = vld [vmem:[%s0 + $0x10] sm:$0xf]
  %v19 = vld [vmem:[%s0 + $0x14] sm:$0xf]
  %v20 = vld [vmem:[%s0 + $0x18] sm:$0xf]
  %v21 = vld [vmem:[%s0 + $0x1c] sm:$0xf]
  %v22 = vld [vmem:[%s0 + $0x20] sm:$0xf]
  %v23 = vld [vmem:[%s0 + $0x24] sm:$0xf]
  %v24 = vld [vmem:[%s0 + $0x28] sm:$0xf]
  %v25 = vld [vmem:[%s0 + $0x2c] sm:$0xf]
  %v26 = vld [vmem:[%s0 + $0x30] sm:$0xf]
  %v27 = vld [vmem:[%s0 + $0x34] sm:$0xf]
  %v28 = vld [vmem:[%s0 + $0x38] sm:$0xf]
  %v29 = vld [vmem:[%s0 + $0x3c] sm:$0xf]
  %v30 = vld [vmem:[%s0 + $0x40] sm:$0xf]
  %v31 = vld [vmem:[%s0 + $0x44] sm:$0xf]
  %v32 = vld [vmem:[%s0 + $0x48] sm:$0xf]
  %v33 = vld [vmem:[%s0 + $0x4c] sm:$0xf]
  %v34 = vld [vmem:[%s0 + $0x50] sm:$0xf]
  %v35 = vld [vmem:[%s0 + $0x54] sm:$0xf]
  %v36 = vld [vmem:[%s0 + $0x58] sm:$0xf]
  %v37 = vld [vmem:[%s0 + $0x5c] sm:$0xf]
  %v38 = vld [vmem:[%s0 + $0x60] sm:$0xf]
  %v39 = vld [vmem:[%s0 + $0x64] sm:$0xf]
  %v40 = vld [vmem:[%s0 + $0x68] sm:$0xf]
  %v41 = vld [vmem:[%s0 + $0x6c] sm:$0xf]
  %v42 = vld [vmem:[%s0 + $0x70] sm:$0xf]
  %v43 = vld [vmem:[%s0 + $0x74] sm:$0xf]
  %v44 = vld [vmem:[%s0 + $0x78] sm:$0xf]
  %v45 = vld [vmem:[%s0 + $0x7c] sm:$0xf]
  %v46 = vmul.f32 %v14, 0.5
  %v47 = vmul.f32 %v15, 0.5
  %v48 = vmul.f32 %v16, 0.5
  %v49 = vmul.f32 %v17, 0.5
  %v50 = vmul.f32 %v18, 0.5
  %v51 = vmul.f32 %v19, 0.5
  %v52 = vmul.f32 %v20, 0.5
  %v53 = vmul.f32 %v21, 0.5
  %v54 = vmul.f32 %v22, 0.5
  %v55 = vmul.f32 %v23, 0.5
  %v56 = vmul.f32 %v24, 0.5
  %v57 = vmul.f32 %v25, 0.5
  %v58 = vmul.f32 %v26, 0.5
  %v59 = vmul.f32 %v27, 0.5
  %v60 = vmul.f32 %v28, 0.5
  %v61 = vmul.f32 %v29, 0.5
  %v62 = vmul.f32 %v30, 0.5
  %v63 = vmul.f32 %v31, 0.5
  %v64 = vmul.f32 %v32, 0.5
  %v65 = vmul.f32 %v33, 0.5
  %v66 = vmul.f32 %v34, 0.5
  %v67 = vmul.f32 %v35, 0.5
  %v68 = vmul.f32 %v36, 0.5
  %v69 = vmul.f32 %v37, 0.5
  %v70 = vmul.f32 %v38, 0.5
  %v71 = vmul.f32 %v39, 0.5
  %v72 = vmul.f32 %v40, 0.5
  %v73 = vmul.f32 %v41, 0.5
  %v74 = vmul.f32 %v42, 0.5
  %v75 = vmul.f32 %v43, 0.5
  %v76 = vmul.f32 %v44, 0.5
  %v77 = vmul.f32 %v45, 0.5
  %v78 = vld [vmem:[%s1] sm:$0xf]
  %v79 = vld [vmem:[%s1 + $0x4] sm:$0xf]
  %v80 = vld [vmem:[%s1 + $0x8] sm:$0xf]
  %v81 = vld [vmem:[%s1 + $0xc] sm:$0xf]
  %v82 = vld [vmem:[%s1 + $0x10] sm:$0xf]
  %v83 = vld [vmem:[%s1 + $0x14] sm:$0xf]
  %v84 = vld [vmem:[%s1 + $0x18] sm:$0xf]
  %v85 = vld [vmem:[%s1 + $0x1c] sm:$0xf]
  %v86 = vld [vmem:[%s1 + $0x20] sm:$0xf]
  %v87 = vld [vmem:[%s1 + $0x24] sm:$0xf]
  %v88 = vld [vmem:[%s1 + $0x28] sm:$0xf]
  %v89 = vld [vmem:[%s1 + $0x2c] sm:$0xf]
  %v90 = vld [vmem:[%s1 + $0x30] sm:$0xf]
  %v91 = vld [vmem:[%s1 + $0x34] sm:$0xf]
  %v92 = vld [vmem:[%s1 + $0x38] sm:$0xf]
  %v93 = vld [vmem:[%s1 + $0x3c] sm:$0xf]
  %v94 = vld [vmem:[%s1 + $0x40] sm:$0xf]
  %v95 = vld [vmem:[%s1 + $0x44] sm:$0xf]
  %v96 = vld [vmem:[%s1 + $0x48] sm:$0xf]
  %v97 = vld [vmem:[%s1 + $0x4c] sm:$0xf]
  %v98 = vld [vmem:[%s1 + $0x50] sm:$0xf]
  %v99 = vld [vmem:[%s1 + $0x54] sm:$0xf]
  %v100 = vld [vmem:[%s1 + $0x58] sm:$0xf]
  %v101 = vld [vmem:[%s1 + $0x5c] sm:$0xf]
  %v102 = vld [vmem:[%s1 + $0x60] sm:$0xf]
  %v103 = vld [vmem:[%s1 + $0x64] sm:$0xf]
  %v104 = vld [vmem:[%s1 + $0x68] sm:$0xf]
  %v105 = vld [vmem:[%s1 + $0x6c] sm:$0xf]
  %v106 = vld [vmem:[%s1 + $0x70] sm:$0xf]
  %v107 = vld [vmem:[%s1 + $0x74] sm:$0xf]
  %v108 = vld [vmem:[%s1 + $0x78] sm:$0xf]
  %v109 = vld [vmem:[%s1 + $0x7c] sm:$0xf]
  %vm110 = vcmask 31744
  %v112 = vsel %vm110, %v46, 0
  %v115 = vsel %vm110, %v78, 0
  %117 = vmatpush.xpose.msra.mxu0 0.0
  %118 = vmatpush.xpose.msra.mxu0 0.0
  %119 = vmatpush.xpose.msra.mxu0 0.0
  %120 = vmatpush.xpose.msra.mxu0 0.0
  %121 = vmatpush.xpose.msra.mxu0 0.0
  %122 = vmatpush.xpose.msra.mxu0 0.0
  %123 = vmatpush.xpose.msra.mxu0 0.0
  %124 = vmatpush.xpose.msra.mxu0 0.0
  %125 = vmatpush.xpose.msra.mxu0 0.0
  %126 = vmatpush.xpose.msra.mxu0 0.0
  %127 = vmatpush.xpose.msra.mxu0 0.0
  %128 = vmatpush.xpose.msra.mxu0 0.0
  %129 = vmatpush.xpose.msra.mxu0 0.0
  %130 = vmatpush.xpose.msra.mxu0 0.0
  %131 = vmatpush.xpose.msra.mxu0 0.0
  %132 = vmatpush.xpose.msra.mxu0 %v115
  %133 = vmatmul.f32.gmra.mxu0 %v112
  %v134 = vpop.f32.mrf.mxu0
  %v135 = vadd.f32 0.0, %v134
  %136 = vdwg.mxu0
  %v138 = vsel %vm110, %v47, 0
  %v141 = vsel %vm110, %v79, 0
  %143 = vmatpush.xpose.msra.mxu0 0.0
  %144 = vmatpush.xpose.msra.mxu0 0.0
  %145 = vmatpush.xpose.msra.mxu0 0.0
  %146 = vmatpush.xpose.msra.mxu0 0.0
  %147 = vmatpush.xpose.msra.mxu0 0.0
  %148 = vmatpush.xpose.msra.mxu0 0.0
  %149 = vmatpush.xpose.msra.mxu0 0.0
  %150 = vmatpush.xpose.msra.mxu0 0.0
  %151 = vmatpush.xpose.msra.mxu0 0.0
  %152 = vmatpush.xpose.msra.mxu0 0.0
  %153 = vmatpush.xpose.msra.mxu0 0.0
  %154 = vmatpush.xpose.msra.mxu0 0.0
  %155 = vmatpush.xpose.msra.mxu0 0.0
  %156 = vmatpush.xpose.msra.mxu0 0.0
  %157 = vmatpush.xpose.msra.mxu0 0.0
  %158 = vmatpush.xpose.msra.mxu0 %v141
  %159 = vmatmul.f32.gmra.mxu0 %v138
  %v160 = vpop.f32.mrf.mxu0
  %v161 = vadd.f32 0.0, %v160
  %162 = vdwg.mxu0
  %v164 = vsel %vm110, %v48, 0
  %v167 = vsel %vm110, %v80, 0
  %169 = vmatpush.xpose.msra.mxu0 0.0
  %170 = vmatpush.xpose.msra.mxu0 0.0
  %171 = vmatpush.xpose.msra.mxu0 0.0
  %172 = vmatpush.xpose.msra.mxu0 0.0
  %173 = vmatpush.xpose.msra.mxu0 0.0
  %174 = vmatpush.xpose.msra.mxu0 0.0
  %175 = vmatpush.xpose.msra.mxu0 0.0
  %176 = vmatpush.xpose.msra.mxu0 0.0
  %177 = vmatpush.xpose.msra.mxu0 0.0
  %178 = vmatpush.xpose.msra.mxu0 0.0
  %179 = vmatpush.xpose.msra.mxu0 0.0
  %180 = vmatpush.xpose.msra.mxu0 0.0
  %181 = vmatpush.xpose.msra.mxu0 0.0
  %182 = vmatpush.xpose.msra.mxu0 0.0
  %183 = vmatpush.xpose.msra.mxu0 0.0
  %184 = vmatpush.xpose.msra.mxu0 %v167
  %185 = vmatmul.f32.gmra.mxu0 %v164
  %v186 = vpop.f32.mrf.mxu0
  %v187 = vadd.f32 0.0, %v186
  %188 = vdwg.mxu0
  %v190 = vsel %vm110, %v49, 0
  %v193 = vsel %vm110, %v81, 0
  %195 = vmatpush.xpose.msra.mxu0 0.0
  %196 = vmatpush.xpose.msra.mxu0 0.0
  %197 = vmatpush.xpose.msra.mxu0 0.0
  %198 = vmatpush.xpose.msra.mxu0 0.0
  %199 = vmatpush.xpose.msra.mxu0 0.0
  %200 = vmatpush.xpose.msra.mxu0 0.0
  %201 = vmatpush.xpose.msra.mxu0 0.0
  %202 = vmatpush.xpose.msra.mxu0 0.0
  %203 = vmatpush.xpose.msra.mxu0 0.0
  %204 = vmatpush.xpose.msra.mxu0 0.0
  %205 = vmatpush.xpose.msra.mxu0 0.0
  %206 = vmatpush.xpose.msra.mxu0 0.0
  %207 = vmatpush.xpose.msra.mxu0 0.0
  %208 = vmatpush.xpose.msra.mxu0 0.0
  %209 = vmatpush.xpose.msra.mxu0 0.0
  %210 = vmatpush.xpose.msra.mxu0 %v193
  %211 = vmatmul.f32.gmra.mxu0 %v190
  %v212 = vpop.f32.mrf.mxu0
  %v213 = vadd.f32 0.0, %v212
  %214 = vdwg.mxu0
  %v216 = vsel %vm110, %v50, 0
  %v219 = vsel %vm110, %v82, 0
  %221 = vmatpush.xpose.msra.mxu0 0.0
  %222 = vmatpush.xpose.msra.mxu0 0.0
  %223 = vmatpush.xpose.msra.mxu0 0.0
  %224 = vmatpush.xpose.msra.mxu0 0.0
  %225 = vmatpush.xpose.msra.mxu0 0.0
  %226 = vmatpush.xpose.msra.mxu0 0.0
  %227 = vmatpush.xpose.msra.mxu0 0.0
  %228 = vmatpush.xpose.msra.mxu0 0.0
  %229 = vmatpush.xpose.msra.mxu0 0.0
  %230 = vmatpush.xpose.msra.mxu0 0.0
  %231 = vmatpush.xpose.msra.mxu0 0.0
  %232 = vmatpush.xpose.msra.mxu0 0.0
  %233 = vmatpush.xpose.msra.mxu0 0.0
  %234 = vmatpush.xpose.msra.mxu0 0.0
  %235 = vmatpush.xpose.msra.mxu0 0.0
  %236 = vmatpush.xpose.msra.mxu0 %v219
  %237 = vmatmul.f32.gmra.mxu0 %v216
  %v238 = vpop.f32.mrf.mxu0
  %v239 = vadd.f32 0.0, %v238
  %240 = vdwg.mxu0
  %v242 = vsel %vm110, %v51, 0
  %v245 = vsel %vm110, %v83, 0
  %247 = vmatpush.xpose.msra.mxu0 0.0
  %248 = vmatpush.xpose.msra.mxu0 0.0
  %249 = vmatpush.xpose.msra.mxu0 0.0
  %250 = vmatpush.xpose.msra.mxu0 0.0
  %251 = vmatpush.xpose.msra.mxu0 0.0
  %252 = vmatpush.xpose.msra.mxu0 0.0
  %253 = vmatpush.xpose.msra.mxu0 0.0
  %254 = vmatpush.xpose.msra.mxu0 0.0
  %255 = vmatpush.xpose.msra.mxu0 0.0
  %256 = vmatpush.xpose.msra.mxu0 0.0
  %257 = vmatpush.xpose.msra.mxu0 0.0
  %258 = vmatpush.xpose.msra.mxu0 0.0
  %259 = vmatpush.xpose.msra.mxu0 0.0
  %260 = vmatpush.xpose.msra.mxu0 0.0
  %261 = vmatpush.xpose.msra.mxu0 0.0
  %262 = vmatpush.xpose.msra.mxu0 %v245
  %263 = vmatmul.f32.gmra.mxu0 %v242
  %v264 = vpop.f32.mrf.mxu0
  %v265 = vadd.f32 0.0, %v264
  %266 = vdwg.mxu0
  %v268 = vsel %vm110, %v52, 0
  %v271 = vsel %vm110, %v84, 0
  %273 = vmatpush.xpose.msra.mxu0 0.0
  %274 = vmatpush.xpose.msra.mxu0 0.0
  %275 = vmatpush.xpose.msra.mxu0 0.0
  %276 = vmatpush.xpose.msra.mxu0 0.0
  %277 = vmatpush.xpose.msra.mxu0 0.0
  %278 = vmatpush.xpose.msra.mxu0 0.0
  %279 = vmatpush.xpose.msra.mxu0 0.0
  %280 = vmatpush.xpose.msra.mxu0 0.0
  %281 = vmatpush.xpose.msra.mxu0 0.0
  %282 = vmatpush.xpose.msra.mxu0 0.0
  %283 = vmatpush.xpose.msra.mxu0 0.0
  %284 = vmatpush.xpose.msra.mxu0 0.0
  %285 = vmatpush.xpose.msra.mxu0 0.0
  %286 = vmatpush.xpose.msra.mxu0 0.0
  %287 = vmatpush.xpose.msra.mxu0 0.0
  %288 = vmatpush.xpose.msra.mxu0 %v271
  %289 = vmatmul.f32.gmra.mxu0 %v268
  %v290 = vpop.f32.mrf.mxu0
  %v291 = vadd.f32 0.0, %v290
  %292 = vdwg.mxu0
  %v294 = vsel %vm110, %v53, 0
  %v297 = vsel %vm110, %v85, 0
  %299 = vmatpush.xpose.msra.mxu0 0.0
  %300 = vmatpush.xpose.msra.mxu0 0.0
  %301 = vmatpush.xpose.msra.mxu0 0.0
  %302 = vmatpush.xpose.msra.mxu0 0.0
  %303 = vmatpush.xpose.msra.mxu0 0.0
  %304 = vmatpush.xpose.msra.mxu0 0.0
  %305 = vmatpush.xpose.msra.mxu0 0.0
  %306 = vmatpush.xpose.msra.mxu0 0.0
  %307 = vmatpush.xpose.msra.mxu0 0.0
  %308 = vmatpush.xpose.msra.mxu0 0.0
  %309 = vmatpush.xpose.msra.mxu0 0.0
  %310 = vmatpush.xpose.msra.mxu0 0.0
  %311 = vmatpush.xpose.msra.mxu0 0.0
  %312 = vmatpush.xpose.msra.mxu0 0.0
  %313 = vmatpush.xpose.msra.mxu0 0.0
  %314 = vmatpush.xpose.msra.mxu0 %v297
  %315 = vmatmul.f32.gmra.mxu0 %v294
  %v316 = vpop.f32.mrf.mxu0
  %v317 = vadd.f32 0.0, %v316
  %318 = vdwg.mxu0
  %v320 = vsel %vm110, %v54, 0
  %v323 = vsel %vm110, %v86, 0
  %325 = vmatpush.xpose.msra.mxu0 0.0
  %326 = vmatpush.xpose.msra.mxu0 0.0
  %327 = vmatpush.xpose.msra.mxu0 0.0
  %328 = vmatpush.xpose.msra.mxu0 0.0
  %329 = vmatpush.xpose.msra.mxu0 0.0
  %330 = vmatpush.xpose.msra.mxu0 0.0
  %331 = vmatpush.xpose.msra.mxu0 0.0
  %332 = vmatpush.xpose.msra.mxu0 0.0
  %333 = vmatpush.xpose.msra.mxu0 0.0
  %334 = vmatpush.xpose.msra.mxu0 0.0
  %335 = vmatpush.xpose.msra.mxu0 0.0
  %336 = vmatpush.xpose.msra.mxu0 0.0
  %337 = vmatpush.xpose.msra.mxu0 0.0
  %338 = vmatpush.xpose.msra.mxu0 0.0
  %339 = vmatpush.xpose.msra.mxu0 0.0
  %340 = vmatpush.xpose.msra.mxu0 %v323
  %341 = vmatmul.f32.gmra.mxu0 %v320
  %v342 = vpop.f32.mrf.mxu0
  %v343 = vadd.f32 0.0, %v342
  %344 = vdwg.mxu0
  %v346 = vsel %vm110, %v55, 0
  %v349 = vsel %vm110, %v87, 0
  %351 = vmatpush.xpose.msra.mxu0 0.0
  %352 = vmatpush.xpose.msra.mxu0 0.0
  %353 = vmatpush.xpose.msra.mxu0 0.0
  %354 = vmatpush.xpose.msra.mxu0 0.0
  %355 = vmatpush.xpose.msra.mxu0 0.0
  %356 = vmatpush.xpose.msra.mxu0 0.0
  %357 = vmatpush.xpose.msra.mxu0 0.0
  %358 = vmatpush.xpose.msra.mxu0 0.0
  %359 = vmatpush.xpose.msra.mxu0 0.0
  %360 = vmatpush.xpose.msra.mxu0 0.0
  %361 = vmatpush.xpose.msra.mxu0 0.0
  %362 = vmatpush.xpose.msra.mxu0 0.0
  %363 = vmatpush.xpose.msra.mxu0 0.0
  %364 = vmatpush.xpose.msra.mxu0 0.0
  %365 = vmatpush.xpose.msra.mxu0 0.0
  %366 = vmatpush.xpose.msra.mxu0 %v349
  %367 = vmatmul.f32.gmra.mxu0 %v346
  %v368 = vpop.f32.mrf.mxu0
  %v369 = vadd.f32 0.0, %v368
  %370 = vdwg.mxu0
  %v372 = vsel %vm110, %v56, 0
  %v375 = vsel %vm110, %v88, 0
  %377 = vmatpush.xpose.msra.mxu0 0.0
  %378 = vmatpush.xpose.msra.mxu0 0.0
  %379 = vmatpush.xpose.msra.mxu0 0.0
  %380 = vmatpush.xpose.msra.mxu0 0.0
  %381 = vmatpush.xpose.msra.mxu0 0.0
  %382 = vmatpush.xpose.msra.mxu0 0.0
  %383 = vmatpush.xpose.msra.mxu0 0.0
  %384 = vmatpush.xpose.msra.mxu0 0.0
  %385 = vmatpush.xpose.msra.mxu0 0.0
  %386 = vmatpush.xpose.msra.mxu0 0.0
  %387 = vmatpush.xpose.msra.mxu0 0.0
  %388 = vmatpush.xpose.msra.mxu0 0.0
  %389 = vmatpush.xpose.msra.mxu0 0.0
  %390 = vmatpush.xpose.msra.mxu0 0.0
  %391 = vmatpush.xpose.msra.mxu0 0.0
  %392 = vmatpush.xpose.msra.mxu0 %v375
  %393 = vmatmul.f32.gmra.mxu0 %v372
  %v394 = vpop.f32.mrf.mxu0
  %v395 = vadd.f32 0.0, %v394
  %396 = vdwg.mxu0
  %v398 = vsel %vm110, %v57, 0
  %v401 = vsel %vm110, %v89, 0
  %403 = vmatpush.xpose.msra.mxu0 0.0
  %404 = vmatpush.xpose.msra.mxu0 0.0
  %405 = vmatpush.xpose.msra.mxu0 0.0
  %406 = vmatpush.xpose.msra.mxu0 0.0
  %407 = vmatpush.xpose.msra.mxu0 0.0
  %408 = vmatpush.xpose.msra.mxu0 0.0
  %409 = vmatpush.xpose.msra.mxu0 0.0
  %410 = vmatpush.xpose.msra.mxu0 0.0
  %411 = vmatpush.xpose.msra.mxu0 0.0
  %412 = vmatpush.xpose.msra.mxu0 0.0
  %413 = vmatpush.xpose.msra.mxu0 0.0
  %414 = vmatpush.xpose.msra.mxu0 0.0
  %415 = vmatpush.xpose.msra.mxu0 0.0
  %416 = vmatpush.xpose.msra.mxu0 0.0
  %417 = vmatpush.xpose.msra.mxu0 0.0
  %418 = vmatpush.xpose.msra.mxu0 %v401
  %419 = vmatmul.f32.gmra.mxu0 %v398
  %v420 = vpop.f32.mrf.mxu0
  %v421 = vadd.f32 0.0, %v420
  %422 = vdwg.mxu0
  %v424 = vsel %vm110, %v58, 0
  %v427 = vsel %vm110, %v90, 0
  %429 = vmatpush.xpose.msra.mxu0 0.0
  %430 = vmatpush.xpose.msra.mxu0 0.0
  %431 = vmatpush.xpose.msra.mxu0 0.0
  %432 = vmatpush.xpose.msra.mxu0 0.0
  %433 = vmatpush.xpose.msra.mxu0 0.0
  %434 = vmatpush.xpose.msra.mxu0 0.0
  %435 = vmatpush.xpose.msra.mxu0 0.0
  %436 = vmatpush.xpose.msra.mxu0 0.0
  %437 = vmatpush.xpose.msra.mxu0 0.0
  %438 = vmatpush.xpose.msra.mxu0 0.0
  %439 = vmatpush.xpose.msra.mxu0 0.0
  %440 = vmatpush.xpose.msra.mxu0 0.0
  %441 = vmatpush.xpose.msra.mxu0 0.0
  %442 = vmatpush.xpose.msra.mxu0 0.0
  %443 = vmatpush.xpose.msra.mxu0 0.0
  %444 = vmatpush.xpose.msra.mxu0 %v427
  %445 = vmatmul.f32.gmra.mxu0 %v424
  %v446 = vpop.f32.mrf.mxu0
  %v447 = vadd.f32 0.0, %v446
  %448 = vdwg.mxu0
  %v450 = vsel %vm110, %v59, 0
  %v453 = vsel %vm110, %v91, 0
  %455 = vmatpush.xpose.msra.mxu0 0.0
  %456 = vmatpush.xpose.msra.mxu0 0.0
  %457 = vmatpush.xpose.msra.mxu0 0.0
  %458 = vmatpush.xpose.msra.mxu0 0.0
  %459 = vmatpush.xpose.msra.mxu0 0.0
  %460 = vmatpush.xpose.msra.mxu0 0.0
  %461 = vmatpush.xpose.msra.mxu0 0.0
  %462 = vmatpush.xpose.msra.mxu0 0.0
  %463 = vmatpush.xpose.msra.mxu0 0.0
  %464 = vmatpush.xpose.msra.mxu0 0.0
  %465 = vmatpush.xpose.msra.mxu0 0.0
  %466 = vmatpush.xpose.msra.mxu0 0.0
  %467 = vmatpush.xpose.msra.mxu0 0.0
  %468 = vmatpush.xpose.msra.mxu0 0.0
  %469 = vmatpush.xpose.msra.mxu0 0.0
  %470 = vmatpush.xpose.msra.mxu0 %v453
  %471 = vmatmul.f32.gmra.mxu0 %v450
  %v472 = vpop.f32.mrf.mxu0
  %v473 = vadd.f32 0.0, %v472
  %474 = vdwg.mxu0
  %v476 = vsel %vm110, %v60, 0
  %v479 = vsel %vm110, %v92, 0
  %481 = vmatpush.xpose.msra.mxu0 0.0
  %482 = vmatpush.xpose.msra.mxu0 0.0
  %483 = vmatpush.xpose.msra.mxu0 0.0
  %484 = vmatpush.xpose.msra.mxu0 0.0
  %485 = vmatpush.xpose.msra.mxu0 0.0
  %486 = vmatpush.xpose.msra.mxu0 0.0
  %487 = vmatpush.xpose.msra.mxu0 0.0
  %488 = vmatpush.xpose.msra.mxu0 0.0
  %489 = vmatpush.xpose.msra.mxu0 0.0
  %490 = vmatpush.xpose.msra.mxu0 0.0
  %491 = vmatpush.xpose.msra.mxu0 0.0
  %492 = vmatpush.xpose.msra.mxu0 0.0
  %493 = vmatpush.xpose.msra.mxu0 0.0
  %494 = vmatpush.xpose.msra.mxu0 0.0
  %495 = vmatpush.xpose.msra.mxu0 0.0
  %496 = vmatpush.xpose.msra.mxu0 %v479
  %497 = vmatmul.f32.gmra.mxu0 %v476
  %v498 = vpop.f32.mrf.mxu0
  %v499 = vadd.f32 0.0, %v498
  %500 = vdwg.mxu0
  %v502 = vsel %vm110, %v61, 0
  %v505 = vsel %vm110, %v93, 0
  %507 = vmatpush.xpose.msra.mxu0 0.0
  %508 = vmatpush.xpose.msra.mxu0 0.0
  %509 = vmatpush.xpose.msra.mxu0 0.0
  %510 = vmatpush.xpose.msra.mxu0 0.0
  %511 = vmatpush.xpose.msra.mxu0 0.0
  %512 = vmatpush.xpose.msra.mxu0 0.0
  %513 = vmatpush.xpose.msra.mxu0 0.0
  %514 = vmatpush.xpose.msra.mxu0 0.0
  %515 = vmatpush.xpose.msra.mxu0 0.0
  %516 = vmatpush.xpose.msra.mxu0 0.0
  %517 = vmatpush.xpose.msra.mxu0 0.0
  %518 = vmatpush.xpose.msra.mxu0 0.0
  %519 = vmatpush.xpose.msra.mxu0 0.0
  %520 = vmatpush.xpose.msra.mxu0 0.0
  %521 = vmatpush.xpose.msra.mxu0 0.0
  %522 = vmatpush.xpose.msra.mxu0 %v505
  %523 = vmatmul.f32.gmra.mxu0 %v502
  %v524 = vpop.f32.mrf.mxu0
  %v525 = vadd.f32 0.0, %v524
  %526 = vdwg.mxu0
  %v528 = vsel %vm110, %v62, 0
  %v531 = vsel %vm110, %v94, 0
  %533 = vmatpush.xpose.msra.mxu0 0.0
  %534 = vmatpush.xpose.msra.mxu0 0.0
  %535 = vmatpush.xpose.msra.mxu0 0.0
  %536 = vmatpush.xpose.msra.mxu0 0.0
  %537 = vmatpush.xpose.msra.mxu0 0.0
  %538 = vmatpush.xpose.msra.mxu0 0.0
  %539 = vmatpush.xpose.msra.mxu0 0.0
  %540 = vmatpush.xpose.msra.mxu0 0.0
  %541 = vmatpush.xpose.msra.mxu0 0.0
  %542 = vmatpush.xpose.msra.mxu0 0.0
  %543 = vmatpush.xpose.msra.mxu0 0.0
  %544 = vmatpush.xpose.msra.mxu0 0.0
  %545 = vmatpush.xpose.msra.mxu0 0.0
  %546 = vmatpush.xpose.msra.mxu0 0.0
  %547 = vmatpush.xpose.msra.mxu0 0.0
  %548 = vmatpush.xpose.msra.mxu0 %v531
  %549 = vmatmul.f32.gmra.mxu0 %v528
  %v550 = vpop.f32.mrf.mxu0
  %v551 = vadd.f32 0.0, %v550
  %552 = vdwg.mxu0
  %v554 = vsel %vm110, %v63, 0
  %v557 = vsel %vm110, %v95, 0
  %559 = vmatpush.xpose.msra.mxu0 0.0
  %560 = vmatpush.xpose.msra.mxu0 0.0
  %561 = vmatpush.xpose.msra.mxu0 0.0
  %562 = vmatpush.xpose.msra.mxu0 0.0
  %563 = vmatpush.xpose.msra.mxu0 0.0
  %564 = vmatpush.xpose.msra.mxu0 0.0
  %565 = vmatpush.xpose.msra.mxu0 0.0
  %566 = vmatpush.xpose.msra.mxu0 0.0
  %567 = vmatpush.xpose.msra.mxu0 0.0
  %568 = vmatpush.xpose.msra.mxu0 0.0
  %569 = vmatpush.xpose.msra.mxu0 0.0
  %570 = vmatpush.xpose.msra.mxu0 0.0
  %571 = vmatpush.xpose.msra.mxu0 0.0
  %572 = vmatpush.xpose.msra.mxu0 0.0
  %573 = vmatpush.xpose.msra.mxu0 0.0
  %574 = vmatpush.xpose.msra.mxu0 %v557
  %575 = vmatmul.f32.gmra.mxu0 %v554
  %v576 = vpop.f32.mrf.mxu0
  %v577 = vadd.f32 0.0, %v576
  %578 = vdwg.mxu0
  %v580 = vsel %vm110, %v64, 0
  %v583 = vsel %vm110, %v96, 0
  %585 = vmatpush.xpose.msra.mxu0 0.0
  %586 = vmatpush.xpose.msra.mxu0 0.0
  %587 = vmatpush.xpose.msra.mxu0 0.0
  %588 = vmatpush.xpose.msra.mxu0 0.0
  %589 = vmatpush.xpose.msra.mxu0 0.0
  %590 = vmatpush.xpose.msra.mxu0 0.0
  %591 = vmatpush.xpose.msra.mxu0 0.0
  %592 = vmatpush.xpose.msra.mxu0 0.0
  %593 = vmatpush.xpose.msra.mxu0 0.0
  %594 = vmatpush.xpose.msra.mxu0 0.0
  %595 = vmatpush.xpose.msra.mxu0 0.0
  %596 = vmatpush.xpose.msra.mxu0 0.0
  %597 = vmatpush.xpose.msra.mxu0 0.0
  %598 = vmatpush.xpose.msra.mxu0 0.0
  %599 = vmatpush.xpose.msra.mxu0 0.0
  %600 = vmatpush.xpose.msra.mxu0 %v583
  %601 = vmatmul.f32.gmra.mxu0 %v580
  %v602 = vpop.f32.mrf.mxu0
  %v603 = vadd.f32 0.0, %v602
  %604 = vdwg.mxu0
  %v606 = vsel %vm110, %v65, 0
  %v609 = vsel %vm110, %v97, 0
  %611 = vmatpush.xpose.msra.mxu0 0.0
  %612 = vmatpush.xpose.msra.mxu0 0.0
  %613 = vmatpush.xpose.msra.mxu0 0.0
  %614 = vmatpush.xpose.msra.mxu0 0.0
  %615 = vmatpush.xpose.msra.mxu0 0.0
  %616 = vmatpush.xpose.msra.mxu0 0.0
  %617 = vmatpush.xpose.msra.mxu0 0.0
  %618 = vmatpush.xpose.msra.mxu0 0.0
  %619 = vmatpush.xpose.msra.mxu0 0.0
  %620 = vmatpush.xpose.msra.mxu0 0.0
  %621 = vmatpush.xpose.msra.mxu0 0.0
  %622 = vmatpush.xpose.msra.mxu0 0.0
  %623 = vmatpush.xpose.msra.mxu0 0.0
  %624 = vmatpush.xpose.msra.mxu0 0.0
  %625 = vmatpush.xpose.msra.mxu0 0.0
  %626 = vmatpush.xpose.msra.mxu0 %v609
  %627 = vmatmul.f32.gmra.mxu0 %v606
  %v628 = vpop.f32.mrf.mxu0
  %v629 = vadd.f32 0.0, %v628
  %630 = vdwg.mxu0
  %v632 = vsel %vm110, %v66, 0
  %v635 = vsel %vm110, %v98, 0
  %637 = vmatpush.xpose.msra.mxu0 0.0
  %638 = vmatpush.xpose.msra.mxu0 0.0
  %639 = vmatpush.xpose.msra.mxu0 0.0
  %640 = vmatpush.xpose.msra.mxu0 0.0
  %641 = vmatpush.xpose.msra.mxu0 0.0
  %642 = vmatpush.xpose.msra.mxu0 0.0
  %643 = vmatpush.xpose.msra.mxu0 0.0
  %644 = vmatpush.xpose.msra.mxu0 0.0
  %645 = vmatpush.xpose.msra.mxu0 0.0
  %646 = vmatpush.xpose.msra.mxu0 0.0
  %647 = vmatpush.xpose.msra.mxu0 0.0
  %648 = vmatpush.xpose.msra.mxu0 0.0
  %649 = vmatpush.xpose.msra.mxu0 0.0
  %650 = vmatpush.xpose.msra.mxu0 0.0
  %651 = vmatpush.xpose.msra.mxu0 0.0
  %652 = vmatpush.xpose.msra.mxu0 %v635
  %653 = vmatmul.f32.gmra.mxu0 %v632
  %v654 = vpop.f32.mrf.mxu0
  %v655 = vadd.f32 0.0, %v654
  %656 = vdwg.mxu0
  %v658 = vsel %vm110, %v67, 0
  %v661 = vsel %vm110, %v99, 0
  %663 = vmatpush.xpose.msra.mxu0 0.0
  %664 = vmatpush.xpose.msra.mxu0 0.0
  %665 = vmatpush.xpose.msra.mxu0 0.0
  %666 = vmatpush.xpose.msra.mxu0 0.0
  %667 = vmatpush.xpose.msra.mxu0 0.0
  %668 = vmatpush.xpose.msra.mxu0 0.0
  %669 = vmatpush.xpose.msra.mxu0 0.0
  %670 = vmatpush.xpose.msra.mxu0 0.0
  %671 = vmatpush.xpose.msra.mxu0 0.0
  %672 = vmatpush.xpose.msra.mxu0 0.0
  %673 = vmatpush.xpose.msra.mxu0 0.0
  %674 = vmatpush.xpose.msra.mxu0 0.0
  %675 = vmatpush.xpose.msra.mxu0 0.0
  %676 = vmatpush.xpose.msra.mxu0 0.0
  %677 = vmatpush.xpose.msra.mxu0 0.0
  %678 = vmatpush.xpose.msra.mxu0 %v661
  %679 = vmatmul.f32.gmra.mxu0 %v658
  %v680 = vpop.f32.mrf.mxu0
  %v681 = vadd.f32 0.0, %v680
  %682 = vdwg.mxu0
  %v684 = vsel %vm110, %v68, 0
  %v687 = vsel %vm110, %v100, 0
  %689 = vmatpush.xpose.msra.mxu0 0.0
  %690 = vmatpush.xpose.msra.mxu0 0.0
  %691 = vmatpush.xpose.msra.mxu0 0.0
  %692 = vmatpush.xpose.msra.mxu0 0.0
  %693 = vmatpush.xpose.msra.mxu0 0.0
  %694 = vmatpush.xpose.msra.mxu0 0.0
  %695 = vmatpush.xpose.msra.mxu0 0.0
  %696 = vmatpush.xpose.msra.mxu0 0.0
  %697 = vmatpush.xpose.msra.mxu0 0.0
  %698 = vmatpush.xpose.msra.mxu0 0.0
  %699 = vmatpush.xpose.msra.mxu0 0.0
  %700 = vmatpush.xpose.msra.mxu0 0.0
  %701 = vmatpush.xpose.msra.mxu0 0.0
  %702 = vmatpush.xpose.msra.mxu0 0.0
  %703 = vmatpush.xpose.msra.mxu0 0.0
  %704 = vmatpush.xpose.msra.mxu0 %v687
  %705 = vmatmul.f32.gmra.mxu0 %v684
  %v706 = vpop.f32.mrf.mxu0
  %v707 = vadd.f32 0.0, %v706
  %708 = vdwg.mxu0
  %v710 = vsel %vm110, %v69, 0
  %v713 = vsel %vm110, %v101, 0
  %715 = vmatpush.xpose.msra.mxu0 0.0
  %716 = vmatpush.xpose.msra.mxu0 0.0
  %717 = vmatpush.xpose.msra.mxu0 0.0
  %718 = vmatpush.xpose.msra.mxu0 0.0
  %719 = vmatpush.xpose.msra.mxu0 0.0
  %720 = vmatpush.xpose.msra.mxu0 0.0
  %721 = vmatpush.xpose.msra.mxu0 0.0
  %722 = vmatpush.xpose.msra.mxu0 0.0
  %723 = vmatpush.xpose.msra.mxu0 0.0
  %724 = vmatpush.xpose.msra.mxu0 0.0
  %725 = vmatpush.xpose.msra.mxu0 0.0
  %726 = vmatpush.xpose.msra.mxu0 0.0
  %727 = vmatpush.xpose.msra.mxu0 0.0
  %728 = vmatpush.xpose.msra.mxu0 0.0
  %729 = vmatpush.xpose.msra.mxu0 0.0
  %730 = vmatpush.xpose.msra.mxu0 %v713
  %731 = vmatmul.f32.gmra.mxu0 %v710
  %v732 = vpop.f32.mrf.mxu0
  %v733 = vadd.f32 0.0, %v732
  %734 = vdwg.mxu0
  %v736 = vsel %vm110, %v70, 0
  %v739 = vsel %vm110, %v102, 0
  %741 = vmatpush.xpose.msra.mxu0 0.0
  %742 = vmatpush.xpose.msra.mxu0 0.0
  %743 = vmatpush.xpose.msra.mxu0 0.0
  %744 = vmatpush.xpose.msra.mxu0 0.0
  %745 = vmatpush.xpose.msra.mxu0 0.0
  %746 = vmatpush.xpose.msra.mxu0 0.0
  %747 = vmatpush.xpose.msra.mxu0 0.0
  %748 = vmatpush.xpose.msra.mxu0 0.0
  %749 = vmatpush.xpose.msra.mxu0 0.0
  %750 = vmatpush.xpose.msra.mxu0 0.0
  %751 = vmatpush.xpose.msra.mxu0 0.0
  %752 = vmatpush.xpose.msra.mxu0 0.0
  %753 = vmatpush.xpose.msra.mxu0 0.0
  %754 = vmatpush.xpose.msra.mxu0 0.0
  %755 = vmatpush.xpose.msra.mxu0 0.0
  %756 = vmatpush.xpose.msra.mxu0 %v739
  %757 = vmatmul.f32.gmra.mxu0 %v736
  %v758 = vpop.f32.mrf.mxu0
  %v759 = vadd.f32 0.0, %v758
  %760 = vdwg.mxu0
  %v762 = vsel %vm110, %v71, 0
  %v765 = vsel %vm110, %v103, 0
  %767 = vmatpush.xpose.msra.mxu0 0.0
  %768 = vmatpush.xpose.msra.mxu0 0.0
  %769 = vmatpush.xpose.msra.mxu0 0.0
  %770 = vmatpush.xpose.msra.mxu0 0.0
  %771 = vmatpush.xpose.msra.mxu0 0.0
  %772 = vmatpush.xpose.msra.mxu0 0.0
  %773 = vmatpush.xpose.msra.mxu0 0.0
  %774 = vmatpush.xpose.msra.mxu0 0.0
  %775 = vmatpush.xpose.msra.mxu0 0.0
  %776 = vmatpush.xpose.msra.mxu0 0.0
  %777 = vmatpush.xpose.msra.mxu0 0.0
  %778 = vmatpush.xpose.msra.mxu0 0.0
  %779 = vmatpush.xpose.msra.mxu0 0.0
  %780 = vmatpush.xpose.msra.mxu0 0.0
  %781 = vmatpush.xpose.msra.mxu0 0.0
  %782 = vmatpush.xpose.msra.mxu0 %v765
  %783 = vmatmul.f32.gmra.mxu0 %v762
  %v784 = vpop.f32.mrf.mxu0
  %v785 = vadd.f32 0.0, %v784
  %786 = vdwg.mxu0
  %v788 = vsel %vm110, %v72, 0
  %v791 = vsel %vm110, %v104, 0
  %793 = vmatpush.xpose.msra.mxu0 0.0
  %794 = vmatpush.xpose.msra.mxu0 0.0
  %795 = vmatpush.xpose.msra.mxu0 0.0
  %796 = vmatpush.xpose.msra.mxu0 0.0
  %797 = vmatpush.xpose.msra.mxu0 0.0
  %798 = vmatpush.xpose.msra.mxu0 0.0
  %799 = vmatpush.xpose.msra.mxu0 0.0
  %800 = vmatpush.xpose.msra.mxu0 0.0
  %801 = vmatpush.xpose.msra.mxu0 0.0
  %802 = vmatpush.xpose.msra.mxu0 0.0
  %803 = vmatpush.xpose.msra.mxu0 0.0
  %804 = vmatpush.xpose.msra.mxu0 0.0
  %805 = vmatpush.xpose.msra.mxu0 0.0
  %806 = vmatpush.xpose.msra.mxu0 0.0
  %807 = vmatpush.xpose.msra.mxu0 0.0
  %808 = vmatpush.xpose.msra.mxu0 %v791
  %809 = vmatmul.f32.gmra.mxu0 %v788
  %v810 = vpop.f32.mrf.mxu0
  %v811 = vadd.f32 0.0, %v810
  %812 = vdwg.mxu0
  %v814 = vsel %vm110, %v73, 0
  %v817 = vsel %vm110, %v105, 0
  %819 = vmatpush.xpose.msra.mxu0 0.0
  %820 = vmatpush.xpose.msra.mxu0 0.0
  %821 = vmatpush.xpose.msra.mxu0 0.0
  %822 = vmatpush.xpose.msra.mxu0 0.0
  %823 = vmatpush.xpose.msra.mxu0 0.0
  %824 = vmatpush.xpose.msra.mxu0 0.0
  %825 = vmatpush.xpose.msra.mxu0 0.0
  %826 = vmatpush.xpose.msra.mxu0 0.0
  %827 = vmatpush.xpose.msra.mxu0 0.0
  %828 = vmatpush.xpose.msra.mxu0 0.0
  %829 = vmatpush.xpose.msra.mxu0 0.0
  %830 = vmatpush.xpose.msra.mxu0 0.0
  %831 = vmatpush.xpose.msra.mxu0 0.0
  %832 = vmatpush.xpose.msra.mxu0 0.0
  %833 = vmatpush.xpose.msra.mxu0 0.0
  %834 = vmatpush.xpose.msra.mxu0 %v817
  %835 = vmatmul.f32.gmra.mxu0 %v814
  %v836 = vpop.f32.mrf.mxu0
  %v837 = vadd.f32 0.0, %v836
  %838 = vdwg.mxu0
  %v840 = vsel %vm110, %v74, 0
  %v843 = vsel %vm110, %v106, 0
  %845 = vmatpush.xpose.msra.mxu0 0.0
  %846 = vmatpush.xpose.msra.mxu0 0.0
  %847 = vmatpush.xpose.msra.mxu0 0.0
  %848 = vmatpush.xpose.msra.mxu0 0.0
  %849 = vmatpush.xpose.msra.mxu0 0.0
  %850 = vmatpush.xpose.msra.mxu0 0.0
  %851 = vmatpush.xpose.msra.mxu0 0.0
  %852 = vmatpush.xpose.msra.mxu0 0.0
  %853 = vmatpush.xpose.msra.mxu0 0.0
  %854 = vmatpush.xpose.msra.mxu0 0.0
  %855 = vmatpush.xpose.msra.mxu0 0.0
  %856 = vmatpush.xpose.msra.mxu0 0.0
  %857 = vmatpush.xpose.msra.mxu0 0.0
  %858 = vmatpush.xpose.msra.mxu0 0.0
  %859 = vmatpush.xpose.msra.mxu0 0.0
  %860 = vmatpush.xpose.msra.mxu0 %v843
  %861 = vmatmul.f32.gmra.mxu0 %v840
  %v862 = vpop.f32.mrf.mxu0
  %v863 = vadd.f32 0.0, %v862
  %864 = vdwg.mxu0
  %v866 = vsel %vm110, %v75, 0
  %v869 = vsel %vm110, %v107, 0
  %871 = vmatpush.xpose.msra.mxu0 0.0
  %872 = vmatpush.xpose.msra.mxu0 0.0
  %873 = vmatpush.xpose.msra.mxu0 0.0
  %874 = vmatpush.xpose.msra.mxu0 0.0
  %875 = vmatpush.xpose.msra.mxu0 0.0
  %876 = vmatpush.xpose.msra.mxu0 0.0
  %877 = vmatpush.xpose.msra.mxu0 0.0
  %878 = vmatpush.xpose.msra.mxu0 0.0
  %879 = vmatpush.xpose.msra.mxu0 0.0
  %880 = vmatpush.xpose.msra.mxu0 0.0
  %881 = vmatpush.xpose.msra.mxu0 0.0
  %882 = vmatpush.xpose.msra.mxu0 0.0
  %883 = vmatpush.xpose.msra.mxu0 0.0
  %884 = vmatpush.xpose.msra.mxu0 0.0
  %885 = vmatpush.xpose.msra.mxu0 0.0
  %886 = vmatpush.xpose.msra.mxu0 %v869
  %887 = vmatmul.f32.gmra.mxu0 %v866
  %v888 = vpop.f32.mrf.mxu0
  %v889 = vadd.f32 0.0, %v888
  %890 = vdwg.mxu0
  %v892 = vsel %vm110, %v76, 0
  %v895 = vsel %vm110, %v108, 0
  %897 = vmatpush.xpose.msra.mxu0 0.0
  %898 = vmatpush.xpose.msra.mxu0 0.0
  %899 = vmatpush.xpose.msra.mxu0 0.0
  %900 = vmatpush.xpose.msra.mxu0 0.0
  %901 = vmatpush.xpose.msra.mxu0 0.0
  %902 = vmatpush.xpose.msra.mxu0 0.0
  %903 = vmatpush.xpose.msra.mxu0 0.0
  %904 = vmatpush.xpose.msra.mxu0 0.0
  %905 = vmatpush.xpose.msra.mxu0 0.0
  %906 = vmatpush.xpose.msra.mxu0 0.0
  %907 = vmatpush.xpose.msra.mxu0 0.0
  %908 = vmatpush.xpose.msra.mxu0 0.0
  %909 = vmatpush.xpose.msra.mxu0 0.0
  %910 = vmatpush.xpose.msra.mxu0 0.0
  %911 = vmatpush.xpose.msra.mxu0 0.0
  %912 = vmatpush.xpose.msra.mxu0 %v895
  %913 = vmatmul.f32.gmra.mxu0 %v892
  %v914 = vpop.f32.mrf.mxu0
  %v915 = vadd.f32 0.0, %v914
  %916 = vdwg.mxu0
  %v918 = vsel %vm110, %v77, 0
  %v921 = vsel %vm110, %v109, 0
  %923 = vmatpush.xpose.msra.mxu0 0.0
  %924 = vmatpush.xpose.msra.mxu0 0.0
  %925 = vmatpush.xpose.msra.mxu0 0.0
  %926 = vmatpush.xpose.msra.mxu0 0.0
  %927 = vmatpush.xpose.msra.mxu0 0.0
  %928 = vmatpush.xpose.msra.mxu0 0.0
  %929 = vmatpush.xpose.msra.mxu0 0.0
  %930 = vmatpush.xpose.msra.mxu0 0.0
  %931 = vmatpush.xpose.msra.mxu0 0.0
  %932 = vmatpush.xpose.msra.mxu0 0.0
  %933 = vmatpush.xpose.msra.mxu0 0.0
  %934 = vmatpush.xpose.msra.mxu0 0.0
  %935 = vmatpush.xpose.msra.mxu0 0.0
  %936 = vmatpush.xpose.msra.mxu0 0.0
  %937 = vmatpush.xpose.msra.mxu0 0.0
  %938 = vmatpush.xpose.msra.mxu0 %v921
  %939 = vmatmul.f32.gmra.mxu0 %v918
  %v940 = vpop.f32.mrf.mxu0
  %v941 = vadd.f32 0.0, %v940
  %942 = vdwg.mxu0
  %vm943 = vcmask 27648
  %v944 = vsel %vm943, %v135, -inf
  %945 = vmax.xlane.f32.xlu0 %v944
  %v946 = vpop.xlane.xlu0 %945
  %v947 = vsel %vm943, %v161, -inf
  %948 = vmax.xlane.f32.xlu0 %v947
  %v949 = vpop.xlane.xlu0 %948
  %v950 = vsel %vm943, %v187, -inf
  %951 = vmax.xlane.f32.xlu0 %v950
  %v952 = vpop.xlane.xlu0 %951
  %v953 = vsel %vm943, %v213, -inf
  %954 = vmax.xlane.f32.xlu0 %v953
  %v955 = vpop.xlane.xlu0 %954
  %v956 = vsel %vm943, %v239, -inf
  %957 = vmax.xlane.f32.xlu0 %v956
  %v958 = vpop.xlane.xlu0 %957
  %v959 = vsel %vm943, %v265, -inf
  %960 = vmax.xlane.f32.xlu0 %v959
  %v961 = vpop.xlane.xlu0 %960
  %v962 = vsel %vm943, %v291, -inf
  %963 = vmax.xlane.f32.xlu0 %v962
  %v964 = vpop.xlane.xlu0 %963
  %v965 = vsel %vm943, %v317, -inf
  %966 = vmax.xlane.f32.xlu0 %v965
  %v967 = vpop.xlane.xlu0 %966
  %v968 = vsel %vm943, %v343, -inf
  %969 = vmax.xlane.f32.xlu0 %v968
  %v970 = vpop.xlane.xlu0 %969
  %v971 = vsel %vm943, %v369, -inf
  %972 = vmax.xlane.f32.xlu0 %v971
  %v973 = vpop.xlane.xlu0 %972
  %v974 = vsel %vm943, %v395, -inf
  %975 = vmax.xlane.f32.xlu0 %v974
  %v976 = vpop.xlane.xlu0 %975
  %v977 = vsel %vm943, %v421, -inf
  %978 = vmax.xlane.f32.xlu0 %v977
  %v979 = vpop.xlane.xlu0 %978
  %v980 = vsel %vm943, %v447, -inf
  %981 = vmax.xlane.f32.xlu0 %v980
  %v982 = vpop.xlane.xlu0 %981
  %v983 = vsel %vm943, %v473, -inf
  %984 = vmax.xlane.f32.xlu0 %v983
  %v985 = vpop.xlane.xlu0 %984
  %v986 = vsel %vm943, %v499, -inf
  %987 = vmax.xlane.f32.xlu0 %v986
  %v988 = vpop.xlane.xlu0 %987
  %v989 = vsel %vm943, %v525, -inf
  %990 = vmax.xlane.f32.xlu0 %v989
  %v991 = vpop.xlane.xlu0 %990
  %v992 = vsel %vm943, %v551, -inf
  %993 = vmax.xlane.f32.xlu0 %v992
  %v994 = vpop.xlane.xlu0 %993
  %v995 = vsel %vm943, %v577, -inf
  %996 = vmax.xlane.f32.xlu0 %v995
  %v997 = vpop.xlane.xlu0 %996
  %v998 = vsel %vm943, %v603, -inf
  %999 = vmax.xlane.f32.xlu0 %v998
  %v1000 = vpop.xlane.xlu0 %999
  %v1001 = vsel %vm943, %v629, -inf
  %1002 = vmax.xlane.f32.xlu0 %v1001
  %v1003 = vpop.xlane.xlu0 %1002
  %v1004 = vsel %vm943, %v655, -inf
  %1005 = vmax.xlane.f32.xlu0 %v1004
  %v1006 = vpop.xlane.xlu0 %1005
  %v1007 = vsel %vm943, %v681, -inf
  %1008 = vmax.xlane.f32.xlu0 %v1007
  %v1009 = vpop.xlane.xlu0 %1008
  %v1010 = vsel %vm943, %v707, -inf
  %1011 = vmax.xlane.f32.xlu0 %v1010
  %v1012 = vpop.xlane.xlu0 %1011
  %v1013 = vsel %vm943, %v733, -inf
  %1014 = vmax.xlane.f32.xlu0 %v1013
  %v1015 = vpop.xlane.xlu0 %1014
  %v1016 = vsel %vm943, %v759, -inf
  %1017 = vmax.xlane.f32.xlu0 %v1016
  %v1018 = vpop.xlane.xlu0 %1017
  %v1019 = vsel %vm943, %v785, -inf
  %1020 = vmax.xlane.f32.xlu0 %v1019
  %v1021 = vpop.xlane.xlu0 %1020
  %v1022 = vsel %vm943, %v811, -inf
  %1023 = vmax.xlane.f32.xlu0 %v1022
  %v1024 = vpop.xlane.xlu0 %1023
  %v1025 = vsel %vm943, %v837, -inf
  %1026 = vmax.xlane.f32.xlu0 %v1025
  %v1027 = vpop.xlane.xlu0 %1026
  %v1028 = vsel %vm943, %v863, -inf
  %1029 = vmax.xlane.f32.xlu0 %v1028
  %v1030 = vpop.xlane.xlu0 %1029
  %v1031 = vsel %vm943, %v889, -inf
  %1032 = vmax.xlane.f32.xlu0 %v1031
  %v1033 = vpop.xlane.xlu0 %1032
  %v1034 = vsel %vm943, %v915, -inf
  %1035 = vmax.xlane.f32.xlu0 %v1034
  %v1036 = vpop.xlane.xlu0 %1035
  %v1037 = vsel %vm943, %v941, -inf
  %1038 = vmax.xlane.f32.xlu0 %v1037
  %v1039 = vpop.xlane.xlu0 %1038
  %v1040 = vsub.f32 %v135, %v946
  %v1041 = vsub.f32 %v161, %v949
  %v1042 = vsub.f32 %v187, %v952
  %v1043 = vsub.f32 %v213, %v955
  %v1044 = vsub.f32 %v239, %v958
  %v1045 = vsub.f32 %v265, %v961
  %v1046 = vsub.f32 %v291, %v964
  %v1047 = vsub.f32 %v317, %v967
  %v1048 = vsub.f32 %v343, %v970
  %v1049 = vsub.f32 %v369, %v973
  %v1050 = vsub.f32 %v395, %v976
  %v1051 = vsub.f32 %v421, %v979
  %v1052 = vsub.f32 %v447, %v982
  %v1053 = vsub.f32 %v473, %v985
  %v1054 = vsub.f32 %v499, %v988
  %v1055 = vsub.f32 %v525, %v991
  %v1056 = vsub.f32 %v551, %v994
  %v1057 = vsub.f32 %v577, %v997
  %v1058 = vsub.f32 %v603, %v1000
  %v1059 = vsub.f32 %v629, %v1003
  %v1060 = vsub.f32 %v655, %v1006
  %v1061 = vsub.f32 %v681, %v1009
  %v1062 = vsub.f32 %v707, %v1012
  %v1063 = vsub.f32 %v733, %v1015
  %v1064 = vsub.f32 %v759, %v1018
  %v1065 = vsub.f32 %v785, %v1021
  %v1066 = vsub.f32 %v811, %v1024
  %v1067 = vsub.f32 %v837, %v1027
  %v1068 = vsub.f32 %v863, %v1030
  %v1069 = vsub.f32 %v889, %v1033
  %v1070 = vsub.f32 %v915, %v1036
  %v1071 = vsub.f32 %v941, %v1039
  %v1072 = vmul.f32 %v1040, 1.442695
  %v1073 = vpow.pop %v1072
  %v1074 = vmul.f32 %v1041, 1.442695
  %v1075 = vpow.pop %v1074
  %v1076 = vmul.f32 %v1042, 1.442695
  %v1077 = vpow.pop %v1076
  %v1078 = vmul.f32 %v1043, 1.442695
  %v1079 = vpow.pop %v1078
  %v1080 = vmul.f32 %v1044, 1.442695
  %v1081 = vpow.pop %v1080
  %v1082 = vmul.f32 %v1045, 1.442695
  %v1083 = vpow.pop %v1082
  %v1084 = vmul.f32 %v1046, 1.442695
  %v1085 = vpow.pop %v1084
  %v1086 = vmul.f32 %v1047, 1.442695
  %v1087 = vpow.pop %v1086
  %v1088 = vmul.f32 %v1048, 1.442695
  %v1089 = vpow.pop %v1088
  %v1090 = vmul.f32 %v1049, 1.442695
  %v1091 = vpow.pop %v1090
  %v1092 = vmul.f32 %v1050, 1.442695
  %v1093 = vpow.pop %v1092
  %v1094 = vmul.f32 %v1051, 1.442695
  %v1095 = vpow.pop %v1094
  %v1096 = vmul.f32 %v1052, 1.442695
  %v1097 = vpow.pop %v1096
  %v1098 = vmul.f32 %v1053, 1.442695
  %v1099 = vpow.pop %v1098
  %v1100 = vmul.f32 %v1054, 1.442695
  %v1101 = vpow.pop %v1100
  %v1102 = vmul.f32 %v1055, 1.442695
  %v1103 = vpow.pop %v1102
  %v1104 = vmul.f32 %v1056, 1.442695
  %v1105 = vpow.pop %v1104
  %v1106 = vmul.f32 %v1057, 1.442695
  %v1107 = vpow.pop %v1106
  %v1108 = vmul.f32 %v1058, 1.442695
  %v1109 = vpow.pop %v1108
  %v1110 = vmul.f32 %v1059, 1.442695
  %v1111 = vpow.pop %v1110
  %v1112 = vmul.f32 %v1060, 1.442695
  %v1113 = vpow.pop %v1112
  %v1114 = vmul.f32 %v1061, 1.442695
  %v1115 = vpow.pop %v1114
  %v1116 = vmul.f32 %v1062, 1.442695
  %v1117 = vpow.pop %v1116
  %v1118 = vmul.f32 %v1063, 1.442695
  %v1119 = vpow.pop %v1118
  %v1120 = vmul.f32 %v1064, 1.442695
  %v1121 = vpow.pop %v1120
  %v1122 = vmul.f32 %v1065, 1.442695
  %v1123 = vpow.pop %v1122
  %v1124 = vmul.f32 %v1066, 1.442695
  %v1125 = vpow.pop %v1124
  %v1126 = vmul.f32 %v1067, 1.442695
  %v1127 = vpow.pop %v1126
  %v1128 = vmul.f32 %v1068, 1.442695
  %v1129 = vpow.pop %v1128
  %v1130 = vmul.f32 %v1069, 1.442695
  %v1131 = vpow.pop %v1130
  %v1132 = vmul.f32 %v1070, 1.442695
  %v1133 = vpow.pop %v1132
  %v1134 = vmul.f32 %v1071, 1.442695
  %v1135 = vpow.pop %v1134
  %v1136 = vsel %vm943, %v1073, 0.0
  %1137 = vadd.xlane.f32.xlu0 %v1136
  %v1138 = vpop.xlane.xlu0 %1137
  %v1139 = vsel %vm943, %v1075, 0.0
  %1140 = vadd.xlane.f32.xlu0 %v1139
  %v1141 = vpop.xlane.xlu0 %1140
  %v1142 = vsel %vm943, %v1077, 0.0
  %1143 = vadd.xlane.f32.xlu0 %v1142
  %v1144 = vpop.xlane.xlu0 %1143
  %v1145 = vsel %vm943, %v1079, 0.0
  %1146 = vadd.xlane.f32.xlu0 %v1145
  %v1147 = vpop.xlane.xlu0 %1146
  %v1148 = vsel %vm943, %v1081, 0.0
  %1149 = vadd.xlane.f32.xlu0 %v1148
  %v1150 = vpop.xlane.xlu0 %1149
  %v1151 = vsel %vm943, %v1083, 0.0
  %1152 = vadd.xlane.f32.xlu0 %v1151
  %v1153 = vpop.xlane.xlu0 %1152
  %v1154 = vsel %vm943, %v1085, 0.0
  %1155 = vadd.xlane.f32.xlu0 %v1154
  %v1156 = vpop.xlane.xlu0 %1155
  %v1157 = vsel %vm943, %v1087, 0.0
  %1158 = vadd.xlane.f32.xlu0 %v1157
  %v1159 = vpop.xlane.xlu0 %1158
  %v1160 = vsel %vm943, %v1089, 0.0
  %1161 = vadd.xlane.f32.xlu0 %v1160
  %v1162 = vpop.xlane.xlu0 %1161
  %v1163 = vsel %vm943, %v1091, 0.0
  %1164 = vadd.xlane.f32.xlu0 %v1163
  %v1165 = vpop.xlane.xlu0 %1164
  %v1166 = vsel %vm943, %v1093, 0.0
  %1167 = vadd.xlane.f32.xlu0 %v1166
  %v1168 = vpop.xlane.xlu0 %1167
  %v1169 = vsel %vm943, %v1095, 0.0
  %1170 = vadd.xlane.f32.xlu0 %v1169
  %v1171 = vpop.xlane.xlu0 %1170
  %v1172 = vsel %vm943, %v1097, 0.0
  %1173 = vadd.xlane.f32.xlu0 %v1172
  %v1174 = vpop.xlane.xlu0 %1173
  %v1175 = vsel %vm943, %v1099, 0.0
  %1176 = vadd.xlane.f32.xlu0 %v1175
  %v1177 = vpop.xlane.xlu0 %1176
  %v1178 = vsel %vm943, %v1101, 0.0
  %1179 = vadd.xlane.f32.xlu0 %v1178
  %v1180 = vpop.xlane.xlu0 %1179
  %v1181 = vsel %vm943, %v1103, 0.0
  %1182 = vadd.xlane.f32.xlu0 %v1181
  %v1183 = vpop.xlane.xlu0 %1182
  %v1184 = vsel %vm943, %v1105, 0.0
  %1185 = vadd.xlane.f32.xlu0 %v1184
  %v1186 = vpop.xlane.xlu0 %1185
  %v1187 = vsel %vm943, %v1107, 0.0
  %1188 = vadd.xlane.f32.xlu0 %v1187
  %v1189 = vpop.xlane.xlu0 %1188
  %v1190 = vsel %vm943, %v1109, 0.0
  %1191 = vadd.xlane.f32.xlu0 %v1190
  %v1192 = vpop.xlane.xlu0 %1191
  %v1193 = vsel %vm943, %v1111, 0.0
  %1194 = vadd.xlane.f32.xlu0 %v1193
  %v1195 = vpop.xlane.xlu0 %1194
  %v1196 = vsel %vm943, %v1113, 0.0
  %1197 = vadd.xlane.f32.xlu0 %v1196
  %v1198 = vpop.xlane.xlu0 %1197
  %v1199 = vsel %vm943, %v1115, 0.0
  %1200 = vadd.xlane.f32.xlu0 %v1199
  %v1201 = vpop.xlane.xlu0 %1200
  %v1202 = vsel %vm943, %v1117, 0.0
  %1203 = vadd.xlane.f32.xlu0 %v1202
  %v1204 = vpop.xlane.xlu0 %1203
  %v1205 = vsel %vm943, %v1119, 0.0
  %1206 = vadd.xlane.f32.xlu0 %v1205
  %v1207 = vpop.xlane.xlu0 %1206
  %v1208 = vsel %vm943, %v1121, 0.0
  %1209 = vadd.xlane.f32.xlu0 %v1208
  %v1210 = vpop.xlane.xlu0 %1209
  %v1211 = vsel %vm943, %v1123, 0.0
  %1212 = vadd.xlane.f32.xlu0 %v1211
  %v1213 = vpop.xlane.xlu0 %1212
  %v1214 = vsel %vm943, %v1125, 0.0
  %1215 = vadd.xlane.f32.xlu0 %v1214
  %v1216 = vpop.xlane.xlu0 %1215
  %v1217 = vsel %vm943, %v1127, 0.0
  %1218 = vadd.xlane.f32.xlu0 %v1217
  %v1219 = vpop.xlane.xlu0 %1218
  %v1220 = vsel %vm943, %v1129, 0.0
  %1221 = vadd.xlane.f32.xlu0 %v1220
  %v1222 = vpop.xlane.xlu0 %1221
  %v1223 = vsel %vm943, %v1131, 0.0
  %1224 = vadd.xlane.f32.xlu0 %v1223
  %v1225 = vpop.xlane.xlu0 %1224
  %v1226 = vsel %vm943, %v1133, 0.0
  %1227 = vadd.xlane.f32.xlu0 %v1226
  %v1228 = vpop.xlane.xlu0 %1227
  %v1229 = vsel %vm943, %v1135, 0.0
  %1230 = vadd.xlane.f32.xlu0 %v1229
  %v1231 = vpop.xlane.xlu0 %1230
  %v1232 = vld [vmem:[%s2] sm:$0xf]
  %v1233 = vld [vmem:[%s2 + $0x4] sm:$0xf]
  %v1234 = vld [vmem:[%s2 + $0x8] sm:$0xf]
  %v1235 = vld [vmem:[%s2 + $0xc] sm:$0xf]
  %v1236 = vld [vmem:[%s2 + $0x10] sm:$0xf]
  %v1237 = vld [vmem:[%s2 + $0x14] sm:$0xf]
  %v1238 = vld [vmem:[%s2 + $0x18] sm:$0xf]
  %v1239 = vld [vmem:[%s2 + $0x1c] sm:$0xf]
  %v1240 = vld [vmem:[%s2 + $0x20] sm:$0xf]
  %v1241 = vld [vmem:[%s2 + $0x24] sm:$0xf]
  %v1242 = vld [vmem:[%s2 + $0x28] sm:$0xf]
  %v1243 = vld [vmem:[%s2 + $0x2c] sm:$0xf]
  %v1244 = vld [vmem:[%s2 + $0x30] sm:$0xf]
  %v1245 = vld [vmem:[%s2 + $0x34] sm:$0xf]
  %v1246 = vld [vmem:[%s2 + $0x38] sm:$0xf]
  %v1247 = vld [vmem:[%s2 + $0x3c] sm:$0xf]
  %v1248 = vld [vmem:[%s2 + $0x40] sm:$0xf]
  %v1249 = vld [vmem:[%s2 + $0x44] sm:$0xf]
  %v1250 = vld [vmem:[%s2 + $0x48] sm:$0xf]
  %v1251 = vld [vmem:[%s2 + $0x4c] sm:$0xf]
  %v1252 = vld [vmem:[%s2 + $0x50] sm:$0xf]
  %v1253 = vld [vmem:[%s2 + $0x54] sm:$0xf]
  %v1254 = vld [vmem:[%s2 + $0x58] sm:$0xf]
  %v1255 = vld [vmem:[%s2 + $0x5c] sm:$0xf]
  %v1256 = vld [vmem:[%s2 + $0x60] sm:$0xf]
  %v1257 = vld [vmem:[%s2 + $0x64] sm:$0xf]
  %v1258 = vld [vmem:[%s2 + $0x68] sm:$0xf]
  %v1259 = vld [vmem:[%s2 + $0x6c] sm:$0xf]
  %v1260 = vld [vmem:[%s2 + $0x70] sm:$0xf]
  %v1261 = vld [vmem:[%s2 + $0x74] sm:$0xf]
  %v1262 = vld [vmem:[%s2 + $0x78] sm:$0xf]
  %v1263 = vld [vmem:[%s2 + $0x7c] sm:$0xf]
  %v1265 = vsel %vm110, %v1073, 0
  %vm1267 = vcmask 1043456
  %v1269 = vsel %vm1267, %v1232, 0
  %1271 = vmatpush.msra.mxu0 0.0
  %1272 = vmatpush.msra.mxu0 0.0
  %1273 = vmatpush.msra.mxu0 0.0
  %1274 = vmatpush.msra.mxu0 0.0
  %1275 = vmatpush.msra.mxu0 0.0
  %1276 = vmatpush.msra.mxu0 0.0
  %1277 = vmatpush.msra.mxu0 0.0
  %1278 = vmatpush.msra.mxu0 0.0
  %1279 = vmatpush.msra.mxu0 0.0
  %1280 = vmatpush.msra.mxu0 0.0
  %1281 = vmatpush.msra.mxu0 0.0
  %1282 = vmatpush.msra.mxu0 0.0
  %1283 = vmatpush.msra.mxu0 0.0
  %1284 = vmatpush.msra.mxu0 0.0
  %1285 = vmatpush.msra.mxu0 0.0
  %1286 = vmatpush.msra.mxu0 %v1269
  %1287 = vmatmul.f32.gmra.mxu0 %v1265
  %v1288 = vpop.f32.mrf.mxu0
  %v1289 = vadd.f32 0.0, %v1288
  %1290 = vdwg.mxu0
  %v1292 = vsel %vm110, %v1075, 0
  %v1295 = vsel %vm1267, %v1233, 0
  %1297 = vmatpush.msra.mxu0 0.0
  %1298 = vmatpush.msra.mxu0 0.0
  %1299 = vmatpush.msra.mxu0 0.0
  %1300 = vmatpush.msra.mxu0 0.0
  %1301 = vmatpush.msra.mxu0 0.0
  %1302 = vmatpush.msra.mxu0 0.0
  %1303 = vmatpush.msra.mxu0 0.0
  %1304 = vmatpush.msra.mxu0 0.0
  %1305 = vmatpush.msra.mxu0 0.0
  %1306 = vmatpush.msra.mxu0 0.0
  %1307 = vmatpush.msra.mxu0 0.0
  %1308 = vmatpush.msra.mxu0 0.0
  %1309 = vmatpush.msra.mxu0 0.0
  %1310 = vmatpush.msra.mxu0 0.0
  %1311 = vmatpush.msra.mxu0 0.0
  %1312 = vmatpush.msra.mxu0 %v1295
  %1313 = vmatmul.f32.gmra.mxu0 %v1292
  %v1314 = vpop.f32.mrf.mxu0
  %v1315 = vadd.f32 0.0, %v1314
  %1316 = vdwg.mxu0
  %v1318 = vsel %vm110, %v1077, 0
  %v1321 = vsel %vm1267, %v1234, 0
  %1323 = vmatpush.msra.mxu0 0.0
  %1324 = vmatpush.msra.mxu0 0.0
  %1325 = vmatpush.msra.mxu0 0.0
  %1326 = vmatpush.msra.mxu0 0.0
  %1327 = vmatpush.msra.mxu0 0.0
  %1328 = vmatpush.msra.mxu0 0.0
  %1329 = vmatpush.msra.mxu0 0.0
  %1330 = vmatpush.msra.mxu0 0.0
  %1331 = vmatpush.msra.mxu0 0.0
  %1332 = vmatpush.msra.mxu0 0.0
  %1333 = vmatpush.msra.mxu0 0.0
  %1334 = vmatpush.msra.mxu0 0.0
  %1335 = vmatpush.msra.mxu0 0.0
  %1336 = vmatpush.msra.mxu0 0.0
  %1337 = vmatpush.msra.mxu0 0.0
  %1338 = vmatpush.msra.mxu0 %v1321
  %1339 = vmatmul.f32.gmra.mxu0 %v1318
  %v1340 = vpop.f32.mrf.mxu0
  %v1341 = vadd.f32 0.0, %v1340
  %1342 = vdwg.mxu0
  %v1344 = vsel %vm110, %v1079, 0
  %v1347 = vsel %vm1267, %v1235, 0
  %1349 = vmatpush.msra.mxu0 0.0
  %1350 = vmatpush.msra.mxu0 0.0
  %1351 = vmatpush.msra.mxu0 0.0
  %1352 = vmatpush.msra.mxu0 0.0
  %1353 = vmatpush.msra.mxu0 0.0
  %1354 = vmatpush.msra.mxu0 0.0
  %1355 = vmatpush.msra.mxu0 0.0
  %1356 = vmatpush.msra.mxu0 0.0
  %1357 = vmatpush.msra.mxu0 0.0
  %1358 = vmatpush.msra.mxu0 0.0
  %1359 = vmatpush.msra.mxu0 0.0
  %1360 = vmatpush.msra.mxu0 0.0
  %1361 = vmatpush.msra.mxu0 0.0
  %1362 = vmatpush.msra.mxu0 0.0
  %1363 = vmatpush.msra.mxu0 0.0
  %1364 = vmatpush.msra.mxu0 %v1347
  %1365 = vmatmul.f32.gmra.mxu0 %v1344
  %v1366 = vpop.f32.mrf.mxu0
  %v1367 = vadd.f32 0.0, %v1366
  %1368 = vdwg.mxu0
  %v1370 = vsel %vm110, %v1081, 0
  %v1373 = vsel %vm1267, %v1236, 0
  %1375 = vmatpush.msra.mxu0 0.0
  %1376 = vmatpush.msra.mxu0 0.0
  %1377 = vmatpush.msra.mxu0 0.0
  %1378 = vmatpush.msra.mxu0 0.0
  %1379 = vmatpush.msra.mxu0 0.0
  %1380 = vmatpush.msra.mxu0 0.0
  %1381 = vmatpush.msra.mxu0 0.0
  %1382 = vmatpush.msra.mxu0 0.0
  %1383 = vmatpush.msra.mxu0 0.0
  %1384 = vmatpush.msra.mxu0 0.0
  %1385 = vmatpush.msra.mxu0 0.0
  %1386 = vmatpush.msra.mxu0 0.0
  %1387 = vmatpush.msra.mxu0 0.0
  %1388 = vmatpush.msra.mxu0 0.0
  %1389 = vmatpush.msra.mxu0 0.0
  %1390 = vmatpush.msra.mxu0 %v1373
  %1391 = vmatmul.f32.gmra.mxu0 %v1370
  %v1392 = vpop.f32.mrf.mxu0
  %v1393 = vadd.f32 0.0, %v1392
  %1394 = vdwg.mxu0
  %v1396 = vsel %vm110, %v1083, 0
  %v1399 = vsel %vm1267, %v1237, 0
  %1401 = vmatpush.msra.mxu0 0.0
  %1402 = vmatpush.msra.mxu0 0.0
  %1403 = vmatpush.msra.mxu0 0.0
  %1404 = vmatpush.msra.mxu0 0.0
  %1405 = vmatpush.msra.mxu0 0.0
  %1406 = vmatpush.msra.mxu0 0.0
  %1407 = vmatpush.msra.mxu0 0.0
  %1408 = vmatpush.msra.mxu0 0.0
  %1409 = vmatpush.msra.mxu0 0.0
  %1410 = vmatpush.msra.mxu0 0.0
  %1411 = vmatpush.msra.mxu0 0.0
  %1412 = vmatpush.msra.mxu0 0.0
  %1413 = vmatpush.msra.mxu0 0.0
  %1414 = vmatpush.msra.mxu0 0.0
  %1415 = vmatpush.msra.mxu0 0.0
  %1416 = vmatpush.msra.mxu0 %v1399
  %1417 = vmatmul.f32.gmra.mxu0 %v1396
  %v1418 = vpop.f32.mrf.mxu0
  %v1419 = vadd.f32 0.0, %v1418
  %1420 = vdwg.mxu0
  %v1422 = vsel %vm110, %v1085, 0
  %v1425 = vsel %vm1267, %v1238, 0
  %1427 = vmatpush.msra.mxu0 0.0
  %1428 = vmatpush.msra.mxu0 0.0
  %1429 = vmatpush.msra.mxu0 0.0
  %1430 = vmatpush.msra.mxu0 0.0
  %1431 = vmatpush.msra.mxu0 0.0
  %1432 = vmatpush.msra.mxu0 0.0
  %1433 = vmatpush.msra.mxu0 0.0
  %1434 = vmatpush.msra.mxu0 0.0
  %1435 = vmatpush.msra.mxu0 0.0
  %1436 = vmatpush.msra.mxu0 0.0
  %1437 = vmatpush.msra.mxu0 0.0
  %1438 = vmatpush.msra.mxu0 0.0
  %1439 = vmatpush.msra.mxu0 0.0
  %1440 = vmatpush.msra.mxu0 0.0
  %1441 = vmatpush.msra.mxu0 0.0
  %1442 = vmatpush.msra.mxu0 %v1425
  %1443 = vmatmul.f32.gmra.mxu0 %v1422
  %v1444 = vpop.f32.mrf.mxu0
  %v1445 = vadd.f32 0.0, %v1444
  %1446 = vdwg.mxu0
  %v1448 = vsel %vm110, %v1087, 0
  %v1451 = vsel %vm1267, %v1239, 0
  %1453 = vmatpush.msra.mxu0 0.0
  %1454 = vmatpush.msra.mxu0 0.0
  %1455 = vmatpush.msra.mxu0 0.0
  %1456 = vmatpush.msra.mxu0 0.0
  %1457 = vmatpush.msra.mxu0 0.0
  %1458 = vmatpush.msra.mxu0 0.0
  %1459 = vmatpush.msra.mxu0 0.0
  %1460 = vmatpush.msra.mxu0 0.0
  %1461 = vmatpush.msra.mxu0 0.0
  %1462 = vmatpush.msra.mxu0 0.0
  %1463 = vmatpush.msra.mxu0 0.0
  %1464 = vmatpush.msra.mxu0 0.0
  %1465 = vmatpush.msra.mxu0 0.0
  %1466 = vmatpush.msra.mxu0 0.0
  %1467 = vmatpush.msra.mxu0 0.0
  %1468 = vmatpush.msra.mxu0 %v1451
  %1469 = vmatmul.f32.gmra.mxu0 %v1448
  %v1470 = vpop.f32.mrf.mxu0
  %v1471 = vadd.f32 0.0, %v1470
  %1472 = vdwg.mxu0
  %v1474 = vsel %vm110, %v1089, 0
  %v1477 = vsel %vm1267, %v1240, 0
  %1479 = vmatpush.msra.mxu0 0.0
  %1480 = vmatpush.msra.mxu0 0.0
  %1481 = vmatpush.msra.mxu0 0.0
  %1482 = vmatpush.msra.mxu0 0.0
  %1483 = vmatpush.msra.mxu0 0.0
  %1484 = vmatpush.msra.mxu0 0.0
  %1485 = vmatpush.msra.mxu0 0.0
  %1486 = vmatpush.msra.mxu0 0.0
  %1487 = vmatpush.msra.mxu0 0.0
  %1488 = vmatpush.msra.mxu0 0.0
  %1489 = vmatpush.msra.mxu0 0.0
  %1490 = vmatpush.msra.mxu0 0.0
  %1491 = vmatpush.msra.mxu0 0.0
  %1492 = vmatpush.msra.mxu0 0.0
  %1493 = vmatpush.msra.mxu0 0.0
  %1494 = vmatpush.msra.mxu0 %v1477
  %1495 = vmatmul.f32.gmra.mxu0 %v1474
  %v1496 = vpop.f32.mrf.mxu0
  %v1497 = vadd.f32 0.0, %v1496
  %1498 = vdwg.mxu0
  %v1500 = vsel %vm110, %v1091, 0
  %v1503 = vsel %vm1267, %v1241, 0
  %1505 = vmatpush.msra.mxu0 0.0
  %1506 = vmatpush.msra.mxu0 0.0
  %1507 = vmatpush.msra.mxu0 0.0
  %1508 = vmatpush.msra.mxu0 0.0
  %1509 = vmatpush.msra.mxu0 0.0
  %1510 = vmatpush.msra.mxu0 0.0
  %1511 = vmatpush.msra.mxu0 0.0
  %1512 = vmatpush.msra.mxu0 0.0
  %1513 = vmatpush.msra.mxu0 0.0
  %1514 = vmatpush.msra.mxu0 0.0
  %1515 = vmatpush.msra.mxu0 0.0
  %1516 = vmatpush.msra.mxu0 0.0
  %1517 = vmatpush.msra.mxu0 0.0
  %1518 = vmatpush.msra.mxu0 0.0
  %1519 = vmatpush.msra.mxu0 0.0
  %1520 = vmatpush.msra.mxu0 %v1503
  %1521 = vmatmul.f32.gmra.mxu0 %v1500
  %v1522 = vpop.f32.mrf.mxu0
  %v1523 = vadd.f32 0.0, %v1522
  %1524 = vdwg.mxu0
  %v1526 = vsel %vm110, %v1093, 0
  %v1529 = vsel %vm1267, %v1242, 0
  %1531 = vmatpush.msra.mxu0 0.0
  %1532 = vmatpush.msra.mxu0 0.0
  %1533 = vmatpush.msra.mxu0 0.0
  %1534 = vmatpush.msra.mxu0 0.0
  %1535 = vmatpush.msra.mxu0 0.0
  %1536 = vmatpush.msra.mxu0 0.0
  %1537 = vmatpush.msra.mxu0 0.0
  %1538 = vmatpush.msra.mxu0 0.0
  %1539 = vmatpush.msra.mxu0 0.0
  %1540 = vmatpush.msra.mxu0 0.0
  %1541 = vmatpush.msra.mxu0 0.0
  %1542 = vmatpush.msra.mxu0 0.0
  %1543 = vmatpush.msra.mxu0 0.0
  %1544 = vmatpush.msra.mxu0 0.0
  %1545 = vmatpush.msra.mxu0 0.0
  %1546 = vmatpush.msra.mxu0 %v1529
  %1547 = vmatmul.f32.gmra.mxu0 %v1526
  %v1548 = vpop.f32.mrf.mxu0
  %v1549 = vadd.f32 0.0, %v1548
  %1550 = vdwg.mxu0
  %v1552 = vsel %vm110, %v1095, 0
  %v1555 = vsel %vm1267, %v1243, 0
  %1557 = vmatpush.msra.mxu0 0.0
  %1558 = vmatpush.msra.mxu0 0.0
  %1559 = vmatpush.msra.mxu0 0.0
  %1560 = vmatpush.msra.mxu0 0.0
  %1561 = vmatpush.msra.mxu0 0.0
  %1562 = vmatpush.msra.mxu0 0.0
  %1563 = vmatpush.msra.mxu0 0.0
  %1564 = vmatpush.msra.mxu0 0.0
  %1565 = vmatpush.msra.mxu0 0.0
  %1566 = vmatpush.msra.mxu0 0.0
  %1567 = vmatpush.msra.mxu0 0.0
  %1568 = vmatpush.msra.mxu0 0.0
  %1569 = vmatpush.msra.mxu0 0.0
  %1570 = vmatpush.msra.mxu0 0.0
  %1571 = vmatpush.msra.mxu0 0.0
  %1572 = vmatpush.msra.mxu0 %v1555
  %1573 = vmatmul.f32.gmra.mxu0 %v1552
  %v1574 = vpop.f32.mrf.mxu0
  %v1575 = vadd.f32 0.0, %v1574
  %1576 = vdwg.mxu0
  %v1578 = vsel %vm110, %v1097, 0
  %v1581 = vsel %vm1267, %v1244, 0
  %1583 = vmatpush.msra.mxu0 0.0
  %1584 = vmatpush.msra.mxu0 0.0
  %1585 = vmatpush.msra.mxu0 0.0
  %1586 = vmatpush.msra.mxu0 0.0
  %1587 = vmatpush.msra.mxu0 0.0
  %1588 = vmatpush.msra.mxu0 0.0
  %1589 = vmatpush.msra.mxu0 0.0
  %1590 = vmatpush.msra.mxu0 0.0
  %1591 = vmatpush.msra.mxu0 0.0
  %1592 = vmatpush.msra.mxu0 0.0
  %1593 = vmatpush.msra.mxu0 0.0
  %1594 = vmatpush.msra.mxu0 0.0
  %1595 = vmatpush.msra.mxu0 0.0
  %1596 = vmatpush.msra.mxu0 0.0
  %1597 = vmatpush.msra.mxu0 0.0
  %1598 = vmatpush.msra.mxu0 %v1581
  %1599 = vmatmul.f32.gmra.mxu0 %v1578
  %v1600 = vpop.f32.mrf.mxu0
  %v1601 = vadd.f32 0.0, %v1600
  %1602 = vdwg.mxu0
  %v1604 = vsel %vm110, %v1099, 0
  %v1607 = vsel %vm1267, %v1245, 0
  %1609 = vmatpush.msra.mxu0 0.0
  %1610 = vmatpush.msra.mxu0 0.0
  %1611 = vmatpush.msra.mxu0 0.0
  %1612 = vmatpush.msra.mxu0 0.0
  %1613 = vmatpush.msra.mxu0 0.0
  %1614 = vmatpush.msra.mxu0 0.0
  %1615 = vmatpush.msra.mxu0 0.0
  %1616 = vmatpush.msra.mxu0 0.0
  %1617 = vmatpush.msra.mxu0 0.0
  %1618 = vmatpush.msra.mxu0 0.0
  %1619 = vmatpush.msra.mxu0 0.0
  %1620 = vmatpush.msra.mxu0 0.0
  %1621 = vmatpush.msra.mxu0 0.0
  %1622 = vmatpush.msra.mxu0 0.0
  %1623 = vmatpush.msra.mxu0 0.0
  %1624 = vmatpush.msra.mxu0 %v1607
  %1625 = vmatmul.f32.gmra.mxu0 %v1604
  %v1626 = vpop.f32.mrf.mxu0
  %v1627 = vadd.f32 0.0, %v1626
  %1628 = vdwg.mxu0
  %v1630 = vsel %vm110, %v1101, 0
  %v1633 = vsel %vm1267, %v1246, 0
  %1635 = vmatpush.msra.mxu0 0.0
  %1636 = vmatpush.msra.mxu0 0.0
  %1637 = vmatpush.msra.mxu0 0.0
  %1638 = vmatpush.msra.mxu0 0.0
  %1639 = vmatpush.msra.mxu0 0.0
  %1640 = vmatpush.msra.mxu0 0.0
  %1641 = vmatpush.msra.mxu0 0.0
  %1642 = vmatpush.msra.mxu0 0.0
  %1643 = vmatpush.msra.mxu0 0.0
  %1644 = vmatpush.msra.mxu0 0.0
  %1645 = vmatpush.msra.mxu0 0.0
  %1646 = vmatpush.msra.mxu0 0.0
  %1647 = vmatpush.msra.mxu0 0.0
  %1648 = vmatpush.msra.mxu0 0.0
  %1649 = vmatpush.msra.mxu0 0.0
  %1650 = vmatpush.msra.mxu0 %v1633
  %1651 = vmatmul.f32.gmra.mxu0 %v1630
  %v1652 = vpop.f32.mrf.mxu0
  %v1653 = vadd.f32 0.0, %v1652
  %1654 = vdwg.mxu0
  %v1656 = vsel %vm110, %v1103, 0
  %v1659 = vsel %vm1267, %v1247, 0
  %1661 = vmatpush.msra.mxu0 0.0
  %1662 = vmatpush.msra.mxu0 0.0
  %1663 = vmatpush.msra.mxu0 0.0
  %1664 = vmatpush.msra.mxu0 0.0
  %1665 = vmatpush.msra.mxu0 0.0
  %1666 = vmatpush.msra.mxu0 0.0
  %1667 = vmatpush.msra.mxu0 0.0
  %1668 = vmatpush.msra.mxu0 0.0
  %1669 = vmatpush.msra.mxu0 0.0
  %1670 = vmatpush.msra.mxu0 0.0
  %1671 = vmatpush.msra.mxu0 0.0
  %1672 = vmatpush.msra.mxu0 0.0
  %1673 = vmatpush.msra.mxu0 0.0
  %1674 = vmatpush.msra.mxu0 0.0
  %1675 = vmatpush.msra.mxu0 0.0
  %1676 = vmatpush.msra.mxu0 %v1659
  %1677 = vmatmul.f32.gmra.mxu0 %v1656
  %v1678 = vpop.f32.mrf.mxu0
  %v1679 = vadd.f32 0.0, %v1678
  %1680 = vdwg.mxu0
  %v1682 = vsel %vm110, %v1105, 0
  %v1685 = vsel %vm1267, %v1248, 0
  %1687 = vmatpush.msra.mxu0 0.0
  %1688 = vmatpush.msra.mxu0 0.0
  %1689 = vmatpush.msra.mxu0 0.0
  %1690 = vmatpush.msra.mxu0 0.0
  %1691 = vmatpush.msra.mxu0 0.0
  %1692 = vmatpush.msra.mxu0 0.0
  %1693 = vmatpush.msra.mxu0 0.0
  %1694 = vmatpush.msra.mxu0 0.0
  %1695 = vmatpush.msra.mxu0 0.0
  %1696 = vmatpush.msra.mxu0 0.0
  %1697 = vmatpush.msra.mxu0 0.0
  %1698 = vmatpush.msra.mxu0 0.0
  %1699 = vmatpush.msra.mxu0 0.0
  %1700 = vmatpush.msra.mxu0 0.0
  %1701 = vmatpush.msra.mxu0 0.0
  %1702 = vmatpush.msra.mxu0 %v1685
  %1703 = vmatmul.f32.gmra.mxu0 %v1682
  %v1704 = vpop.f32.mrf.mxu0
  %v1705 = vadd.f32 0.0, %v1704
  %1706 = vdwg.mxu0
  %v1708 = vsel %vm110, %v1107, 0
  %v1711 = vsel %vm1267, %v1249, 0
  %1713 = vmatpush.msra.mxu0 0.0
  %1714 = vmatpush.msra.mxu0 0.0
  %1715 = vmatpush.msra.mxu0 0.0
  %1716 = vmatpush.msra.mxu0 0.0
  %1717 = vmatpush.msra.mxu0 0.0
  %1718 = vmatpush.msra.mxu0 0.0
  %1719 = vmatpush.msra.mxu0 0.0
  %1720 = vmatpush.msra.mxu0 0.0
  %1721 = vmatpush.msra.mxu0 0.0
  %1722 = vmatpush.msra.mxu0 0.0
  %1723 = vmatpush.msra.mxu0 0.0
  %1724 = vmatpush.msra.mxu0 0.0
  %1725 = vmatpush.msra.mxu0 0.0
  %1726 = vmatpush.msra.mxu0 0.0
  %1727 = vmatpush.msra.mxu0 0.0
  %1728 = vmatpush.msra.mxu0 %v1711
  %1729 = vmatmul.f32.gmra.mxu0 %v1708
  %v1730 = vpop.f32.mrf.mxu0
  %v1731 = vadd.f32 0.0, %v1730
  %1732 = vdwg.mxu0
  %v1734 = vsel %vm110, %v1109, 0
  %v1737 = vsel %vm1267, %v1250, 0
  %1739 = vmatpush.msra.mxu0 0.0
  %1740 = vmatpush.msra.mxu0 0.0
  %1741 = vmatpush.msra.mxu0 0.0
  %1742 = vmatpush.msra.mxu0 0.0
  %1743 = vmatpush.msra.mxu0 0.0
  %1744 = vmatpush.msra.mxu0 0.0
  %1745 = vmatpush.msra.mxu0 0.0
  %1746 = vmatpush.msra.mxu0 0.0
  %1747 = vmatpush.msra.mxu0 0.0
  %1748 = vmatpush.msra.mxu0 0.0
  %1749 = vmatpush.msra.mxu0 0.0
  %1750 = vmatpush.msra.mxu0 0.0
  %1751 = vmatpush.msra.mxu0 0.0
  %1752 = vmatpush.msra.mxu0 0.0
  %1753 = vmatpush.msra.mxu0 0.0
  %1754 = vmatpush.msra.mxu0 %v1737
  %1755 = vmatmul.f32.gmra.mxu0 %v1734
  %v1756 = vpop.f32.mrf.mxu0
  %v1757 = vadd.f32 0.0, %v1756
  %1758 = vdwg.mxu0
  %v1760 = vsel %vm110, %v1111, 0
  %v1763 = vsel %vm1267, %v1251, 0
  %1765 = vmatpush.msra.mxu0 0.0
  %1766 = vmatpush.msra.mxu0 0.0
  %1767 = vmatpush.msra.mxu0 0.0
  %1768 = vmatpush.msra.mxu0 0.0
  %1769 = vmatpush.msra.mxu0 0.0
  %1770 = vmatpush.msra.mxu0 0.0
  %1771 = vmatpush.msra.mxu0 0.0
  %1772 = vmatpush.msra.mxu0 0.0
  %1773 = vmatpush.msra.mxu0 0.0
  %1774 = vmatpush.msra.mxu0 0.0
  %1775 = vmatpush.msra.mxu0 0.0
  %1776 = vmatpush.msra.mxu0 0.0
  %1777 = vmatpush.msra.mxu0 0.0
  %1778 = vmatpush.msra.mxu0 0.0
  %1779 = vmatpush.msra.mxu0 0.0
  %1780 = vmatpush.msra.mxu0 %v1763
  %1781 = vmatmul.f32.gmra.mxu0 %v1760
  %v1782 = vpop.f32.mrf.mxu0
  %v1783 = vadd.f32 0.0, %v1782
  %1784 = vdwg.mxu0
  %v1786 = vsel %vm110, %v1113, 0
  %v1789 = vsel %vm1267, %v1252, 0
  %1791 = vmatpush.msra.mxu0 0.0
  %1792 = vmatpush.msra.mxu0 0.0
  %1793 = vmatpush.msra.mxu0 0.0
  %1794 = vmatpush.msra.mxu0 0.0
  %1795 = vmatpush.msra.mxu0 0.0
  %1796 = vmatpush.msra.mxu0 0.0
  %1797 = vmatpush.msra.mxu0 0.0
  %1798 = vmatpush.msra.mxu0 0.0
  %1799 = vmatpush.msra.mxu0 0.0
  %1800 = vmatpush.msra.mxu0 0.0
  %1801 = vmatpush.msra.mxu0 0.0
  %1802 = vmatpush.msra.mxu0 0.0
  %1803 = vmatpush.msra.mxu0 0.0
  %1804 = vmatpush.msra.mxu0 0.0
  %1805 = vmatpush.msra.mxu0 0.0
  %1806 = vmatpush.msra.mxu0 %v1789
  %1807 = vmatmul.f32.gmra.mxu0 %v1786
  %v1808 = vpop.f32.mrf.mxu0
  %v1809 = vadd.f32 0.0, %v1808
  %1810 = vdwg.mxu0
  %v1812 = vsel %vm110, %v1115, 0
  %v1815 = vsel %vm1267, %v1253, 0
  %1817 = vmatpush.msra.mxu0 0.0
  %1818 = vmatpush.msra.mxu0 0.0
  %1819 = vmatpush.msra.mxu0 0.0
  %1820 = vmatpush.msra.mxu0 0.0
  %1821 = vmatpush.msra.mxu0 0.0
  %1822 = vmatpush.msra.mxu0 0.0
  %1823 = vmatpush.msra.mxu0 0.0
  %1824 = vmatpush.msra.mxu0 0.0
  %1825 = vmatpush.msra.mxu0 0.0
  %1826 = vmatpush.msra.mxu0 0.0
  %1827 = vmatpush.msra.mxu0 0.0
  %1828 = vmatpush.msra.mxu0 0.0
  %1829 = vmatpush.msra.mxu0 0.0
  %1830 = vmatpush.msra.mxu0 0.0
  %1831 = vmatpush.msra.mxu0 0.0
  %1832 = vmatpush.msra.mxu0 %v1815
  %1833 = vmatmul.f32.gmra.mxu0 %v1812
  %v1834 = vpop.f32.mrf.mxu0
  %v1835 = vadd.f32 0.0, %v1834
  %1836 = vdwg.mxu0
  %v1838 = vsel %vm110, %v1117, 0
  %v1841 = vsel %vm1267, %v1254, 0
  %1843 = vmatpush.msra.mxu0 0.0
  %1844 = vmatpush.msra.mxu0 0.0
  %1845 = vmatpush.msra.mxu0 0.0
  %1846 = vmatpush.msra.mxu0 0.0
  %1847 = vmatpush.msra.mxu0 0.0
  %1848 = vmatpush.msra.mxu0 0.0
  %1849 = vmatpush.msra.mxu0 0.0
  %1850 = vmatpush.msra.mxu0 0.0
  %1851 = vmatpush.msra.mxu0 0.0
  %1852 = vmatpush.msra.mxu0 0.0
  %1853 = vmatpush.msra.mxu0 0.0
  %1854 = vmatpush.msra.mxu0 0.0
  %1855 = vmatpush.msra.mxu0 0.0
  %1856 = vmatpush.msra.mxu0 0.0
  %1857 = vmatpush.msra.mxu0 0.0
  %1858 = vmatpush.msra.mxu0 %v1841
  %1859 = vmatmul.f32.gmra.mxu0 %v1838
  %v1860 = vpop.f32.mrf.mxu0
  %v1861 = vadd.f32 0.0, %v1860
  %1862 = vdwg.mxu0
  %v1864 = vsel %vm110, %v1119, 0
  %v1867 = vsel %vm1267, %v1255, 0
  %1869 = vmatpush.msra.mxu0 0.0
  %1870 = vmatpush.msra.mxu0 0.0
  %1871 = vmatpush.msra.mxu0 0.0
  %1872 = vmatpush.msra.mxu0 0.0
  %1873 = vmatpush.msra.mxu0 0.0
  %1874 = vmatpush.msra.mxu0 0.0
  %1875 = vmatpush.msra.mxu0 0.0
  %1876 = vmatpush.msra.mxu0 0.0
  %1877 = vmatpush.msra.mxu0 0.0
  %1878 = vmatpush.msra.mxu0 0.0
  %1879 = vmatpush.msra.mxu0 0.0
  %1880 = vmatpush.msra.mxu0 0.0
  %1881 = vmatpush.msra.mxu0 0.0
  %1882 = vmatpush.msra.mxu0 0.0
  %1883 = vmatpush.msra.mxu0 0.0
  %1884 = vmatpush.msra.mxu0 %v1867
  %1885 = vmatmul.f32.gmra.mxu0 %v1864
  %v1886 = vpop.f32.mrf.mxu0
  %v1887 = vadd.f32 0.0, %v1886
  %1888 = vdwg.mxu0
  %v1890 = vsel %vm110, %v1121, 0
  %v1893 = vsel %vm1267, %v1256, 0
  %1895 = vmatpush.msra.mxu0 0.0
  %1896 = vmatpush.msra.mxu0 0.0
  %1897 = vmatpush.msra.mxu0 0.0
  %1898 = vmatpush.msra.mxu0 0.0
  %1899 = vmatpush.msra.mxu0 0.0
  %1900 = vmatpush.msra.mxu0 0.0
  %1901 = vmatpush.msra.mxu0 0.0
  %1902 = vmatpush.msra.mxu0 0.0
  %1903 = vmatpush.msra.mxu0 0.0
  %1904 = vmatpush.msra.mxu0 0.0
  %1905 = vmatpush.msra.mxu0 0.0
  %1906 = vmatpush.msra.mxu0 0.0
  %1907 = vmatpush.msra.mxu0 0.0
  %1908 = vmatpush.msra.mxu0 0.0
  %1909 = vmatpush.msra.mxu0 0.0
  %1910 = vmatpush.msra.mxu0 %v1893
  %1911 = vmatmul.f32.gmra.mxu0 %v1890
  %v1912 = vpop.f32.mrf.mxu0
  %v1913 = vadd.f32 0.0, %v1912
  %1914 = vdwg.mxu0
  %v1916 = vsel %vm110, %v1123, 0
  %v1919 = vsel %vm1267, %v1257, 0
  %1921 = vmatpush.msra.mxu0 0.0
  %1922 = vmatpush.msra.mxu0 0.0
  %1923 = vmatpush.msra.mxu0 0.0
  %1924 = vmatpush.msra.mxu0 0.0
  %1925 = vmatpush.msra.mxu0 0.0
  %1926 = vmatpush.msra.mxu0 0.0
  %1927 = vmatpush.msra.mxu0 0.0
  %1928 = vmatpush.msra.mxu0 0.0
  %1929 = vmatpush.msra.mxu0 0.0
  %1930 = vmatpush.msra.mxu0 0.0
  %1931 = vmatpush.msra.mxu0 0.0
  %1932 = vmatpush.msra.mxu0 0.0
  %1933 = vmatpush.msra.mxu0 0.0
  %1934 = vmatpush.msra.mxu0 0.0
  %1935 = vmatpush.msra.mxu0 0.0
  %1936 = vmatpush.msra.mxu0 %v1919
  %1937 = vmatmul.f32.gmra.mxu0 %v1916
  %v1938 = vpop.f32.mrf.mxu0
  %v1939 = vadd.f32 0.0, %v1938
  %1940 = vdwg.mxu0
  %v1942 = vsel %vm110, %v1125, 0
  %v1945 = vsel %vm1267, %v1258, 0
  %1947 = vmatpush.msra.mxu0 0.0
  %1948 = vmatpush.msra.mxu0 0.0
  %1949 = vmatpush.msra.mxu0 0.0
  %1950 = vmatpush.msra.mxu0 0.0
  %1951 = vmatpush.msra.mxu0 0.0
  %1952 = vmatpush.msra.mxu0 0.0
  %1953 = vmatpush.msra.mxu0 0.0
  %1954 = vmatpush.msra.mxu0 0.0
  %1955 = vmatpush.msra.mxu0 0.0
  %1956 = vmatpush.msra.mxu0 0.0
  %1957 = vmatpush.msra.mxu0 0.0
  %1958 = vmatpush.msra.mxu0 0.0
  %1959 = vmatpush.msra.mxu0 0.0
  %1960 = vmatpush.msra.mxu0 0.0
  %1961 = vmatpush.msra.mxu0 0.0
  %1962 = vmatpush.msra.mxu0 %v1945
  %1963 = vmatmul.f32.gmra.mxu0 %v1942
  %v1964 = vpop.f32.mrf.mxu0
  %v1965 = vadd.f32 0.0, %v1964
  %1966 = vdwg.mxu0
  %v1968 = vsel %vm110, %v1127, 0
  %v1971 = vsel %vm1267, %v1259, 0
  %1973 = vmatpush.msra.mxu0 0.0
  %1974 = vmatpush.msra.mxu0 0.0
  %1975 = vmatpush.msra.mxu0 0.0
  %1976 = vmatpush.msra.mxu0 0.0
  %1977 = vmatpush.msra.mxu0 0.0
  %1978 = vmatpush.msra.mxu0 0.0
  %1979 = vmatpush.msra.mxu0 0.0
  %1980 = vmatpush.msra.mxu0 0.0
  %1981 = vmatpush.msra.mxu0 0.0
  %1982 = vmatpush.msra.mxu0 0.0
  %1983 = vmatpush.msra.mxu0 0.0
  %1984 = vmatpush.msra.mxu0 0.0
  %1985 = vmatpush.msra.mxu0 0.0
  %1986 = vmatpush.msra.mxu0 0.0
  %1987 = vmatpush.msra.mxu0 0.0
  %1988 = vmatpush.msra.mxu0 %v1971
  %1989 = vmatmul.f32.gmra.mxu0 %v1968
  %v1990 = vpop.f32.mrf.mxu0
  %v1991 = vadd.f32 0.0, %v1990
  %1992 = vdwg.mxu0
  %v1994 = vsel %vm110, %v1129, 0
  %v1997 = vsel %vm1267, %v1260, 0
  %1999 = vmatpush.msra.mxu0 0.0
  %2000 = vmatpush.msra.mxu0 0.0
  %2001 = vmatpush.msra.mxu0 0.0
  %2002 = vmatpush.msra.mxu0 0.0
  %2003 = vmatpush.msra.mxu0 0.0
  %2004 = vmatpush.msra.mxu0 0.0
  %2005 = vmatpush.msra.mxu0 0.0
  %2006 = vmatpush.msra.mxu0 0.0
  %2007 = vmatpush.msra.mxu0 0.0
  %2008 = vmatpush.msra.mxu0 0.0
  %2009 = vmatpush.msra.mxu0 0.0
  %2010 = vmatpush.msra.mxu0 0.0
  %2011 = vmatpush.msra.mxu0 0.0
  %2012 = vmatpush.msra.mxu0 0.0
  %2013 = vmatpush.msra.mxu0 0.0
  %2014 = vmatpush.msra.mxu0 %v1997
  %2015 = vmatmul.f32.gmra.mxu0 %v1994
  %v2016 = vpop.f32.mrf.mxu0
  %v2017 = vadd.f32 0.0, %v2016
  %2018 = vdwg.mxu0
  %v2020 = vsel %vm110, %v1131, 0
  %v2023 = vsel %vm1267, %v1261, 0
  %2025 = vmatpush.msra.mxu0 0.0
  %2026 = vmatpush.msra.mxu0 0.0
  %2027 = vmatpush.msra.mxu0 0.0
  %2028 = vmatpush.msra.mxu0 0.0
  %2029 = vmatpush.msra.mxu0 0.0
  %2030 = vmatpush.msra.mxu0 0.0
  %2031 = vmatpush.msra.mxu0 0.0
  %2032 = vmatpush.msra.mxu0 0.0
  %2033 = vmatpush.msra.mxu0 0.0
  %2034 = vmatpush.msra.mxu0 0.0
  %2035 = vmatpush.msra.mxu0 0.0
  %2036 = vmatpush.msra.mxu0 0.0
  %2037 = vmatpush.msra.mxu0 0.0
  %2038 = vmatpush.msra.mxu0 0.0
  %2039 = vmatpush.msra.mxu0 0.0
  %2040 = vmatpush.msra.mxu0 %v2023
  %2041 = vmatmul.f32.gmra.mxu0 %v2020
  %v2042 = vpop.f32.mrf.mxu0
  %v2043 = vadd.f32 0.0, %v2042
  %2044 = vdwg.mxu0
  %v2046 = vsel %vm110, %v1133, 0
  %v2049 = vsel %vm1267, %v1262, 0
  %2051 = vmatpush.msra.mxu0 0.0
  %2052 = vmatpush.msra.mxu0 0.0
  %2053 = vmatpush.msra.mxu0 0.0
  %2054 = vmatpush.msra.mxu0 0.0
  %2055 = vmatpush.msra.mxu0 0.0
  %2056 = vmatpush.msra.mxu0 0.0
  %2057 = vmatpush.msra.mxu0 0.0
  %2058 = vmatpush.msra.mxu0 0.0
  %2059 = vmatpush.msra.mxu0 0.0
  %2060 = vmatpush.msra.mxu0 0.0
  %2061 = vmatpush.msra.mxu0 0.0
  %2062 = vmatpush.msra.mxu0 0.0
  %2063 = vmatpush.msra.mxu0 0.0
  %2064 = vmatpush.msra.mxu0 0.0
  %2065 = vmatpush.msra.mxu0 0.0
  %2066 = vmatpush.msra.mxu0 %v2049
  %2067 = vmatmul.f32.gmra.mxu0 %v2046
  %v2068 = vpop.f32.mrf.mxu0
  %v2069 = vadd.f32 0.0, %v2068
  %2070 = vdwg.mxu0
  %v2072 = vsel %vm110, %v1135, 0
  %v2075 = vsel %vm1267, %v1263, 0
  %2077 = vmatpush.msra.mxu0 0.0
  %2078 = vmatpush.msra.mxu0 0.0
  %2079 = vmatpush.msra.mxu0 0.0
  %2080 = vmatpush.msra.mxu0 0.0
  %2081 = vmatpush.msra.mxu0 0.0
  %2082 = vmatpush.msra.mxu0 0.0
  %2083 = vmatpush.msra.mxu0 0.0
  %2084 = vmatpush.msra.mxu0 0.0
  %2085 = vmatpush.msra.mxu0 0.0
  %2086 = vmatpush.msra.mxu0 0.0
  %2087 = vmatpush.msra.mxu0 0.0
  %2088 = vmatpush.msra.mxu0 0.0
  %2089 = vmatpush.msra.mxu0 0.0
  %2090 = vmatpush.msra.mxu0 0.0
  %2091 = vmatpush.msra.mxu0 0.0
  %2092 = vmatpush.msra.mxu0 %v2075
  %2093 = vmatmul.f32.gmra.mxu0 %v2072
  %v2094 = vpop.f32.mrf.mxu0
  %v2095 = vadd.f32 0.0, %v2094
  %2096 = vdwg.mxu0
  %v2097 = vrcp.pop %v1138
  %v2098 = vrcp.pop %v1141
  %v2099 = vrcp.pop %v1144
  %v2100 = vrcp.pop %v1147
  %v2101 = vrcp.pop %v1150
  %v2102 = vrcp.pop %v1153
  %v2103 = vrcp.pop %v1156
  %v2104 = vrcp.pop %v1159
  %v2105 = vrcp.pop %v1162
  %v2106 = vrcp.pop %v1165
  %v2107 = vrcp.pop %v1168
  %v2108 = vrcp.pop %v1171
  %v2109 = vrcp.pop %v1174
  %v2110 = vrcp.pop %v1177
  %v2111 = vrcp.pop %v1180
  %v2112 = vrcp.pop %v1183
  %v2113 = vrcp.pop %v1186
  %v2114 = vrcp.pop %v1189
  %v2115 = vrcp.pop %v1192
  %v2116 = vrcp.pop %v1195
  %v2117 = vrcp.pop %v1198
  %v2118 = vrcp.pop %v1201
  %v2119 = vrcp.pop %v1204
  %v2120 = vrcp.pop %v1207
  %v2121 = vrcp.pop %v1210
  %v2122 = vrcp.pop %v1213
  %v2123 = vrcp.pop %v1216
  %v2124 = vrcp.pop %v1219
  %v2125 = vrcp.pop %v1222
  %v2126 = vrcp.pop %v1225
  %v2127 = vrcp.pop %v1228
  %v2128 = vrcp.pop %v1231
  %v2129 = vmul.f32 %v1289, %v2097
  %v2130 = vmul.f32 %v1315, %v2098
  %v2131 = vmul.f32 %v1341, %v2099
  %v2132 = vmul.f32 %v1367, %v2100
  %v2133 = vmul.f32 %v1393, %v2101
  %v2134 = vmul.f32 %v1419, %v2102
  %v2135 = vmul.f32 %v1445, %v2103
  %v2136 = vmul.f32 %v1471, %v2104
  %v2137 = vmul.f32 %v1497, %v2105
  %v2138 = vmul.f32 %v1523, %v2106
  %v2139 = vmul.f32 %v1549, %v2107
  %v2140 = vmul.f32 %v1575, %v2108
  %v2141 = vmul.f32 %v1601, %v2109
  %v2142 = vmul.f32 %v1627, %v2110
  %v2143 = vmul.f32 %v1653, %v2111
  %v2144 = vmul.f32 %v1679, %v2112
  %v2145 = vmul.f32 %v1705, %v2113
  %v2146 = vmul.f32 %v1731, %v2114
  %v2147 = vmul.f32 %v1757, %v2115
  %v2148 = vmul.f32 %v1783, %v2116
  %v2149 = vmul.f32 %v1809, %v2117
  %v2150 = vmul.f32 %v1835, %v2118
  %v2151 = vmul.f32 %v1861, %v2119
  %v2152 = vmul.f32 %v1887, %v2120
  %v2153 = vmul.f32 %v1913, %v2121
  %v2154 = vmul.f32 %v1939, %v2122
  %v2155 = vmul.f32 %v1965, %v2123
  %v2156 = vmul.f32 %v1991, %v2124
  %v2157 = vmul.f32 %v2017, %v2125
  %v2158 = vmul.f32 %v2043, %v2126
  %v2159 = vmul.f32 %v2069, %v2127
  %v2160 = vmul.f32 %v2095, %v2128
  %2161 = vst.msk [vmem:[%s3] sm:$0xf] %vm943, %v2129
  %2162 = vst.msk [vmem:[%s3 + $0x4] sm:$0xf] %vm943, %v2130
  %2163 = vst.msk [vmem:[%s3 + $0x8] sm:$0xf] %vm943, %v2131
  %2164 = vst.msk [vmem:[%s3 + $0xc] sm:$0xf] %vm943, %v2132
  %2165 = vst.msk [vmem:[%s3 + $0x10] sm:$0xf] %vm943, %v2133
  %2166 = vst.msk [vmem:[%s3 + $0x14] sm:$0xf] %vm943, %v2134
  %2167 = vst.msk [vmem:[%s3 + $0x18] sm:$0xf] %vm943, %v2135
  %2168 = vst.msk [vmem:[%s3 + $0x1c] sm:$0xf] %vm943, %v2136
  %2169 = vst.msk [vmem:[%s3 + $0x20] sm:$0xf] %vm943, %v2137
  %2170 = vst.msk [vmem:[%s3 + $0x24] sm:$0xf] %vm943, %v2138
  %2171 = vst.msk [vmem:[%s3 + $0x28] sm:$0xf] %vm943, %v2139
  %2172 = vst.msk [vmem:[%s3 + $0x2c] sm:$0xf] %vm943, %v2140
  %2173 = vst.msk [vmem:[%s3 + $0x30] sm:$0xf] %vm943, %v2141
  %2174 = vst.msk [vmem:[%s3 + $0x34] sm:$0xf] %vm943, %v2142
  %2175 = vst.msk [vmem:[%s3 + $0x38] sm:$0xf] %vm943, %v2143
  %2176 = vst.msk [vmem:[%s3 + $0x3c] sm:$0xf] %vm943, %v2144
  %2177 = vst.msk [vmem:[%s3 + $0x40] sm:$0xf] %vm943, %v2145
  %2178 = vst.msk [vmem:[%s3 + $0x44] sm:$0xf] %vm943, %v2146
  %2179 = vst.msk [vmem:[%s3 + $0x48] sm:$0xf] %vm943, %v2147
  %2180 = vst.msk [vmem:[%s3 + $0x4c] sm:$0xf] %vm943, %v2148
  %2181 = vst.msk [vmem:[%s3 + $0x50] sm:$0xf] %vm943, %v2149
  %2182 = vst.msk [vmem:[%s3 + $0x54] sm:$0xf] %vm943, %v2150
  %2183 = vst.msk [vmem:[%s3 + $0x58] sm:$0xf] %vm943, %v2151
  %2184 = vst.msk [vmem:[%s3 + $0x5c] sm:$0xf] %vm943, %v2152
  %2185 = vst.msk [vmem:[%s3 + $0x60] sm:$0xf] %vm943, %v2153
  %2186 = vst.msk [vmem:[%s3 + $0x64] sm:$0xf] %vm943, %v2154
  %2187 = vst.msk [vmem:[%s3 + $0x68] sm:$0xf] %vm943, %v2155
  %2188 = vst.msk [vmem:[%s3 + $0x6c] sm:$0xf] %vm943, %v2156
  %2189 = vst.msk [vmem:[%s3 + $0x70] sm:$0xf] %vm943, %v2157
  %2190 = vst.msk [vmem:[%s3 + $0x74] sm:$0xf] %vm943, %v2158
  %2191 = vst.msk [vmem:[%s3 + $0x78] sm:$0xf] %vm943, %v2159
  %2192 = vst.msk [vmem:[%s3 + $0x7c] sm:$0xf] %vm943, %v2160
  // Predicated region
  $region14: #{st_self_attention.10} parent=0 // pred_check
    _
  $region15: #{st_self_attention.10} parent=0 // pred_check_branch
    %2194 = sbr.rel (0) target = $region17
  $region16: #{st_self_attention.10} parent=0 // pred_region
    _
  $region17: #{st_self_attention.10} parent=0 // pred_fallthru
    _
  // Predicated region
  $region18: #{st_self_attention.10} parent=0 // pred_check
    _
  $region19: #{st_self_attention.10} parent=0 // pred_check_branch
    %2196 = sbr.rel (0) target = $region21
  $region20: #{st_self_attention.10} parent=0 // pred_region
    _
  $region21: #{st_self_attention.10} parent=0 // pred_fallthru
    _

</llo_original>
